<compile_context>
chip_gen: v7x
topology: tpu7x:2x2x1
jax: 0.10.0
libtpu: 0.0.40
codegen_flags: <defaults>
</compile_context>

<pallas_src>
import jax
import jax.numpy as jnp
from jax.experimental import pallas as pl
from jax.experimental.pallas import tpu as pltpu

EPS = 1e-5  # nn.BatchNorm3d default
_VMEM_LIMIT = 48 * 1024 * 1024  # per-step blocks are small; 48MB is safe on v5e/v6e/v7x


# ---------------------------------------------------------------------------
# Kernels
# ---------------------------------------------------------------------------
def _make_conv_stats_kernel(H, W, Cin, Cout):
    """Conv3d(3,pad=1) for one output depth slice + fused BN partial statistics.

    Inputs per grid step: the three padded depth slices (Hp, Wp, Cin) needed for
    this output slice, plus the full (27, Cin, Cout) weight block (VMEM resident).
    """
    HW = H * W

    def kernel(x0_ref, x1_ref, x2_ref, w_ref, y_ref, s_ref, q_ref):
        planes = (x0_ref[...], x1_ref[...], x2_ref[...])      # each (H+2, W+2, Cin) bf16
        acc = jnp.zeros((HW, Cout), jnp.float32)
        for kd in range(3):
            xk = planes[kd]
            for kh in range(3):
                for kw in range(3):
                    t = (kd * 3 + kh) * 3 + kw
                    tap = xk[kh:kh + H, kw:kw + W, :].reshape(HW, Cin)
                    acc = acc + jnp.dot(tap, w_ref[t],
                                        preferred_element_type=jnp.float32)
        # Conv bias intentionally omitted: it cancels exactly in training-mode BN.
        y_ref[...] = acc.astype(y_ref.dtype)                  # bf16 intermediate
        s = jnp.sum(acc, axis=0, keepdims=True)               # (1, Cout) exact f32
        q = jnp.sum(acc * acc, axis=0, keepdims=True)
        # Broadcast to 8 rows so the stats outputs keep (8,128)-friendly tiles.
        s_ref[...] = jnp.broadcast_to(s, s_ref.shape)
        q_ref[...] = jnp.broadcast_to(q, q_ref.shape)

    return kernel


def _affine_relu_kernel(y_ref, scale_ref, shift_ref, o_ref):
    """Folded BatchNorm (y*scale + shift) + ReLU on a lane-dense folded view."""
    y = y_ref[...].astype(jnp.float32)
    o_ref[...] = jnp.maximum(y * scale_ref[...] + shift_ref[...], 0.0).astype(o_ref.dtype)


# ---------------------------------------------------------------------------
# Helpers
# ---------------------------------------------------------------------------
def _shifted_depth_spec(kd, Hp, Wp, Cin):
    # Three views of the same padded array: output depth slice d reads padded
    # depth rows d, d+1, d+2.  Squeeze the (n, depth) dims out of the kernel ref.
    def imap(n, d):
        return (n, d + kd, 0, 0, 0)
    return pl.BlockSpec((None, None, Hp, Wp, Cin), imap)


def _pick_row_tile(n_rows, max_rows=2048):
    if n_rows <= max_rows:
        return n_rows
    start = max_rows - max_rows % 8
    for t in range(start, 7, -8):
        if n_rows % t == 0:
            return t
    return n_rows


# ---------------------------------------------------------------------------
# One Conv3d(3,pad=1) + BatchNorm3d(train) + ReLU block (channels-last, padded input)
# ---------------------------------------------------------------------------
def conv3d_bn_relu_block(xp, w, gamma, beta, *, out_dtype):
    """xp: (N, D+2, H+2, W+2, Cin) bf16 (zero-padded). Returns (N, D, H, W, Cout)."""
    N, Dp, Hp, Wp, Cin = xp.shape
    D, H, W = Dp - 2, Hp - 2, Wp - 2
    Cout = w.shape[-1]
    HW = H * W
    M = N * D * HW
    assert HW % 8 == 0, "H*W must be a multiple of 8 (sublane tiling of the conv output)"

    wk = w.reshape(27, Cin, Cout).astype(jnp.bfloat16)
    conv_kernel = _make_conv_stats_kernel(H, W, Cin, Cout)

    # --- conv + fused BN partial statistics (grid over (n, output depth slice)) ---
    y, s_part, q_part = pl.pallas_call(
        conv_kernel,
        out_shape=(jax.ShapeDtypeStruct((M, Cout), jnp.bfloat16),
                   jax.ShapeDtypeStruct((N * D * 8, Cout), jnp.float32),
                   jax.ShapeDtypeStruct((N * D * 8, Cout), jnp.float32)),
        grid_spec=pltpu.PrefetchScalarGridSpec(
            num_scalar_prefetch=0,
            grid=(N, D),
            in_specs=[_shifted_depth_spec(0, Hp, Wp, Cin),
                      _shifted_depth_spec(1, Hp, Wp, Cin),
                      _shifted_depth_spec(2, Hp, Wp, Cin),
                      pl.BlockSpec((27, Cin, Cout), lambda n, d: (0, 0, 0))],
            out_specs=(pl.BlockSpec((HW, Cout), lambda n, d: (n * D + d, 0)),
                       pl.BlockSpec((8, Cout), lambda n, d: (n * D + d, 0)),
                       pl.BlockSpec((8, Cout), lambda n, d: (n * D + d, 0))),
        ),
        compiler_params=pltpu.CompilerParams(
            dimension_semantics=("parallel", "parallel"),
            vmem_limit_bytes=_VMEM_LIMIT),
    )(xp, xp, xp, wk)

    # --- tiny (N*D, Cout) reductions + fold BN into scale/shift (XLA glue) ---
    s = s_part.reshape(N * D, 8, Cout)[:, 0, :].sum(axis=0)
    q = q_part.reshape(N * D, 8, Cout)[:, 0, :].sum(axis=0)
    mean = s / M
    var = jnp.maximum(q / M - mean * mean, 0.0)   # biased variance, clamped >= 0
    scale_v = gamma * jax.lax.rsqrt(var + EPS)
    shift_v = beta - mean * scale_v

    # --- lane-dense folded view: (M, Cout) -> (M//r, r*Cout) is a free row-major reshape ---
    r = 128 // Cout if (Cout <= 128 and 128 % Cout == 0 and M % (128 // Cout) == 0) else 1
    n_rows = M // r
    tr = _pick_row_tile(n_rows)
    yf = y.reshape(n_rows, r * Cout)
    scale2 = jnp.tile(scale_v.astype(jnp.float32), r).reshape(1, r * Cout)
    shift2 = jnp.tile(shift_v.astype(jnp.float32), r).reshape(1, r * Cout)

    out = pl.pallas_call(
        _affine_relu_kernel,
        out_shape=jax.ShapeDtypeStruct((n_rows, r * Cout), out_dtype),
        grid_spec=pltpu.PrefetchScalarGridSpec(
            num_scalar_prefetch=0,
            grid=(n_rows // tr,),
            in_specs=[pl.BlockSpec((tr, r * Cout), lambda i: (i, 0)),
                      pl.BlockSpec((1, r * Cout), lambda i: (0, 0)),
                      pl.BlockSpec((1, r * Cout), lambda i: (0, 0))],
            out_specs=pl.BlockSpec((tr, r * Cout), lambda i: (i, 0)),
        ),
        compiler_params=pltpu.CompilerParams(
            dimension_semantics=("parallel",),
            vmem_limit_bytes=_VMEM_LIMIT),
    )(yf, scale2, shift2)

    return out.reshape(N, D, H, W, Cout)


# ---------------------------------------------------------------------------
# DoubleConv3D module (deterministic synthetic parameters)
# ---------------------------------------------------------------------------
class DoubleConv3DPallas:
    def __init__(self, in_channels, out_channels, key):
        k1, k2, k3, k4, k5, k6, k7, k8 = jax.random.split(key, 8)
        f1 = in_channels * 27
        f2 = out_channels * 27
        # weights kept in (kD, kH, kW, Cin, Cout) layout
        self.w1 = jax.random.normal(k1, (3, 3, 3, in_channels, out_channels),
                                    jnp.float32) / jnp.sqrt(f1)
        self.b1 = 0.1 * jax.random.normal(k2, (out_channels,), jnp.float32)
        self.w2 = jax.random.normal(k3, (3, 3, 3, out_channels, out_channels),
                                    jnp.float32) / jnp.sqrt(f2)
        self.b2 = 0.1 * jax.random.normal(k4, (out_channels,), jnp.float32)
        self.gamma1 = 1.0 + 0.1 * jax.random.normal(k5, (out_channels,), jnp.float32)
        self.beta1 = 0.1 * jax.random.normal(k6, (out_channels,), jnp.float32)
        self.gamma2 = 1.0 + 0.1 * jax.random.normal(k7, (out_channels,), jnp.float32)
        self.beta2 = 0.1 * jax.random.normal(k8, (out_channels,), jnp.float32)

    def __call__(self, x_ncdhw):
        # NCDHW (PyTorch) -> NDHWC for the TPU kernels; final transpose back to NCDHW
        # is required by the PyTorch return contract.
        x = jnp.transpose(x_ncdhw, (0, 2, 3, 4, 1)).astype(jnp.bfloat16)
        xp = jnp.pad(x, ((0, 0), (1, 1), (1, 1), (1, 1), (0, 0)))
        # Conv biases b1/b2 are intentionally NOT applied in the kernel path: a constant
        # per-channel shift cancels exactly under training-mode BatchNorm.
        a1 = conv3d_bn_relu_block(xp, self.w1, self.gamma1, self.beta1,
                                  out_dtype=jnp.bfloat16)
        a1p = jnp.pad(a1, ((0, 0), (1, 1), (1, 1), (1, 1), (0, 0)))
        a2 = conv3d_bn_relu_block(a1p, self.w2, self.gamma2, self.beta2,
                                  out_dtype=jnp.float32)
        return jnp.transpose(a2, (0, 4, 1, 2, 3))


# ---------------------------------------------------------------------------
# Pure-JAX reference for verification (uses biases; identical output by BN cancellation)
# ---------------------------------------------------------------------------
def _reference_forward(x_ncdhw, m: DoubleConv3DPallas):
    def block(x, w, b, gamma, beta):
        w_oidhw = jnp.transpose(w, (4, 3, 0, 1, 2))  # -> (Cout, Cin, kD, kH, kW)
        y = jax.lax.conv_general_dilated(
            x, w_oidhw, window_strides=(1, 1, 1),
            padding=((1, 1), (1, 1), (1, 1)),
            dimension_numbers=("NCDHW", "OIDHW", "NCDHW"),
            precision=jax.lax.Precision.HIGHEST)
        y = y + b.reshape(1, -1, 1, 1, 1)
        mean = jnp.mean(y, axis=(0, 2, 3, 4), keepdims=True)
        var = jnp.mean((y - mean) ** 2, axis=(0, 2, 3, 4), keepdims=True)
        y = (y - mean) * jax.lax.rsqrt(var + EPS)
        y = y * gamma.reshape(1, -1, 1, 1, 1) + beta.reshape(1, -1, 1, 1, 1)
        return jnp.maximum(y, 0.0)

    x = block(x_ncdhw, m.w1, m.b1, m.gamma1, m.beta1)
    x = block(x, m.w2, m.b2, m.gamma2, m.beta2)
    return x


if __name__ == "__main__":
    key = jax.random.PRNGKey(0)
    kx, kp = jax.random.split(key)

    N, Cin, Cout, D, H, W = 2, 4, 8, 8, 8, 8
    x = jax.random.normal(kx, (N, Cin, D, H, W), jnp.float32)

    model = DoubleConv3DPallas(Cin, Cout, kp)
    fwd = jax.jit(lambda xx: model(xx))
    out = jax.block_until_ready(fwd(x))
    assert out.shape == (N, Cout, D, H, W), out.shape

    ref = jax.block_until_ready(_reference_forward(x, model))
    max_err = float(jnp.max(jnp.abs(out - ref)))
    assert jnp.allclose(out, ref, atol=2e-2, rtol=2e-2), f"max abs err {max_err}"

    print("KERNEL_OK")
</pallas_src>

<mosaic_0001>
module attributes {stable_mosaic.version = 11 : i64} {
  func.func @kernel(%arg0: i32, %arg1: i32, %arg2: memref<1x1x10x10x4xbf16, #tpu.memory_space<vmem>>, %arg3: memref<1x1x10x10x4xbf16, #tpu.memory_space<vmem>>, %arg4: memref<1x1x10x10x4xbf16, #tpu.memory_space<vmem>>, %arg5: memref<27x4x8xbf16, #tpu.memory_space<vmem>>, %arg6: memref<64x8xbf16, #tpu.memory_space<vmem>>, %arg7: memref<8x8xf32, #tpu.memory_space<vmem>>, %arg8: memref<8x8xf32, #tpu.memory_space<vmem>>) attributes {dimension_semantics = [#tpu.dimension_semantics<parallel>, #tpu.dimension_semantics<parallel>], iteration_bounds = array<i64: 2, 8>, scalar_prefetch = 0 : i64, scratch_operands = 0 : i64, tpu.core_type = #tpu.core_type<tc>, window_params = [{transform_indices = @transform_0, window_bounds = array<i64: 1, 1, 10, 10, 4>}, {transform_indices = @transform_1, window_bounds = array<i64: 1, 1, 10, 10, 4>}, {transform_indices = @transform_2, window_bounds = array<i64: 1, 1, 10, 10, 4>}, {pipeline_mode = #tpu.pipeline_mode<synchronous>, transform_indices = @transform_3, window_bounds = array<i64: 27, 4, 8>}, {transform_indices = @transform_4, window_bounds = array<i64: 64, 8>}, {transform_indices = @transform_5, window_bounds = array<i64: 8, 8>}, {transform_indices = @transform_6, window_bounds = array<i64: 8, 8>}]} {
    %c0 = arith.constant 0 : index
    %c0_0 = arith.constant 0 : index
    %c0_1 = arith.constant 0 : index
    %c0_2 = arith.constant 0 : index
    %c0_3 = arith.constant 0 : index
    %0 = vector.load %arg2[%c0, %c0_0, %c0_1, %c0_2, %c0_3] : memref<1x1x10x10x4xbf16, #tpu.memory_space<vmem>>, vector<1x1x10x10x4xbf16>
    %1 = vector.shape_cast %0 : vector<1x1x10x10x4xbf16> to vector<10x10x4xbf16>
    %c0_4 = arith.constant 0 : index
    %c0_5 = arith.constant 0 : index
    %c0_6 = arith.constant 0 : index
    %c0_7 = arith.constant 0 : index
    %c0_8 = arith.constant 0 : index
    %2 = vector.load %arg3[%c0_4, %c0_5, %c0_6, %c0_7, %c0_8] : memref<1x1x10x10x4xbf16, #tpu.memory_space<vmem>>, vector<1x1x10x10x4xbf16>
    %3 = vector.shape_cast %2 : vector<1x1x10x10x4xbf16> to vector<10x10x4xbf16>
    %c0_9 = arith.constant 0 : index
    %c0_10 = arith.constant 0 : index
    %c0_11 = arith.constant 0 : index
    %c0_12 = arith.constant 0 : index
    %c0_13 = arith.constant 0 : index
    %4 = vector.load %arg4[%c0_9, %c0_10, %c0_11, %c0_12, %c0_13] : memref<1x1x10x10x4xbf16, #tpu.memory_space<vmem>>, vector<1x1x10x10x4xbf16>
    %5 = vector.shape_cast %4 : vector<1x1x10x10x4xbf16> to vector<10x10x4xbf16>
    %cst = arith.constant 0.000000e+00 : f32
    %6 = vector.broadcast %cst : f32 to vector<64x8xf32>
    %7 = vector.extract_strided_slice %1 {offsets = [0, 0, 0], sizes = [8, 8, 4], strides = [1, 1, 1]} : vector<10x10x4xbf16> to vector<8x8x4xbf16>
    %8 = vector.shape_cast %7 : vector<8x8x4xbf16> to vector<64x4xbf16>
    %c0_14 = arith.constant 0 : index
    %c0_15 = arith.constant 0 : index
    %c0_16 = arith.constant 0 : index
    %9 = vector.load %arg5[%c0_14, %c0_15, %c0_16] : memref<27x4x8xbf16, #tpu.memory_space<vmem>>, vector<1x4x8xbf16>
    %10 = vector.shape_cast %9 : vector<1x4x8xbf16> to vector<4x8xbf16>
    %cst_17 = arith.constant dense<0.000000e+00> : vector<64x8xf32>
    %11 = tpu.matmul %8, %10, %cst_17 {dimension_numbers = #tpu.dot_dimension_numbers<[1], [0], [0], [1], [0, 0, 1, 1], [], []>} : vector<64x4xbf16>, vector<4x8xbf16>, vector<64x8xf32> -> vector<64x8xf32>
    %12 = arith.addf %6, %11 : vector<64x8xf32>
    %13 = vector.extract_strided_slice %1 {offsets = [0, 1, 0], sizes = [8, 8, 4], strides = [1, 1, 1]} : vector<10x10x4xbf16> to vector<8x8x4xbf16>
    %14 = vector.shape_cast %13 : vector<8x8x4xbf16> to vector<64x4xbf16>
    %c1 = arith.constant 1 : index
    %c0_18 = arith.constant 0 : index
    %c0_19 = arith.constant 0 : index
    %15 = vector.load %arg5[%c1, %c0_18, %c0_19] : memref<27x4x8xbf16, #tpu.memory_space<vmem>>, vector<1x4x8xbf16>
    %16 = vector.shape_cast %15 : vector<1x4x8xbf16> to vector<4x8xbf16>
    %cst_20 = arith.constant dense<0.000000e+00> : vector<64x8xf32>
    %17 = tpu.matmul %14, %16, %cst_20 {dimension_numbers = #tpu.dot_dimension_numbers<[1], [0], [0], [1], [0, 0, 1, 1], [], []>} : vector<64x4xbf16>, vector<4x8xbf16>, vector<64x8xf32> -> vector<64x8xf32>
    %18 = arith.addf %12, %17 : vector<64x8xf32>
    %19 = vector.extract_strided_slice %1 {offsets = [0, 2, 0], sizes = [8, 8, 4], strides = [1, 1, 1]} : vector<10x10x4xbf16> to vector<8x8x4xbf16>
    %20 = vector.shape_cast %19 : vector<8x8x4xbf16> to vector<64x4xbf16>
    %c2 = arith.constant 2 : index
    %c0_21 = arith.constant 0 : index
    %c0_22 = arith.constant 0 : index
    %21 = vector.load %arg5[%c2, %c0_21, %c0_22] : memref<27x4x8xbf16, #tpu.memory_space<vmem>>, vector<1x4x8xbf16>
    %22 = vector.shape_cast %21 : vector<1x4x8xbf16> to vector<4x8xbf16>
    %cst_23 = arith.constant dense<0.000000e+00> : vector<64x8xf32>
    %23 = tpu.matmul %20, %22, %cst_23 {dimension_numbers = #tpu.dot_dimension_numbers<[1], [0], [0], [1], [0, 0, 1, 1], [], []>} : vector<64x4xbf16>, vector<4x8xbf16>, vector<64x8xf32> -> vector<64x8xf32>
    %24 = arith.addf %18, %23 : vector<64x8xf32>
    %25 = vector.extract_strided_slice %1 {offsets = [1, 0, 0], sizes = [8, 8, 4], strides = [1, 1, 1]} : vector<10x10x4xbf16> to vector<8x8x4xbf16>
    %26 = vector.shape_cast %25 : vector<8x8x4xbf16> to vector<64x4xbf16>
    %c3 = arith.constant 3 : index
    %c0_24 = arith.constant 0 : index
    %c0_25 = arith.constant 0 : index
    %27 = vector.load %arg5[%c3, %c0_24, %c0_25] : memref<27x4x8xbf16, #tpu.memory_space<vmem>>, vector<1x4x8xbf16>
    %28 = vector.shape_cast %27 : vector<1x4x8xbf16> to vector<4x8xbf16>
    %cst_26 = arith.constant dense<0.000000e+00> : vector<64x8xf32>
    %29 = tpu.matmul %26, %28, %cst_26 {dimension_numbers = #tpu.dot_dimension_numbers<[1], [0], [0], [1], [0, 0, 1, 1], [], []>} : vector<64x4xbf16>, vector<4x8xbf16>, vector<64x8xf32> -> vector<64x8xf32>
    %30 = arith.addf %24, %29 : vector<64x8xf32>
    %31 = vector.extract_strided_slice %1 {offsets = [1, 1, 0], sizes = [8, 8, 4], strides = [1, 1, 1]} : vector<10x10x4xbf16> to vector<8x8x4xbf16>
    %32 = vector.shape_cast %31 : vector<8x8x4xbf16> to vector<64x4xbf16>
    %c4 = arith.constant 4 : index
    %c0_27 = arith.constant 0 : index
    %c0_28 = arith.constant 0 : index
    %33 = vector.load %arg5[%c4, %c0_27, %c0_28] : memref<27x4x8xbf16, #tpu.memory_space<vmem>>, vector<1x4x8xbf16>
    %34 = vector.shape_cast %33 : vector<1x4x8xbf16> to vector<4x8xbf16>
    %cst_29 = arith.constant dense<0.000000e+00> : vector<64x8xf32>
    %35 = tpu.matmul %32, %34, %cst_29 {dimension_numbers = #tpu.dot_dimension_numbers<[1], [0], [0], [1], [0, 0, 1, 1], [], []>} : vector<64x4xbf16>, vector<4x8xbf16>, vector<64x8xf32> -> vector<64x8xf32>
    %36 = arith.addf %30, %35 : vector<64x8xf32>
    %37 = vector.extract_strided_slice %1 {offsets = [1, 2, 0], sizes = [8, 8, 4], strides = [1, 1, 1]} : vector<10x10x4xbf16> to vector<8x8x4xbf16>
    %38 = vector.shape_cast %37 : vector<8x8x4xbf16> to vector<64x4xbf16>
    %c5 = arith.constant 5 : index
    %c0_30 = arith.constant 0 : index
    %c0_31 = arith.constant 0 : index
    %39 = vector.load %arg5[%c5, %c0_30, %c0_31] : memref<27x4x8xbf16, #tpu.memory_space<vmem>>, vector<1x4x8xbf16>
    %40 = vector.shape_cast %39 : vector<1x4x8xbf16> to vector<4x8xbf16>
    %cst_32 = arith.constant dense<0.000000e+00> : vector<64x8xf32>
    %41 = tpu.matmul %38, %40, %cst_32 {dimension_numbers = #tpu.dot_dimension_numbers<[1], [0], [0], [1], [0, 0, 1, 1], [], []>} : vector<64x4xbf16>, vector<4x8xbf16>, vector<64x8xf32> -> vector<64x8xf32>
    %42 = arith.addf %36, %41 : vector<64x8xf32>
    %43 = vector.extract_strided_slice %1 {offsets = [2, 0, 0], sizes = [8, 8, 4], strides = [1, 1, 1]} : vector<10x10x4xbf16> to vector<8x8x4xbf16>
    %44 = vector.shape_cast %43 : vector<8x8x4xbf16> to vector<64x4xbf16>
    %c6 = arith.constant 6 : index
    %c0_33 = arith.constant 0 : index
    %c0_34 = arith.constant 0 : index
    %45 = vector.load %arg5[%c6, %c0_33, %c0_34] : memref<27x4x8xbf16, #tpu.memory_space<vmem>>, vector<1x4x8xbf16>
    %46 = vector.shape_cast %45 : vector<1x4x8xbf16> to vector<4x8xbf16>
    %cst_35 = arith.constant dense<0.000000e+00> : vector<64x8xf32>
    %47 = tpu.matmul %44, %46, %cst_35 {dimension_numbers = #tpu.dot_dimension_numbers<[1], [0], [0], [1], [0, 0, 1, 1], [], []>} : vector<64x4xbf16>, vector<4x8xbf16>, vector<64x8xf32> -> vector<64x8xf32>
    %48 = arith.addf %42, %47 : vector<64x8xf32>
    %49 = vector.extract_strided_slice %1 {offsets = [2, 1, 0], sizes = [8, 8, 4], strides = [1, 1, 1]} : vector<10x10x4xbf16> to vector<8x8x4xbf16>
    %50 = vector.shape_cast %49 : vector<8x8x4xbf16> to vector<64x4xbf16>
    %c7 = arith.constant 7 : index
    %c0_36 = arith.constant 0 : index
    %c0_37 = arith.constant 0 : index
    %51 = vector.load %arg5[%c7, %c0_36, %c0_37] : memref<27x4x8xbf16, #tpu.memory_space<vmem>>, vector<1x4x8xbf16>
    %52 = vector.shape_cast %51 : vector<1x4x8xbf16> to vector<4x8xbf16>
    %cst_38 = arith.constant dense<0.000000e+00> : vector<64x8xf32>
    %53 = tpu.matmul %50, %52, %cst_38 {dimension_numbers = #tpu.dot_dimension_numbers<[1], [0], [0], [1], [0, 0, 1, 1], [], []>} : vector<64x4xbf16>, vector<4x8xbf16>, vector<64x8xf32> -> vector<64x8xf32>
    %54 = arith.addf %48, %53 : vector<64x8xf32>
    %55 = vector.extract_strided_slice %1 {offsets = [2, 2, 0], sizes = [8, 8, 4], strides = [1, 1, 1]} : vector<10x10x4xbf16> to vector<8x8x4xbf16>
    %56 = vector.shape_cast %55 : vector<8x8x4xbf16> to vector<64x4xbf16>
    %c8 = arith.constant 8 : index
    %c0_39 = arith.constant 0 : index
    %c0_40 = arith.constant 0 : index
    %57 = vector.load %arg5[%c8, %c0_39, %c0_40] : memref<27x4x8xbf16, #tpu.memory_space<vmem>>, vector<1x4x8xbf16>
    %58 = vector.shape_cast %57 : vector<1x4x8xbf16> to vector<4x8xbf16>
    %cst_41 = arith.constant dense<0.000000e+00> : vector<64x8xf32>
    %59 = tpu.matmul %56, %58, %cst_41 {dimension_numbers = #tpu.dot_dimension_numbers<[1], [0], [0], [1], [0, 0, 1, 1], [], []>} : vector<64x4xbf16>, vector<4x8xbf16>, vector<64x8xf32> -> vector<64x8xf32>
    %60 = arith.addf %54, %59 : vector<64x8xf32>
    %61 = vector.extract_strided_slice %3 {offsets = [0, 0, 0], sizes = [8, 8, 4], strides = [1, 1, 1]} : vector<10x10x4xbf16> to vector<8x8x4xbf16>
    %62 = vector.shape_cast %61 : vector<8x8x4xbf16> to vector<64x4xbf16>
    %c9 = arith.constant 9 : index
    %c0_42 = arith.constant 0 : index
    %c0_43 = arith.constant 0 : index
    %63 = vector.load %arg5[%c9, %c0_42, %c0_43] : memref<27x4x8xbf16, #tpu.memory_space<vmem>>, vector<1x4x8xbf16>
    %64 = vector.shape_cast %63 : vector<1x4x8xbf16> to vector<4x8xbf16>
    %cst_44 = arith.constant dense<0.000000e+00> : vector<64x8xf32>
    %65 = tpu.matmul %62, %64, %cst_44 {dimension_numbers = #tpu.dot_dimension_numbers<[1], [0], [0], [1], [0, 0, 1, 1], [], []>} : vector<64x4xbf16>, vector<4x8xbf16>, vector<64x8xf32> -> vector<64x8xf32>
    %66 = arith.addf %60, %65 : vector<64x8xf32>
    %67 = vector.extract_strided_slice %3 {offsets = [0, 1, 0], sizes = [8, 8, 4], strides = [1, 1, 1]} : vector<10x10x4xbf16> to vector<8x8x4xbf16>
    %68 = vector.shape_cast %67 : vector<8x8x4xbf16> to vector<64x4xbf16>
    %c10 = arith.constant 10 : index
    %c0_45 = arith.constant 0 : index
    %c0_46 = arith.constant 0 : index
    %69 = vector.load %arg5[%c10, %c0_45, %c0_46] : memref<27x4x8xbf16, #tpu.memory_space<vmem>>, vector<1x4x8xbf16>
    %70 = vector.shape_cast %69 : vector<1x4x8xbf16> to vector<4x8xbf16>
    %cst_47 = arith.constant dense<0.000000e+00> : vector<64x8xf32>
    %71 = tpu.matmul %68, %70, %cst_47 {dimension_numbers = #tpu.dot_dimension_numbers<[1], [0], [0], [1], [0, 0, 1, 1], [], []>} : vector<64x4xbf16>, vector<4x8xbf16>, vector<64x8xf32> -> vector<64x8xf32>
    %72 = arith.addf %66, %71 : vector<64x8xf32>
    %73 = vector.extract_strided_slice %3 {offsets = [0, 2, 0], sizes = [8, 8, 4], strides = [1, 1, 1]} : vector<10x10x4xbf16> to vector<8x8x4xbf16>
    %74 = vector.shape_cast %73 : vector<8x8x4xbf16> to vector<64x4xbf16>
    %c11 = arith.constant 11 : index
    %c0_48 = arith.constant 0 : index
    %c0_49 = arith.constant 0 : index
    %75 = vector.load %arg5[%c11, %c0_48, %c0_49] : memref<27x4x8xbf16, #tpu.memory_space<vmem>>, vector<1x4x8xbf16>
    %76 = vector.shape_cast %75 : vector<1x4x8xbf16> to vector<4x8xbf16>
    %cst_50 = arith.constant dense<0.000000e+00> : vector<64x8xf32>
    %77 = tpu.matmul %74, %76, %cst_50 {dimension_numbers = #tpu.dot_dimension_numbers<[1], [0], [0], [1], [0, 0, 1, 1], [], []>} : vector<64x4xbf16>, vector<4x8xbf16>, vector<64x8xf32> -> vector<64x8xf32>
    %78 = arith.addf %72, %77 : vector<64x8xf32>
    %79 = vector.extract_strided_slice %3 {offsets = [1, 0, 0], sizes = [8, 8, 4], strides = [1, 1, 1]} : vector<10x10x4xbf16> to vector<8x8x4xbf16>
    %80 = vector.shape_cast %79 : vector<8x8x4xbf16> to vector<64x4xbf16>
    %c12 = arith.constant 12 : index
    %c0_51 = arith.constant 0 : index
    %c0_52 = arith.constant 0 : index
    %81 = vector.load %arg5[%c12, %c0_51, %c0_52] : memref<27x4x8xbf16, #tpu.memory_space<vmem>>, vector<1x4x8xbf16>
    %82 = vector.shape_cast %81 : vector<1x4x8xbf16> to vector<4x8xbf16>
    %cst_53 = arith.constant dense<0.000000e+00> : vector<64x8xf32>
    %83 = tpu.matmul %80, %82, %cst_53 {dimension_numbers = #tpu.dot_dimension_numbers<[1], [0], [0], [1], [0, 0, 1, 1], [], []>} : vector<64x4xbf16>, vector<4x8xbf16>, vector<64x8xf32> -> vector<64x8xf32>
    %84 = arith.addf %78, %83 : vector<64x8xf32>
    %85 = vector.extract_strided_slice %3 {offsets = [1, 1, 0], sizes = [8, 8, 4], strides = [1, 1, 1]} : vector<10x10x4xbf16> to vector<8x8x4xbf16>
    %86 = vector.shape_cast %85 : vector<8x8x4xbf16> to vector<64x4xbf16>
    %c13 = arith.constant 13 : index
    %c0_54 = arith.constant 0 : index
    %c0_55 = arith.constant 0 : index
    %87 = vector.load %arg5[%c13, %c0_54, %c0_55] : memref<27x4x8xbf16, #tpu.memory_space<vmem>>, vector<1x4x8xbf16>
    %88 = vector.shape_cast %87 : vector<1x4x8xbf16> to vector<4x8xbf16>
    %cst_56 = arith.constant dense<0.000000e+00> : vector<64x8xf32>
    %89 = tpu.matmul %86, %88, %cst_56 {dimension_numbers = #tpu.dot_dimension_numbers<[1], [0], [0], [1], [0, 0, 1, 1], [], []>} : vector<64x4xbf16>, vector<4x8xbf16>, vector<64x8xf32> -> vector<64x8xf32>
    %90 = arith.addf %84, %89 : vector<64x8xf32>
    %91 = vector.extract_strided_slice %3 {offsets = [1, 2, 0], sizes = [8, 8, 4], strides = [1, 1, 1]} : vector<10x10x4xbf16> to vector<8x8x4xbf16>
    %92 = vector.shape_cast %91 : vector<8x8x4xbf16> to vector<64x4xbf16>
    %c14 = arith.constant 14 : index
    %c0_57 = arith.constant 0 : index
    %c0_58 = arith.constant 0 : index
    %93 = vector.load %arg5[%c14, %c0_57, %c0_58] : memref<27x4x8xbf16, #tpu.memory_space<vmem>>, vector<1x4x8xbf16>
    %94 = vector.shape_cast %93 : vector<1x4x8xbf16> to vector<4x8xbf16>
    %cst_59 = arith.constant dense<0.000000e+00> : vector<64x8xf32>
    %95 = tpu.matmul %92, %94, %cst_59 {dimension_numbers = #tpu.dot_dimension_numbers<[1], [0], [0], [1], [0, 0, 1, 1], [], []>} : vector<64x4xbf16>, vector<4x8xbf16>, vector<64x8xf32> -> vector<64x8xf32>
    %96 = arith.addf %90, %95 : vector<64x8xf32>
    %97 = vector.extract_strided_slice %3 {offsets = [2, 0, 0], sizes = [8, 8, 4], strides = [1, 1, 1]} : vector<10x10x4xbf16> to vector<8x8x4xbf16>
    %98 = vector.shape_cast %97 : vector<8x8x4xbf16> to vector<64x4xbf16>
    %c15 = arith.constant 15 : index
    %c0_60 = arith.constant 0 : index
    %c0_61 = arith.constant 0 : index
    %99 = vector.load %arg5[%c15, %c0_60, %c0_61] : memref<27x4x8xbf16, #tpu.memory_space<vmem>>, vector<1x4x8xbf16>
    %100 = vector.shape_cast %99 : vector<1x4x8xbf16> to vector<4x8xbf16>
    %cst_62 = arith.constant dense<0.000000e+00> : vector<64x8xf32>
    %101 = tpu.matmul %98, %100, %cst_62 {dimension_numbers = #tpu.dot_dimension_numbers<[1], [0], [0], [1], [0, 0, 1, 1], [], []>} : vector<64x4xbf16>, vector<4x8xbf16>, vector<64x8xf32> -> vector<64x8xf32>
    %102 = arith.addf %96, %101 : vector<64x8xf32>
    %103 = vector.extract_strided_slice %3 {offsets = [2, 1, 0], sizes = [8, 8, 4], strides = [1, 1, 1]} : vector<10x10x4xbf16> to vector<8x8x4xbf16>
    %104 = vector.shape_cast %103 : vector<8x8x4xbf16> to vector<64x4xbf16>
    %c16 = arith.constant 16 : index
    %c0_63 = arith.constant 0 : index
    %c0_64 = arith.constant 0 : index
    %105 = vector.load %arg5[%c16, %c0_63, %c0_64] : memref<27x4x8xbf16, #tpu.memory_space<vmem>>, vector<1x4x8xbf16>
    %106 = vector.shape_cast %105 : vector<1x4x8xbf16> to vector<4x8xbf16>
    %cst_65 = arith.constant dense<0.000000e+00> : vector<64x8xf32>
    %107 = tpu.matmul %104, %106, %cst_65 {dimension_numbers = #tpu.dot_dimension_numbers<[1], [0], [0], [1], [0, 0, 1, 1], [], []>} : vector<64x4xbf16>, vector<4x8xbf16>, vector<64x8xf32> -> vector<64x8xf32>
    %108 = arith.addf %102, %107 : vector<64x8xf32>
    %109 = vector.extract_strided_slice %3 {offsets = [2, 2, 0], sizes = [8, 8, 4], strides = [1, 1, 1]} : vector<10x10x4xbf16> to vector<8x8x4xbf16>
    %110 = vector.shape_cast %109 : vector<8x8x4xbf16> to vector<64x4xbf16>
    %c17 = arith.constant 17 : index
    %c0_66 = arith.constant 0 : index
    %c0_67 = arith.constant 0 : index
    %111 = vector.load %arg5[%c17, %c0_66, %c0_67] : memref<27x4x8xbf16, #tpu.memory_space<vmem>>, vector<1x4x8xbf16>
    %112 = vector.shape_cast %111 : vector<1x4x8xbf16> to vector<4x8xbf16>
    %cst_68 = arith.constant dense<0.000000e+00> : vector<64x8xf32>
    %113 = tpu.matmul %110, %112, %cst_68 {dimension_numbers = #tpu.dot_dimension_numbers<[1], [0], [0], [1], [0, 0, 1, 1], [], []>} : vector<64x4xbf16>, vector<4x8xbf16>, vector<64x8xf32> -> vector<64x8xf32>
    %114 = arith.addf %108, %113 : vector<64x8xf32>
    %115 = vector.extract_strided_slice %5 {offsets = [0, 0, 0], sizes = [8, 8, 4], strides = [1, 1, 1]} : vector<10x10x4xbf16> to vector<8x8x4xbf16>
    %116 = vector.shape_cast %115 : vector<8x8x4xbf16> to vector<64x4xbf16>
    %c18 = arith.constant 18 : index
    %c0_69 = arith.constant 0 : index
    %c0_70 = arith.constant 0 : index
    %117 = vector.load %arg5[%c18, %c0_69, %c0_70] : memref<27x4x8xbf16, #tpu.memory_space<vmem>>, vector<1x4x8xbf16>
    %118 = vector.shape_cast %117 : vector<1x4x8xbf16> to vector<4x8xbf16>
    %cst_71 = arith.constant dense<0.000000e+00> : vector<64x8xf32>
    %119 = tpu.matmul %116, %118, %cst_71 {dimension_numbers = #tpu.dot_dimension_numbers<[1], [0], [0], [1], [0, 0, 1, 1], [], []>} : vector<64x4xbf16>, vector<4x8xbf16>, vector<64x8xf32> -> vector<64x8xf32>
    %120 = arith.addf %114, %119 : vector<64x8xf32>
    %121 = vector.extract_strided_slice %5 {offsets = [0, 1, 0], sizes = [8, 8, 4], strides = [1, 1, 1]} : vector<10x10x4xbf16> to vector<8x8x4xbf16>
    %122 = vector.shape_cast %121 : vector<8x8x4xbf16> to vector<64x4xbf16>
    %c19 = arith.constant 19 : index
    %c0_72 = arith.constant 0 : index
    %c0_73 = arith.constant 0 : index
    %123 = vector.load %arg5[%c19, %c0_72, %c0_73] : memref<27x4x8xbf16, #tpu.memory_space<vmem>>, vector<1x4x8xbf16>
    %124 = vector.shape_cast %123 : vector<1x4x8xbf16> to vector<4x8xbf16>
    %cst_74 = arith.constant dense<0.000000e+00> : vector<64x8xf32>
    %125 = tpu.matmul %122, %124, %cst_74 {dimension_numbers = #tpu.dot_dimension_numbers<[1], [0], [0], [1], [0, 0, 1, 1], [], []>} : vector<64x4xbf16>, vector<4x8xbf16>, vector<64x8xf32> -> vector<64x8xf32>
    %126 = arith.addf %120, %125 : vector<64x8xf32>
    %127 = vector.extract_strided_slice %5 {offsets = [0, 2, 0], sizes = [8, 8, 4], strides = [1, 1, 1]} : vector<10x10x4xbf16> to vector<8x8x4xbf16>
    %128 = vector.shape_cast %127 : vector<8x8x4xbf16> to vector<64x4xbf16>
    %c20 = arith.constant 20 : index
    %c0_75 = arith.constant 0 : index
    %c0_76 = arith.constant 0 : index
    %129 = vector.load %arg5[%c20, %c0_75, %c0_76] : memref<27x4x8xbf16, #tpu.memory_space<vmem>>, vector<1x4x8xbf16>
    %130 = vector.shape_cast %129 : vector<1x4x8xbf16> to vector<4x8xbf16>
    %cst_77 = arith.constant dense<0.000000e+00> : vector<64x8xf32>
    %131 = tpu.matmul %128, %130, %cst_77 {dimension_numbers = #tpu.dot_dimension_numbers<[1], [0], [0], [1], [0, 0, 1, 1], [], []>} : vector<64x4xbf16>, vector<4x8xbf16>, vector<64x8xf32> -> vector<64x8xf32>
    %132 = arith.addf %126, %131 : vector<64x8xf32>
    %133 = vector.extract_strided_slice %5 {offsets = [1, 0, 0], sizes = [8, 8, 4], strides = [1, 1, 1]} : vector<10x10x4xbf16> to vector<8x8x4xbf16>
    %134 = vector.shape_cast %133 : vector<8x8x4xbf16> to vector<64x4xbf16>
    %c21 = arith.constant 21 : index
    %c0_78 = arith.constant 0 : index
    %c0_79 = arith.constant 0 : index
    %135 = vector.load %arg5[%c21, %c0_78, %c0_79] : memref<27x4x8xbf16, #tpu.memory_space<vmem>>, vector<1x4x8xbf16>
    %136 = vector.shape_cast %135 : vector<1x4x8xbf16> to vector<4x8xbf16>
    %cst_80 = arith.constant dense<0.000000e+00> : vector<64x8xf32>
    %137 = tpu.matmul %134, %136, %cst_80 {dimension_numbers = #tpu.dot_dimension_numbers<[1], [0], [0], [1], [0, 0, 1, 1], [], []>} : vector<64x4xbf16>, vector<4x8xbf16>, vector<64x8xf32> -> vector<64x8xf32>
    %138 = arith.addf %132, %137 : vector<64x8xf32>
    %139 = vector.extract_strided_slice %5 {offsets = [1, 1, 0], sizes = [8, 8, 4], strides = [1, 1, 1]} : vector<10x10x4xbf16> to vector<8x8x4xbf16>
    %140 = vector.shape_cast %139 : vector<8x8x4xbf16> to vector<64x4xbf16>
    %c22 = arith.constant 22 : index
    %c0_81 = arith.constant 0 : index
    %c0_82 = arith.constant 0 : index
    %141 = vector.load %arg5[%c22, %c0_81, %c0_82] : memref<27x4x8xbf16, #tpu.memory_space<vmem>>, vector<1x4x8xbf16>
    %142 = vector.shape_cast %141 : vector<1x4x8xbf16> to vector<4x8xbf16>
    %cst_83 = arith.constant dense<0.000000e+00> : vector<64x8xf32>
    %143 = tpu.matmul %140, %142, %cst_83 {dimension_numbers = #tpu.dot_dimension_numbers<[1], [0], [0], [1], [0, 0, 1, 1], [], []>} : vector<64x4xbf16>, vector<4x8xbf16>, vector<64x8xf32> -> vector<64x8xf32>
    %144 = arith.addf %138, %143 : vector<64x8xf32>
    %145 = vector.extract_strided_slice %5 {offsets = [1, 2, 0], sizes = [8, 8, 4], strides = [1, 1, 1]} : vector<10x10x4xbf16> to vector<8x8x4xbf16>
    %146 = vector.shape_cast %145 : vector<8x8x4xbf16> to vector<64x4xbf16>
    %c23 = arith.constant 23 : index
    %c0_84 = arith.constant 0 : index
    %c0_85 = arith.constant 0 : index
    %147 = vector.load %arg5[%c23, %c0_84, %c0_85] : memref<27x4x8xbf16, #tpu.memory_space<vmem>>, vector<1x4x8xbf16>
    %148 = vector.shape_cast %147 : vector<1x4x8xbf16> to vector<4x8xbf16>
    %cst_86 = arith.constant dense<0.000000e+00> : vector<64x8xf32>
    %149 = tpu.matmul %146, %148, %cst_86 {dimension_numbers = #tpu.dot_dimension_numbers<[1], [0], [0], [1], [0, 0, 1, 1], [], []>} : vector<64x4xbf16>, vector<4x8xbf16>, vector<64x8xf32> -> vector<64x8xf32>
    %150 = arith.addf %144, %149 : vector<64x8xf32>
    %151 = vector.extract_strided_slice %5 {offsets = [2, 0, 0], sizes = [8, 8, 4], strides = [1, 1, 1]} : vector<10x10x4xbf16> to vector<8x8x4xbf16>
    %152 = vector.shape_cast %151 : vector<8x8x4xbf16> to vector<64x4xbf16>
    %c24 = arith.constant 24 : index
    %c0_87 = arith.constant 0 : index
    %c0_88 = arith.constant 0 : index
    %153 = vector.load %arg5[%c24, %c0_87, %c0_88] : memref<27x4x8xbf16, #tpu.memory_space<vmem>>, vector<1x4x8xbf16>
    %154 = vector.shape_cast %153 : vector<1x4x8xbf16> to vector<4x8xbf16>
    %cst_89 = arith.constant dense<0.000000e+00> : vector<64x8xf32>
    %155 = tpu.matmul %152, %154, %cst_89 {dimension_numbers = #tpu.dot_dimension_numbers<[1], [0], [0], [1], [0, 0, 1, 1], [], []>} : vector<64x4xbf16>, vector<4x8xbf16>, vector<64x8xf32> -> vector<64x8xf32>
    %156 = arith.addf %150, %155 : vector<64x8xf32>
    %157 = vector.extract_strided_slice %5 {offsets = [2, 1, 0], sizes = [8, 8, 4], strides = [1, 1, 1]} : vector<10x10x4xbf16> to vector<8x8x4xbf16>
    %158 = vector.shape_cast %157 : vector<8x8x4xbf16> to vector<64x4xbf16>
    %c25 = arith.constant 25 : index
    %c0_90 = arith.constant 0 : index
    %c0_91 = arith.constant 0 : index
    %159 = vector.load %arg5[%c25, %c0_90, %c0_91] : memref<27x4x8xbf16, #tpu.memory_space<vmem>>, vector<1x4x8xbf16>
    %160 = vector.shape_cast %159 : vector<1x4x8xbf16> to vector<4x8xbf16>
    %cst_92 = arith.constant dense<0.000000e+00> : vector<64x8xf32>
    %161 = tpu.matmul %158, %160, %cst_92 {dimension_numbers = #tpu.dot_dimension_numbers<[1], [0], [0], [1], [0, 0, 1, 1], [], []>} : vector<64x4xbf16>, vector<4x8xbf16>, vector<64x8xf32> -> vector<64x8xf32>
    %162 = arith.addf %156, %161 : vector<64x8xf32>
    %163 = vector.extract_strided_slice %5 {offsets = [2, 2, 0], sizes = [8, 8, 4], strides = [1, 1, 1]} : vector<10x10x4xbf16> to vector<8x8x4xbf16>
    %164 = vector.shape_cast %163 : vector<8x8x4xbf16> to vector<64x4xbf16>
    %c26 = arith.constant 26 : index
    %c0_93 = arith.constant 0 : index
    %c0_94 = arith.constant 0 : index
    %165 = vector.load %arg5[%c26, %c0_93, %c0_94] : memref<27x4x8xbf16, #tpu.memory_space<vmem>>, vector<1x4x8xbf16>
    %166 = vector.shape_cast %165 : vector<1x4x8xbf16> to vector<4x8xbf16>
    %cst_95 = arith.constant dense<0.000000e+00> : vector<64x8xf32>
    %167 = tpu.matmul %164, %166, %cst_95 {dimension_numbers = #tpu.dot_dimension_numbers<[1], [0], [0], [1], [0, 0, 1, 1], [], []>} : vector<64x4xbf16>, vector<4x8xbf16>, vector<64x8xf32> -> vector<64x8xf32>
    %168 = arith.addf %162, %167 : vector<64x8xf32>
    %169 = arith.truncf %168 : vector<64x8xf32> to vector<64x8xbf16>
    %c0_96 = arith.constant 0 : index
    %c0_97 = arith.constant 0 : index
    %170 = vector.load %arg6[%c0_96, %c0_97] : memref<64x8xbf16, #tpu.memory_space<vmem>>, vector<64x8xbf16>
    tpu.vector_store %arg6[%c0_96, %c0_97], %169 {strides = array<i32>} : memref<64x8xbf16, #tpu.memory_space<vmem>>, vector<64x8xbf16>,
    %cst_98 = arith.constant dense<0.000000e+00> : vector<8xf32>
    %171 = vector.multi_reduction <add>, %168, %cst_98 [0] : vector<64x8xf32> to vector<8xf32>
    %172 = vector.shape_cast %171 : vector<8xf32> to vector<1x8xf32>
    %173 = arith.mulf %168, %168 : vector<64x8xf32>
    %cst_99 = arith.constant dense<0.000000e+00> : vector<8xf32>
    %174 = vector.multi_reduction <add>, %173, %cst_99 [0] : vector<64x8xf32> to vector<8xf32>
    %175 = vector.shape_cast %174 : vector<8xf32> to vector<1x8xf32>
    %176 = vector.shape_cast %172 : vector<1x8xf32> to vector<1x8xf32>
    %177 = vector.broadcast %176 : vector<1x8xf32> to vector<8x8xf32>
    %c0_100 = arith.constant 0 : index
    %c0_101 = arith.constant 0 : index
    %178 = vector.load %arg7[%c0_100, %c0_101] : memref<8x8xf32, #tpu.memory_space<vmem>>, vector<8x8xf32>
    tpu.vector_store %arg7[%c0_100, %c0_101], %177 {strides = array<i32>} : memref<8x8xf32, #tpu.memory_space<vmem>>, vector<8x8xf32>,
    %179 = vector.shape_cast %175 : vector<1x8xf32> to vector<1x8xf32>
    %180 = vector.broadcast %179 : vector<1x8xf32> to vector<8x8xf32>
    %c0_102 = arith.constant 0 : index
    %c0_103 = arith.constant 0 : index
    %181 = vector.load %arg8[%c0_102, %c0_103] : memref<8x8xf32, #tpu.memory_space<vmem>>, vector<8x8xf32>
    tpu.vector_store %arg8[%c0_102, %c0_103], %180 {strides = array<i32>} : memref<8x8xf32, #tpu.memory_space<vmem>>, vector<8x8xf32>,
    return
  }
  func.func @transform_0(%arg0: i32, %arg1: i32) -> (i32, i32, i32, i32, i32) {
    %c0_i32 = arith.constant 0 : i32
    %0 = arith.addi %arg1, %c0_i32 : i32
    %c0_i32_0 = arith.constant 0 : i32
    %c0_i32_1 = arith.constant 0 : i32
    %c0_i32_2 = arith.constant 0 : i32
    %c0_i32_3 = arith.constant 0 : i32
    return %arg0, %0, %c0_i32_0, %c0_i32_1, %c0_i32_2 : i32, i32, i32, i32, i32
  }
  func.func @transform_1(%arg0: i32, %arg1: i32) -> (i32, i32, i32, i32, i32) {
    %c1_i32 = arith.constant 1 : i32
    %0 = arith.addi %arg1, %c1_i32 : i32
    %c0_i32 = arith.constant 0 : i32
    %c0_i32_0 = arith.constant 0 : i32
    %c0_i32_1 = arith.constant 0 : i32
    %c0_i32_2 = arith.constant 0 : i32
    return %arg0, %0, %c0_i32, %c0_i32_0, %c0_i32_1 : i32, i32, i32, i32, i32
  }
  func.func @transform_2(%arg0: i32, %arg1: i32) -> (i32, i32, i32, i32, i32) {
    %c2_i32 = arith.constant 2 : i32
    %0 = arith.addi %arg1, %c2_i32 : i32
    %c0_i32 = arith.constant 0 : i32
    %c0_i32_0 = arith.constant 0 : i32
    %c0_i32_1 = arith.constant 0 : i32
    %c0_i32_2 = arith.constant 0 : i32
    return %arg0, %0, %c0_i32, %c0_i32_0, %c0_i32_1 : i32, i32, i32, i32, i32
  }
  func.func @transform_3(%arg0: i32, %arg1: i32) -> (i32, i32, i32) {
    %c0_i32 = arith.constant 0 : i32
    %c0_i32_0 = arith.constant 0 : i32
    %c0_i32_1 = arith.constant 0 : i32
    %c0_i32_2 = arith.constant 0 : i32
    return %c0_i32, %c0_i32_0, %c0_i32_1 : i32, i32, i32
  }
  func.func @transform_4(%arg0: i32, %arg1: i32) -> (i32, i32) {
    %c8_i32 = arith.constant 8 : i32
    %0 = arith.muli %arg0, %c8_i32 : i32
    %1 = arith.addi %0, %arg1 : i32
    %c0_i32 = arith.constant 0 : i32
    %c0_i32_0 = arith.constant 0 : i32
    return %1, %c0_i32 : i32, i32
  }
  func.func @transform_5(%arg0: i32, %arg1: i32) -> (i32, i32) {
    %c8_i32 = arith.constant 8 : i32
    %0 = arith.muli %arg0, %c8_i32 : i32
    %1 = arith.addi %0, %arg1 : i32
    %c0_i32 = arith.constant 0 : i32
    %c0_i32_0 = arith.constant 0 : i32
    return %1, %c0_i32 : i32, i32
  }
  func.func @transform_6(%arg0: i32, %arg1: i32) -> (i32, i32) {
    %c8_i32 = arith.constant 8 : i32
    %0 = arith.muli %arg0, %c8_i32 : i32
    %1 = arith.addi %0, %arg1 : i32
    %c0_i32 = arith.constant 0 : i32
    %c0_i32_0 = arith.constant 0 : i32
    return %1, %c0_i32 : i32, i32
  }
}

module attributes {stable_mosaic.version = 11 : i64} {
  func.func @_affine_relu_kernel(%arg0: i32, %arg1: memref<64x128xbf16, #tpu.memory_space<vmem>>, %arg2: memref<1x128xf32, #tpu.memory_space<vmem>>, %arg3: memref<1x128xf32, #tpu.memory_space<vmem>>, %arg4: memref<64x128xbf16, #tpu.memory_space<vmem>>) attributes {dimension_semantics = [#tpu.dimension_semantics<parallel>], iteration_bounds = array<i64: 1>, scalar_prefetch = 0 : i64, scratch_operands = 0 : i64, tpu.core_type = #tpu.core_type<tc>, window_params = [{transform_indices = @transform_0, window_bounds = array<i64: 64, 128>}, {pipeline_mode = #tpu.pipeline_mode<synchronous>, transform_indices = @transform_1, window_bounds = array<i64: 1, 128>}, {pipeline_mode = #tpu.pipeline_mode<synchronous>, transform_indices = @transform_2, window_bounds = array<i64: 1, 128>}, {transform_indices = @transform_3, window_bounds = array<i64: 64, 128>}]} {
    %c0 = arith.constant 0 : index
    %c0_0 = arith.constant 0 : index
    %0 = vector.load %arg1[%c0, %c0_0] : memref<64x128xbf16, #tpu.memory_space<vmem>>, vector<64x128xbf16>
    %1 = arith.extf %0 : vector<64x128xbf16> to vector<64x128xf32>
    %c0_1 = arith.constant 0 : index
    %c0_2 = arith.constant 0 : index
    %2 = vector.load %arg2[%c0_1, %c0_2] : memref<1x128xf32, #tpu.memory_space<vmem>>, vector<1x128xf32>
    %3 = vector.broadcast %2 : vector<1x128xf32> to vector<64x128xf32>
    %4 = arith.mulf %1, %3 : vector<64x128xf32>
    %c0_3 = arith.constant 0 : index
    %c0_4 = arith.constant 0 : index
    %5 = vector.load %arg3[%c0_3, %c0_4] : memref<1x128xf32, #tpu.memory_space<vmem>>, vector<1x128xf32>
    %6 = vector.broadcast %5 : vector<1x128xf32> to vector<64x128xf32>
    %7 = arith.addf %4, %6 : vector<64x128xf32>
    %cst = arith.constant 0.000000e+00 : f32
    %8 = vector.broadcast %cst : f32 to vector<64x128xf32>
    %9 = arith.maximumf %7, %8 : vector<64x128xf32>
    %10 = arith.truncf %9 : vector<64x128xf32> to vector<64x128xbf16>
    %c0_5 = arith.constant 0 : index
    %c0_6 = arith.constant 0 : index
    %11 = vector.load %arg4[%c0_5, %c0_6] : memref<64x128xbf16, #tpu.memory_space<vmem>>, vector<64x128xbf16>
    tpu.vector_store %arg4[%c0_5, %c0_6], %10 {strides = array<i32>} : memref<64x128xbf16, #tpu.memory_space<vmem>>, vector<64x128xbf16>,
    return
  }
  func.func @transform_0(%arg0: i32) -> (i32, i32) {
    %c0_i32 = arith.constant 0 : i32
    %c0_i32_0 = arith.constant 0 : i32
    return %arg0, %c0_i32 : i32, i32
  }
  func.func @transform_1(%arg0: i32) -> (i32, i32) {
    %c0_i32 = arith.constant 0 : i32
    %c0_i32_0 = arith.constant 0 : i32
    %c0_i32_1 = arith.constant 0 : i32
    return %c0_i32, %c0_i32_0 : i32, i32
  }
  func.func @transform_2(%arg0: i32) -> (i32, i32) {
    %c0_i32 = arith.constant 0 : i32
    %c0_i32_0 = arith.constant 0 : i32
    %c0_i32_1 = arith.constant 0 : i32
    return %c0_i32, %c0_i32_0 : i32, i32
  }
  func.func @transform_3(%arg0: i32) -> (i32, i32) {
    %c0_i32 = arith.constant 0 : i32
    %c0_i32_0 = arith.constant 0 : i32
    return %arg0, %c0_i32 : i32, i32
  }
}

module attributes {stable_mosaic.version = 11 : i64} {
  func.func @kernel(%arg0: i32, %arg1: i32, %arg2: memref<1x1x10x10x8xbf16, #tpu.memory_space<vmem>>, %arg3: memref<1x1x10x10x8xbf16, #tpu.memory_space<vmem>>, %arg4: memref<1x1x10x10x8xbf16, #tpu.memory_space<vmem>>, %arg5: memref<27x8x8xbf16, #tpu.memory_space<vmem>>, %arg6: memref<64x8xbf16, #tpu.memory_space<vmem>>, %arg7: memref<8x8xf32, #tpu.memory_space<vmem>>, %arg8: memref<8x8xf32, #tpu.memory_space<vmem>>) attributes {dimension_semantics = [#tpu.dimension_semantics<parallel>, #tpu.dimension_semantics<parallel>], iteration_bounds = array<i64: 2, 8>, scalar_prefetch = 0 : i64, scratch_operands = 0 : i64, tpu.core_type = #tpu.core_type<tc>, window_params = [{transform_indices = @transform_0, window_bounds = array<i64: 1, 1, 10, 10, 8>}, {transform_indices = @transform_1, window_bounds = array<i64: 1, 1, 10, 10, 8>}, {transform_indices = @transform_2, window_bounds = array<i64: 1, 1, 10, 10, 8>}, {pipeline_mode = #tpu.pipeline_mode<synchronous>, transform_indices = @transform_3, window_bounds = array<i64: 27, 8, 8>}, {transform_indices = @transform_4, window_bounds = array<i64: 64, 8>}, {transform_indices = @transform_5, window_bounds = array<i64: 8, 8>}, {transform_indices = @transform_6, window_bounds = array<i64: 8, 8>}]} {
    %c0 = arith.constant 0 : index
    %c0_0 = arith.constant 0 : index
    %c0_1 = arith.constant 0 : index
    %c0_2 = arith.constant 0 : index
    %c0_3 = arith.constant 0 : index
    %0 = vector.load %arg2[%c0, %c0_0, %c0_1, %c0_2, %c0_3] : memref<1x1x10x10x8xbf16, #tpu.memory_space<vmem>>, vector<1x1x10x10x8xbf16>
    %1 = vector.shape_cast %0 : vector<1x1x10x10x8xbf16> to vector<10x10x8xbf16>
    %c0_4 = arith.constant 0 : index
    %c0_5 = arith.constant 0 : index
    %c0_6 = arith.constant 0 : index
    %c0_7 = arith.constant 0 : index
    %c0_8 = arith.constant 0 : index
    %2 = vector.load %arg3[%c0_4, %c0_5, %c0_6, %c0_7, %c0_8] : memref<1x1x10x10x8xbf16, #tpu.memory_space<vmem>>, vector<1x1x10x10x8xbf16>
    %3 = vector.shape_cast %2 : vector<1x1x10x10x8xbf16> to vector<10x10x8xbf16>
    %c0_9 = arith.constant 0 : index
    %c0_10 = arith.constant 0 : index
    %c0_11 = arith.constant 0 : index
    %c0_12 = arith.constant 0 : index
    %c0_13 = arith.constant 0 : index
    %4 = vector.load %arg4[%c0_9, %c0_10, %c0_11, %c0_12, %c0_13] : memref<1x1x10x10x8xbf16, #tpu.memory_space<vmem>>, vector<1x1x10x10x8xbf16>
    %5 = vector.shape_cast %4 : vector<1x1x10x10x8xbf16> to vector<10x10x8xbf16>
    %cst = arith.constant 0.000000e+00 : f32
    %6 = vector.broadcast %cst : f32 to vector<64x8xf32>
    %7 = vector.extract_strided_slice %1 {offsets = [0, 0, 0], sizes = [8, 8, 8], strides = [1, 1, 1]} : vector<10x10x8xbf16> to vector<8x8x8xbf16>
    %8 = vector.shape_cast %7 : vector<8x8x8xbf16> to vector<64x8xbf16>
    %c0_14 = arith.constant 0 : index
    %c0_15 = arith.constant 0 : index
    %c0_16 = arith.constant 0 : index
    %9 = vector.load %arg5[%c0_14, %c0_15, %c0_16] : memref<27x8x8xbf16, #tpu.memory_space<vmem>>, vector<1x8x8xbf16>
    %10 = vector.shape_cast %9 : vector<1x8x8xbf16> to vector<8x8xbf16>
    %cst_17 = arith.constant dense<0.000000e+00> : vector<64x8xf32>
    %11 = tpu.matmul %8, %10, %cst_17 {dimension_numbers = #tpu.dot_dimension_numbers<[1], [0], [0], [1], [0, 0, 1, 1], [], []>} : vector<64x8xbf16>, vector<8x8xbf16>, vector<64x8xf32> -> vector<64x8xf32>
    %12 = arith.addf %6, %11 : vector<64x8xf32>
    %13 = vector.extract_strided_slice %1 {offsets = [0, 1, 0], sizes = [8, 8, 8], strides = [1, 1, 1]} : vector<10x10x8xbf16> to vector<8x8x8xbf16>
    %14 = vector.shape_cast %13 : vector<8x8x8xbf16> to vector<64x8xbf16>
    %c1 = arith.constant 1 : index
    %c0_18 = arith.constant 0 : index
    %c0_19 = arith.constant 0 : index
    %15 = vector.load %arg5[%c1, %c0_18, %c0_19] : memref<27x8x8xbf16, #tpu.memory_space<vmem>>, vector<1x8x8xbf16>
    %16 = vector.shape_cast %15 : vector<1x8x8xbf16> to vector<8x8xbf16>
    %cst_20 = arith.constant dense<0.000000e+00> : vector<64x8xf32>
    %17 = tpu.matmul %14, %16, %cst_20 {dimension_numbers = #tpu.dot_dimension_numbers<[1], [0], [0], [1], [0, 0, 1, 1], [], []>} : vector<64x8xbf16>, vector<8x8xbf16>, vector<64x8xf32> -> vector<64x8xf32>
    %18 = arith.addf %12, %17 : vector<64x8xf32>
    %19 = vector.extract_strided_slice %1 {offsets = [0, 2, 0], sizes = [8, 8, 8], strides = [1, 1, 1]} : vector<10x10x8xbf16> to vector<8x8x8xbf16>
    %20 = vector.shape_cast %19 : vector<8x8x8xbf16> to vector<64x8xbf16>
    %c2 = arith.constant 2 : index
    %c0_21 = arith.constant 0 : index
    %c0_22 = arith.constant 0 : index
    %21 = vector.load %arg5[%c2, %c0_21, %c0_22] : memref<27x8x8xbf16, #tpu.memory_space<vmem>>, vector<1x8x8xbf16>
    %22 = vector.shape_cast %21 : vector<1x8x8xbf16> to vector<8x8xbf16>
    %cst_23 = arith.constant dense<0.000000e+00> : vector<64x8xf32>
    %23 = tpu.matmul %20, %22, %cst_23 {dimension_numbers = #tpu.dot_dimension_numbers<[1], [0], [0], [1], [0, 0, 1, 1], [], []>} : vector<64x8xbf16>, vector<8x8xbf16>, vector<64x8xf32> -> vector<64x8xf32>
    %24 = arith.addf %18, %23 : vector<64x8xf32>
    %25 = vector.extract_strided_slice %1 {offsets = [1, 0, 0], sizes = [8, 8, 8], strides = [1, 1, 1]} : vector<10x10x8xbf16> to vector<8x8x8xbf16>
    %26 = vector.shape_cast %25 : vector<8x8x8xbf16> to vector<64x8xbf16>
    %c3 = arith.constant 3 : index
    %c0_24 = arith.constant 0 : index
    %c0_25 = arith.constant 0 : index
    %27 = vector.load %arg5[%c3, %c0_24, %c0_25] : memref<27x8x8xbf16, #tpu.memory_space<vmem>>, vector<1x8x8xbf16>
    %28 = vector.shape_cast %27 : vector<1x8x8xbf16> to vector<8x8xbf16>
    %cst_26 = arith.constant dense<0.000000e+00> : vector<64x8xf32>
    %29 = tpu.matmul %26, %28, %cst_26 {dimension_numbers = #tpu.dot_dimension_numbers<[1], [0], [0], [1], [0, 0, 1, 1], [], []>} : vector<64x8xbf16>, vector<8x8xbf16>, vector<64x8xf32> -> vector<64x8xf32>
    %30 = arith.addf %24, %29 : vector<64x8xf32>
    %31 = vector.extract_strided_slice %1 {offsets = [1, 1, 0], sizes = [8, 8, 8], strides = [1, 1, 1]} : vector<10x10x8xbf16> to vector<8x8x8xbf16>
    %32 = vector.shape_cast %31 : vector<8x8x8xbf16> to vector<64x8xbf16>
    %c4 = arith.constant 4 : index
    %c0_27 = arith.constant 0 : index
    %c0_28 = arith.constant 0 : index
    %33 = vector.load %arg5[%c4, %c0_27, %c0_28] : memref<27x8x8xbf16, #tpu.memory_space<vmem>>, vector<1x8x8xbf16>
    %34 = vector.shape_cast %33 : vector<1x8x8xbf16> to vector<8x8xbf16>
    %cst_29 = arith.constant dense<0.000000e+00> : vector<64x8xf32>
    %35 = tpu.matmul %32, %34, %cst_29 {dimension_numbers = #tpu.dot_dimension_numbers<[1], [0], [0], [1], [0, 0, 1, 1], [], []>} : vector<64x8xbf16>, vector<8x8xbf16>, vector<64x8xf32> -> vector<64x8xf32>
    %36 = arith.addf %30, %35 : vector<64x8xf32>
    %37 = vector.extract_strided_slice %1 {offsets = [1, 2, 0], sizes = [8, 8, 8], strides = [1, 1, 1]} : vector<10x10x8xbf16> to vector<8x8x8xbf16>
    %38 = vector.shape_cast %37 : vector<8x8x8xbf16> to vector<64x8xbf16>
    %c5 = arith.constant 5 : index
    %c0_30 = arith.constant 0 : index
    %c0_31 = arith.constant 0 : index
    %39 = vector.load %arg5[%c5, %c0_30, %c0_31] : memref<27x8x8xbf16, #tpu.memory_space<vmem>>, vector<1x8x8xbf16>
    %40 = vector.shape_cast %39 : vector<1x8x8xbf16> to vector<8x8xbf16>
    %cst_32 = arith.constant dense<0.000000e+00> : vector<64x8xf32>
    %41 = tpu.matmul %38, %40, %cst_32 {dimension_numbers = #tpu.dot_dimension_numbers<[1], [0], [0], [1], [0, 0, 1, 1], [], []>} : vector<64x8xbf16>, vector<8x8xbf16>, vector<64x8xf32> -> vector<64x8xf32>
    %42 = arith.addf %36, %41 : vector<64x8xf32>
    %43 = vector.extract_strided_slice %1 {offsets = [2, 0, 0], sizes = [8, 8, 8], strides = [1, 1, 1]} : vector<10x10x8xbf16> to vector<8x8x8xbf16>
    %44 = vector.shape_cast %43 : vector<8x8x8xbf16> to vector<64x8xbf16>
    %c6 = arith.constant 6 : index
    %c0_33 = arith.constant 0 : index
    %c0_34 = arith.constant 0 : index
    %45 = vector.load %arg5[%c6, %c0_33, %c0_34] : memref<27x8x8xbf16, #tpu.memory_space<vmem>>, vector<1x8x8xbf16>
    %46 = vector.shape_cast %45 : vector<1x8x8xbf16> to vector<8x8xbf16>
    %cst_35 = arith.constant dense<0.000000e+00> : vector<64x8xf32>
    %47 = tpu.matmul %44, %46, %cst_35 {dimension_numbers = #tpu.dot_dimension_numbers<[1], [0], [0], [1], [0, 0, 1, 1], [], []>} : vector<64x8xbf16>, vector<8x8xbf16>, vector<64x8xf32> -> vector<64x8xf32>
    %48 = arith.addf %42, %47 : vector<64x8xf32>
    %49 = vector.extract_strided_slice %1 {offsets = [2, 1, 0], sizes = [8, 8, 8], strides = [1, 1, 1]} : vector<10x10x8xbf16> to vector<8x8x8xbf16>
    %50 = vector.shape_cast %49 : vector<8x8x8xbf16> to vector<64x8xbf16>
    %c7 = arith.constant 7 : index
    %c0_36 = arith.constant 0 : index
    %c0_37 = arith.constant 0 : index
    %51 = vector.load %arg5[%c7, %c0_36, %c0_37] : memref<27x8x8xbf16, #tpu.memory_space<vmem>>, vector<1x8x8xbf16>
    %52 = vector.shape_cast %51 : vector<1x8x8xbf16> to vector<8x8xbf16>
    %cst_38 = arith.constant dense<0.000000e+00> : vector<64x8xf32>
    %53 = tpu.matmul %50, %52, %cst_38 {dimension_numbers = #tpu.dot_dimension_numbers<[1], [0], [0], [1], [0, 0, 1, 1], [], []>} : vector<64x8xbf16>, vector<8x8xbf16>, vector<64x8xf32> -> vector<64x8xf32>
    %54 = arith.addf %48, %53 : vector<64x8xf32>
    %55 = vector.extract_strided_slice %1 {offsets = [2, 2, 0], sizes = [8, 8, 8], strides = [1, 1, 1]} : vector<10x10x8xbf16> to vector<8x8x8xbf16>
    %56 = vector.shape_cast %55 : vector<8x8x8xbf16> to vector<64x8xbf16>
    %c8 = arith.constant 8 : index
    %c0_39 = arith.constant 0 : index
    %c0_40 = arith.constant 0 : index
    %57 = vector.load %arg5[%c8, %c0_39, %c0_40] : memref<27x8x8xbf16, #tpu.memory_space<vmem>>, vector<1x8x8xbf16>
    %58 = vector.shape_cast %57 : vector<1x8x8xbf16> to vector<8x8xbf16>
    %cst_41 = arith.constant dense<0.000000e+00> : vector<64x8xf32>
    %59 = tpu.matmul %56, %58, %cst_41 {dimension_numbers = #tpu.dot_dimension_numbers<[1], [0], [0], [1], [0, 0, 1, 1], [], []>} : vector<64x8xbf16>, vector<8x8xbf16>, vector<64x8xf32> -> vector<64x8xf32>
    %60 = arith.addf %54, %59 : vector<64x8xf32>
    %61 = vector.extract_strided_slice %3 {offsets = [0, 0, 0], sizes = [8, 8, 8], strides = [1, 1, 1]} : vector<10x10x8xbf16> to vector<8x8x8xbf16>
    %62 = vector.shape_cast %61 : vector<8x8x8xbf16> to vector<64x8xbf16>
    %c9 = arith.constant 9 : index
    %c0_42 = arith.constant 0 : index
    %c0_43 = arith.constant 0 : index
    %63 = vector.load %arg5[%c9, %c0_42, %c0_43] : memref<27x8x8xbf16, #tpu.memory_space<vmem>>, vector<1x8x8xbf16>
    %64 = vector.shape_cast %63 : vector<1x8x8xbf16> to vector<8x8xbf16>
    %cst_44 = arith.constant dense<0.000000e+00> : vector<64x8xf32>
    %65 = tpu.matmul %62, %64, %cst_44 {dimension_numbers = #tpu.dot_dimension_numbers<[1], [0], [0], [1], [0, 0, 1, 1], [], []>} : vector<64x8xbf16>, vector<8x8xbf16>, vector<64x8xf32> -> vector<64x8xf32>
    %66 = arith.addf %60, %65 : vector<64x8xf32>
    %67 = vector.extract_strided_slice %3 {offsets = [0, 1, 0], sizes = [8, 8, 8], strides = [1, 1, 1]} : vector<10x10x8xbf16> to vector<8x8x8xbf16>
    %68 = vector.shape_cast %67 : vector<8x8x8xbf16> to vector<64x8xbf16>
    %c10 = arith.constant 10 : index
    %c0_45 = arith.constant 0 : index
    %c0_46 = arith.constant 0 : index
    %69 = vector.load %arg5[%c10, %c0_45, %c0_46] : memref<27x8x8xbf16, #tpu.memory_space<vmem>>, vector<1x8x8xbf16>
    %70 = vector.shape_cast %69 : vector<1x8x8xbf16> to vector<8x8xbf16>
    %cst_47 = arith.constant dense<0.000000e+00> : vector<64x8xf32>
    %71 = tpu.matmul %68, %70, %cst_47 {dimension_numbers = #tpu.dot_dimension_numbers<[1], [0], [0], [1], [0, 0, 1, 1], [], []>} : vector<64x8xbf16>, vector<8x8xbf16>, vector<64x8xf32> -> vector<64x8xf32>
    %72 = arith.addf %66, %71 : vector<64x8xf32>
    %73 = vector.extract_strided_slice %3 {offsets = [0, 2, 0], sizes = [8, 8, 8], strides = [1, 1, 1]} : vector<10x10x8xbf16> to vector<8x8x8xbf16>
    %74 = vector.shape_cast %73 : vector<8x8x8xbf16> to vector<64x8xbf16>
    %c11 = arith.constant 11 : index
    %c0_48 = arith.constant 0 : index
    %c0_49 = arith.constant 0 : index
    %75 = vector.load %arg5[%c11, %c0_48, %c0_49] : memref<27x8x8xbf16, #tpu.memory_space<vmem>>, vector<1x8x8xbf16>
    %76 = vector.shape_cast %75 : vector<1x8x8xbf16> to vector<8x8xbf16>
    %cst_50 = arith.constant dense<0.000000e+00> : vector<64x8xf32>
    %77 = tpu.matmul %74, %76, %cst_50 {dimension_numbers = #tpu.dot_dimension_numbers<[1], [0], [0], [1], [0, 0, 1, 1], [], []>} : vector<64x8xbf16>, vector<8x8xbf16>, vector<64x8xf32> -> vector<64x8xf32>
    %78 = arith.addf %72, %77 : vector<64x8xf32>
    %79 = vector.extract_strided_slice %3 {offsets = [1, 0, 0], sizes = [8, 8, 8], strides = [1, 1, 1]} : vector<10x10x8xbf16> to vector<8x8x8xbf16>
    %80 = vector.shape_cast %79 : vector<8x8x8xbf16> to vector<64x8xbf16>
    %c12 = arith.constant 12 : index
    %c0_51 = arith.constant 0 : index
    %c0_52 = arith.constant 0 : index
    %81 = vector.load %arg5[%c12, %c0_51, %c0_52] : memref<27x8x8xbf16, #tpu.memory_space<vmem>>, vector<1x8x8xbf16>
    %82 = vector.shape_cast %81 : vector<1x8x8xbf16> to vector<8x8xbf16>
    %cst_53 = arith.constant dense<0.000000e+00> : vector<64x8xf32>
    %83 = tpu.matmul %80, %82, %cst_53 {dimension_numbers = #tpu.dot_dimension_numbers<[1], [0], [0], [1], [0, 0, 1, 1], [], []>} : vector<64x8xbf16>, vector<8x8xbf16>, vector<64x8xf32> -> vector<64x8xf32>
    %84 = arith.addf %78, %83 : vector<64x8xf32>
    %85 = vector.extract_strided_slice %3 {offsets = [1, 1, 0], sizes = [8, 8, 8], strides = [1, 1, 1]} : vector<10x10x8xbf16> to vector<8x8x8xbf16>
    %86 = vector.shape_cast %85 : vector<8x8x8xbf16> to vector<64x8xbf16>
    %c13 = arith.constant 13 : index
    %c0_54 = arith.constant 0 : index
    %c0_55 = arith.constant 0 : index
    %87 = vector.load %arg5[%c13, %c0_54, %c0_55] : memref<27x8x8xbf16, #tpu.memory_space<vmem>>, vector<1x8x8xbf16>
    %88 = vector.shape_cast %87 : vector<1x8x8xbf16> to vector<8x8xbf16>
    %cst_56 = arith.constant dense<0.000000e+00> : vector<64x8xf32>
    %89 = tpu.matmul %86, %88, %cst_56 {dimension_numbers = #tpu.dot_dimension_numbers<[1], [0], [0], [1], [0, 0, 1, 1], [], []>} : vector<64x8xbf16>, vector<8x8xbf16>, vector<64x8xf32> -> vector<64x8xf32>
    %90 = arith.addf %84, %89 : vector<64x8xf32>
    %91 = vector.extract_strided_slice %3 {offsets = [1, 2, 0], sizes = [8, 8, 8], strides = [1, 1, 1]} : vector<10x10x8xbf16> to vector<8x8x8xbf16>
    %92 = vector.shape_cast %91 : vector<8x8x8xbf16> to vector<64x8xbf16>
    %c14 = arith.constant 14 : index
    %c0_57 = arith.constant 0 : index
    %c0_58 = arith.constant 0 : index
    %93 = vector.load %arg5[%c14, %c0_57, %c0_58] : memref<27x8x8xbf16, #tpu.memory_space<vmem>>, vector<1x8x8xbf16>
    %94 = vector.shape_cast %93 : vector<1x8x8xbf16> to vector<8x8xbf16>
    %cst_59 = arith.constant dense<0.000000e+00> : vector<64x8xf32>
    %95 = tpu.matmul %92, %94, %cst_59 {dimension_numbers = #tpu.dot_dimension_numbers<[1], [0], [0], [1], [0, 0, 1, 1], [], []>} : vector<64x8xbf16>, vector<8x8xbf16>, vector<64x8xf32> -> vector<64x8xf32>
    %96 = arith.addf %90, %95 : vector<64x8xf32>
    %97 = vector.extract_strided_slice %3 {offsets = [2, 0, 0], sizes = [8, 8, 8], strides = [1, 1, 1]} : vector<10x10x8xbf16> to vector<8x8x8xbf16>
    %98 = vector.shape_cast %97 : vector<8x8x8xbf16> to vector<64x8xbf16>
    %c15 = arith.constant 15 : index
    %c0_60 = arith.constant 0 : index
    %c0_61 = arith.constant 0 : index
    %99 = vector.load %arg5[%c15, %c0_60, %c0_61] : memref<27x8x8xbf16, #tpu.memory_space<vmem>>, vector<1x8x8xbf16>
    %100 = vector.shape_cast %99 : vector<1x8x8xbf16> to vector<8x8xbf16>
    %cst_62 = arith.constant dense<0.000000e+00> : vector<64x8xf32>
    %101 = tpu.matmul %98, %100, %cst_62 {dimension_numbers = #tpu.dot_dimension_numbers<[1], [0], [0], [1], [0, 0, 1, 1], [], []>} : vector<64x8xbf16>, vector<8x8xbf16>, vector<64x8xf32> -> vector<64x8xf32>
    %102 = arith.addf %96, %101 : vector<64x8xf32>
    %103 = vector.extract_strided_slice %3 {offsets = [2, 1, 0], sizes = [8, 8, 8], strides = [1, 1, 1]} : vector<10x10x8xbf16> to vector<8x8x8xbf16>
    %104 = vector.shape_cast %103 : vector<8x8x8xbf16> to vector<64x8xbf16>
    %c16 = arith.constant 16 : index
    %c0_63 = arith.constant 0 : index
    %c0_64 = arith.constant 0 : index
    %105 = vector.load %arg5[%c16, %c0_63, %c0_64] : memref<27x8x8xbf16, #tpu.memory_space<vmem>>, vector<1x8x8xbf16>
    %106 = vector.shape_cast %105 : vector<1x8x8xbf16> to vector<8x8xbf16>
    %cst_65 = arith.constant dense<0.000000e+00> : vector<64x8xf32>
    %107 = tpu.matmul %104, %106, %cst_65 {dimension_numbers = #tpu.dot_dimension_numbers<[1], [0], [0], [1], [0, 0, 1, 1], [], []>} : vector<64x8xbf16>, vector<8x8xbf16>, vector<64x8xf32> -> vector<64x8xf32>
    %108 = arith.addf %102, %107 : vector<64x8xf32>
    %109 = vector.extract_strided_slice %3 {offsets = [2, 2, 0], sizes = [8, 8, 8], strides = [1, 1, 1]} : vector<10x10x8xbf16> to vector<8x8x8xbf16>
    %110 = vector.shape_cast %109 : vector<8x8x8xbf16> to vector<64x8xbf16>
    %c17 = arith.constant 17 : index
    %c0_66 = arith.constant 0 : index
    %c0_67 = arith.constant 0 : index
    %111 = vector.load %arg5[%c17, %c0_66, %c0_67] : memref<27x8x8xbf16, #tpu.memory_space<vmem>>, vector<1x8x8xbf16>
    %112 = vector.shape_cast %111 : vector<1x8x8xbf16> to vector<8x8xbf16>
    %cst_68 = arith.constant dense<0.000000e+00> : vector<64x8xf32>
    %113 = tpu.matmul %110, %112, %cst_68 {dimension_numbers = #tpu.dot_dimension_numbers<[1], [0], [0], [1], [0, 0, 1, 1], [], []>} : vector<64x8xbf16>, vector<8x8xbf16>, vector<64x8xf32> -> vector<64x8xf32>
    %114 = arith.addf %108, %113 : vector<64x8xf32>
    %115 = vector.extract_strided_slice %5 {offsets = [0, 0, 0], sizes = [8, 8, 8], strides = [1, 1, 1]} : vector<10x10x8xbf16> to vector<8x8x8xbf16>
    %116 = vector.shape_cast %115 : vector<8x8x8xbf16> to vector<64x8xbf16>
    %c18 = arith.constant 18 : index
    %c0_69 = arith.constant 0 : index
    %c0_70 = arith.constant 0 : index
    %117 = vector.load %arg5[%c18, %c0_69, %c0_70] : memref<27x8x8xbf16, #tpu.memory_space<vmem>>, vector<1x8x8xbf16>
    %118 = vector.shape_cast %117 : vector<1x8x8xbf16> to vector<8x8xbf16>
    %cst_71 = arith.constant dense<0.000000e+00> : vector<64x8xf32>
    %119 = tpu.matmul %116, %118, %cst_71 {dimension_numbers = #tpu.dot_dimension_numbers<[1], [0], [0], [1], [0, 0, 1, 1], [], []>} : vector<64x8xbf16>, vector<8x8xbf16>, vector<64x8xf32> -> vector<64x8xf32>
    %120 = arith.addf %114, %119 : vector<64x8xf32>
    %121 = vector.extract_strided_slice %5 {offsets = [0, 1, 0], sizes = [8, 8, 8], strides = [1, 1, 1]} : vector<10x10x8xbf16> to vector<8x8x8xbf16>
    %122 = vector.shape_cast %121 : vector<8x8x8xbf16> to vector<64x8xbf16>
    %c19 = arith.constant 19 : index
    %c0_72 = arith.constant 0 : index
    %c0_73 = arith.constant 0 : index
    %123 = vector.load %arg5[%c19, %c0_72, %c0_73] : memref<27x8x8xbf16, #tpu.memory_space<vmem>>, vector<1x8x8xbf16>
    %124 = vector.shape_cast %123 : vector<1x8x8xbf16> to vector<8x8xbf16>
    %cst_74 = arith.constant dense<0.000000e+00> : vector<64x8xf32>
    %125 = tpu.matmul %122, %124, %cst_74 {dimension_numbers = #tpu.dot_dimension_numbers<[1], [0], [0], [1], [0, 0, 1, 1], [], []>} : vector<64x8xbf16>, vector<8x8xbf16>, vector<64x8xf32> -> vector<64x8xf32>
    %126 = arith.addf %120, %125 : vector<64x8xf32>
    %127 = vector.extract_strided_slice %5 {offsets = [0, 2, 0], sizes = [8, 8, 8], strides = [1, 1, 1]} : vector<10x10x8xbf16> to vector<8x8x8xbf16>
    %128 = vector.shape_cast %127 : vector<8x8x8xbf16> to vector<64x8xbf16>
    %c20 = arith.constant 20 : index
    %c0_75 = arith.constant 0 : index
    %c0_76 = arith.constant 0 : index
    %129 = vector.load %arg5[%c20, %c0_75, %c0_76] : memref<27x8x8xbf16, #tpu.memory_space<vmem>>, vector<1x8x8xbf16>
    %130 = vector.shape_cast %129 : vector<1x8x8xbf16> to vector<8x8xbf16>
    %cst_77 = arith.constant dense<0.000000e+00> : vector<64x8xf32>
    %131 = tpu.matmul %128, %130, %cst_77 {dimension_numbers = #tpu.dot_dimension_numbers<[1], [0], [0], [1], [0, 0, 1, 1], [], []>} : vector<64x8xbf16>, vector<8x8xbf16>, vector<64x8xf32> -> vector<64x8xf32>
    %132 = arith.addf %126, %131 : vector<64x8xf32>
    %133 = vector.extract_strided_slice %5 {offsets = [1, 0, 0], sizes = [8, 8, 8], strides = [1, 1, 1]} : vector<10x10x8xbf16> to vector<8x8x8xbf16>
    %134 = vector.shape_cast %133 : vector<8x8x8xbf16> to vector<64x8xbf16>
    %c21 = arith.constant 21 : index
    %c0_78 = arith.constant 0 : index
    %c0_79 = arith.constant 0 : index
    %135 = vector.load %arg5[%c21, %c0_78, %c0_79] : memref<27x8x8xbf16, #tpu.memory_space<vmem>>, vector<1x8x8xbf16>
    %136 = vector.shape_cast %135 : vector<1x8x8xbf16> to vector<8x8xbf16>
    %cst_80 = arith.constant dense<0.000000e+00> : vector<64x8xf32>
    %137 = tpu.matmul %134, %136, %cst_80 {dimension_numbers = #tpu.dot_dimension_numbers<[1], [0], [0], [1], [0, 0, 1, 1], [], []>} : vector<64x8xbf16>, vector<8x8xbf16>, vector<64x8xf32> -> vector<64x8xf32>
    %138 = arith.addf %132, %137 : vector<64x8xf32>
    %139 = vector.extract_strided_slice %5 {offsets = [1, 1, 0], sizes = [8, 8, 8], strides = [1, 1, 1]} : vector<10x10x8xbf16> to vector<8x8x8xbf16>
    %140 = vector.shape_cast %139 : vector<8x8x8xbf16> to vector<64x8xbf16>
    %c22 = arith.constant 22 : index
    %c0_81 = arith.constant 0 : index
    %c0_82 = arith.constant 0 : index
    %141 = vector.load %arg5[%c22, %c0_81, %c0_82] : memref<27x8x8xbf16, #tpu.memory_space<vmem>>, vector<1x8x8xbf16>
    %142 = vector.shape_cast %141 : vector<1x8x8xbf16> to vector<8x8xbf16>
    %cst_83 = arith.constant dense<0.000000e+00> : vector<64x8xf32>
    %143 = tpu.matmul %140, %142, %cst_83 {dimension_numbers = #tpu.dot_dimension_numbers<[1], [0], [0], [1], [0, 0, 1, 1], [], []>} : vector<64x8xbf16>, vector<8x8xbf16>, vector<64x8xf32> -> vector<64x8xf32>
    %144 = arith.addf %138, %143 : vector<64x8xf32>
    %145 = vector.extract_strided_slice %5 {offsets = [1, 2, 0], sizes = [8, 8, 8], strides = [1, 1, 1]} : vector<10x10x8xbf16> to vector<8x8x8xbf16>
    %146 = vector.shape_cast %145 : vector<8x8x8xbf16> to vector<64x8xbf16>
    %c23 = arith.constant 23 : index
    %c0_84 = arith.constant 0 : index
    %c0_85 = arith.constant 0 : index
    %147 = vector.load %arg5[%c23, %c0_84, %c0_85] : memref<27x8x8xbf16, #tpu.memory_space<vmem>>, vector<1x8x8xbf16>
    %148 = vector.shape_cast %147 : vector<1x8x8xbf16> to vector<8x8xbf16>
    %cst_86 = arith.constant dense<0.000000e+00> : vector<64x8xf32>
    %149 = tpu.matmul %146, %148, %cst_86 {dimension_numbers = #tpu.dot_dimension_numbers<[1], [0], [0], [1], [0, 0, 1, 1], [], []>} : vector<64x8xbf16>, vector<8x8xbf16>, vector<64x8xf32> -> vector<64x8xf32>
    %150 = arith.addf %144, %149 : vector<64x8xf32>
    %151 = vector.extract_strided_slice %5 {offsets = [2, 0, 0], sizes = [8, 8, 8], strides = [1, 1, 1]} : vector<10x10x8xbf16> to vector<8x8x8xbf16>
    %152 = vector.shape_cast %151 : vector<8x8x8xbf16> to vector<64x8xbf16>
    %c24 = arith.constant 24 : index
    %c0_87 = arith.constant 0 : index
    %c0_88 = arith.constant 0 : index
    %153 = vector.load %arg5[%c24, %c0_87, %c0_88] : memref<27x8x8xbf16, #tpu.memory_space<vmem>>, vector<1x8x8xbf16>
    %154 = vector.shape_cast %153 : vector<1x8x8xbf16> to vector<8x8xbf16>
    %cst_89 = arith.constant dense<0.000000e+00> : vector<64x8xf32>
    %155 = tpu.matmul %152, %154, %cst_89 {dimension_numbers = #tpu.dot_dimension_numbers<[1], [0], [0], [1], [0, 0, 1, 1], [], []>} : vector<64x8xbf16>, vector<8x8xbf16>, vector<64x8xf32> -> vector<64x8xf32>
    %156 = arith.addf %150, %155 : vector<64x8xf32>
    %157 = vector.extract_strided_slice %5 {offsets = [2, 1, 0], sizes = [8, 8, 8], strides = [1, 1, 1]} : vector<10x10x8xbf16> to vector<8x8x8xbf16>
    %158 = vector.shape_cast %157 : vector<8x8x8xbf16> to vector<64x8xbf16>
    %c25 = arith.constant 25 : index
    %c0_90 = arith.constant 0 : index
    %c0_91 = arith.constant 0 : index
    %159 = vector.load %arg5[%c25, %c0_90, %c0_91] : memref<27x8x8xbf16, #tpu.memory_space<vmem>>, vector<1x8x8xbf16>
    %160 = vector.shape_cast %159 : vector<1x8x8xbf16> to vector<8x8xbf16>
    %cst_92 = arith.constant dense<0.000000e+00> : vector<64x8xf32>
    %161 = tpu.matmul %158, %160, %cst_92 {dimension_numbers = #tpu.dot_dimension_numbers<[1], [0], [0], [1], [0, 0, 1, 1], [], []>} : vector<64x8xbf16>, vector<8x8xbf16>, vector<64x8xf32> -> vector<64x8xf32>
    %162 = arith.addf %156, %161 : vector<64x8xf32>
    %163 = vector.extract_strided_slice %5 {offsets = [2, 2, 0], sizes = [8, 8, 8], strides = [1, 1, 1]} : vector<10x10x8xbf16> to vector<8x8x8xbf16>
    %164 = vector.shape_cast %163 : vector<8x8x8xbf16> to vector<64x8xbf16>
    %c26 = arith.constant 26 : index
    %c0_93 = arith.constant 0 : index
    %c0_94 = arith.constant 0 : index
    %165 = vector.load %arg5[%c26, %c0_93, %c0_94] : memref<27x8x8xbf16, #tpu.memory_space<vmem>>, vector<1x8x8xbf16>
    %166 = vector.shape_cast %165 : vector<1x8x8xbf16> to vector<8x8xbf16>
    %cst_95 = arith.constant dense<0.000000e+00> : vector<64x8xf32>
    %167 = tpu.matmul %164, %166, %cst_95 {dimension_numbers = #tpu.dot_dimension_numbers<[1], [0], [0], [1], [0, 0, 1, 1], [], []>} : vector<64x8xbf16>, vector<8x8xbf16>, vector<64x8xf32> -> vector<64x8xf32>
    %168 = arith.addf %162, %167 : vector<64x8xf32>
    %169 = arith.truncf %168 : vector<64x8xf32> to vector<64x8xbf16>
    %c0_96 = arith.constant 0 : index
    %c0_97 = arith.constant 0 : index
    %170 = vector.load %arg6[%c0_96, %c0_97] : memref<64x8xbf16, #tpu.memory_space<vmem>>, vector<64x8xbf16>
    tpu.vector_store %arg6[%c0_96, %c0_97], %169 {strides = array<i32>} : memref<64x8xbf16, #tpu.memory_space<vmem>>, vector<64x8xbf16>,
    %cst_98 = arith.constant dense<0.000000e+00> : vector<8xf32>
    %171 = vector.multi_reduction <add>, %168, %cst_98 [0] : vector<64x8xf32> to vector<8xf32>
    %172 = vector.shape_cast %171 : vector<8xf32> to vector<1x8xf32>
    %173 = arith.mulf %168, %168 : vector<64x8xf32>
    %cst_99 = arith.constant dense<0.000000e+00> : vector<8xf32>
    %174 = vector.multi_reduction <add>, %173, %cst_99 [0] : vector<64x8xf32> to vector<8xf32>
    %175 = vector.shape_cast %174 : vector<8xf32> to vector<1x8xf32>
    %176 = vector.shape_cast %172 : vector<1x8xf32> to vector<1x8xf32>
    %177 = vector.broadcast %176 : vector<1x8xf32> to vector<8x8xf32>
    %c0_100 = arith.constant 0 : index
    %c0_101 = arith.constant 0 : index
    %178 = vector.load %arg7[%c0_100, %c0_101] : memref<8x8xf32, #tpu.memory_space<vmem>>, vector<8x8xf32>
    tpu.vector_store %arg7[%c0_100, %c0_101], %177 {strides = array<i32>} : memref<8x8xf32, #tpu.memory_space<vmem>>, vector<8x8xf32>,
    %179 = vector.shape_cast %175 : vector<1x8xf32> to vector<1x8xf32>
    %180 = vector.broadcast %179 : vector<1x8xf32> to vector<8x8xf32>
    %c0_102 = arith.constant 0 : index
    %c0_103 = arith.constant 0 : index
    %181 = vector.load %arg8[%c0_102, %c0_103] : memref<8x8xf32, #tpu.memory_space<vmem>>, vector<8x8xf32>
    tpu.vector_store %arg8[%c0_102, %c0_103], %180 {strides = array<i32>} : memref<8x8xf32, #tpu.memory_space<vmem>>, vector<8x8xf32>,
    return
  }
  func.func @transform_0(%arg0: i32, %arg1: i32) -> (i32, i32, i32, i32, i32) {
    %c0_i32 = arith.constant 0 : i32
    %0 = arith.addi %arg1, %c0_i32 : i32
    %c0_i32_0 = arith.constant 0 : i32
    %c0_i32_1 = arith.constant 0 : i32
    %c0_i32_2 = arith.constant 0 : i32
    %c0_i32_3 = arith.constant 0 : i32
    return %arg0, %0, %c0_i32_0, %c0_i32_1, %c0_i32_2 : i32, i32, i32, i32, i32
  }
  func.func @transform_1(%arg0: i32, %arg1: i32) -> (i32, i32, i32, i32, i32) {
    %c1_i32 = arith.constant 1 : i32
    %0 = arith.addi %arg1, %c1_i32 : i32
    %c0_i32 = arith.constant 0 : i32
    %c0_i32_0 = arith.constant 0 : i32
    %c0_i32_1 = arith.constant 0 : i32
    %c0_i32_2 = arith.constant 0 : i32
    return %arg0, %0, %c0_i32, %c0_i32_0, %c0_i32_1 : i32, i32, i32, i32, i32
  }
  func.func @transform_2(%arg0: i32, %arg1: i32) -> (i32, i32, i32, i32, i32) {
    %c2_i32 = arith.constant 2 : i32
    %0 = arith.addi %arg1, %c2_i32 : i32
    %c0_i32 = arith.constant 0 : i32
    %c0_i32_0 = arith.constant 0 : i32
    %c0_i32_1 = arith.constant 0 : i32
    %c0_i32_2 = arith.constant 0 : i32
    return %arg0, %0, %c0_i32, %c0_i32_0, %c0_i32_1 : i32, i32, i32, i32, i32
  }
  func.func @transform_3(%arg0: i32, %arg1: i32) -> (i32, i32, i32) {
    %c0_i32 = arith.constant 0 : i32
    %c0_i32_0 = arith.constant 0 : i32
    %c0_i32_1 = arith.constant 0 : i32
    %c0_i32_2 = arith.constant 0 : i32
    return %c0_i32, %c0_i32_0, %c0_i32_1 : i32, i32, i32
  }
  func.func @transform_4(%arg0: i32, %arg1: i32) -> (i32, i32) {
    %c8_i32 = arith.constant 8 : i32
    %0 = arith.muli %arg0, %c8_i32 : i32
    %1 = arith.addi %0, %arg1 : i32
    %c0_i32 = arith.constant 0 : i32
    %c0_i32_0 = arith.constant 0 : i32
    return %1, %c0_i32 : i32, i32
  }
  func.func @transform_5(%arg0: i32, %arg1: i32) -> (i32, i32) {
    %c8_i32 = arith.constant 8 : i32
    %0 = arith.muli %arg0, %c8_i32 : i32
    %1 = arith.addi %0, %arg1 : i32
    %c0_i32 = arith.constant 0 : i32
    %c0_i32_0 = arith.constant 0 : i32
    return %1, %c0_i32 : i32, i32
  }
  func.func @transform_6(%arg0: i32, %arg1: i32) -> (i32, i32) {
    %c8_i32 = arith.constant 8 : i32
    %0 = arith.muli %arg0, %c8_i32 : i32
    %1 = arith.addi %0, %arg1 : i32
    %c0_i32 = arith.constant 0 : i32
    %c0_i32_0 = arith.constant 0 : i32
    return %1, %c0_i32 : i32, i32
  }
}

module attributes {stable_mosaic.version = 11 : i64} {
  func.func @_affine_relu_kernel(%arg0: i32, %arg1: memref<64x128xbf16, #tpu.memory_space<vmem>>, %arg2: memref<1x128xf32, #tpu.memory_space<vmem>>, %arg3: memref<1x128xf32, #tpu.memory_space<vmem>>, %arg4: memref<64x128xf32, #tpu.memory_space<vmem>>) attributes {dimension_semantics = [#tpu.dimension_semantics<parallel>], iteration_bounds = array<i64: 1>, scalar_prefetch = 0 : i64, scratch_operands = 0 : i64, tpu.core_type = #tpu.core_type<tc>, window_params = [{transform_indices = @transform_0, window_bounds = array<i64: 64, 128>}, {pipeline_mode = #tpu.pipeline_mode<synchronous>, transform_indices = @transform_1, window_bounds = array<i64: 1, 128>}, {pipeline_mode = #tpu.pipeline_mode<synchronous>, transform_indices = @transform_2, window_bounds = array<i64: 1, 128>}, {transform_indices = @transform_3, window_bounds = array<i64: 64, 128>}]} {
    %c0 = arith.constant 0 : index
    %c0_0 = arith.constant 0 : index
    %0 = vector.load %arg1[%c0, %c0_0] : memref<64x128xbf16, #tpu.memory_space<vmem>>, vector<64x128xbf16>
    %1 = arith.extf %0 : vector<64x128xbf16> to vector<64x128xf32>
    %c0_1 = arith.constant 0 : index
    %c0_2 = arith.constant 0 : index
    %2 = vector.load %arg2[%c0_1, %c0_2] : memref<1x128xf32, #tpu.memory_space<vmem>>, vector<1x128xf32>
    %3 = vector.broadcast %2 : vector<1x128xf32> to vector<64x128xf32>
    %4 = arith.mulf %1, %3 : vector<64x128xf32>
    %c0_3 = arith.constant 0 : index
    %c0_4 = arith.constant 0 : index
    %5 = vector.load %arg3[%c0_3, %c0_4] : memref<1x128xf32, #tpu.memory_space<vmem>>, vector<1x128xf32>
    %6 = vector.broadcast %5 : vector<1x128xf32> to vector<64x128xf32>
    %7 = arith.addf %4, %6 : vector<64x128xf32>
    %cst = arith.constant 0.000000e+00 : f32
    %8 = vector.broadcast %cst : f32 to vector<64x128xf32>
    %9 = arith.maximumf %7, %8 : vector<64x128xf32>
    %c0_5 = arith.constant 0 : index
    %c0_6 = arith.constant 0 : index
    %10 = vector.load %arg4[%c0_5, %c0_6] : memref<64x128xf32, #tpu.memory_space<vmem>>, vector<64x128xf32>
    tpu.vector_store %arg4[%c0_5, %c0_6], %9 {strides = array<i32>} : memref<64x128xf32, #tpu.memory_space<vmem>>, vector<64x128xf32>,
    return
  }
  func.func @transform_0(%arg0: i32) -> (i32, i32) {
    %c0_i32 = arith.constant 0 : i32
    %c0_i32_0 = arith.constant 0 : i32
    return %arg0, %c0_i32 : i32, i32
  }
  func.func @transform_1(%arg0: i32) -> (i32, i32) {
    %c0_i32 = arith.constant 0 : i32
    %c0_i32_0 = arith.constant 0 : i32
    %c0_i32_1 = arith.constant 0 : i32
    return %c0_i32, %c0_i32_0 : i32, i32
  }
  func.func @transform_2(%arg0: i32) -> (i32, i32) {
    %c0_i32 = arith.constant 0 : i32
    %c0_i32_0 = arith.constant 0 : i32
    %c0_i32_1 = arith.constant 0 : i32
    return %c0_i32, %c0_i32_0 : i32, i32
  }
  func.func @transform_3(%arg0: i32) -> (i32, i32) {
    %c0_i32 = arith.constant 0 : i32
    %c0_i32_0 = arith.constant 0 : i32
    return %arg0, %c0_i32 : i32, i32
  }
}

</mosaic_0001>

<llo_original>
// kernel: tile.28
$region0: #{tile.28}
  #allocation0 [shape = 's32[1]{0}', space=sflag, size = 0x4, scoped, tag = 'scoped memory for tile.28']
  %s0 = inlined_call_operand.vmem [shape: f32[8], index: 0, kind: input, shape index: {}]
  %s1 = inlined_call_operand.vmem [shape: f32[16,8], index: 1, kind: output, shape index: {}]
  // Predicated region
  $region2: #{tile.28} parent=0 // pred_check
    _
  $region3: #{tile.28} parent=0 // pred_check_branch
    %3 = sbr.rel (0) target = $region5
  $region4: #{tile.28} parent=0 // pred_region
    _
  $region5: #{tile.28} parent=0 // pred_fallthru
    _
  %v4 = vld [vmem:[%s0] ss:$0 sm:$0xff]
  %5 = vst [vmem:[%s1] sm:$0xff] %v4
  %s6 = scalar_lea.vmem %s1, 8
  %7 = vst [vmem:[%s6] sm:$0xff] %v4

// kernel: tile.29
$region0: #{tile.29}
  %s0 = inlined_call_operand.vmem [shape: f32[16,8], index: 0, kind: input, shape index: {}]
  %s1 = inlined_call_operand.vmem [shape: f32[1,128], index: 1, kind: output, shape index: {}]
  $region1: #{tile.29} parent=0
    #allocation0 [shape = 'u8[4096]{0}', space=vmem, size = 0x1000, scoped, tag = 'scoped mem for output reshape']
    %v2 = vld [vmem:[%s0] sm:$0x1]
    %vm3 = vcmask 64512
    %4 = vst.msk [vmem:[#allocation0] sm:$0x1] %vm3, %v2
    %s5 = scalar_lea.vmem %s0, 15
    %v6 = vld [vmem:[%s5] sm:$0x1]
    %7 = vrot.lane.b32.xlu0 %v6, 120
    %v8 = vpop.permute.xlu0 %7
    %vm9 = vcmask 1048512
    %10 = vst.msk [vmem:[#allocation0] sm:$0x1] %vm9, %v8
    %s11 = scalar_lea.vmem %s0, 14
    %v12 = vld [vmem:[%s11] sm:$0x1]
    %13 = vrot.lane.b32.xlu0 %v12, 112
    %v14 = vpop.permute.xlu0 %13
    %vm15 = vcmask 982912
    %16 = vst.msk [vmem:[#allocation0] sm:$0x1] %vm15, %v14
    %s17 = scalar_lea.vmem %s0, 13
    %v18 = vld [vmem:[%s17] sm:$0x1]
    %19 = vrot.lane.b32.xlu0 %v18, 104
    %v20 = vpop.permute.xlu0 %19
    %vm21 = vcmask 917312
    %22 = vst.msk [vmem:[#allocation0] sm:$0x1] %vm21, %v20
    %s23 = scalar_lea.vmem %s0, 12
    %v24 = vld [vmem:[%s23] sm:$0x1]
    %25 = vrot.lane.b32.xlu0 %v24, 96
    %v26 = vpop.permute.xlu0 %25
    %vm27 = vcmask 851712
    %28 = vst.msk [vmem:[#allocation0] sm:$0x1] %vm27, %v26
    %s29 = scalar_lea.vmem %s0, 11
    %v30 = vld [vmem:[%s29] sm:$0x1]
    %31 = vrot.lane.b32.xlu0 %v30, 88
    %v32 = vpop.permute.xlu0 %31
    %vm33 = vcmask 786112
    %34 = vst.msk [vmem:[#allocation0] sm:$0x1] %vm33, %v32
    %s35 = scalar_lea.vmem %s0, 10
    %v36 = vld [vmem:[%s35] sm:$0x1]
    %37 = vrot.lane.b32.xlu0 %v36, 80
    %v38 = vpop.permute.xlu0 %37
    %vm39 = vcmask 720512
    %40 = vst.msk [vmem:[#allocation0] sm:$0x1] %vm39, %v38
    %s41 = scalar_lea.vmem %s0, 9
    %v42 = vld [vmem:[%s41] sm:$0x1]
    %43 = vrot.lane.b32.xlu0 %v42, 72
    %v44 = vpop.permute.xlu0 %43
    %vm45 = vcmask 654912
    %46 = vst.msk [vmem:[#allocation0] sm:$0x1] %vm45, %v44
    %s47 = scalar_lea.vmem %s0, 8
    %v48 = vld [vmem:[%s47] sm:$0x1]
    %49 = vrot.lane.b32.xlu0 %v48, 64
    %v50 = vpop.permute.xlu0 %49
    %vm51 = vcmask 589312
    %52 = vst.msk [vmem:[#allocation0] sm:$0x1] %vm51, %v50
    %s53 = scalar_lea.vmem %s0, 7
    %v54 = vld [vmem:[%s53] sm:$0x1]
    %55 = vrot.lane.b32.xlu0 %v54, 56
    %v56 = vpop.permute.xlu0 %55
    %vm57 = vcmask 523712
    %58 = vst.msk [vmem:[#allocation0] sm:$0x1] %vm57, %v56
    %s59 = scalar_lea.vmem %s0, 6
    %v60 = vld [vmem:[%s59] sm:$0x1]
    %61 = vrot.lane.b32.xlu0 %v60, 48
    %v62 = vpop.permute.xlu0 %61
    %vm63 = vcmask 458112
    %64 = vst.msk [vmem:[#allocation0] sm:$0x1] %vm63, %v62
    %s65 = scalar_lea.vmem %s0, 5
    %v66 = vld [vmem:[%s65] sm:$0x1]
    %67 = vrot.lane.b32.xlu0 %v66, 40
    %v68 = vpop.permute.xlu0 %67
    %vm69 = vcmask 392512
    %70 = vst.msk [vmem:[#allocation0] sm:$0x1] %vm69, %v68
    %s71 = scalar_lea.vmem %s0, 4
    %v72 = vld [vmem:[%s71] sm:$0x1]
    %73 = vrot.lane.b32.xlu0 %v72, 32
    %v74 = vpop.permute.xlu0 %73
    %vm75 = vcmask 326912
    %76 = vst.msk [vmem:[#allocation0] sm:$0x1] %vm75, %v74
    %s77 = scalar_lea.vmem %s0, 3
    %v78 = vld [vmem:[%s77] sm:$0x1]
    %79 = vrot.lane.b32.xlu0 %v78, 24
    %v80 = vpop.permute.xlu0 %79
    %vm81 = vcmask 261312
    %82 = vst.msk [vmem:[#allocation0] sm:$0x1] %vm81, %v80
    %s83 = scalar_lea.vmem %s0, 2
    %v84 = vld [vmem:[%s83] sm:$0x1]
    %85 = vrot.lane.b32.xlu0 %v84, 16
    %v86 = vpop.permute.xlu0 %85
    %vm87 = vcmask 195712
    %88 = vst.msk [vmem:[#allocation0] sm:$0x1] %vm87, %v86
    %s89 = scalar_lea.vmem %s0, 1
    %v90 = vld [vmem:[%s89] sm:$0x1]
    %91 = vrot.lane.b32.xlu0 %v90, 8
    %v92 = vpop.permute.xlu0 %91
    %vm93 = vcmask 130112
    %94 = vst.msk [vmem:[#allocation0] sm:$0x1] %vm93, %v92
    %s96 = sshllo.u32 0, 1
    %v98 = vld [vmem:[#allocation0] sm:%s96]
    %s99 = sshllo.u32 0, 1
    %100 = vst [vmem:[%s1] sm:%s99] %v98

// kernel: _lambda_.5
$region0: #{_lambda_.5}
  #allocation0 [shape = 'u32[]', space=smem, size = 0x4, offset = 0x4, fixed_abs, tag = 'smem constant byte address 0x4 - core index']
  #allocation1 [shape = 'u32[144,128]{1,0:T(1,128)}', space=vmem, size = 0x12000, scoped, tag = 'internal scratch']
  %s0 = inlined_call_operand.vmem [shape: bf16[64,128], index: 0, kind: input, shape index: {}]
  %s1 = inlined_call_operand.vmem [shape: f32[1,128], index: 1, kind: input, shape index: {}]
  %s2 = inlined_call_operand.vmem [shape: f32[1,128], index: 2, kind: input, shape index: {}]
  %s3 = inlined_call_operand.vmem [shape: bf16[64,128], index: 3, kind: output, shape index: {}]
  %s4 = sld [smem:[#allocation0]]
  $region22: #{_lambda_.5} parent=0
    _
  %s6 = ssub.s32 1, %s4
  %s7 = scalar_select 0, %s6, %s4
  // Predicated region
  $region2: #{_lambda_.5} parent=0 // pred_check
    _
  $region3: #{_lambda_.5} parent=0 // pred_check_branch
    %9 = sbr.rel (0) target = $region5
  $region4: #{_lambda_.5} parent=0 // pred_region
    _
  $region5: #{_lambda_.5} parent=0 // pred_fallthru
    _
  // Predicated region
  $region6: #{_lambda_.5} parent=0 // pred_check
    _
  $region7: #{_lambda_.5} parent=0 // pred_check_branch
    %11 = sbr.rel (0) target = $region9
  $region8: #{_lambda_.5} parent=0 // pred_region
    _
  $region9: #{_lambda_.5} parent=0 // pred_fallthru
    _
  // Predicated region
  $region10: #{_lambda_.5} parent=0 // pred_check
    _
  $region11: #{_lambda_.5} parent=0 // pred_check_branch
    %13 = sbr.rel (0) target = $region13
  $region12: #{_lambda_.5} parent=0 // pred_region
    _
  $region13: #{_lambda_.5} parent=0 // pred_fallthru
    _
  %v14 = vld [vmem:[%s0] sm:$0xf]
  %v15 = vld [vmem:[%s0 + $0x4] sm:$0xf]
  %v16 = vld [vmem:[%s0 + $0x8] sm:$0xf]
  %v17 = vld [vmem:[%s0 + $0xc] sm:$0xf]
  %v18 = vld [vmem:[%s0 + $0x10] sm:$0xf]
  %v19 = vld [vmem:[%s0 + $0x14] sm:$0xf]
  %v20 = vld [vmem:[%s0 + $0x18] sm:$0xf]
  %v21 = vld [vmem:[%s0 + $0x1c] sm:$0xf]
  %v22 = vunpack.c.l.bf16 %v14
  %v23 = vunpack.c.l.bf16 %v15
  %v24 = vunpack.c.l.bf16 %v16
  %v25 = vunpack.c.l.bf16 %v17
  %v26 = vunpack.c.l.bf16 %v18
  %v27 = vunpack.c.l.bf16 %v19
  %v28 = vunpack.c.l.bf16 %v20
  %v29 = vunpack.c.l.bf16 %v21
  %v30 = vld [vmem:[%s1] sm:$0x1]
  %v32 = vlaneseq
  %v33 = vshrl.u32 %v32, 7
  %v34 = vsub.s32 0, %v33
  %v35 = vrot.slane %v30, %v34
  %v37 = vmul.f32 %v22, %v35
  %v38 = vmul.f32 %v23, %v35
  %v39 = vmul.f32 %v24, %v35
  %v40 = vmul.f32 %v25, %v35
  %v41 = vmul.f32 %v26, %v35
  %v42 = vmul.f32 %v27, %v35
  %v43 = vmul.f32 %v28, %v35
  %v44 = vmul.f32 %v29, %v35
  %v45 = vld [vmem:[%s2] sm:$0x1]
  %v47 = vlaneseq
  %v48 = vshrl.u32 %v47, 7
  %v49 = vsub.s32 0, %v48
  %v50 = vrot.slane %v45, %v49
  %v52 = vadd.f32 %v37, %v50
  %v53 = vadd.f32 %v38, %v50
  %v54 = vadd.f32 %v39, %v50
  %v55 = vadd.f32 %v40, %v50
  %v56 = vadd.f32 %v41, %v50
  %v57 = vadd.f32 %v42, %v50
  %v58 = vadd.f32 %v43, %v50
  %v59 = vadd.f32 %v44, %v50
  %v60 = vmax.f32 %v52, 0.0
  %v61 = vmax.f32 %v53, 0.0
  %v62 = vmax.f32 %v54, 0.0
  %v63 = vmax.f32 %v55, 0.0
  %v64 = vmax.f32 %v56, 0.0
  %v65 = vmax.f32 %v57, 0.0
  %v66 = vmax.f32 %v58, 0.0
  %v67 = vmax.f32 %v59, 0.0
  %v68 = vpack.c.bf16 %v61, %v60
  %v69 = vpack.c.bf16 %v63, %v62
  %v70 = vpack.c.bf16 %v65, %v64
  %v71 = vpack.c.bf16 %v67, %v66
  %v76 = vunpack.c.l.b16 %v68
  %v77 = vunpack.c.h.b16 %v68
  %v78 = vunpack.c.l.b16 %v69
  %v79 = vunpack.c.h.b16 %v69
  %v80 = vunpack.c.l.b16 %v70
  %v81 = vunpack.c.h.b16 %v70
  %v82 = vunpack.c.l.b16 %v71
  %v83 = vunpack.c.h.b16 %v71
  %v84 = vpack.c.b16 %v76, %v76
  %v85 = vpack.c.b16 %v77, %v77
  %v86 = vpack.c.b16 %v78, %v78
  %v87 = vpack.c.b16 %v79, %v79
  %v88 = vpack.c.b16 %v80, %v80
  %v89 = vpack.c.b16 %v81, %v81
  %v90 = vpack.c.b16 %v82, %v82
  %v91 = vpack.c.b16 %v83, %v83
  %100 = vst [vmem:[%s3] sm:$0xf] %v84
  %101 = vst [vmem:[%s3 + $0x4] sm:$0xf] %v85
  %102 = vst [vmem:[%s3 + $0x8] sm:$0xf] %v86
  %103 = vst [vmem:[%s3 + $0xc] sm:$0xf] %v87
  %104 = vst [vmem:[%s3 + $0x10] sm:$0xf] %v88
  %105 = vst [vmem:[%s3 + $0x14] sm:$0xf] %v89
  %106 = vst [vmem:[%s3 + $0x18] sm:$0xf] %v90
  %107 = vst [vmem:[%s3 + $0x1c] sm:$0xf] %v91
  // Predicated region
  $region14: #{_lambda_.5} parent=0 // pred_check
    _
  $region15: #{_lambda_.5} parent=0 // pred_check_branch
    %109 = sbr.rel (0) target = $region17
  $region16: #{_lambda_.5} parent=0 // pred_region
    _
  $region17: #{_lambda_.5} parent=0 // pred_fallthru
    _
  // Predicated region
  $region18: #{_lambda_.5} parent=0 // pred_check
    _
  $region19: #{_lambda_.5} parent=0 // pred_check_branch
    %111 = sbr.rel (0) target = $region21
  $region20: #{_lambda_.5} parent=0 // pred_region
    _
  $region21: #{_lambda_.5} parent=0 // pred_fallthru
    _

// kernel: _lambda_.4
$region0: #{_lambda_.4}
  #allocation0 [shape = 'u32[]', space=smem, size = 0x4, offset = 0x4, fixed_abs, tag = 'smem constant byte address 0x4 - core index']
  #allocation1 [shape = 'u32[144,128]{1,0:T(1,128)}', space=vmem, size = 0x12000, scoped, tag = 'internal scratch']
  %s0 = inlined_call_operand.vmem [shape: bf16[2,10,10,10,4], index: 0, kind: input, shape index: {}, may-alias: {0,1,2}]
  %s1 = inlined_call_operand.vmem [shape: bf16[2,10,10,10,4], index: 1, kind: input, shape index: {}, may-alias: {0,1,2}]
  %s2 = inlined_call_operand.vmem [shape: bf16[2,10,10,10,4], index: 2, kind: input, shape index: {}, may-alias: {0,1,2}]
  %s3 = inlined_call_operand.vmem [shape: bf16[27,4,8], index: 3, kind: input, shape index: {}]
  %s4 = inlined_call_operand.vmem [shape: bf16[1024,8], index: 4, kind: output, shape index: {0}]
  %s5 = inlined_call_operand.vmem [shape: f32[128,8], index: 5, kind: output, shape index: {1}]
  %s6 = inlined_call_operand.vmem [shape: f32[128,8], index: 6, kind: output, shape index: {2}]
  %7 = xla_tuple %s4, %s5, %s6
  %s8 = sld [smem:[#allocation0]]
  $region65: #{_lambda_.4} parent=0
    _
  %s10 = ssub.s32 1, %s8
  %s11 = scalar_select 0, %s10, %s8
  loop: start=0, step=1, limit=18
  $region2: #{_lambda_.4} parent=0 // loop_pre_header
    _
  $region3: #{_lambda_.4} parent=0 // loop_header
    %s13 = sphi 0, %s17
    %p14 = scmp.ge.s32.totalorder %s13, 18
    %s20 = sphi 0, %s32
    %s21 = sphi 0, %s28
    %s22 = sphi 0, %s20
    %s23 = sphi 0, %s21
    %s24 = sphi 0, %s22
    %s25 = sphi 0, %s23
    %s37 = sphi 0, %s39
    %s40 = sphi 0, %s37
    %s41 = sphi 0, %s40
    %s57 = sphi 0, %s41
    %s67 = sphi 0, %s69
    %s70 = sphi 0, %s67
    %s71 = sphi 0, %s70
    %s87 = sphi 0, %s71
    %s97 = sphi 0, %s99
    %s100 = sphi 0, %s97
    %s101 = sphi 0, %s100
    %s117 = sphi 0, %s101
    %s121 = sphi 0, %s121
    %s123 = sphi 0, %s121
    %s124 = sphi 0, %s123
    %s138 = sphi 0, %s124
    %s148 = sphi 0, %s150
    %s151 = sphi 0, %s148
    %s152 = sphi 0, %s151
    %s168 = sphi 0, %s152
    %s178 = sphi 0, %s180
    %s181 = sphi 0, %s178
    %s182 = sphi 0, %s181
    %s198 = sphi 0, %s182
    %s208 = sphi 0, %s210
    %s211 = sphi 0, %s208
    %s212 = sphi 0, %s211
    %s228 = sphi 0, %s212
  $region4: #{_lambda_.4} parent=0 // loop_header_branch
    %16 = sbr.rel (%p14) target = $region8
  $region5: #{_lambda_.4} parent=0 // loop_body
    %s18 = ssub.s32 %s13, 1
    %s19 = ssub.s32 %s13, 2
    %s26 = sadd.s32 1, %s21
    %p27 = scmp.ge.s32.totalorder %s26, 8
    %s28 = scalar_select %p27, 0, %s26
    %s29 = sadd.s32 1, %s20
    %s30 = scalar_select %p27, %s29, %s20
    %p31 = scmp.ge.s32.totalorder %s30, 2
    %s32 = scalar_select %p31, 0, %s30
    %s33 = ssub.s32 %s20, %s32
    %s34 = ssub.s32 %s21, %s28
    %s35 = sor.u32 %s33, %s34
    %p36 = scmp.eq.s32.totalorder %s35, 0
    %s38 = sadd.s32 %s37, 1
    %s39 = scalar_select %p36, %s37, %s38
    %p42 = pneg %p36
    %p43 = scmp.eq.s32.totalorder %s13, 15
    %p44 = por %p42, %p43
    %p45 = scmp.ne.s32.totalorder %s37, %s40
    %p46 = scmp.eq.s32.totalorder %s13, 0
    %p47 = por %p45, %p46
    %p48 = scmp.ne.s32.totalorder %s37, %s40
    %p49 = scmp.eq.s32.totalorder %s18, 15
    %p50 = por %p48, %p49
    %p51 = scmp.ne.s32.totalorder %s40, %s41
    %p52 = scmp.eq.s32.totalorder %s18, 0
    %p53 = por %p51, %p52
    %p54 = scmp.ne.s32.totalorder %s40, %s41
    %p55 = scmp.eq.s32.totalorder %s19, 15
    %p56 = por %p54, %p55
    %p58 = scmp.ne.s32.totalorder %s41, %s57
    %p59 = scmp.eq.s32.totalorder %s19, 0
    %p60 = por %p58, %p59
    %s61 = sadd.s32 %s21, 1
    %s62 = sadd.s32 %s28, 1
    %s63 = ssub.s32 %s20, %s32
    %s64 = ssub.s32 %s61, %s62
    %s65 = sor.u32 %s63, %s64
    %p66 = scmp.eq.s32.totalorder %s65, 0
    %s68 = sadd.s32 %s67, 1
    %s69 = scalar_select %p66, %s67, %s68
    %p72 = pneg %p66
    %p73 = scmp.eq.s32.totalorder %s13, 15
    %p74 = por %p72, %p73
    %p75 = scmp.ne.s32.totalorder %s67, %s70
    %p76 = scmp.eq.s32.totalorder %s13, 0
    %p77 = por %p75, %p76
    %p78 = scmp.ne.s32.totalorder %s67, %s70
    %p79 = scmp.eq.s32.totalorder %s18, 15
    %p80 = por %p78, %p79
    %p81 = scmp.ne.s32.totalorder %s70, %s71
    %p82 = scmp.eq.s32.totalorder %s18, 0
    %p83 = por %p81, %p82
    %p84 = scmp.ne.s32.totalorder %s70, %s71
    %p85 = scmp.eq.s32.totalorder %s19, 15
    %p86 = por %p84, %p85
    %p88 = scmp.ne.s32.totalorder %s71, %s87
    %p89 = scmp.eq.s32.totalorder %s19, 0
    %p90 = por %p88, %p89
    %s91 = sadd.s32 %s21, 2
    %s92 = sadd.s32 %s28, 2
    %s93 = ssub.s32 %s20, %s32
    %s94 = ssub.s32 %s91, %s92
    %s95 = sor.u32 %s93, %s94
    %p96 = scmp.eq.s32.totalorder %s95, 0
    %s98 = sadd.s32 %s97, 1
    %s99 = scalar_select %p96, %s97, %s98
    %p102 = pneg %p96
    %p103 = scmp.eq.s32.totalorder %s13, 15
    %p104 = por %p102, %p103
    %p105 = scmp.ne.s32.totalorder %s97, %s100
    %p106 = scmp.eq.s32.totalorder %s13, 0
    %p107 = por %p105, %p106
    %p108 = scmp.ne.s32.totalorder %s97, %s100
    %p109 = scmp.eq.s32.totalorder %s18, 15
    %p110 = por %p108, %p109
    %p111 = scmp.ne.s32.totalorder %s100, %s101
    %p112 = scmp.eq.s32.totalorder %s18, 0
    %p113 = por %p111, %p112
    %p114 = scmp.ne.s32.totalorder %s100, %s101
    %p115 = scmp.eq.s32.totalorder %s19, 15
    %p116 = por %p114, %p115
    %p118 = scmp.ne.s32.totalorder %s101, %s117
    %p119 = scmp.eq.s32.totalorder %s19, 0
    %p120 = por %p118, %p119
    %s122 = sadd.s32 %s121, 1
    %p125 = scmp.eq.s32.totalorder %s13, 15
    %p126 = scmp.ne.s32.totalorder %s121, %s123
    %p127 = scmp.eq.s32.totalorder %s13, 0
    %p128 = por %p126, %p127
    %p129 = scmp.ne.s32.totalorder %s121, %s123
    %p130 = scmp.eq.s32.totalorder %s18, 15
    %p131 = por %p129, %p130
    %p132 = scmp.ne.s32.totalorder %s123, %s124
    %p133 = scmp.eq.s32.totalorder %s18, 0
    %p134 = por %p132, %p133
    %p135 = scmp.ne.s32.totalorder %s123, %s124
    %p136 = scmp.eq.s32.totalorder %s19, 15
    %p137 = por %p135, %p136
    %p139 = scmp.ne.s32.totalorder %s124, %s138
    %p140 = scmp.eq.s32.totalorder %s19, 0
    %p141 = por %p139, %p140
    %s142 = smul.u32 %s20, 8
    %s143 = sadd.s32 %s142, %s21
    %s144 = smul.u32 %s32, 8
    %s145 = sadd.s32 %s144, %s28
    %s146 = ssub.s32 %s143, %s145
    %p147 = scmp.eq.s32.totalorder %s146, 0
    %s149 = sadd.s32 %s148, 1
    %s150 = scalar_select %p147, %s148, %s149
    %p153 = pneg %p147
    %p154 = scmp.eq.s32.totalorder %s13, 15
    %p155 = por %p153, %p154
    %p156 = scmp.ne.s32.totalorder %s148, %s151
    %p157 = scmp.eq.s32.totalorder %s13, 0
    %p158 = por %p156, %p157
    %p159 = scmp.ne.s32.totalorder %s148, %s151
    %p160 = scmp.eq.s32.totalorder %s18, 15
    %p161 = por %p159, %p160
    %p162 = scmp.ne.s32.totalorder %s151, %s152
    %p163 = scmp.eq.s32.totalorder %s18, 0
    %p164 = por %p162, %p163
    %p165 = scmp.ne.s32.totalorder %s151, %s152
    %p166 = scmp.eq.s32.totalorder %s19, 15
    %p167 = por %p165, %p166
    %p169 = scmp.ne.s32.totalorder %s152, %s168
    %p170 = scmp.eq.s32.totalorder %s19, 0
    %p171 = por %p169, %p170
    %s172 = smul.u32 %s20, 8
    %s173 = sadd.s32 %s172, %s21
    %s174 = smul.u32 %s32, 8
    %s175 = sadd.s32 %s174, %s28
    %s176 = ssub.s32 %s173, %s175
    %p177 = scmp.eq.s32.totalorder %s176, 0
    %s179 = sadd.s32 %s178, 1
    %s180 = scalar_select %p177, %s178, %s179
    %p183 = pneg %p177
    %p184 = scmp.eq.s32.totalorder %s13, 15
    %p185 = por %p183, %p184
    %p186 = scmp.ne.s32.totalorder %s178, %s181
    %p187 = scmp.eq.s32.totalorder %s13, 0
    %p188 = por %p186, %p187
    %p189 = scmp.ne.s32.totalorder %s178, %s181
    %p190 = scmp.eq.s32.totalorder %s18, 15
    %p191 = por %p189, %p190
    %p192 = scmp.ne.s32.totalorder %s181, %s182
    %p193 = scmp.eq.s32.totalorder %s18, 0
    %p194 = por %p192, %p193
    %p195 = scmp.ne.s32.totalorder %s181, %s182
    %p196 = scmp.eq.s32.totalorder %s19, 15
    %p197 = por %p195, %p196
    %p199 = scmp.ne.s32.totalorder %s182, %s198
    %p200 = scmp.eq.s32.totalorder %s19, 0
    %p201 = por %p199, %p200
    %s202 = smul.u32 %s20, 8
    %s203 = sadd.s32 %s202, %s21
    %s204 = smul.u32 %s32, 8
    %s205 = sadd.s32 %s204, %s28
    %s206 = ssub.s32 %s203, %s205
    %p207 = scmp.eq.s32.totalorder %s206, 0
    %s209 = sadd.s32 %s208, 1
    %s210 = scalar_select %p207, %s208, %s209
    %p213 = pneg %p207
    %p214 = scmp.eq.s32.totalorder %s13, 15
    %p215 = por %p213, %p214
    %p216 = scmp.ne.s32.totalorder %s208, %s211
    %p217 = scmp.eq.s32.totalorder %s13, 0
    %p218 = por %p216, %p217
    %p219 = scmp.ne.s32.totalorder %s208, %s211
    %p220 = scmp.eq.s32.totalorder %s18, 15
    %p221 = por %p219, %p220
    %p222 = scmp.ne.s32.totalorder %s211, %s212
    %p223 = scmp.eq.s32.totalorder %s18, 0
    %p224 = por %p222, %p223
    %p225 = scmp.ne.s32.totalorder %s211, %s212
    %p226 = scmp.eq.s32.totalorder %s19, 15
    %p227 = por %p225, %p226
    %p229 = scmp.ne.s32.totalorder %s212, %s228
    %p230 = scmp.eq.s32.totalorder %s19, 0
    %p231 = por %p229, %p230
    %p232 = scmp.le.s32.totalorder 1, %s13
    %p233 = scmp.lt.s32.totalorder %s13, 17
    %p234 = pnand %p232, %p233
    %p235 = pneg %p234
    // Predicated region
    $region9: #{_lambda_.4} parent=5 // pred_check
      _
    $region10: #{_lambda_.4} parent=5 // pred_check_branch
      %237 = sbr.rel (%p234) target = $region12
    $region11: #{_lambda_.4} parent=5 // pred_region
      %s238 = ssub.s32 %s13, 1
      // Predicated region
      $region13: #{_lambda_.4} parent=11 // pred_check
        %p239 = pneg %p134
      $region14: #{_lambda_.4} parent=11 // pred_check_branch
        %241 = sbr.rel (%p239) target = $region16
      $region15: #{_lambda_.4} parent=11 // pred_region
        _
      $region16: #{_lambda_.4} parent=11 // pred_fallthru
        _
    $region12: #{_lambda_.4} parent=5 // pred_fallthru
      _
    %p242 = scmp.lt.s32.totalorder %s13, 16
    // Predicated region
    $region17: #{_lambda_.4} parent=5 // pred_check
      %p243 = pneg %p242
    $region18: #{_lambda_.4} parent=5 // pred_check_branch
      %245 = sbr.rel (%p243) target = $region20
    $region19: #{_lambda_.4} parent=5 // pred_region
      // Predicated region
      $region21: #{_lambda_.4} parent=19 // pred_check
        %p246 = pneg %p47
      $region22: #{_lambda_.4} parent=19 // pred_check_branch
        %248 = sbr.rel (%p246) target = $region24
      $region23: #{_lambda_.4} parent=19 // pred_region
        %p249 = scmp.lt.s32.totalorder %s20, 1
        %s250 = scalar_select %p249, %s20, 1
        %p251 = scmp.lt.s32.totalorder %s21, 9
        %s252 = scalar_select %p251, %s21, 9
        %s253 = smul.addr %s252, 20
        %s254 = smul.addr %s250, 200
        %s255 = sadd.s32 %s253, %s254
        %s256 = smul.addr %s255, 4
        %s257 = scalar_lea.vmem %s0, %s256
      $region24: #{_lambda_.4} parent=19 // pred_fallthru
        _
      // Predicated region
      $region25: #{_lambda_.4} parent=19 // pred_check
        %p258 = pneg %p77
      $region26: #{_lambda_.4} parent=19 // pred_check_branch
        %260 = sbr.rel (%p258) target = $region28
      $region27: #{_lambda_.4} parent=19 // pred_region
        %s261 = sadd.s32 %s21, 1
        %p262 = scmp.lt.s32.totalorder %s20, 1
        %s263 = scalar_select %p262, %s20, 1
        %p264 = scmp.lt.s32.totalorder %s261, 9
        %s265 = scalar_select %p264, %s261, 9
        %s266 = smul.addr %s265, 20
        %s267 = smul.addr %s263, 200
        %s268 = sadd.s32 %s266, %s267
        %s269 = smul.addr %s268, 4
        %s270 = scalar_lea.vmem %s1, %s269
        %s271 = sadd.s32 %s21, 1
      $region28: #{_lambda_.4} parent=19 // pred_fallthru
        _
      // Predicated region
      $region29: #{_lambda_.4} parent=19 // pred_check
        %p272 = pneg %p107
      $region30: #{_lambda_.4} parent=19 // pred_check_branch
        %274 = sbr.rel (%p272) target = $region32
      $region31: #{_lambda_.4} parent=19 // pred_region
        %s275 = sadd.s32 %s21, 2
        %p276 = scmp.lt.s32.totalorder %s20, 1
        %s277 = scalar_select %p276, %s20, 1
        %p278 = scmp.lt.s32.totalorder %s275, 9
        %s279 = scalar_select %p278, %s275, 9
        %s280 = smul.addr %s279, 20
        %s281 = smul.addr %s277, 200
        %s282 = sadd.s32 %s280, %s281
        %s283 = smul.addr %s282, 4
        %s284 = scalar_lea.vmem %s2, %s283
        %s285 = sadd.s32 %s21, 2
      $region32: #{_lambda_.4} parent=19 // pred_fallthru
        _
    $region20: #{_lambda_.4} parent=5 // pred_fallthru
      _
    %p286 = scmp.le.s32.totalorder 1, %s13
    %p287 = scmp.lt.s32.totalorder %s13, 17
    %p288 = pnand %p286, %p287
    %p289 = pneg %p288
    // Predicated region
    $region33: #{_lambda_.4} parent=5 // pred_check
      _
    $region34: #{_lambda_.4} parent=5 // pred_check_branch
      %291 = sbr.rel (%p288) target = $region36
    $region35: #{_lambda_.4} parent=5 // pred_region
      %s292 = ssub.s32 %s13, 1
      %p293 = scmp.lt.s32.totalorder %s22, 1
      %s294 = scalar_select %p293, %s22, 1
      %p295 = scmp.lt.s32.totalorder %s23, 9
      %s296 = scalar_select %p295, %s23, 9
      %s297 = smul.addr %s296, 20
      %s298 = smul.addr %s294, 200
      %s299 = sadd.s32 %s297, %s298
      %s300 = smul.addr %s299, 4
      %s301 = scalar_lea.vmem %s0, %s300
      %p302 = pneg %p53
      %p303 = pneg %p50
      %s304 = sadd.s32 %s23, 1
      %p305 = scmp.lt.s32.totalorder %s22, 1
      %s306 = scalar_select %p305, %s22, 1
      %p307 = scmp.lt.s32.totalorder %s304, 9
      %s308 = scalar_select %p307, %s304, 9
      %s309 = smul.addr %s308, 20
      %s310 = smul.addr %s306, 200
      %s311 = sadd.s32 %s309, %s310
      %s312 = smul.addr %s311, 4
      %s313 = scalar_lea.vmem %s1, %s312
      %p314 = pneg %p83
      %p315 = pneg %p80
      %s316 = sadd.s32 %s23, 2
      %p317 = scmp.lt.s32.totalorder %s22, 1
      %s318 = scalar_select %p317, %s22, 1
      %p319 = scmp.lt.s32.totalorder %s316, 9
      %s320 = scalar_select %p319, %s316, 9
      %s321 = smul.addr %s320, 20
      %s322 = smul.addr %s318, 200
      %s323 = sadd.s32 %s321, %s322
      %s324 = smul.addr %s323, 4
      %s325 = scalar_lea.vmem %s2, %s324
      %p326 = pneg %p113
      %p327 = pneg %p110
      %p328 = pneg %p134
      %p329 = pneg %p131
      %p330 = pneg %p164
      %p331 = pneg %p161
      %s332 = smul.u32 %s22, 8
      %s333 = sadd.s32 %s332, %s23
      %s334 = smul.u32 8, %s333
      %p335 = scmp.lt.s32.totalorder %s334, 127
      %s336 = scalar_select %p335, %s334, 127
      %s337 = smul.addr %s336, 4
      %s338 = scalar_lea.vmem %s4, %s337
      %p339 = pneg %p194
      %p340 = pneg %p191
      %s341 = smul.u32 %s22, 8
      %s342 = sadd.s32 %s341, %s23
      %p343 = scmp.lt.s32.totalorder %s342, 15
      %s344 = scalar_select %p343, %s342, 15
      %s345 = smul.addr %s344, 8
      %s346 = scalar_lea.vmem %s5, %s345
      %p347 = pneg %p224
      %p348 = pneg %p221
      %s349 = smul.u32 %s22, 8
      %s350 = sadd.s32 %s349, %s23
      %p351 = scmp.lt.s32.totalorder %s350, 15
      %s352 = scalar_select %p351, %s350, 15
      %s353 = smul.addr %s352, 8
      %s354 = scalar_lea.vmem %s6, %s353
      %p355 = scmp.lt.s32.totalorder %s22, 1
      %s356 = scalar_select %p355, %s22, 1
      %p357 = scmp.lt.s32.totalorder %s23, 9
      %s358 = scalar_select %p357, %s23, 9
      %s359 = smul.addr %s358, 20
      %s360 = smul.addr %s356, 200
      %s361 = sadd.s32 %s359, %s360
      %s362 = smul.addr %s361, 4
      %s363 = scalar_lea.vmem %s0, %s362
      %s364 = sadd.s32 %s23, 1
      %p365 = scmp.lt.s32.totalorder %s22, 1
      %s366 = scalar_select %p365, %s22, 1
      %p367 = scmp.lt.s32.totalorder %s364, 9
      %s368 = scalar_select %p367, %s364, 9
      %s369 = smul.addr %s368, 20
      %s370 = smul.addr %s366, 200
      %s371 = sadd.s32 %s369, %s370
      %s372 = smul.addr %s371, 4
      %s373 = scalar_lea.vmem %s1, %s372
      %s374 = sadd.s32 %s23, 1
      %s375 = sadd.s32 %s23, 2
      %p376 = scmp.lt.s32.totalorder %s22, 1
      %s377 = scalar_select %p376, %s22, 1
      %p378 = scmp.lt.s32.totalorder %s375, 9
      %s379 = scalar_select %p378, %s375, 9
      %s380 = smul.addr %s379, 20
      %s381 = smul.addr %s377, 200
      %s382 = sadd.s32 %s380, %s381
      %s383 = smul.addr %s382, 4
      %s384 = scalar_lea.vmem %s2, %s383
      %s385 = sadd.s32 %s23, 2
      %s386 = smul.u32 %s22, 8
      %s387 = sadd.s32 %s386, %s23
      %s388 = smul.u32 8, %s387
      %p389 = scmp.lt.s32.totalorder %s388, 127
      %s390 = scalar_select %p389, %s388, 127
      %s391 = smul.addr %s390, 4
      %s392 = scalar_lea.vmem %s4, %s391
      %s393 = smul.u32 %s22, 8
      %s394 = sadd.s32 %s393, %s23
      %s395 = smul.u32 8, %s394
      %s396 = smul.u32 %s22, 8
      %s397 = sadd.s32 %s396, %s23
      %p398 = scmp.lt.s32.totalorder %s397, 15
      %s399 = scalar_select %p398, %s397, 15
      %s400 = smul.addr %s399, 8
      %s401 = scalar_lea.vmem %s5, %s400
      %s402 = smul.u32 %s22, 8
      %s403 = sadd.s32 %s402, %s23
      %s404 = smul.u32 %s22, 8
      %s405 = sadd.s32 %s404, %s23
      %p406 = scmp.lt.s32.totalorder %s405, 15
      %s407 = scalar_select %p406, %s405, 15
      %s408 = smul.addr %s407, 8
      %s409 = scalar_lea.vmem %s6, %s408
      %s410 = smul.u32 %s22, 8
      %s411 = sadd.s32 %s410, %s23
      %v413 = vld [vmem:[%s363] sm:$0xf]
      %v414 = vld [vmem:[%s363 + $0x4] sm:$0x1]
      %v415 = vld [vmem:[%s363 + $0x8] sm:$0xf]
      %v416 = vld [vmem:[%s363 + $0xc] sm:$0x1]
      %v417 = vld [vmem:[%s363 + $0x10] sm:$0xf]
      %v418 = vld [vmem:[%s363 + $0x14] sm:$0x1]
      %v419 = vld [vmem:[%s363 + $0x18] sm:$0xf]
      %v420 = vld [vmem:[%s363 + $0x1c] sm:$0x1]
      %v421 = vld [vmem:[%s363 + $0x20] sm:$0xf]
      %v422 = vld [vmem:[%s363 + $0x24] sm:$0x1]
      %v423 = vld [vmem:[%s363 + $0x28] sm:$0xf]
      %v424 = vld [vmem:[%s363 + $0x2c] sm:$0x1]
      %v425 = vld [vmem:[%s363 + $0x30] sm:$0xf]
      %v426 = vld [vmem:[%s363 + $0x34] sm:$0x1]
      %v427 = vld [vmem:[%s363 + $0x38] sm:$0xf]
      %v428 = vld [vmem:[%s363 + $0x3c] sm:$0x1]
      %v429 = vld [vmem:[%s363 + $0x40] sm:$0xf]
      %v430 = vld [vmem:[%s363 + $0x44] sm:$0x1]
      %v431 = vld [vmem:[%s363 + $0x48] sm:$0xf]
      %v432 = vld [vmem:[%s363 + $0x4c] sm:$0x1]
      %v433 = vld [vmem:[%s373] sm:$0xf]
      %v434 = vld [vmem:[%s373 + $0x4] sm:$0x1]
      %v435 = vld [vmem:[%s373 + $0x8] sm:$0xf]
      %v436 = vld [vmem:[%s373 + $0xc] sm:$0x1]
      %v437 = vld [vmem:[%s373 + $0x10] sm:$0xf]
      %v438 = vld [vmem:[%s373 + $0x14] sm:$0x1]
      %v439 = vld [vmem:[%s373 + $0x18] sm:$0xf]
      %v440 = vld [vmem:[%s373 + $0x1c] sm:$0x1]
      %v441 = vld [vmem:[%s373 + $0x20] sm:$0xf]
      %v442 = vld [vmem:[%s373 + $0x24] sm:$0x1]
      %v443 = vld [vmem:[%s373 + $0x28] sm:$0xf]
      %v444 = vld [vmem:[%s373 + $0x2c] sm:$0x1]
      %v445 = vld [vmem:[%s373 + $0x30] sm:$0xf]
      %v446 = vld [vmem:[%s373 + $0x34] sm:$0x1]
      %v447 = vld [vmem:[%s373 + $0x38] sm:$0xf]
      %v448 = vld [vmem:[%s373 + $0x3c] sm:$0x1]
      %v449 = vld [vmem:[%s373 + $0x40] sm:$0xf]
      %v450 = vld [vmem:[%s373 + $0x44] sm:$0x1]
      %v451 = vld [vmem:[%s373 + $0x48] sm:$0xf]
      %v452 = vld [vmem:[%s373 + $0x4c] sm:$0x1]
      %v453 = vld [vmem:[%s384] sm:$0xf]
      %v454 = vld [vmem:[%s384 + $0x4] sm:$0x1]
      %v455 = vld [vmem:[%s384 + $0x8] sm:$0xf]
      %v456 = vld [vmem:[%s384 + $0xc] sm:$0x1]
      %v457 = vld [vmem:[%s384 + $0x10] sm:$0xf]
      %v458 = vld [vmem:[%s384 + $0x14] sm:$0x1]
      %v459 = vld [vmem:[%s384 + $0x18] sm:$0xf]
      %v460 = vld [vmem:[%s384 + $0x1c] sm:$0x1]
      %v461 = vld [vmem:[%s384 + $0x20] sm:$0xf]
      %v462 = vld [vmem:[%s384 + $0x24] sm:$0x1]
      %v463 = vld [vmem:[%s384 + $0x28] sm:$0xf]
      %v464 = vld [vmem:[%s384 + $0x2c] sm:$0x1]
      %v465 = vld [vmem:[%s384 + $0x30] sm:$0xf]
      %v466 = vld [vmem:[%s384 + $0x34] sm:$0x1]
      %v467 = vld [vmem:[%s384 + $0x38] sm:$0xf]
      %v468 = vld [vmem:[%s384 + $0x3c] sm:$0x1]
      %v469 = vld [vmem:[%s384 + $0x40] sm:$0xf]
      %v470 = vld [vmem:[%s384 + $0x44] sm:$0x1]
      %v471 = vld [vmem:[%s384 + $0x48] sm:$0xf]
      %v472 = vld [vmem:[%s384 + $0x4c] sm:$0x1]
      %v473 = vld [vmem:[%s3] sm:$0x3]
      %vm474 = vsmask.f32 3328
      %vm475 = vsmask.f32 7440
      %vm476 = vmor %vm474, %vm475
      %v478 = vshrl.u32 %v413, 16
      %v480 = vrot.slane %v478, 4
      %v481 = vshll.u32 %v413, 16
      %v483 = vrot.slane %v481, 5
      %v484 = vor.u32 %v480, %v483
      %v485 = vrot.slane %v484, 4
      %v487 = vshll.u32 %v414, 16
      %v489 = vrot.slane %v487, 5
      %v490 = vsel %vm476, %v485, %v489
      %v492 = vshrl.u32 %v415, 16
      %v494 = vrot.slane %v492, 4
      %v495 = vshll.u32 %v415, 16
      %v497 = vrot.slane %v495, 5
      %v498 = vor.u32 %v494, %v497
      %v499 = vrot.slane %v498, 4
      %v501 = vshll.u32 %v416, 16
      %v503 = vrot.slane %v501, 5
      %v504 = vsel %vm476, %v499, %v503
      %v506 = vshrl.u32 %v417, 16
      %v508 = vrot.slane %v506, 4
      %v509 = vshll.u32 %v417, 16
      %v511 = vrot.slane %v509, 5
      %v512 = vor.u32 %v508, %v511
      %v513 = vrot.slane %v512, 4
      %v515 = vshll.u32 %v418, 16
      %v517 = vrot.slane %v515, 5
      %v518 = vsel %vm476, %v513, %v517
      %v520 = vshrl.u32 %v419, 16
      %v522 = vrot.slane %v520, 4
      %v523 = vshll.u32 %v419, 16
      %v525 = vrot.slane %v523, 5
      %v526 = vor.u32 %v522, %v525
      %v527 = vrot.slane %v526, 4
      %v529 = vshll.u32 %v420, 16
      %v531 = vrot.slane %v529, 5
      %v532 = vsel %vm476, %v527, %v531
      %v534 = vshrl.u32 %v421, 16
      %v536 = vrot.slane %v534, 4
      %v537 = vshll.u32 %v421, 16
      %v539 = vrot.slane %v537, 5
      %v540 = vor.u32 %v536, %v539
      %v541 = vrot.slane %v540, 4
      %v543 = vshll.u32 %v422, 16
      %v545 = vrot.slane %v543, 5
      %v546 = vsel %vm476, %v541, %v545
      %v548 = vshrl.u32 %v423, 16
      %v550 = vrot.slane %v548, 4
      %v551 = vshll.u32 %v423, 16
      %v553 = vrot.slane %v551, 5
      %v554 = vor.u32 %v550, %v553
      %v555 = vrot.slane %v554, 4
      %v557 = vshll.u32 %v424, 16
      %v559 = vrot.slane %v557, 5
      %v560 = vsel %vm476, %v555, %v559
      %v562 = vshrl.u32 %v425, 16
      %v564 = vrot.slane %v562, 4
      %v565 = vshll.u32 %v425, 16
      %v567 = vrot.slane %v565, 5
      %v568 = vor.u32 %v564, %v567
      %v569 = vrot.slane %v568, 4
      %v571 = vshll.u32 %v426, 16
      %v573 = vrot.slane %v571, 5
      %v574 = vsel %vm476, %v569, %v573
      %v576 = vshrl.u32 %v427, 16
      %v578 = vrot.slane %v576, 4
      %v579 = vshll.u32 %v427, 16
      %v581 = vrot.slane %v579, 5
      %v582 = vor.u32 %v578, %v581
      %v583 = vrot.slane %v582, 4
      %v585 = vshll.u32 %v428, 16
      %v587 = vrot.slane %v585, 5
      %v588 = vsel %vm476, %v583, %v587
      %s589 = scalar_lea.vmem %s3, 2
      %v590 = vld [vmem:[%s589] sm:$0x3]
      %v591 = vunpack.c.l.b16 %v490
      %v592 = vunpack.c.l.b16 %v504
      %v593 = vunpack.c.l.b16 %v518
      %v594 = vunpack.c.l.b16 %v532
      %v595 = vunpack.c.l.b16 %v546
      %v596 = vunpack.c.l.b16 %v560
      %v597 = vunpack.c.l.b16 %v574
      %v598 = vunpack.c.l.b16 %v588
      %v599 = vpack.c.b16 %v592, %v591
      %v600 = vpack.c.b16 %v594, %v593
      %v601 = vpack.c.b16 %v596, %v595
      %v602 = vpack.c.b16 %v598, %v597
      %vm603 = vcmask 31744
      %v605 = vsel %vm603, %v599, 0
      %v608 = vsel %vm603, %v600, 0
      %v611 = vsel %vm603, %v601, 0
      %v614 = vsel %vm603, %v602, 0
      %vm616 = vcmask 1041408
      %v618 = vsel %vm616, %v590, 0
      %620 = vmatprep.subr.bf16.mxu0 0
      %621 = vmatpush1.bf16.msra.mxu0 %v618
      %622 = vmatprep.subr.bf16.mxu0 0
      %623 = vmatpush1.bf16.msra.mxu0 0
      %624 = vmatprep.subr.bf16.mxu0 0
      %625 = vmatpush1.bf16.msra.mxu0 0
      %626 = vmatprep.subr.bf16.mxu0 0
      %627 = vmatpush1.bf16.msra.mxu0 0
      %628 = vmatprep.subr.bf16.mxu0 0
      %629 = vmatpush1.bf16.msra.mxu0 0
      %630 = vmatprep.subr.bf16.mxu0 0
      %631 = vmatpush1.bf16.msra.mxu0 0
      %632 = vmatprep.subr.bf16.mxu0 0
      %633 = vmatpush1.bf16.msra.mxu0 0
      %634 = vmatprep.subr.bf16.mxu0 0
      %635 = vmatpush1.bf16.msra.mxu0 0
      %636 = vmatprep.subr.bf16.mxu0 0
      %637 = vmatpush1.bf16.msra.mxu0 0
      %638 = vmatprep.subr.bf16.mxu0 0
      %639 = vmatpush1.bf16.msra.mxu0 0
      %640 = vmatprep.subr.bf16.mxu0 0
      %641 = vmatpush1.bf16.msra.mxu0 0
      %642 = vmatprep.subr.bf16.mxu0 0
      %643 = vmatpush1.bf16.msra.mxu0 0
      %644 = vmatprep.subr.bf16.mxu0 0
      %645 = vmatpush1.bf16.msra.mxu0 0
      %646 = vmatprep.subr.bf16.mxu0 0
      %647 = vmatpush1.bf16.msra.mxu0 0
      %648 = vmatprep.subr.bf16.mxu0 0
      %649 = vmatpush1.bf16.msra.mxu0 0
      %650 = vmatprep.subr.bf16.mxu0 0
      %651 = vmatpush1.bf16.msra.mxu0 0
      %652 = vmatprep.mubr.bf16.mxu0 0
      %653 = vmatmul.mubr.bf16.gmra.mrb[0].mxu0 %v605
      %v654 = vpop.f32.mrb[0].mxu0
      %v655 = vadd.f32 0.0, %v654
      %v656 = vpop.f32.mrb[0].mxu0
      %v657 = vpop.f32.mrb[0].mxu0
      %v658 = vadd.f32 0.0, %v657
      %v659 = vpop.f32.mrb[0].mxu0
      %660 = vmatprep.mubr.bf16.mxu0 0
      %661 = vmatmul.mubr.bf16.gmra.mrb[0].mxu0 %v608
      %v662 = vpop.f32.mrb[0].mxu0
      %v663 = vadd.f32 0.0, %v662
      %v664 = vpop.f32.mrb[0].mxu0
      %v665 = vpop.f32.mrb[0].mxu0
      %v666 = vadd.f32 0.0, %v665
      %v667 = vpop.f32.mrb[0].mxu0
      %668 = vmatprep.mubr.bf16.mxu0 0
      %669 = vmatmul.mubr.bf16.gmra.mrb[0].mxu0 %v611
      %v670 = vpop.f32.mrb[0].mxu0
      %v671 = vadd.f32 0.0, %v670
      %v672 = vpop.f32.mrb[0].mxu0
      %v673 = vpop.f32.mrb[0].mxu0
      %v674 = vadd.f32 0.0, %v673
      %v675 = vpop.f32.mrb[0].mxu0
      %676 = vmatprep.mubr.bf16.mxu0 0
      %677 = vmatmul.mubr.bf16.gmra.mrb[0].mxu0 %v614
      %v678 = vpop.f32.mrb[0].mxu0
      %v679 = vadd.f32 0.0, %v678
      %v680 = vpop.f32.mrb[0].mxu0
      %v681 = vpop.f32.mrb[0].mxu0
      %v682 = vadd.f32 0.0, %v681
      %v683 = vpop.f32.mrb[0].mxu0
      %684 = vdwg.mxu0
      %v693 = vunpack.c.l.b16 %v413
      %v694 = vunpack.c.l.b16 %v415
      %v695 = vunpack.c.l.b16 %v417
      %v696 = vunpack.c.l.b16 %v419
      %v697 = vunpack.c.l.b16 %v421
      %v698 = vunpack.c.l.b16 %v423
      %v699 = vunpack.c.l.b16 %v425
      %v700 = vunpack.c.l.b16 %v427
      %v701 = vpack.c.b16 %v694, %v693
      %v702 = vpack.c.b16 %v696, %v695
      %v703 = vpack.c.b16 %v698, %v697
      %v704 = vpack.c.b16 %v700, %v699
      %v706 = vsel %vm603, %v701, 0
      %v709 = vsel %vm603, %v702, 0
      %v712 = vsel %vm603, %v703, 0
      %v715 = vsel %vm603, %v704, 0
      %v718 = vsel %vm616, %v473, 0
      %720 = vmatprep.subr.bf16.mxu0 0
      %721 = vmatpush1.bf16.msra.mxu0 %v718
      %722 = vmatprep.subr.bf16.mxu0 0
      %723 = vmatpush1.bf16.msra.mxu0 0
      %724 = vmatprep.subr.bf16.mxu0 0
      %725 = vmatpush1.bf16.msra.mxu0 0
      %726 = vmatprep.subr.bf16.mxu0 0
      %727 = vmatpush1.bf16.msra.mxu0 0
      %728 = vmatprep.subr.bf16.mxu0 0
      %729 = vmatpush1.bf16.msra.mxu0 0
      %730 = vmatprep.subr.bf16.mxu0 0
      %731 = vmatpush1.bf16.msra.mxu0 0
      %732 = vmatprep.subr.bf16.mxu0 0
      %733 = vmatpush1.bf16.msra.mxu0 0
      %734 = vmatprep.subr.bf16.mxu0 0
      %735 = vmatpush1.bf16.msra.mxu0 0
      %736 = vmatprep.subr.bf16.mxu0 0
      %737 = vmatpush1.bf16.msra.mxu0 0
      %738 = vmatprep.subr.bf16.mxu0 0
      %739 = vmatpush1.bf16.msra.mxu0 0
      %740 = vmatprep.subr.bf16.mxu0 0
      %741 = vmatpush1.bf16.msra.mxu0 0
      %742 = vmatprep.subr.bf16.mxu0 0
      %743 = vmatpush1.bf16.msra.mxu0 0
      %744 = vmatprep.subr.bf16.mxu0 0
      %745 = vmatpush1.bf16.msra.mxu0 0
      %746 = vmatprep.subr.bf16.mxu0 0
      %747 = vmatpush1.bf16.msra.mxu0 0
      %748 = vmatprep.subr.bf16.mxu0 0
      %749 = vmatpush1.bf16.msra.mxu0 0
      %750 = vmatprep.subr.bf16.mxu0 0
      %751 = vmatpush1.bf16.msra.mxu0 0
      %752 = vmatprep.mubr.bf16.mxu0 0
      %753 = vmatmul.mubr.bf16.gmra.mrb[0].mxu0 %v706
      %v754 = vpop.f32.mrb[0].mxu0
      %v755 = vadd.f32 %v655, %v754
      %v756 = vpop.f32.mrb[0].mxu0
      %v757 = vpop.f32.mrb[0].mxu0
      %v758 = vadd.f32 %v658, %v757
      %v759 = vpop.f32.mrb[0].mxu0
      %760 = vmatprep.mubr.bf16.mxu0 0
      %761 = vmatmul.mubr.bf16.gmra.mrb[0].mxu0 %v709
      %v762 = vpop.f32.mrb[0].mxu0
      %v763 = vadd.f32 %v663, %v762
      %v764 = vpop.f32.mrb[0].mxu0
      %v765 = vpop.f32.mrb[0].mxu0
      %v766 = vadd.f32 %v666, %v765
      %v767 = vpop.f32.mrb[0].mxu0
      %768 = vmatprep.mubr.bf16.mxu0 0
      %769 = vmatmul.mubr.bf16.gmra.mrb[0].mxu0 %v712
      %v770 = vpop.f32.mrb[0].mxu0
      %v771 = vadd.f32 %v671, %v770
      %v772 = vpop.f32.mrb[0].mxu0
      %v773 = vpop.f32.mrb[0].mxu0
      %v774 = vadd.f32 %v674, %v773
      %v775 = vpop.f32.mrb[0].mxu0
      %776 = vmatprep.mubr.bf16.mxu0 0
      %777 = vmatmul.mubr.bf16.gmra.mrb[0].mxu0 %v715
      %v778 = vpop.f32.mrb[0].mxu0
      %v779 = vadd.f32 %v679, %v778
      %v780 = vpop.f32.mrb[0].mxu0
      %v781 = vpop.f32.mrb[0].mxu0
      %v782 = vadd.f32 %v682, %v781
      %v783 = vpop.f32.mrb[0].mxu0
      %784 = vdwg.mxu0
      %vm793 = vcmask 1042432
      %vm794 = vcmask 1046532
      %vm795 = vmor %vm793, %vm794
      %v796 = vrot.slane %v413, 5
      %v797 = vrot.slane %v796, 4
      %v798 = vrot.slane %v414, 5
      %v799 = vsel %vm795, %v797, %v798
      %v800 = vrot.slane %v415, 5
      %v801 = vrot.slane %v800, 4
      %v802 = vrot.slane %v416, 5
      %v803 = vsel %vm795, %v801, %v802
      %v804 = vrot.slane %v417, 5
      %v805 = vrot.slane %v804, 4
      %v806 = vrot.slane %v418, 5
      %v807 = vsel %vm795, %v805, %v806
      %v808 = vrot.slane %v419, 5
      %v809 = vrot.slane %v808, 4
      %v810 = vrot.slane %v420, 5
      %v811 = vsel %vm795, %v809, %v810
      %v812 = vrot.slane %v421, 5
      %v813 = vrot.slane %v812, 4
      %v814 = vrot.slane %v422, 5
      %v815 = vsel %vm795, %v813, %v814
      %v816 = vrot.slane %v423, 5
      %v817 = vrot.slane %v816, 4
      %v818 = vrot.slane %v424, 5
      %v819 = vsel %vm795, %v817, %v818
      %v820 = vrot.slane %v425, 5
      %v821 = vrot.slane %v820, 4
      %v822 = vrot.slane %v426, 5
      %v823 = vsel %vm795, %v821, %v822
      %v824 = vrot.slane %v427, 5
      %v825 = vrot.slane %v824, 4
      %v826 = vrot.slane %v428, 5
      %v827 = vsel %vm795, %v825, %v826
      %s828 = scalar_lea.vmem %s3, 4
      %v829 = vld [vmem:[%s828] sm:$0x3]
      %v830 = vunpack.c.l.b16 %v799
      %v831 = vunpack.c.l.b16 %v803
      %v832 = vunpack.c.l.b16 %v807
      %v833 = vunpack.c.l.b16 %v811
      %v834 = vunpack.c.l.b16 %v815
      %v835 = vunpack.c.l.b16 %v819
      %v836 = vunpack.c.l.b16 %v823
      %v837 = vunpack.c.l.b16 %v827
      %v838 = vpack.c.b16 %v831, %v830
      %v839 = vpack.c.b16 %v833, %v832
      %v840 = vpack.c.b16 %v835, %v834
      %v841 = vpack.c.b16 %v837, %v836
      %v843 = vsel %vm603, %v838, 0
      %v846 = vsel %vm603, %v839, 0
      %v849 = vsel %vm603, %v840, 0
      %v852 = vsel %vm603, %v841, 0
      %v855 = vsel %vm616, %v829, 0
      %857 = vmatprep.subr.bf16.mxu0 0
      %858 = vmatpush1.bf16.msra.mxu0 %v855
      %859 = vmatprep.subr.bf16.mxu0 0
      %860 = vmatpush1.bf16.msra.mxu0 0
      %861 = vmatprep.subr.bf16.mxu0 0
      %862 = vmatpush1.bf16.msra.mxu0 0
      %863 = vmatprep.subr.bf16.mxu0 0
      %864 = vmatpush1.bf16.msra.mxu0 0
      %865 = vmatprep.subr.bf16.mxu0 0
      %866 = vmatpush1.bf16.msra.mxu0 0
      %867 = vmatprep.subr.bf16.mxu0 0
      %868 = vmatpush1.bf16.msra.mxu0 0
      %869 = vmatprep.subr.bf16.mxu0 0
      %870 = vmatpush1.bf16.msra.mxu0 0
      %871 = vmatprep.subr.bf16.mxu0 0
      %872 = vmatpush1.bf16.msra.mxu0 0
      %873 = vmatprep.subr.bf16.mxu0 0
      %874 = vmatpush1.bf16.msra.mxu0 0
      %875 = vmatprep.subr.bf16.mxu0 0
      %876 = vmatpush1.bf16.msra.mxu0 0
      %877 = vmatprep.subr.bf16.mxu0 0
      %878 = vmatpush1.bf16.msra.mxu0 0
      %879 = vmatprep.subr.bf16.mxu0 0
      %880 = vmatpush1.bf16.msra.mxu0 0
      %881 = vmatprep.subr.bf16.mxu0 0
      %882 = vmatpush1.bf16.msra.mxu0 0
      %883 = vmatprep.subr.bf16.mxu0 0
      %884 = vmatpush1.bf16.msra.mxu0 0
      %885 = vmatprep.subr.bf16.mxu0 0
      %886 = vmatpush1.bf16.msra.mxu0 0
      %887 = vmatprep.subr.bf16.mxu0 0
      %888 = vmatpush1.bf16.msra.mxu0 0
      %889 = vmatprep.mubr.bf16.mxu0 0
      %890 = vmatmul.mubr.bf16.gmra.mrb[0].mxu0 %v843
      %v891 = vpop.f32.mrb[0].mxu0
      %v892 = vadd.f32 0.0, %v891
      %v893 = vpop.f32.mrb[0].mxu0
      %v894 = vpop.f32.mrb[0].mxu0
      %v895 = vadd.f32 0.0, %v894
      %v896 = vpop.f32.mrb[0].mxu0
      %897 = vmatprep.mubr.bf16.mxu0 0
      %898 = vmatmul.mubr.bf16.gmra.mrb[0].mxu0 %v846
      %v899 = vpop.f32.mrb[0].mxu0
      %v900 = vadd.f32 0.0, %v899
      %v901 = vpop.f32.mrb[0].mxu0
      %v902 = vpop.f32.mrb[0].mxu0
      %v903 = vadd.f32 0.0, %v902
      %v904 = vpop.f32.mrb[0].mxu0
      %905 = vmatprep.mubr.bf16.mxu0 0
      %906 = vmatmul.mubr.bf16.gmra.mrb[0].mxu0 %v849
      %v907 = vpop.f32.mrb[0].mxu0
      %v908 = vadd.f32 0.0, %v907
      %v909 = vpop.f32.mrb[0].mxu0
      %v910 = vpop.f32.mrb[0].mxu0
      %v911 = vadd.f32 0.0, %v910
      %v912 = vpop.f32.mrb[0].mxu0
      %913 = vmatprep.mubr.bf16.mxu0 0
      %914 = vmatmul.mubr.bf16.gmra.mrb[0].mxu0 %v852
      %v915 = vpop.f32.mrb[0].mxu0
      %v916 = vadd.f32 0.0, %v915
      %v917 = vpop.f32.mrb[0].mxu0
      %v918 = vpop.f32.mrb[0].mxu0
      %v919 = vadd.f32 0.0, %v918
      %v920 = vpop.f32.mrb[0].mxu0
      %921 = vdwg.mxu0
      %v922 = vadd.f32 %v755, %v892
      %v923 = vadd.f32 %v758, %v895
      %v924 = vadd.f32 %v763, %v900
      %v925 = vadd.f32 %v766, %v903
      %v926 = vadd.f32 %v771, %v908
      %v927 = vadd.f32 %v774, %v911
      %v928 = vadd.f32 %v779, %v916
      %v929 = vadd.f32 %v782, %v919
      %s930 = scalar_lea.vmem %s3, 6
      %v931 = vld [vmem:[%s930] sm:$0x3]
      %v933 = vunpack.c.l.b16 %v429
      %v934 = vpack.c.b16 %v695, %v694
      %v935 = vpack.c.b16 %v697, %v696
      %v936 = vpack.c.b16 %v699, %v698
      %v937 = vpack.c.b16 %v933, %v700
      %v939 = vsel %vm603, %v934, 0
      %v942 = vsel %vm603, %v935, 0
      %v945 = vsel %vm603, %v936, 0
      %v948 = vsel %vm603, %v937, 0
      %v951 = vsel %vm616, %v931, 0
      %953 = vmatprep.subr.bf16.mxu0 0
      %954 = vmatpush1.bf16.msra.mxu0 %v951
      %955 = vmatprep.subr.bf16.mxu0 0
      %956 = vmatpush1.bf16.msra.mxu0 0
      %957 = vmatprep.subr.bf16.mxu0 0
      %958 = vmatpush1.bf16.msra.mxu0 0
      %959 = vmatprep.subr.bf16.mxu0 0
      %960 = vmatpush1.bf16.msra.mxu0 0
      %961 = vmatprep.subr.bf16.mxu0 0
      %962 = vmatpush1.bf16.msra.mxu0 0
      %963 = vmatprep.subr.bf16.mxu0 0
      %964 = vmatpush1.bf16.msra.mxu0 0
      %965 = vmatprep.subr.bf16.mxu0 0
      %966 = vmatpush1.bf16.msra.mxu0 0
      %967 = vmatprep.subr.bf16.mxu0 0
      %968 = vmatpush1.bf16.msra.mxu0 0
      %969 = vmatprep.subr.bf16.mxu0 0
      %970 = vmatpush1.bf16.msra.mxu0 0
      %971 = vmatprep.subr.bf16.mxu0 0
      %972 = vmatpush1.bf16.msra.mxu0 0
      %973 = vmatprep.subr.bf16.mxu0 0
      %974 = vmatpush1.bf16.msra.mxu0 0
      %975 = vmatprep.subr.bf16.mxu0 0
      %976 = vmatpush1.bf16.msra.mxu0 0
      %977 = vmatprep.subr.bf16.mxu0 0
      %978 = vmatpush1.bf16.msra.mxu0 0
      %979 = vmatprep.subr.bf16.mxu0 0
      %980 = vmatpush1.bf16.msra.mxu0 0
      %981 = vmatprep.subr.bf16.mxu0 0
      %982 = vmatpush1.bf16.msra.mxu0 0
      %983 = vmatprep.subr.bf16.mxu0 0
      %984 = vmatpush1.bf16.msra.mxu0 0
      %985 = vmatprep.mubr.bf16.mxu0 0
      %986 = vmatmul.mubr.bf16.gmra.mrb[0].mxu0 %v939
      %v987 = vpop.f32.mrb[0].mxu0
      %v988 = vadd.f32 0.0, %v987
      %v989 = vpop.f32.mrb[0].mxu0
      %v990 = vpop.f32.mrb[0].mxu0
      %v991 = vadd.f32 0.0, %v990
      %v992 = vpop.f32.mrb[0].mxu0
      %993 = vmatprep.mubr.bf16.mxu0 0
      %994 = vmatmul.mubr.bf16.gmra.mrb[0].mxu0 %v942
      %v995 = vpop.f32.mrb[0].mxu0
      %v996 = vadd.f32 0.0, %v995
      %v997 = vpop.f32.mrb[0].mxu0
      %v998 = vpop.f32.mrb[0].mxu0
      %v999 = vadd.f32 0.0, %v998
      %v1000 = vpop.f32.mrb[0].mxu0
      %1001 = vmatprep.mubr.bf16.mxu0 0
      %1002 = vmatmul.mubr.bf16.gmra.mrb[0].mxu0 %v945
      %v1003 = vpop.f32.mrb[0].mxu0
      %v1004 = vadd.f32 0.0, %v1003
      %v1005 = vpop.f32.mrb[0].mxu0
      %v1006 = vpop.f32.mrb[0].mxu0
      %v1007 = vadd.f32 0.0, %v1006
      %v1008 = vpop.f32.mrb[0].mxu0
      %1009 = vmatprep.mubr.bf16.mxu0 0
      %1010 = vmatmul.mubr.bf16.gmra.mrb[0].mxu0 %v948
      %v1011 = vpop.f32.mrb[0].mxu0
      %v1012 = vadd.f32 0.0, %v1011
      %v1013 = vpop.f32.mrb[0].mxu0
      %v1014 = vpop.f32.mrb[0].mxu0
      %v1015 = vadd.f32 0.0, %v1014
      %v1016 = vpop.f32.mrb[0].mxu0
      %1017 = vdwg.mxu0
      %v1018 = vadd.f32 %v922, %v988
      %v1019 = vadd.f32 %v923, %v991
      %v1020 = vadd.f32 %v924, %v996
      %v1021 = vadd.f32 %v925, %v999
      %v1022 = vadd.f32 %v926, %v1004
      %v1023 = vadd.f32 %v927, %v1007
      %v1024 = vadd.f32 %v928, %v1012
      %v1025 = vadd.f32 %v929, %v1015
      %v1027 = vshrl.u32 %v429, 16
      %v1029 = vrot.slane %v1027, 4
      %v1030 = vshll.u32 %v429, 16
      %v1032 = vrot.slane %v1030, 5
      %v1033 = vor.u32 %v1029, %v1032
      %v1034 = vrot.slane %v1033, 4
      %v1036 = vshll.u32 %v430, 16
      %v1038 = vrot.slane %v1036, 5
      %v1039 = vsel %vm476, %v1034, %v1038
      %s1040 = scalar_lea.vmem %s3, 8
      %v1041 = vld [vmem:[%s1040] sm:$0x3]
      %v1042 = vunpack.c.l.b16 %v1039
      %v1043 = vpack.c.b16 %v593, %v592
      %v1044 = vpack.c.b16 %v595, %v594
      %v1045 = vpack.c.b16 %v597, %v596
      %v1046 = vpack.c.b16 %v1042, %v598
      %v1048 = vsel %vm603, %v1043, 0
      %v1051 = vsel %vm603, %v1044, 0
      %v1054 = vsel %vm603, %v1045, 0
      %v1057 = vsel %vm603, %v1046, 0
      %v1060 = vsel %vm616, %v1041, 0
      %1062 = vmatprep.subr.bf16.mxu0 0
      %1063 = vmatpush1.bf16.msra.mxu0 %v1060
      %1064 = vmatprep.subr.bf16.mxu0 0
      %1065 = vmatpush1.bf16.msra.mxu0 0
      %1066 = vmatprep.subr.bf16.mxu0 0
      %1067 = vmatpush1.bf16.msra.mxu0 0
      %1068 = vmatprep.subr.bf16.mxu0 0
      %1069 = vmatpush1.bf16.msra.mxu0 0
      %1070 = vmatprep.subr.bf16.mxu0 0
      %1071 = vmatpush1.bf16.msra.mxu0 0
      %1072 = vmatprep.subr.bf16.mxu0 0
      %1073 = vmatpush1.bf16.msra.mxu0 0
      %1074 = vmatprep.subr.bf16.mxu0 0
      %1075 = vmatpush1.bf16.msra.mxu0 0
      %1076 = vmatprep.subr.bf16.mxu0 0
      %1077 = vmatpush1.bf16.msra.mxu0 0
      %1078 = vmatprep.subr.bf16.mxu0 0
      %1079 = vmatpush1.bf16.msra.mxu0 0
      %1080 = vmatprep.subr.bf16.mxu0 0
      %1081 = vmatpush1.bf16.msra.mxu0 0
      %1082 = vmatprep.subr.bf16.mxu0 0
      %1083 = vmatpush1.bf16.msra.mxu0 0
      %1084 = vmatprep.subr.bf16.mxu0 0
      %1085 = vmatpush1.bf16.msra.mxu0 0
      %1086 = vmatprep.subr.bf16.mxu0 0
      %1087 = vmatpush1.bf16.msra.mxu0 0
      %1088 = vmatprep.subr.bf16.mxu0 0
      %1089 = vmatpush1.bf16.msra.mxu0 0
      %1090 = vmatprep.subr.bf16.mxu0 0
      %1091 = vmatpush1.bf16.msra.mxu0 0
      %1092 = vmatprep.subr.bf16.mxu0 0
      %1093 = vmatpush1.bf16.msra.mxu0 0
      %1094 = vmatprep.mubr.bf16.mxu0 0
      %1095 = vmatmul.mubr.bf16.gmra.mrb[0].mxu0 %v1048
      %v1096 = vpop.f32.mrb[0].mxu0
      %v1097 = vadd.f32 0.0, %v1096
      %v1098 = vpop.f32.mrb[0].mxu0
      %v1099 = vpop.f32.mrb[0].mxu0
      %v1100 = vadd.f32 0.0, %v1099
      %v1101 = vpop.f32.mrb[0].mxu0
      %1102 = vmatprep.mubr.bf16.mxu0 0
      %1103 = vmatmul.mubr.bf16.gmra.mrb[0].mxu0 %v1051
      %v1104 = vpop.f32.mrb[0].mxu0
      %v1105 = vadd.f32 0.0, %v1104
      %v1106 = vpop.f32.mrb[0].mxu0
      %v1107 = vpop.f32.mrb[0].mxu0
      %v1108 = vadd.f32 0.0, %v1107
      %v1109 = vpop.f32.mrb[0].mxu0
      %1110 = vmatprep.mubr.bf16.mxu0 0
      %1111 = vmatmul.mubr.bf16.gmra.mrb[0].mxu0 %v1054
      %v1112 = vpop.f32.mrb[0].mxu0
      %v1113 = vadd.f32 0.0, %v1112
      %v1114 = vpop.f32.mrb[0].mxu0
      %v1115 = vpop.f32.mrb[0].mxu0
      %v1116 = vadd.f32 0.0, %v1115
      %v1117 = vpop.f32.mrb[0].mxu0
      %1118 = vmatprep.mubr.bf16.mxu0 0
      %1119 = vmatmul.mubr.bf16.gmra.mrb[0].mxu0 %v1057
      %v1120 = vpop.f32.mrb[0].mxu0
      %v1121 = vadd.f32 0.0, %v1120
      %v1122 = vpop.f32.mrb[0].mxu0
      %v1123 = vpop.f32.mrb[0].mxu0
      %v1124 = vadd.f32 0.0, %v1123
      %v1125 = vpop.f32.mrb[0].mxu0
      %1126 = vdwg.mxu0
      %v1127 = vadd.f32 %v1018, %v1097
      %v1128 = vadd.f32 %v1019, %v1100
      %v1129 = vadd.f32 %v1020, %v1105
      %v1130 = vadd.f32 %v1021, %v1108
      %v1131 = vadd.f32 %v1022, %v1113
      %v1132 = vadd.f32 %v1023, %v1116
      %v1133 = vadd.f32 %v1024, %v1121
      %v1134 = vadd.f32 %v1025, %v1124
      %v1136 = vrot.slane %v429, 5
      %v1137 = vrot.slane %v1136, 4
      %v1138 = vrot.slane %v430, 5
      %v1139 = vsel %vm795, %v1137, %v1138
      %s1140 = scalar_lea.vmem %s3, 10
      %v1141 = vld [vmem:[%s1140] sm:$0x3]
      %v1142 = vunpack.c.l.b16 %v1139
      %v1143 = vpack.c.b16 %v832, %v831
      %v1144 = vpack.c.b16 %v834, %v833
      %v1145 = vpack.c.b16 %v836, %v835
      %v1146 = vpack.c.b16 %v1142, %v837
      %v1148 = vsel %vm603, %v1143, 0
      %v1151 = vsel %vm603, %v1144, 0
      %v1154 = vsel %vm603, %v1145, 0
      %v1157 = vsel %vm603, %v1146, 0
      %v1160 = vsel %vm616, %v1141, 0
      %1162 = vmatprep.subr.bf16.mxu0 0
      %1163 = vmatpush1.bf16.msra.mxu0 %v1160
      %1164 = vmatprep.subr.bf16.mxu0 0
      %1165 = vmatpush1.bf16.msra.mxu0 0
      %1166 = vmatprep.subr.bf16.mxu0 0
      %1167 = vmatpush1.bf16.msra.mxu0 0
      %1168 = vmatprep.subr.bf16.mxu0 0
      %1169 = vmatpush1.bf16.msra.mxu0 0
      %1170 = vmatprep.subr.bf16.mxu0 0
      %1171 = vmatpush1.bf16.msra.mxu0 0
      %1172 = vmatprep.subr.bf16.mxu0 0
      %1173 = vmatpush1.bf16.msra.mxu0 0
      %1174 = vmatprep.subr.bf16.mxu0 0
      %1175 = vmatpush1.bf16.msra.mxu0 0
      %1176 = vmatprep.subr.bf16.mxu0 0
      %1177 = vmatpush1.bf16.msra.mxu0 0
      %1178 = vmatprep.subr.bf16.mxu0 0
      %1179 = vmatpush1.bf16.msra.mxu0 0
      %1180 = vmatprep.subr.bf16.mxu0 0
      %1181 = vmatpush1.bf16.msra.mxu0 0
      %1182 = vmatprep.subr.bf16.mxu0 0
      %1183 = vmatpush1.bf16.msra.mxu0 0
      %1184 = vmatprep.subr.bf16.mxu0 0
      %1185 = vmatpush1.bf16.msra.mxu0 0
      %1186 = vmatprep.subr.bf16.mxu0 0
      %1187 = vmatpush1.bf16.msra.mxu0 0
      %1188 = vmatprep.subr.bf16.mxu0 0
      %1189 = vmatpush1.bf16.msra.mxu0 0
      %1190 = vmatprep.subr.bf16.mxu0 0
      %1191 = vmatpush1.bf16.msra.mxu0 0
      %1192 = vmatprep.subr.bf16.mxu0 0
      %1193 = vmatpush1.bf16.msra.mxu0 0
      %1194 = vmatprep.mubr.bf16.mxu0 0
      %1195 = vmatmul.mubr.bf16.gmra.mrb[0].mxu0 %v1148
      %v1196 = vpop.f32.mrb[0].mxu0
      %v1197 = vadd.f32 0.0, %v1196
      %v1198 = vpop.f32.mrb[0].mxu0
      %v1199 = vpop.f32.mrb[0].mxu0
      %v1200 = vadd.f32 0.0, %v1199
      %v1201 = vpop.f32.mrb[0].mxu0
      %1202 = vmatprep.mubr.bf16.mxu0 0
      %1203 = vmatmul.mubr.bf16.gmra.mrb[0].mxu0 %v1151
      %v1204 = vpop.f32.mrb[0].mxu0
      %v1205 = vadd.f32 0.0, %v1204
      %v1206 = vpop.f32.mrb[0].mxu0
      %v1207 = vpop.f32.mrb[0].mxu0
      %v1208 = vadd.f32 0.0, %v1207
      %v1209 = vpop.f32.mrb[0].mxu0
      %1210 = vmatprep.mubr.bf16.mxu0 0
      %1211 = vmatmul.mubr.bf16.gmra.mrb[0].mxu0 %v1154
      %v1212 = vpop.f32.mrb[0].mxu0
      %v1213 = vadd.f32 0.0, %v1212
      %v1214 = vpop.f32.mrb[0].mxu0
      %v1215 = vpop.f32.mrb[0].mxu0
      %v1216 = vadd.f32 0.0, %v1215
      %v1217 = vpop.f32.mrb[0].mxu0
      %1218 = vmatprep.mubr.bf16.mxu0 0
      %1219 = vmatmul.mubr.bf16.gmra.mrb[0].mxu0 %v1157
      %v1220 = vpop.f32.mrb[0].mxu0
      %v1221 = vadd.f32 0.0, %v1220
      %v1222 = vpop.f32.mrb[0].mxu0
      %v1223 = vpop.f32.mrb[0].mxu0
      %v1224 = vadd.f32 0.0, %v1223
      %v1225 = vpop.f32.mrb[0].mxu0
      %1226 = vdwg.mxu0
      %v1227 = vadd.f32 %v1127, %v1197
      %v1228 = vadd.f32 %v1128, %v1200
      %v1229 = vadd.f32 %v1129, %v1205
      %v1230 = vadd.f32 %v1130, %v1208
      %v1231 = vadd.f32 %v1131, %v1213
      %v1232 = vadd.f32 %v1132, %v1216
      %v1233 = vadd.f32 %v1133, %v1221
      %v1234 = vadd.f32 %v1134, %v1224
      %s1235 = scalar_lea.vmem %s3, 12
      %v1236 = vld [vmem:[%s1235] sm:$0x3]
      %v1238 = vunpack.c.l.b16 %v431
      %v1239 = vpack.c.b16 %v1238, %v933
      %v1241 = vsel %vm603, %v1239, 0
      %v1244 = vsel %vm616, %v1236, 0
      %1246 = vmatprep.subr.bf16.mxu0 0
      %1247 = vmatpush1.bf16.msra.mxu0 %v1244
      %1248 = vmatprep.subr.bf16.mxu0 0
      %1249 = vmatpush1.bf16.msra.mxu0 0
      %1250 = vmatprep.subr.bf16.mxu0 0
      %1251 = vmatpush1.bf16.msra.mxu0 0
      %1252 = vmatprep.subr.bf16.mxu0 0
      %1253 = vmatpush1.bf16.msra.mxu0 0
      %1254 = vmatprep.subr.bf16.mxu0 0
      %1255 = vmatpush1.bf16.msra.mxu0 0
      %1256 = vmatprep.subr.bf16.mxu0 0
      %1257 = vmatpush1.bf16.msra.mxu0 0
      %1258 = vmatprep.subr.bf16.mxu0 0
      %1259 = vmatpush1.bf16.msra.mxu0 0
      %1260 = vmatprep.subr.bf16.mxu0 0
      %1261 = vmatpush1.bf16.msra.mxu0 0
      %1262 = vmatprep.subr.bf16.mxu0 0
      %1263 = vmatpush1.bf16.msra.mxu0 0
      %1264 = vmatprep.subr.bf16.mxu0 0
      %1265 = vmatpush1.bf16.msra.mxu0 0
      %1266 = vmatprep.subr.bf16.mxu0 0
      %1267 = vmatpush1.bf16.msra.mxu0 0
      %1268 = vmatprep.subr.bf16.mxu0 0
      %1269 = vmatpush1.bf16.msra.mxu0 0
      %1270 = vmatprep.subr.bf16.mxu0 0
      %1271 = vmatpush1.bf16.msra.mxu0 0
      %1272 = vmatprep.subr.bf16.mxu0 0
      %1273 = vmatpush1.bf16.msra.mxu0 0
      %1274 = vmatprep.subr.bf16.mxu0 0
      %1275 = vmatpush1.bf16.msra.mxu0 0
      %1276 = vmatprep.subr.bf16.mxu0 0
      %1277 = vmatpush1.bf16.msra.mxu0 0
      %1278 = vmatprep.mubr.bf16.mxu0 0
      %1279 = vmatmul.mubr.bf16.gmra.mrb[0].mxu0 %v709
      %v1280 = vpop.f32.mrb[0].mxu0
      %v1281 = vadd.f32 0.0, %v1280
      %v1282 = vpop.f32.mrb[0].mxu0
      %v1283 = vpop.f32.mrb[0].mxu0
      %v1284 = vadd.f32 0.0, %v1283
      %v1285 = vpop.f32.mrb[0].mxu0
      %1286 = vmatprep.mubr.bf16.mxu0 0
      %1287 = vmatmul.mubr.bf16.gmra.mrb[0].mxu0 %v712
      %v1288 = vpop.f32.mrb[0].mxu0
      %v1289 = vadd.f32 0.0, %v1288
      %v1290 = vpop.f32.mrb[0].mxu0
      %v1291 = vpop.f32.mrb[0].mxu0
      %v1292 = vadd.f32 0.0, %v1291
      %v1293 = vpop.f32.mrb[0].mxu0
      %1294 = vmatprep.mubr.bf16.mxu0 0
      %1295 = vmatmul.mubr.bf16.gmra.mrb[0].mxu0 %v715
      %v1296 = vpop.f32.mrb[0].mxu0
      %v1297 = vadd.f32 0.0, %v1296
      %v1298 = vpop.f32.mrb[0].mxu0
      %v1299 = vpop.f32.mrb[0].mxu0
      %v1300 = vadd.f32 0.0, %v1299
      %v1301 = vpop.f32.mrb[0].mxu0
      %1302 = vmatprep.mubr.bf16.mxu0 0
      %1303 = vmatmul.mubr.bf16.gmra.mrb[0].mxu0 %v1241
      %v1304 = vpop.f32.mrb[0].mxu0
      %v1305 = vadd.f32 0.0, %v1304
      %v1306 = vpop.f32.mrb[0].mxu0
      %v1307 = vpop.f32.mrb[0].mxu0
      %v1308 = vadd.f32 0.0, %v1307
      %v1309 = vpop.f32.mrb[0].mxu0
      %1310 = vdwg.mxu0
      %v1311 = vadd.f32 %v1227, %v1281
      %v1312 = vadd.f32 %v1228, %v1284
      %v1313 = vadd.f32 %v1229, %v1289
      %v1314 = vadd.f32 %v1230, %v1292
      %v1315 = vadd.f32 %v1231, %v1297
      %v1316 = vadd.f32 %v1232, %v1300
      %v1317 = vadd.f32 %v1233, %v1305
      %v1318 = vadd.f32 %v1234, %v1308
      %v1320 = vshrl.u32 %v431, 16
      %v1322 = vrot.slane %v1320, 4
      %v1323 = vshll.u32 %v431, 16
      %v1325 = vrot.slane %v1323, 5
      %v1326 = vor.u32 %v1322, %v1325
      %v1327 = vrot.slane %v1326, 4
      %v1329 = vshll.u32 %v432, 16
      %v1331 = vrot.slane %v1329, 5
      %v1332 = vsel %vm476, %v1327, %v1331
      %s1333 = scalar_lea.vmem %s3, 14
      %v1334 = vld [vmem:[%s1333] sm:$0x3]
      %v1335 = vunpack.c.l.b16 %v1332
      %v1336 = vpack.c.b16 %v1335, %v1042
      %v1338 = vsel %vm603, %v1336, 0
      %v1341 = vsel %vm616, %v1334, 0
      %1343 = vmatprep.subr.bf16.mxu0 0
      %1344 = vmatpush1.bf16.msra.mxu0 %v1341
      %1345 = vmatprep.subr.bf16.mxu0 0
      %1346 = vmatpush1.bf16.msra.mxu0 0
      %1347 = vmatprep.subr.bf16.mxu0 0
      %1348 = vmatpush1.bf16.msra.mxu0 0
      %1349 = vmatprep.subr.bf16.mxu0 0
      %1350 = vmatpush1.bf16.msra.mxu0 0
      %1351 = vmatprep.subr.bf16.mxu0 0
      %1352 = vmatpush1.bf16.msra.mxu0 0
      %1353 = vmatprep.subr.bf16.mxu0 0
      %1354 = vmatpush1.bf16.msra.mxu0 0
      %1355 = vmatprep.subr.bf16.mxu0 0
      %1356 = vmatpush1.bf16.msra.mxu0 0
      %1357 = vmatprep.subr.bf16.mxu0 0
      %1358 = vmatpush1.bf16.msra.mxu0 0
      %1359 = vmatprep.subr.bf16.mxu0 0
      %1360 = vmatpush1.bf16.msra.mxu0 0
      %1361 = vmatprep.subr.bf16.mxu0 0
      %1362 = vmatpush1.bf16.msra.mxu0 0
      %1363 = vmatprep.subr.bf16.mxu0 0
      %1364 = vmatpush1.bf16.msra.mxu0 0
      %1365 = vmatprep.subr.bf16.mxu0 0
      %1366 = vmatpush1.bf16.msra.mxu0 0
      %1367 = vmatprep.subr.bf16.mxu0 0
      %1368 = vmatpush1.bf16.msra.mxu0 0
      %1369 = vmatprep.subr.bf16.mxu0 0
      %1370 = vmatpush1.bf16.msra.mxu0 0
      %1371 = vmatprep.subr.bf16.mxu0 0
      %1372 = vmatpush1.bf16.msra.mxu0 0
      %1373 = vmatprep.subr.bf16.mxu0 0
      %1374 = vmatpush1.bf16.msra.mxu0 0
      %1375 = vmatprep.mubr.bf16.mxu0 0
      %1376 = vmatmul.mubr.bf16.gmra.mrb[0].mxu0 %v608
      %v1377 = vpop.f32.mrb[0].mxu0
      %v1378 = vadd.f32 0.0, %v1377
      %v1379 = vpop.f32.mrb[0].mxu0
      %v1380 = vpop.f32.mrb[0].mxu0
      %v1381 = vadd.f32 0.0, %v1380
      %v1382 = vpop.f32.mrb[0].mxu0
      %1383 = vmatprep.mubr.bf16.mxu0 0
      %1384 = vmatmul.mubr.bf16.gmra.mrb[0].mxu0 %v611
      %v1385 = vpop.f32.mrb[0].mxu0
      %v1386 = vadd.f32 0.0, %v1385
      %v1387 = vpop.f32.mrb[0].mxu0
      %v1388 = vpop.f32.mrb[0].mxu0
      %v1389 = vadd.f32 0.0, %v1388
      %v1390 = vpop.f32.mrb[0].mxu0
      %1391 = vmatprep.mubr.bf16.mxu0 0
      %1392 = vmatmul.mubr.bf16.gmra.mrb[0].mxu0 %v614
      %v1393 = vpop.f32.mrb[0].mxu0
      %v1394 = vadd.f32 0.0, %v1393
      %v1395 = vpop.f32.mrb[0].mxu0
      %v1396 = vpop.f32.mrb[0].mxu0
      %v1397 = vadd.f32 0.0, %v1396
      %v1398 = vpop.f32.mrb[0].mxu0
      %1399 = vmatprep.mubr.bf16.mxu0 0
      %1400 = vmatmul.mubr.bf16.gmra.mrb[0].mxu0 %v1338
      %v1401 = vpop.f32.mrb[0].mxu0
      %v1402 = vadd.f32 0.0, %v1401
      %v1403 = vpop.f32.mrb[0].mxu0
      %v1404 = vpop.f32.mrb[0].mxu0
      %v1405 = vadd.f32 0.0, %v1404
      %v1406 = vpop.f32.mrb[0].mxu0
      %1407 = vdwg.mxu0
      %v1408 = vadd.f32 %v1311, %v1378
      %v1409 = vadd.f32 %v1312, %v1381
      %v1410 = vadd.f32 %v1313, %v1386
      %v1411 = vadd.f32 %v1314, %v1389
      %v1412 = vadd.f32 %v1315, %v1394
      %v1413 = vadd.f32 %v1316, %v1397
      %v1414 = vadd.f32 %v1317, %v1402
      %v1415 = vadd.f32 %v1318, %v1405
      %v1417 = vrot.slane %v431, 5
      %v1418 = vrot.slane %v1417, 4
      %v1419 = vrot.slane %v432, 5
      %v1420 = vsel %vm795, %v1418, %v1419
      %s1421 = scalar_lea.vmem %s3, 16
      %v1422 = vld [vmem:[%s1421] sm:$0x3]
      %v1423 = vunpack.c.l.b16 %v1420
      %v1424 = vpack.c.b16 %v1423, %v1142
      %v1426 = vsel %vm603, %v1424, 0
      %v1429 = vsel %vm616, %v1422, 0
      %1431 = vmatprep.subr.bf16.mxu0 0
      %1432 = vmatpush1.bf16.msra.mxu0 %v1429
      %1433 = vmatprep.subr.bf16.mxu0 0
      %1434 = vmatpush1.bf16.msra.mxu0 0
      %1435 = vmatprep.subr.bf16.mxu0 0
      %1436 = vmatpush1.bf16.msra.mxu0 0
      %1437 = vmatprep.subr.bf16.mxu0 0
      %1438 = vmatpush1.bf16.msra.mxu0 0
      %1439 = vmatprep.subr.bf16.mxu0 0
      %1440 = vmatpush1.bf16.msra.mxu0 0
      %1441 = vmatprep.subr.bf16.mxu0 0
      %1442 = vmatpush1.bf16.msra.mxu0 0
      %1443 = vmatprep.subr.bf16.mxu0 0
      %1444 = vmatpush1.bf16.msra.mxu0 0
      %1445 = vmatprep.subr.bf16.mxu0 0
      %1446 = vmatpush1.bf16.msra.mxu0 0
      %1447 = vmatprep.subr.bf16.mxu0 0
      %1448 = vmatpush1.bf16.msra.mxu0 0
      %1449 = vmatprep.subr.bf16.mxu0 0
      %1450 = vmatpush1.bf16.msra.mxu0 0
      %1451 = vmatprep.subr.bf16.mxu0 0
      %1452 = vmatpush1.bf16.msra.mxu0 0
      %1453 = vmatprep.subr.bf16.mxu0 0
      %1454 = vmatpush1.bf16.msra.mxu0 0
      %1455 = vmatprep.subr.bf16.mxu0 0
      %1456 = vmatpush1.bf16.msra.mxu0 0
      %1457 = vmatprep.subr.bf16.mxu0 0
      %1458 = vmatpush1.bf16.msra.mxu0 0
      %1459 = vmatprep.subr.bf16.mxu0 0
      %1460 = vmatpush1.bf16.msra.mxu0 0
      %1461 = vmatprep.subr.bf16.mxu0 0
      %1462 = vmatpush1.bf16.msra.mxu0 0
      %1463 = vmatprep.mubr.bf16.mxu0 0
      %1464 = vmatmul.mubr.bf16.gmra.mrb[0].mxu0 %v846
      %v1465 = vpop.f32.mrb[0].mxu0
      %v1466 = vadd.f32 0.0, %v1465
      %v1467 = vpop.f32.mrb[0].mxu0
      %v1468 = vpop.f32.mrb[0].mxu0
      %v1469 = vadd.f32 0.0, %v1468
      %v1470 = vpop.f32.mrb[0].mxu0
      %1471 = vmatprep.mubr.bf16.mxu0 0
      %1472 = vmatmul.mubr.bf16.gmra.mrb[0].mxu0 %v849
      %v1473 = vpop.f32.mrb[0].mxu0
      %v1474 = vadd.f32 0.0, %v1473
      %v1475 = vpop.f32.mrb[0].mxu0
      %v1476 = vpop.f32.mrb[0].mxu0
      %v1477 = vadd.f32 0.0, %v1476
      %v1478 = vpop.f32.mrb[0].mxu0
      %1479 = vmatprep.mubr.bf16.mxu0 0
      %1480 = vmatmul.mubr.bf16.gmra.mrb[0].mxu0 %v852
      %v1481 = vpop.f32.mrb[0].mxu0
      %v1482 = vadd.f32 0.0, %v1481
      %v1483 = vpop.f32.mrb[0].mxu0
      %v1484 = vpop.f32.mrb[0].mxu0
      %v1485 = vadd.f32 0.0, %v1484
      %v1486 = vpop.f32.mrb[0].mxu0
      %1487 = vmatprep.mubr.bf16.mxu0 0
      %1488 = vmatmul.mubr.bf16.gmra.mrb[0].mxu0 %v1426
      %v1489 = vpop.f32.mrb[0].mxu0
      %v1490 = vadd.f32 0.0, %v1489
      %v1491 = vpop.f32.mrb[0].mxu0
      %v1492 = vpop.f32.mrb[0].mxu0
      %v1493 = vadd.f32 0.0, %v1492
      %v1494 = vpop.f32.mrb[0].mxu0
      %1495 = vdwg.mxu0
      %v1496 = vadd.f32 %v1408, %v1466
      %v1497 = vadd.f32 %v1409, %v1469
      %v1498 = vadd.f32 %v1410, %v1474
      %v1499 = vadd.f32 %v1411, %v1477
      %v1500 = vadd.f32 %v1412, %v1482
      %v1501 = vadd.f32 %v1413, %v1485
      %v1502 = vadd.f32 %v1414, %v1490
      %v1503 = vadd.f32 %v1415, %v1493
      %s1504 = scalar_lea.vmem %s3, 18
      %v1505 = vld [vmem:[%s1504] sm:$0x3]
      %v1514 = vunpack.c.l.b16 %v433
      %v1515 = vunpack.c.l.b16 %v435
      %v1516 = vunpack.c.l.b16 %v437
      %v1517 = vunpack.c.l.b16 %v439
      %v1518 = vunpack.c.l.b16 %v441
      %v1519 = vunpack.c.l.b16 %v443
      %v1520 = vunpack.c.l.b16 %v445
      %v1521 = vunpack.c.l.b16 %v447
      %v1522 = vpack.c.b16 %v1515, %v1514
      %v1523 = vpack.c.b16 %v1517, %v1516
      %v1524 = vpack.c.b16 %v1519, %v1518
      %v1525 = vpack.c.b16 %v1521, %v1520
      %v1527 = vsel %vm603, %v1522, 0
      %v1530 = vsel %vm603, %v1523, 0
      %v1533 = vsel %vm603, %v1524, 0
      %v1536 = vsel %vm603, %v1525, 0
      %v1539 = vsel %vm616, %v1505, 0
      %1541 = vmatprep.subr.bf16.mxu0 0
      %1542 = vmatpush1.bf16.msra.mxu0 %v1539
      %1543 = vmatprep.subr.bf16.mxu0 0
      %1544 = vmatpush1.bf16.msra.mxu0 0
      %1545 = vmatprep.subr.bf16.mxu0 0
      %1546 = vmatpush1.bf16.msra.mxu0 0
      %1547 = vmatprep.subr.bf16.mxu0 0
      %1548 = vmatpush1.bf16.msra.mxu0 0
      %1549 = vmatprep.subr.bf16.mxu0 0
      %1550 = vmatpush1.bf16.msra.mxu0 0
      %1551 = vmatprep.subr.bf16.mxu0 0
      %1552 = vmatpush1.bf16.msra.mxu0 0
      %1553 = vmatprep.subr.bf16.mxu0 0
      %1554 = vmatpush1.bf16.msra.mxu0 0
      %1555 = vmatprep.subr.bf16.mxu0 0
      %1556 = vmatpush1.bf16.msra.mxu0 0
      %1557 = vmatprep.subr.bf16.mxu0 0
      %1558 = vmatpush1.bf16.msra.mxu0 0
      %1559 = vmatprep.subr.bf16.mxu0 0
      %1560 = vmatpush1.bf16.msra.mxu0 0
      %1561 = vmatprep.subr.bf16.mxu0 0
      %1562 = vmatpush1.bf16.msra.mxu0 0
      %1563 = vmatprep.subr.bf16.mxu0 0
      %1564 = vmatpush1.bf16.msra.mxu0 0
      %1565 = vmatprep.subr.bf16.mxu0 0
      %1566 = vmatpush1.bf16.msra.mxu0 0
      %1567 = vmatprep.subr.bf16.mxu0 0
      %1568 = vmatpush1.bf16.msra.mxu0 0
      %1569 = vmatprep.subr.bf16.mxu0 0
      %1570 = vmatpush1.bf16.msra.mxu0 0
      %1571 = vmatprep.subr.bf16.mxu0 0
      %1572 = vmatpush1.bf16.msra.mxu0 0
      %1573 = vmatprep.mubr.bf16.mxu0 0
      %1574 = vmatmul.mubr.bf16.gmra.mrb[0].mxu0 %v1527
      %v1575 = vpop.f32.mrb[0].mxu0
      %v1576 = vadd.f32 0.0, %v1575
      %v1577 = vpop.f32.mrb[0].mxu0
      %v1578 = vpop.f32.mrb[0].mxu0
      %v1579 = vadd.f32 0.0, %v1578
      %v1580 = vpop.f32.mrb[0].mxu0
      %1581 = vmatprep.mubr.bf16.mxu0 0
      %1582 = vmatmul.mubr.bf16.gmra.mrb[0].mxu0 %v1530
      %v1583 = vpop.f32.mrb[0].mxu0
      %v1584 = vadd.f32 0.0, %v1583
      %v1585 = vpop.f32.mrb[0].mxu0
      %v1586 = vpop.f32.mrb[0].mxu0
      %v1587 = vadd.f32 0.0, %v1586
      %v1588 = vpop.f32.mrb[0].mxu0
      %1589 = vmatprep.mubr.bf16.mxu0 0
      %1590 = vmatmul.mubr.bf16.gmra.mrb[0].mxu0 %v1533
      %v1591 = vpop.f32.mrb[0].mxu0
      %v1592 = vadd.f32 0.0, %v1591
      %v1593 = vpop.f32.mrb[0].mxu0
      %v1594 = vpop.f32.mrb[0].mxu0
      %v1595 = vadd.f32 0.0, %v1594
      %v1596 = vpop.f32.mrb[0].mxu0
      %1597 = vmatprep.mubr.bf16.mxu0 0
      %1598 = vmatmul.mubr.bf16.gmra.mrb[0].mxu0 %v1536
      %v1599 = vpop.f32.mrb[0].mxu0
      %v1600 = vadd.f32 0.0, %v1599
      %v1601 = vpop.f32.mrb[0].mxu0
      %v1602 = vpop.f32.mrb[0].mxu0
      %v1603 = vadd.f32 0.0, %v1602
      %v1604 = vpop.f32.mrb[0].mxu0
      %1605 = vdwg.mxu0
      %v1606 = vadd.f32 %v1496, %v1576
      %v1607 = vadd.f32 %v1497, %v1579
      %v1608 = vadd.f32 %v1498, %v1584
      %v1609 = vadd.f32 %v1499, %v1587
      %v1610 = vadd.f32 %v1500, %v1592
      %v1611 = vadd.f32 %v1501, %v1595
      %v1612 = vadd.f32 %v1502, %v1600
      %v1613 = vadd.f32 %v1503, %v1603
      %v1615 = vshrl.u32 %v433, 16
      %v1617 = vrot.slane %v1615, 4
      %v1618 = vshll.u32 %v433, 16
      %v1620 = vrot.slane %v1618, 5
      %v1621 = vor.u32 %v1617, %v1620
      %v1622 = vrot.slane %v1621, 4
      %v1624 = vshll.u32 %v434, 16
      %v1626 = vrot.slane %v1624, 5
      %v1627 = vsel %vm476, %v1622, %v1626
      %v1629 = vshrl.u32 %v435, 16
      %v1631 = vrot.slane %v1629, 4
      %v1632 = vshll.u32 %v435, 16
      %v1634 = vrot.slane %v1632, 5
      %v1635 = vor.u32 %v1631, %v1634
      %v1636 = vrot.slane %v1635, 4
      %v1638 = vshll.u32 %v436, 16
      %v1640 = vrot.slane %v1638, 5
      %v1641 = vsel %vm476, %v1636, %v1640
      %v1643 = vshrl.u32 %v437, 16
      %v1645 = vrot.slane %v1643, 4
      %v1646 = vshll.u32 %v437, 16
      %v1648 = vrot.slane %v1646, 5
      %v1649 = vor.u32 %v1645, %v1648
      %v1650 = vrot.slane %v1649, 4
      %v1652 = vshll.u32 %v438, 16
      %v1654 = vrot.slane %v1652, 5
      %v1655 = vsel %vm476, %v1650, %v1654
      %v1657 = vshrl.u32 %v439, 16
      %v1659 = vrot.slane %v1657, 4
      %v1660 = vshll.u32 %v439, 16
      %v1662 = vrot.slane %v1660, 5
      %v1663 = vor.u32 %v1659, %v1662
      %v1664 = vrot.slane %v1663, 4
      %v1666 = vshll.u32 %v440, 16
      %v1668 = vrot.slane %v1666, 5
      %v1669 = vsel %vm476, %v1664, %v1668
      %v1671 = vshrl.u32 %v441, 16
      %v1673 = vrot.slane %v1671, 4
      %v1674 = vshll.u32 %v441, 16
      %v1676 = vrot.slane %v1674, 5
      %v1677 = vor.u32 %v1673, %v1676
      %v1678 = vrot.slane %v1677, 4
      %v1680 = vshll.u32 %v442, 16
      %v1682 = vrot.slane %v1680, 5
      %v1683 = vsel %vm476, %v1678, %v1682
      %v1685 = vshrl.u32 %v443, 16
      %v1687 = vrot.slane %v1685, 4
      %v1688 = vshll.u32 %v443, 16
      %v1690 = vrot.slane %v1688, 5
      %v1691 = vor.u32 %v1687, %v1690
      %v1692 = vrot.slane %v1691, 4
      %v1694 = vshll.u32 %v444, 16
      %v1696 = vrot.slane %v1694, 5
      %v1697 = vsel %vm476, %v1692, %v1696
      %v1699 = vshrl.u32 %v445, 16
      %v1701 = vrot.slane %v1699, 4
      %v1702 = vshll.u32 %v445, 16
      %v1704 = vrot.slane %v1702, 5
      %v1705 = vor.u32 %v1701, %v1704
      %v1706 = vrot.slane %v1705, 4
      %v1708 = vshll.u32 %v446, 16
      %v1710 = vrot.slane %v1708, 5
      %v1711 = vsel %vm476, %v1706, %v1710
      %v1713 = vshrl.u32 %v447, 16
      %v1715 = vrot.slane %v1713, 4
      %v1716 = vshll.u32 %v447, 16
      %v1718 = vrot.slane %v1716, 5
      %v1719 = vor.u32 %v1715, %v1718
      %v1720 = vrot.slane %v1719, 4
      %v1722 = vshll.u32 %v448, 16
      %v1724 = vrot.slane %v1722, 5
      %v1725 = vsel %vm476, %v1720, %v1724
      %s1726 = scalar_lea.vmem %s3, 20
      %v1727 = vld [vmem:[%s1726] sm:$0x3]
      %v1728 = vunpack.c.l.b16 %v1627
      %v1729 = vunpack.c.l.b16 %v1641
      %v1730 = vunpack.c.l.b16 %v1655
      %v1731 = vunpack.c.l.b16 %v1669
      %v1732 = vunpack.c.l.b16 %v1683
      %v1733 = vunpack.c.l.b16 %v1697
      %v1734 = vunpack.c.l.b16 %v1711
      %v1735 = vunpack.c.l.b16 %v1725
      %v1736 = vpack.c.b16 %v1729, %v1728
      %v1737 = vpack.c.b16 %v1731, %v1730
      %v1738 = vpack.c.b16 %v1733, %v1732
      %v1739 = vpack.c.b16 %v1735, %v1734
      %v1741 = vsel %vm603, %v1736, 0
      %v1744 = vsel %vm603, %v1737, 0
      %v1747 = vsel %vm603, %v1738, 0
      %v1750 = vsel %vm603, %v1739, 0
      %v1753 = vsel %vm616, %v1727, 0
      %1755 = vmatprep.subr.bf16.mxu0 0
      %1756 = vmatpush1.bf16.msra.mxu0 %v1753
      %1757 = vmatprep.subr.bf16.mxu0 0
      %1758 = vmatpush1.bf16.msra.mxu0 0
      %1759 = vmatprep.subr.bf16.mxu0 0
      %1760 = vmatpush1.bf16.msra.mxu0 0
      %1761 = vmatprep.subr.bf16.mxu0 0
      %1762 = vmatpush1.bf16.msra.mxu0 0
      %1763 = vmatprep.subr.bf16.mxu0 0
      %1764 = vmatpush1.bf16.msra.mxu0 0
      %1765 = vmatprep.subr.bf16.mxu0 0
      %1766 = vmatpush1.bf16.msra.mxu0 0
      %1767 = vmatprep.subr.bf16.mxu0 0
      %1768 = vmatpush1.bf16.msra.mxu0 0
      %1769 = vmatprep.subr.bf16.mxu0 0
      %1770 = vmatpush1.bf16.msra.mxu0 0
      %1771 = vmatprep.subr.bf16.mxu0 0
      %1772 = vmatpush1.bf16.msra.mxu0 0
      %1773 = vmatprep.subr.bf16.mxu0 0
      %1774 = vmatpush1.bf16.msra.mxu0 0
      %1775 = vmatprep.subr.bf16.mxu0 0
      %1776 = vmatpush1.bf16.msra.mxu0 0
      %1777 = vmatprep.subr.bf16.mxu0 0
      %1778 = vmatpush1.bf16.msra.mxu0 0
      %1779 = vmatprep.subr.bf16.mxu0 0
      %1780 = vmatpush1.bf16.msra.mxu0 0
      %1781 = vmatprep.subr.bf16.mxu0 0
      %1782 = vmatpush1.bf16.msra.mxu0 0
      %1783 = vmatprep.subr.bf16.mxu0 0
      %1784 = vmatpush1.bf16.msra.mxu0 0
      %1785 = vmatprep.subr.bf16.mxu0 0
      %1786 = vmatpush1.bf16.msra.mxu0 0
      %1787 = vmatprep.mubr.bf16.mxu0 0
      %1788 = vmatmul.mubr.bf16.gmra.mrb[0].mxu0 %v1741
      %v1789 = vpop.f32.mrb[0].mxu0
      %v1790 = vadd.f32 0.0, %v1789
      %v1791 = vpop.f32.mrb[0].mxu0
      %v1792 = vpop.f32.mrb[0].mxu0
      %v1793 = vadd.f32 0.0, %v1792
      %v1794 = vpop.f32.mrb[0].mxu0
      %1795 = vmatprep.mubr.bf16.mxu0 0
      %1796 = vmatmul.mubr.bf16.gmra.mrb[0].mxu0 %v1744
      %v1797 = vpop.f32.mrb[0].mxu0
      %v1798 = vadd.f32 0.0, %v1797
      %v1799 = vpop.f32.mrb[0].mxu0
      %v1800 = vpop.f32.mrb[0].mxu0
      %v1801 = vadd.f32 0.0, %v1800
      %v1802 = vpop.f32.mrb[0].mxu0
      %1803 = vmatprep.mubr.bf16.mxu0 0
      %1804 = vmatmul.mubr.bf16.gmra.mrb[0].mxu0 %v1747
      %v1805 = vpop.f32.mrb[0].mxu0
      %v1806 = vadd.f32 0.0, %v1805
      %v1807 = vpop.f32.mrb[0].mxu0
      %v1808 = vpop.f32.mrb[0].mxu0
      %v1809 = vadd.f32 0.0, %v1808
      %v1810 = vpop.f32.mrb[0].mxu0
      %1811 = vmatprep.mubr.bf16.mxu0 0
      %1812 = vmatmul.mubr.bf16.gmra.mrb[0].mxu0 %v1750
      %v1813 = vpop.f32.mrb[0].mxu0
      %v1814 = vadd.f32 0.0, %v1813
      %v1815 = vpop.f32.mrb[0].mxu0
      %v1816 = vpop.f32.mrb[0].mxu0
      %v1817 = vadd.f32 0.0, %v1816
      %v1818 = vpop.f32.mrb[0].mxu0
      %1819 = vdwg.mxu0
      %v1820 = vadd.f32 %v1606, %v1790
      %v1821 = vadd.f32 %v1607, %v1793
      %v1822 = vadd.f32 %v1608, %v1798
      %v1823 = vadd.f32 %v1609, %v1801
      %v1824 = vadd.f32 %v1610, %v1806
      %v1825 = vadd.f32 %v1611, %v1809
      %v1826 = vadd.f32 %v1612, %v1814
      %v1827 = vadd.f32 %v1613, %v1817
      %v1836 = vrot.slane %v433, 5
      %v1837 = vrot.slane %v1836, 4
      %v1838 = vrot.slane %v434, 5
      %v1839 = vsel %vm795, %v1837, %v1838
      %v1840 = vrot.slane %v435, 5
      %v1841 = vrot.slane %v1840, 4
      %v1842 = vrot.slane %v436, 5
      %v1843 = vsel %vm795, %v1841, %v1842
      %v1844 = vrot.slane %v437, 5
      %v1845 = vrot.slane %v1844, 4
      %v1846 = vrot.slane %v438, 5
      %v1847 = vsel %vm795, %v1845, %v1846
      %v1848 = vrot.slane %v439, 5
      %v1849 = vrot.slane %v1848, 4
      %v1850 = vrot.slane %v440, 5
      %v1851 = vsel %vm795, %v1849, %v1850
      %v1852 = vrot.slane %v441, 5
      %v1853 = vrot.slane %v1852, 4
      %v1854 = vrot.slane %v442, 5
      %v1855 = vsel %vm795, %v1853, %v1854
      %v1856 = vrot.slane %v443, 5
      %v1857 = vrot.slane %v1856, 4
      %v1858 = vrot.slane %v444, 5
      %v1859 = vsel %vm795, %v1857, %v1858
      %v1860 = vrot.slane %v445, 5
      %v1861 = vrot.slane %v1860, 4
      %v1862 = vrot.slane %v446, 5
      %v1863 = vsel %vm795, %v1861, %v1862
      %v1864 = vrot.slane %v447, 5
      %v1865 = vrot.slane %v1864, 4
      %v1866 = vrot.slane %v448, 5
      %v1867 = vsel %vm795, %v1865, %v1866
      %s1868 = scalar_lea.vmem %s3, 22
      %v1869 = vld [vmem:[%s1868] sm:$0x3]
      %v1870 = vunpack.c.l.b16 %v1839
      %v1871 = vunpack.c.l.b16 %v1843
      %v1872 = vunpack.c.l.b16 %v1847
      %v1873 = vunpack.c.l.b16 %v1851
      %v1874 = vunpack.c.l.b16 %v1855
      %v1875 = vunpack.c.l.b16 %v1859
      %v1876 = vunpack.c.l.b16 %v1863
      %v1877 = vunpack.c.l.b16 %v1867
      %v1878 = vpack.c.b16 %v1871, %v1870
      %v1879 = vpack.c.b16 %v1873, %v1872
      %v1880 = vpack.c.b16 %v1875, %v1874
      %v1881 = vpack.c.b16 %v1877, %v1876
      %v1883 = vsel %vm603, %v1878, 0
      %v1886 = vsel %vm603, %v1879, 0
      %v1889 = vsel %vm603, %v1880, 0
      %v1892 = vsel %vm603, %v1881, 0
      %v1895 = vsel %vm616, %v1869, 0
      %1897 = vmatprep.subr.bf16.mxu0 0
      %1898 = vmatpush1.bf16.msra.mxu0 %v1895
      %1899 = vmatprep.subr.bf16.mxu0 0
      %1900 = vmatpush1.bf16.msra.mxu0 0
      %1901 = vmatprep.subr.bf16.mxu0 0
      %1902 = vmatpush1.bf16.msra.mxu0 0
      %1903 = vmatprep.subr.bf16.mxu0 0
      %1904 = vmatpush1.bf16.msra.mxu0 0
      %1905 = vmatprep.subr.bf16.mxu0 0
      %1906 = vmatpush1.bf16.msra.mxu0 0
      %1907 = vmatprep.subr.bf16.mxu0 0
      %1908 = vmatpush1.bf16.msra.mxu0 0
      %1909 = vmatprep.subr.bf16.mxu0 0
      %1910 = vmatpush1.bf16.msra.mxu0 0
      %1911 = vmatprep.subr.bf16.mxu0 0
      %1912 = vmatpush1.bf16.msra.mxu0 0
      %1913 = vmatprep.subr.bf16.mxu0 0
      %1914 = vmatpush1.bf16.msra.mxu0 0
      %1915 = vmatprep.subr.bf16.mxu0 0
      %1916 = vmatpush1.bf16.msra.mxu0 0
      %1917 = vmatprep.subr.bf16.mxu0 0
      %1918 = vmatpush1.bf16.msra.mxu0 0
      %1919 = vmatprep.subr.bf16.mxu0 0
      %1920 = vmatpush1.bf16.msra.mxu0 0
      %1921 = vmatprep.subr.bf16.mxu0 0
      %1922 = vmatpush1.bf16.msra.mxu0 0
      %1923 = vmatprep.subr.bf16.mxu0 0
      %1924 = vmatpush1.bf16.msra.mxu0 0
      %1925 = vmatprep.subr.bf16.mxu0 0
      %1926 = vmatpush1.bf16.msra.mxu0 0
      %1927 = vmatprep.subr.bf16.mxu0 0
      %1928 = vmatpush1.bf16.msra.mxu0 0
      %1929 = vmatprep.mubr.bf16.mxu0 0
      %1930 = vmatmul.mubr.bf16.gmra.mrb[0].mxu0 %v1883
      %v1931 = vpop.f32.mrb[0].mxu0
      %v1932 = vadd.f32 0.0, %v1931
      %v1933 = vpop.f32.mrb[0].mxu0
      %v1934 = vpop.f32.mrb[0].mxu0
      %v1935 = vadd.f32 0.0, %v1934
      %v1936 = vpop.f32.mrb[0].mxu0
      %1937 = vmatprep.mubr.bf16.mxu0 0
      %1938 = vmatmul.mubr.bf16.gmra.mrb[0].mxu0 %v1886
      %v1939 = vpop.f32.mrb[0].mxu0
      %v1940 = vadd.f32 0.0, %v1939
      %v1941 = vpop.f32.mrb[0].mxu0
      %v1942 = vpop.f32.mrb[0].mxu0
      %v1943 = vadd.f32 0.0, %v1942
      %v1944 = vpop.f32.mrb[0].mxu0
      %1945 = vmatprep.mubr.bf16.mxu0 0
      %1946 = vmatmul.mubr.bf16.gmra.mrb[0].mxu0 %v1889
      %v1947 = vpop.f32.mrb[0].mxu0
      %v1948 = vadd.f32 0.0, %v1947
      %v1949 = vpop.f32.mrb[0].mxu0
      %v1950 = vpop.f32.mrb[0].mxu0
      %v1951 = vadd.f32 0.0, %v1950
      %v1952 = vpop.f32.mrb[0].mxu0
      %1953 = vmatprep.mubr.bf16.mxu0 0
      %1954 = vmatmul.mubr.bf16.gmra.mrb[0].mxu0 %v1892
      %v1955 = vpop.f32.mrb[0].mxu0
      %v1956 = vadd.f32 0.0, %v1955
      %v1957 = vpop.f32.mrb[0].mxu0
      %v1958 = vpop.f32.mrb[0].mxu0
      %v1959 = vadd.f32 0.0, %v1958
      %v1960 = vpop.f32.mrb[0].mxu0
      %1961 = vdwg.mxu0
      %v1962 = vadd.f32 %v1820, %v1932
      %v1963 = vadd.f32 %v1821, %v1935
      %v1964 = vadd.f32 %v1822, %v1940
      %v1965 = vadd.f32 %v1823, %v1943
      %v1966 = vadd.f32 %v1824, %v1948
      %v1967 = vadd.f32 %v1825, %v1951
      %v1968 = vadd.f32 %v1826, %v1956
      %v1969 = vadd.f32 %v1827, %v1959
      %s1970 = scalar_lea.vmem %s3, 24
      %v1971 = vld [vmem:[%s1970] sm:$0x3]
      %v1973 = vunpack.c.l.b16 %v449
      %v1974 = vpack.c.b16 %v1516, %v1515
      %v1975 = vpack.c.b16 %v1518, %v1517
      %v1976 = vpack.c.b16 %v1520, %v1519
      %v1977 = vpack.c.b16 %v1973, %v1521
      %v1979 = vsel %vm603, %v1974, 0
      %v1982 = vsel %vm603, %v1975, 0
      %v1985 = vsel %vm603, %v1976, 0
      %v1988 = vsel %vm603, %v1977, 0
      %v1991 = vsel %vm616, %v1971, 0
      %1993 = vmatprep.subr.bf16.mxu0 0
      %1994 = vmatpush1.bf16.msra.mxu0 %v1991
      %1995 = vmatprep.subr.bf16.mxu0 0
      %1996 = vmatpush1.bf16.msra.mxu0 0
      %1997 = vmatprep.subr.bf16.mxu0 0
      %1998 = vmatpush1.bf16.msra.mxu0 0
      %1999 = vmatprep.subr.bf16.mxu0 0
      %2000 = vmatpush1.bf16.msra.mxu0 0
      %2001 = vmatprep.subr.bf16.mxu0 0
      %2002 = vmatpush1.bf16.msra.mxu0 0
      %2003 = vmatprep.subr.bf16.mxu0 0
      %2004 = vmatpush1.bf16.msra.mxu0 0
      %2005 = vmatprep.subr.bf16.mxu0 0
      %2006 = vmatpush1.bf16.msra.mxu0 0
      %2007 = vmatprep.subr.bf16.mxu0 0
      %2008 = vmatpush1.bf16.msra.mxu0 0
      %2009 = vmatprep.subr.bf16.mxu0 0
      %2010 = vmatpush1.bf16.msra.mxu0 0
      %2011 = vmatprep.subr.bf16.mxu0 0
      %2012 = vmatpush1.bf16.msra.mxu0 0
      %2013 = vmatprep.subr.bf16.mxu0 0
      %2014 = vmatpush1.bf16.msra.mxu0 0
      %2015 = vmatprep.subr.bf16.mxu0 0
      %2016 = vmatpush1.bf16.msra.mxu0 0
      %2017 = vmatprep.subr.bf16.mxu0 0
      %2018 = vmatpush1.bf16.msra.mxu0 0
      %2019 = vmatprep.subr.bf16.mxu0 0
      %2020 = vmatpush1.bf16.msra.mxu0 0
      %2021 = vmatprep.subr.bf16.mxu0 0
      %2022 = vmatpush1.bf16.msra.mxu0 0
      %2023 = vmatprep.subr.bf16.mxu0 0
      %2024 = vmatpush1.bf16.msra.mxu0 0
      %2025 = vmatprep.mubr.bf16.mxu0 0
      %2026 = vmatmul.mubr.bf16.gmra.mrb[0].mxu0 %v1979
      %v2027 = vpop.f32.mrb[0].mxu0
      %v2028 = vadd.f32 0.0, %v2027
      %v2029 = vpop.f32.mrb[0].mxu0
      %v2030 = vpop.f32.mrb[0].mxu0
      %v2031 = vadd.f32 0.0, %v2030
      %v2032 = vpop.f32.mrb[0].mxu0
      %2033 = vmatprep.mubr.bf16.mxu0 0
      %2034 = vmatmul.mubr.bf16.gmra.mrb[0].mxu0 %v1982
      %v2035 = vpop.f32.mrb[0].mxu0
      %v2036 = vadd.f32 0.0, %v2035
      %v2037 = vpop.f32.mrb[0].mxu0
      %v2038 = vpop.f32.mrb[0].mxu0
      %v2039 = vadd.f32 0.0, %v2038
      %v2040 = vpop.f32.mrb[0].mxu0
      %2041 = vmatprep.mubr.bf16.mxu0 0
      %2042 = vmatmul.mubr.bf16.gmra.mrb[0].mxu0 %v1985
      %v2043 = vpop.f32.mrb[0].mxu0
      %v2044 = vadd.f32 0.0, %v2043
      %v2045 = vpop.f32.mrb[0].mxu0
      %v2046 = vpop.f32.mrb[0].mxu0
      %v2047 = vadd.f32 0.0, %v2046
      %v2048 = vpop.f32.mrb[0].mxu0
      %2049 = vmatprep.mubr.bf16.mxu0 0
      %2050 = vmatmul.mubr.bf16.gmra.mrb[0].mxu0 %v1988
      %v2051 = vpop.f32.mrb[0].mxu0
      %v2052 = vadd.f32 0.0, %v2051
      %v2053 = vpop.f32.mrb[0].mxu0
      %v2054 = vpop.f32.mrb[0].mxu0
      %v2055 = vadd.f32 0.0, %v2054
      %v2056 = vpop.f32.mrb[0].mxu0
      %2057 = vdwg.mxu0
      %v2058 = vadd.f32 %v1962, %v2028
      %v2059 = vadd.f32 %v1963, %v2031
      %v2060 = vadd.f32 %v1964, %v2036
      %v2061 = vadd.f32 %v1965, %v2039
      %v2062 = vadd.f32 %v1966, %v2044
      %v2063 = vadd.f32 %v1967, %v2047
      %v2064 = vadd.f32 %v1968, %v2052
      %v2065 = vadd.f32 %v1969, %v2055
      %v2067 = vshrl.u32 %v449, 16
      %v2069 = vrot.slane %v2067, 4
      %v2070 = vshll.u32 %v449, 16
      %v2072 = vrot.slane %v2070, 5
      %v2073 = vor.u32 %v2069, %v2072
      %v2074 = vrot.slane %v2073, 4
      %v2076 = vshll.u32 %v450, 16
      %v2078 = vrot.slane %v2076, 5
      %v2079 = vsel %vm476, %v2074, %v2078
      %s2080 = scalar_lea.vmem %s3, 26
      %v2081 = vld [vmem:[%s2080] sm:$0x3]
      %v2082 = vunpack.c.l.b16 %v2079
      %v2083 = vpack.c.b16 %v1730, %v1729
      %v2084 = vpack.c.b16 %v1732, %v1731
      %v2085 = vpack.c.b16 %v1734, %v1733
      %v2086 = vpack.c.b16 %v2082, %v1735
      %v2088 = vsel %vm603, %v2083, 0
      %v2091 = vsel %vm603, %v2084, 0
      %v2094 = vsel %vm603, %v2085, 0
      %v2097 = vsel %vm603, %v2086, 0
      %v2100 = vsel %vm616, %v2081, 0
      %2102 = vmatprep.subr.bf16.mxu0 0
      %2103 = vmatpush1.bf16.msra.mxu0 %v2100
      %2104 = vmatprep.subr.bf16.mxu0 0
      %2105 = vmatpush1.bf16.msra.mxu0 0
      %2106 = vmatprep.subr.bf16.mxu0 0
      %2107 = vmatpush1.bf16.msra.mxu0 0
      %2108 = vmatprep.subr.bf16.mxu0 0
      %2109 = vmatpush1.bf16.msra.mxu0 0
      %2110 = vmatprep.subr.bf16.mxu0 0
      %2111 = vmatpush1.bf16.msra.mxu0 0
      %2112 = vmatprep.subr.bf16.mxu0 0
      %2113 = vmatpush1.bf16.msra.mxu0 0
      %2114 = vmatprep.subr.bf16.mxu0 0
      %2115 = vmatpush1.bf16.msra.mxu0 0
      %2116 = vmatprep.subr.bf16.mxu0 0
      %2117 = vmatpush1.bf16.msra.mxu0 0
      %2118 = vmatprep.subr.bf16.mxu0 0
      %2119 = vmatpush1.bf16.msra.mxu0 0
      %2120 = vmatprep.subr.bf16.mxu0 0
      %2121 = vmatpush1.bf16.msra.mxu0 0
      %2122 = vmatprep.subr.bf16.mxu0 0
      %2123 = vmatpush1.bf16.msra.mxu0 0
      %2124 = vmatprep.subr.bf16.mxu0 0
      %2125 = vmatpush1.bf16.msra.mxu0 0
      %2126 = vmatprep.subr.bf16.mxu0 0
      %2127 = vmatpush1.bf16.msra.mxu0 0
      %2128 = vmatprep.subr.bf16.mxu0 0
      %2129 = vmatpush1.bf16.msra.mxu0 0
      %2130 = vmatprep.subr.bf16.mxu0 0
      %2131 = vmatpush1.bf16.msra.mxu0 0
      %2132 = vmatprep.subr.bf16.mxu0 0
      %2133 = vmatpush1.bf16.msra.mxu0 0
      %2134 = vmatprep.mubr.bf16.mxu0 0
      %2135 = vmatmul.mubr.bf16.gmra.mrb[0].mxu0 %v2088
      %v2136 = vpop.f32.mrb[0].mxu0
      %v2137 = vadd.f32 0.0, %v2136
      %v2138 = vpop.f32.mrb[0].mxu0
      %v2139 = vpop.f32.mrb[0].mxu0
      %v2140 = vadd.f32 0.0, %v2139
      %v2141 = vpop.f32.mrb[0].mxu0
      %2142 = vmatprep.mubr.bf16.mxu0 0
      %2143 = vmatmul.mubr.bf16.gmra.mrb[0].mxu0 %v2091
      %v2144 = vpop.f32.mrb[0].mxu0
      %v2145 = vadd.f32 0.0, %v2144
      %v2146 = vpop.f32.mrb[0].mxu0
      %v2147 = vpop.f32.mrb[0].mxu0
      %v2148 = vadd.f32 0.0, %v2147
      %v2149 = vpop.f32.mrb[0].mxu0
      %2150 = vmatprep.mubr.bf16.mxu0 0
      %2151 = vmatmul.mubr.bf16.gmra.mrb[0].mxu0 %v2094
      %v2152 = vpop.f32.mrb[0].mxu0
      %v2153 = vadd.f32 0.0, %v2152
      %v2154 = vpop.f32.mrb[0].mxu0
      %v2155 = vpop.f32.mrb[0].mxu0
      %v2156 = vadd.f32 0.0, %v2155
      %v2157 = vpop.f32.mrb[0].mxu0
      %2158 = vmatprep.mubr.bf16.mxu0 0
      %2159 = vmatmul.mubr.bf16.gmra.mrb[0].mxu0 %v2097
      %v2160 = vpop.f32.mrb[0].mxu0
      %v2161 = vadd.f32 0.0, %v2160
      %v2162 = vpop.f32.mrb[0].mxu0
      %v2163 = vpop.f32.mrb[0].mxu0
      %v2164 = vadd.f32 0.0, %v2163
      %v2165 = vpop.f32.mrb[0].mxu0
      %2166 = vdwg.mxu0
      %v2167 = vadd.f32 %v2058, %v2137
      %v2168 = vadd.f32 %v2059, %v2140
      %v2169 = vadd.f32 %v2060, %v2145
      %v2170 = vadd.f32 %v2061, %v2148
      %v2171 = vadd.f32 %v2062, %v2153
      %v2172 = vadd.f32 %v2063, %v2156
      %v2173 = vadd.f32 %v2064, %v2161
      %v2174 = vadd.f32 %v2065, %v2164
      %v2176 = vrot.slane %v449, 5
      %v2177 = vrot.slane %v2176, 4
      %v2178 = vrot.slane %v450, 5
      %v2179 = vsel %vm795, %v2177, %v2178
      %s2180 = scalar_lea.vmem %s3, 28
      %v2181 = vld [vmem:[%s2180] sm:$0x3]
      %v2182 = vunpack.c.l.b16 %v2179
      %v2183 = vpack.c.b16 %v1872, %v1871
      %v2184 = vpack.c.b16 %v1874, %v1873
      %v2185 = vpack.c.b16 %v1876, %v1875
      %v2186 = vpack.c.b16 %v2182, %v1877
      %v2188 = vsel %vm603, %v2183, 0
      %v2191 = vsel %vm603, %v2184, 0
      %v2194 = vsel %vm603, %v2185, 0
      %v2197 = vsel %vm603, %v2186, 0
      %v2200 = vsel %vm616, %v2181, 0
      %2202 = vmatprep.subr.bf16.mxu0 0
      %2203 = vmatpush1.bf16.msra.mxu0 %v2200
      %2204 = vmatprep.subr.bf16.mxu0 0
      %2205 = vmatpush1.bf16.msra.mxu0 0
      %2206 = vmatprep.subr.bf16.mxu0 0
      %2207 = vmatpush1.bf16.msra.mxu0 0
      %2208 = vmatprep.subr.bf16.mxu0 0
      %2209 = vmatpush1.bf16.msra.mxu0 0
      %2210 = vmatprep.subr.bf16.mxu0 0
      %2211 = vmatpush1.bf16.msra.mxu0 0
      %2212 = vmatprep.subr.bf16.mxu0 0
      %2213 = vmatpush1.bf16.msra.mxu0 0
      %2214 = vmatprep.subr.bf16.mxu0 0
      %2215 = vmatpush1.bf16.msra.mxu0 0
      %2216 = vmatprep.subr.bf16.mxu0 0
      %2217 = vmatpush1.bf16.msra.mxu0 0
      %2218 = vmatprep.subr.bf16.mxu0 0
      %2219 = vmatpush1.bf16.msra.mxu0 0
      %2220 = vmatprep.subr.bf16.mxu0 0
      %2221 = vmatpush1.bf16.msra.mxu0 0
      %2222 = vmatprep.subr.bf16.mxu0 0
      %2223 = vmatpush1.bf16.msra.mxu0 0
      %2224 = vmatprep.subr.bf16.mxu0 0
      %2225 = vmatpush1.bf16.msra.mxu0 0
      %2226 = vmatprep.subr.bf16.mxu0 0
      %2227 = vmatpush1.bf16.msra.mxu0 0
      %2228 = vmatprep.subr.bf16.mxu0 0
      %2229 = vmatpush1.bf16.msra.mxu0 0
      %2230 = vmatprep.subr.bf16.mxu0 0
      %2231 = vmatpush1.bf16.msra.mxu0 0
      %2232 = vmatprep.subr.bf16.mxu0 0
      %2233 = vmatpush1.bf16.msra.mxu0 0
      %2234 = vmatprep.mubr.bf16.mxu0 0
      %2235 = vmatmul.mubr.bf16.gmra.mrb[0].mxu0 %v2188
      %v2236 = vpop.f32.mrb[0].mxu0
      %v2237 = vadd.f32 0.0, %v2236
      %v2238 = vpop.f32.mrb[0].mxu0
      %v2239 = vpop.f32.mrb[0].mxu0
      %v2240 = vadd.f32 0.0, %v2239
      %v2241 = vpop.f32.mrb[0].mxu0
      %2242 = vmatprep.mubr.bf16.mxu0 0
      %2243 = vmatmul.mubr.bf16.gmra.mrb[0].mxu0 %v2191
      %v2244 = vpop.f32.mrb[0].mxu0
      %v2245 = vadd.f32 0.0, %v2244
      %v2246 = vpop.f32.mrb[0].mxu0
      %v2247 = vpop.f32.mrb[0].mxu0
      %v2248 = vadd.f32 0.0, %v2247
      %v2249 = vpop.f32.mrb[0].mxu0
      %2250 = vmatprep.mubr.bf16.mxu0 0
      %2251 = vmatmul.mubr.bf16.gmra.mrb[0].mxu0 %v2194
      %v2252 = vpop.f32.mrb[0].mxu0
      %v2253 = vadd.f32 0.0, %v2252
      %v2254 = vpop.f32.mrb[0].mxu0
      %v2255 = vpop.f32.mrb[0].mxu0
      %v2256 = vadd.f32 0.0, %v2255
      %v2257 = vpop.f32.mrb[0].mxu0
      %2258 = vmatprep.mubr.bf16.mxu0 0
      %2259 = vmatmul.mubr.bf16.gmra.mrb[0].mxu0 %v2197
      %v2260 = vpop.f32.mrb[0].mxu0
      %v2261 = vadd.f32 0.0, %v2260
      %v2262 = vpop.f32.mrb[0].mxu0
      %v2263 = vpop.f32.mrb[0].mxu0
      %v2264 = vadd.f32 0.0, %v2263
      %v2265 = vpop.f32.mrb[0].mxu0
      %2266 = vdwg.mxu0
      %v2267 = vadd.f32 %v2167, %v2237
      %v2268 = vadd.f32 %v2168, %v2240
      %v2269 = vadd.f32 %v2169, %v2245
      %v2270 = vadd.f32 %v2170, %v2248
      %v2271 = vadd.f32 %v2171, %v2253
      %v2272 = vadd.f32 %v2172, %v2256
      %v2273 = vadd.f32 %v2173, %v2261
      %v2274 = vadd.f32 %v2174, %v2264
      %s2275 = scalar_lea.vmem %s3, 30
      %v2276 = vld [vmem:[%s2275] sm:$0x3]
      %v2278 = vunpack.c.l.b16 %v451
      %v2279 = vpack.c.b16 %v2278, %v1973
      %v2281 = vsel %vm603, %v2279, 0
      %v2284 = vsel %vm616, %v2276, 0
      %2286 = vmatprep.subr.bf16.mxu0 0
      %2287 = vmatpush1.bf16.msra.mxu0 %v2284
      %2288 = vmatprep.subr.bf16.mxu0 0
      %2289 = vmatpush1.bf16.msra.mxu0 0
      %2290 = vmatprep.subr.bf16.mxu0 0
      %2291 = vmatpush1.bf16.msra.mxu0 0
      %2292 = vmatprep.subr.bf16.mxu0 0
      %2293 = vmatpush1.bf16.msra.mxu0 0
      %2294 = vmatprep.subr.bf16.mxu0 0
      %2295 = vmatpush1.bf16.msra.mxu0 0
      %2296 = vmatprep.subr.bf16.mxu0 0
      %2297 = vmatpush1.bf16.msra.mxu0 0
      %2298 = vmatprep.subr.bf16.mxu0 0
      %2299 = vmatpush1.bf16.msra.mxu0 0
      %2300 = vmatprep.subr.bf16.mxu0 0
      %2301 = vmatpush1.bf16.msra.mxu0 0
      %2302 = vmatprep.subr.bf16.mxu0 0
      %2303 = vmatpush1.bf16.msra.mxu0 0
      %2304 = vmatprep.subr.bf16.mxu0 0
      %2305 = vmatpush1.bf16.msra.mxu0 0
      %2306 = vmatprep.subr.bf16.mxu0 0
      %2307 = vmatpush1.bf16.msra.mxu0 0
      %2308 = vmatprep.subr.bf16.mxu0 0
      %2309 = vmatpush1.bf16.msra.mxu0 0
      %2310 = vmatprep.subr.bf16.mxu0 0
      %2311 = vmatpush1.bf16.msra.mxu0 0
      %2312 = vmatprep.subr.bf16.mxu0 0
      %2313 = vmatpush1.bf16.msra.mxu0 0
      %2314 = vmatprep.subr.bf16.mxu0 0
      %2315 = vmatpush1.bf16.msra.mxu0 0
      %2316 = vmatprep.subr.bf16.mxu0 0
      %2317 = vmatpush1.bf16.msra.mxu0 0
      %2318 = vmatprep.mubr.bf16.mxu0 0
      %2319 = vmatmul.mubr.bf16.gmra.mrb[0].mxu0 %v1530
      %v2320 = vpop.f32.mrb[0].mxu0
      %v2321 = vadd.f32 0.0, %v2320
      %v2322 = vpop.f32.mrb[0].mxu0
      %v2323 = vpop.f32.mrb[0].mxu0
      %v2324 = vadd.f32 0.0, %v2323
      %v2325 = vpop.f32.mrb[0].mxu0
      %2326 = vmatprep.mubr.bf16.mxu0 0
      %2327 = vmatmul.mubr.bf16.gmra.mrb[0].mxu0 %v1533
      %v2328 = vpop.f32.mrb[0].mxu0
      %v2329 = vadd.f32 0.0, %v2328
      %v2330 = vpop.f32.mrb[0].mxu0
      %v2331 = vpop.f32.mrb[0].mxu0
      %v2332 = vadd.f32 0.0, %v2331
      %v2333 = vpop.f32.mrb[0].mxu0
      %2334 = vmatprep.mubr.bf16.mxu0 0
      %2335 = vmatmul.mubr.bf16.gmra.mrb[0].mxu0 %v1536
      %v2336 = vpop.f32.mrb[0].mxu0
      %v2337 = vadd.f32 0.0, %v2336
      %v2338 = vpop.f32.mrb[0].mxu0
      %v2339 = vpop.f32.mrb[0].mxu0
      %v2340 = vadd.f32 0.0, %v2339
      %v2341 = vpop.f32.mrb[0].mxu0
      %2342 = vmatprep.mubr.bf16.mxu0 0
      %2343 = vmatmul.mubr.bf16.gmra.mrb[0].mxu0 %v2281
      %v2344 = vpop.f32.mrb[0].mxu0
      %v2345 = vadd.f32 0.0, %v2344
      %v2346 = vpop.f32.mrb[0].mxu0
      %v2347 = vpop.f32.mrb[0].mxu0
      %v2348 = vadd.f32 0.0, %v2347
      %v2349 = vpop.f32.mrb[0].mxu0
      %2350 = vdwg.mxu0
      %v2351 = vadd.f32 %v2267, %v2321
      %v2352 = vadd.f32 %v2268, %v2324
      %v2353 = vadd.f32 %v2269, %v2329
      %v2354 = vadd.f32 %v2270, %v2332
      %v2355 = vadd.f32 %v2271, %v2337
      %v2356 = vadd.f32 %v2272, %v2340
      %v2357 = vadd.f32 %v2273, %v2345
      %v2358 = vadd.f32 %v2274, %v2348
      %v2360 = vshrl.u32 %v451, 16
      %v2362 = vrot.slane %v2360, 4
      %v2363 = vshll.u32 %v451, 16
      %v2365 = vrot.slane %v2363, 5
      %v2366 = vor.u32 %v2362, %v2365
      %v2367 = vrot.slane %v2366, 4
      %v2369 = vshll.u32 %v452, 16
      %v2371 = vrot.slane %v2369, 5
      %v2372 = vsel %vm476, %v2367, %v2371
      %s2373 = scalar_lea.vmem %s3, 32
      %v2374 = vld [vmem:[%s2373] sm:$0x3]
      %v2375 = vunpack.c.l.b16 %v2372
      %v2376 = vpack.c.b16 %v2375, %v2082
      %v2378 = vsel %vm603, %v2376, 0
      %v2381 = vsel %vm616, %v2374, 0
      %2383 = vmatprep.subr.bf16.mxu0 0
      %2384 = vmatpush1.bf16.msra.mxu0 %v2381
      %2385 = vmatprep.subr.bf16.mxu0 0
      %2386 = vmatpush1.bf16.msra.mxu0 0
      %2387 = vmatprep.subr.bf16.mxu0 0
      %2388 = vmatpush1.bf16.msra.mxu0 0
      %2389 = vmatprep.subr.bf16.mxu0 0
      %2390 = vmatpush1.bf16.msra.mxu0 0
      %2391 = vmatprep.subr.bf16.mxu0 0
      %2392 = vmatpush1.bf16.msra.mxu0 0
      %2393 = vmatprep.subr.bf16.mxu0 0
      %2394 = vmatpush1.bf16.msra.mxu0 0
      %2395 = vmatprep.subr.bf16.mxu0 0
      %2396 = vmatpush1.bf16.msra.mxu0 0
      %2397 = vmatprep.subr.bf16.mxu0 0
      %2398 = vmatpush1.bf16.msra.mxu0 0
      %2399 = vmatprep.subr.bf16.mxu0 0
      %2400 = vmatpush1.bf16.msra.mxu0 0
      %2401 = vmatprep.subr.bf16.mxu0 0
      %2402 = vmatpush1.bf16.msra.mxu0 0
      %2403 = vmatprep.subr.bf16.mxu0 0
      %2404 = vmatpush1.bf16.msra.mxu0 0
      %2405 = vmatprep.subr.bf16.mxu0 0
      %2406 = vmatpush1.bf16.msra.mxu0 0
      %2407 = vmatprep.subr.bf16.mxu0 0
      %2408 = vmatpush1.bf16.msra.mxu0 0
      %2409 = vmatprep.subr.bf16.mxu0 0
      %2410 = vmatpush1.bf16.msra.mxu0 0
      %2411 = vmatprep.subr.bf16.mxu0 0
      %2412 = vmatpush1.bf16.msra.mxu0 0
      %2413 = vmatprep.subr.bf16.mxu0 0
      %2414 = vmatpush1.bf16.msra.mxu0 0
      %2415 = vmatprep.mubr.bf16.mxu0 0
      %2416 = vmatmul.mubr.bf16.gmra.mrb[0].mxu0 %v1744
      %v2417 = vpop.f32.mrb[0].mxu0
      %v2418 = vadd.f32 0.0, %v2417
      %v2419 = vpop.f32.mrb[0].mxu0
      %v2420 = vpop.f32.mrb[0].mxu0
      %v2421 = vadd.f32 0.0, %v2420
      %v2422 = vpop.f32.mrb[0].mxu0
      %2423 = vmatprep.mubr.bf16.mxu0 0
      %2424 = vmatmul.mubr.bf16.gmra.mrb[0].mxu0 %v1747
      %v2425 = vpop.f32.mrb[0].mxu0
      %v2426 = vadd.f32 0.0, %v2425
      %v2427 = vpop.f32.mrb[0].mxu0
      %v2428 = vpop.f32.mrb[0].mxu0
      %v2429 = vadd.f32 0.0, %v2428
      %v2430 = vpop.f32.mrb[0].mxu0
      %2431 = vmatprep.mubr.bf16.mxu0 0
      %2432 = vmatmul.mubr.bf16.gmra.mrb[0].mxu0 %v1750
      %v2433 = vpop.f32.mrb[0].mxu0
      %v2434 = vadd.f32 0.0, %v2433
      %v2435 = vpop.f32.mrb[0].mxu0
      %v2436 = vpop.f32.mrb[0].mxu0
      %v2437 = vadd.f32 0.0, %v2436
      %v2438 = vpop.f32.mrb[0].mxu0
      %2439 = vmatprep.mubr.bf16.mxu0 0
      %2440 = vmatmul.mubr.bf16.gmra.mrb[0].mxu0 %v2378
      %v2441 = vpop.f32.mrb[0].mxu0
      %v2442 = vadd.f32 0.0, %v2441
      %v2443 = vpop.f32.mrb[0].mxu0
      %v2444 = vpop.f32.mrb[0].mxu0
      %v2445 = vadd.f32 0.0, %v2444
      %v2446 = vpop.f32.mrb[0].mxu0
      %2447 = vdwg.mxu0
      %v2448 = vadd.f32 %v2351, %v2418
      %v2449 = vadd.f32 %v2352, %v2421
      %v2450 = vadd.f32 %v2353, %v2426
      %v2451 = vadd.f32 %v2354, %v2429
      %v2452 = vadd.f32 %v2355, %v2434
      %v2453 = vadd.f32 %v2356, %v2437
      %v2454 = vadd.f32 %v2357, %v2442
      %v2455 = vadd.f32 %v2358, %v2445
      %v2457 = vrot.slane %v451, 5
      %v2458 = vrot.slane %v2457, 4
      %v2459 = vrot.slane %v452, 5
      %v2460 = vsel %vm795, %v2458, %v2459
      %s2461 = scalar_lea.vmem %s3, 34
      %v2462 = vld [vmem:[%s2461] sm:$0x3]
      %v2463 = vunpack.c.l.b16 %v2460
      %v2464 = vpack.c.b16 %v2463, %v2182
      %v2466 = vsel %vm603, %v2464, 0
      %v2469 = vsel %vm616, %v2462, 0
      %2471 = vmatprep.subr.bf16.mxu0 0
      %2472 = vmatpush1.bf16.msra.mxu0 %v2469
      %2473 = vmatprep.subr.bf16.mxu0 0
      %2474 = vmatpush1.bf16.msra.mxu0 0
      %2475 = vmatprep.subr.bf16.mxu0 0
      %2476 = vmatpush1.bf16.msra.mxu0 0
      %2477 = vmatprep.subr.bf16.mxu0 0
      %2478 = vmatpush1.bf16.msra.mxu0 0
      %2479 = vmatprep.subr.bf16.mxu0 0
      %2480 = vmatpush1.bf16.msra.mxu0 0
      %2481 = vmatprep.subr.bf16.mxu0 0
      %2482 = vmatpush1.bf16.msra.mxu0 0
      %2483 = vmatprep.subr.bf16.mxu0 0
      %2484 = vmatpush1.bf16.msra.mxu0 0
      %2485 = vmatprep.subr.bf16.mxu0 0
      %2486 = vmatpush1.bf16.msra.mxu0 0
      %2487 = vmatprep.subr.bf16.mxu0 0
      %2488 = vmatpush1.bf16.msra.mxu0 0
      %2489 = vmatprep.subr.bf16.mxu0 0
      %2490 = vmatpush1.bf16.msra.mxu0 0
      %2491 = vmatprep.subr.bf16.mxu0 0
      %2492 = vmatpush1.bf16.msra.mxu0 0
      %2493 = vmatprep.subr.bf16.mxu0 0
      %2494 = vmatpush1.bf16.msra.mxu0 0
      %2495 = vmatprep.subr.bf16.mxu0 0
      %2496 = vmatpush1.bf16.msra.mxu0 0
      %2497 = vmatprep.subr.bf16.mxu0 0
      %2498 = vmatpush1.bf16.msra.mxu0 0
      %2499 = vmatprep.subr.bf16.mxu0 0
      %2500 = vmatpush1.bf16.msra.mxu0 0
      %2501 = vmatprep.subr.bf16.mxu0 0
      %2502 = vmatpush1.bf16.msra.mxu0 0
      %2503 = vmatprep.mubr.bf16.mxu0 0
      %2504 = vmatmul.mubr.bf16.gmra.mrb[0].mxu0 %v1886
      %v2505 = vpop.f32.mrb[0].mxu0
      %v2506 = vadd.f32 0.0, %v2505
      %v2507 = vpop.f32.mrb[0].mxu0
      %v2508 = vpop.f32.mrb[0].mxu0
      %v2509 = vadd.f32 0.0, %v2508
      %v2510 = vpop.f32.mrb[0].mxu0
      %2511 = vmatprep.mubr.bf16.mxu0 0
      %2512 = vmatmul.mubr.bf16.gmra.mrb[0].mxu0 %v1889
      %v2513 = vpop.f32.mrb[0].mxu0
      %v2514 = vadd.f32 0.0, %v2513
      %v2515 = vpop.f32.mrb[0].mxu0
      %v2516 = vpop.f32.mrb[0].mxu0
      %v2517 = vadd.f32 0.0, %v2516
      %v2518 = vpop.f32.mrb[0].mxu0
      %2519 = vmatprep.mubr.bf16.mxu0 0
      %2520 = vmatmul.mubr.bf16.gmra.mrb[0].mxu0 %v1892
      %v2521 = vpop.f32.mrb[0].mxu0
      %v2522 = vadd.f32 0.0, %v2521
      %v2523 = vpop.f32.mrb[0].mxu0
      %v2524 = vpop.f32.mrb[0].mxu0
      %v2525 = vadd.f32 0.0, %v2524
      %v2526 = vpop.f32.mrb[0].mxu0
      %2527 = vmatprep.mubr.bf16.mxu0 0
      %2528 = vmatmul.mubr.bf16.gmra.mrb[0].mxu0 %v2466
      %v2529 = vpop.f32.mrb[0].mxu0
      %v2530 = vadd.f32 0.0, %v2529
      %v2531 = vpop.f32.mrb[0].mxu0
      %v2532 = vpop.f32.mrb[0].mxu0
      %v2533 = vadd.f32 0.0, %v2532
      %v2534 = vpop.f32.mrb[0].mxu0
      %2535 = vdwg.mxu0
      %v2536 = vadd.f32 %v2448, %v2506
      %v2537 = vadd.f32 %v2449, %v2509
      %v2538 = vadd.f32 %v2450, %v2514
      %v2539 = vadd.f32 %v2451, %v2517
      %v2540 = vadd.f32 %v2452, %v2522
      %v2541 = vadd.f32 %v2453, %v2525
      %v2542 = vadd.f32 %v2454, %v2530
      %v2543 = vadd.f32 %v2455, %v2533
      %s2544 = scalar_lea.vmem %s3, 36
      %v2545 = vld [vmem:[%s2544] sm:$0x3]
      %v2554 = vunpack.c.l.b16 %v453
      %v2555 = vunpack.c.l.b16 %v455
      %v2556 = vunpack.c.l.b16 %v457
      %v2557 = vunpack.c.l.b16 %v459
      %v2558 = vunpack.c.l.b16 %v461
      %v2559 = vunpack.c.l.b16 %v463
      %v2560 = vunpack.c.l.b16 %v465
      %v2561 = vunpack.c.l.b16 %v467
      %v2562 = vpack.c.b16 %v2555, %v2554
      %v2563 = vpack.c.b16 %v2557, %v2556
      %v2564 = vpack.c.b16 %v2559, %v2558
      %v2565 = vpack.c.b16 %v2561, %v2560
      %v2567 = vsel %vm603, %v2562, 0
      %v2570 = vsel %vm603, %v2563, 0
      %v2573 = vsel %vm603, %v2564, 0
      %v2576 = vsel %vm603, %v2565, 0
      %v2579 = vsel %vm616, %v2545, 0
      %2581 = vmatprep.subr.bf16.mxu0 0
      %2582 = vmatpush1.bf16.msra.mxu0 %v2579
      %2583 = vmatprep.subr.bf16.mxu0 0
      %2584 = vmatpush1.bf16.msra.mxu0 0
      %2585 = vmatprep.subr.bf16.mxu0 0
      %2586 = vmatpush1.bf16.msra.mxu0 0
      %2587 = vmatprep.subr.bf16.mxu0 0
      %2588 = vmatpush1.bf16.msra.mxu0 0
      %2589 = vmatprep.subr.bf16.mxu0 0
      %2590 = vmatpush1.bf16.msra.mxu0 0
      %2591 = vmatprep.subr.bf16.mxu0 0
      %2592 = vmatpush1.bf16.msra.mxu0 0
      %2593 = vmatprep.subr.bf16.mxu0 0
      %2594 = vmatpush1.bf16.msra.mxu0 0
      %2595 = vmatprep.subr.bf16.mxu0 0
      %2596 = vmatpush1.bf16.msra.mxu0 0
      %2597 = vmatprep.subr.bf16.mxu0 0
      %2598 = vmatpush1.bf16.msra.mxu0 0
      %2599 = vmatprep.subr.bf16.mxu0 0
      %2600 = vmatpush1.bf16.msra.mxu0 0
      %2601 = vmatprep.subr.bf16.mxu0 0
      %2602 = vmatpush1.bf16.msra.mxu0 0
      %2603 = vmatprep.subr.bf16.mxu0 0
      %2604 = vmatpush1.bf16.msra.mxu0 0
      %2605 = vmatprep.subr.bf16.mxu0 0
      %2606 = vmatpush1.bf16.msra.mxu0 0
      %2607 = vmatprep.subr.bf16.mxu0 0
      %2608 = vmatpush1.bf16.msra.mxu0 0
      %2609 = vmatprep.subr.bf16.mxu0 0
      %2610 = vmatpush1.bf16.msra.mxu0 0
      %2611 = vmatprep.subr.bf16.mxu0 0
      %2612 = vmatpush1.bf16.msra.mxu0 0
      %2613 = vmatprep.mubr.bf16.mxu0 0
      %2614 = vmatmul.mubr.bf16.gmra.mrb[0].mxu0 %v2567
      %v2615 = vpop.f32.mrb[0].mxu0
      %v2616 = vadd.f32 0.0, %v2615
      %v2617 = vpop.f32.mrb[0].mxu0
      %v2618 = vpop.f32.mrb[0].mxu0
      %v2619 = vadd.f32 0.0, %v2618
      %v2620 = vpop.f32.mrb[0].mxu0
      %2621 = vmatprep.mubr.bf16.mxu0 0
      %2622 = vmatmul.mubr.bf16.gmra.mrb[0].mxu0 %v2570
      %v2623 = vpop.f32.mrb[0].mxu0
      %v2624 = vadd.f32 0.0, %v2623
      %v2625 = vpop.f32.mrb[0].mxu0
      %v2626 = vpop.f32.mrb[0].mxu0
      %v2627 = vadd.f32 0.0, %v2626
      %v2628 = vpop.f32.mrb[0].mxu0
      %2629 = vmatprep.mubr.bf16.mxu0 0
      %2630 = vmatmul.mubr.bf16.gmra.mrb[0].mxu0 %v2573
      %v2631 = vpop.f32.mrb[0].mxu0
      %v2632 = vadd.f32 0.0, %v2631
      %v2633 = vpop.f32.mrb[0].mxu0
      %v2634 = vpop.f32.mrb[0].mxu0
      %v2635 = vadd.f32 0.0, %v2634
      %v2636 = vpop.f32.mrb[0].mxu0
      %2637 = vmatprep.mubr.bf16.mxu0 0
      %2638 = vmatmul.mubr.bf16.gmra.mrb[0].mxu0 %v2576
      %v2639 = vpop.f32.mrb[0].mxu0
      %v2640 = vadd.f32 0.0, %v2639
      %v2641 = vpop.f32.mrb[0].mxu0
      %v2642 = vpop.f32.mrb[0].mxu0
      %v2643 = vadd.f32 0.0, %v2642
      %v2644 = vpop.f32.mrb[0].mxu0
      %2645 = vdwg.mxu0
      %v2646 = vadd.f32 %v2536, %v2616
      %v2647 = vadd.f32 %v2537, %v2619
      %v2648 = vadd.f32 %v2538, %v2624
      %v2649 = vadd.f32 %v2539, %v2627
      %v2650 = vadd.f32 %v2540, %v2632
      %v2651 = vadd.f32 %v2541, %v2635
      %v2652 = vadd.f32 %v2542, %v2640
      %v2653 = vadd.f32 %v2543, %v2643
      %v2655 = vshrl.u32 %v453, 16
      %v2657 = vrot.slane %v2655, 4
      %v2658 = vshll.u32 %v453, 16
      %v2660 = vrot.slane %v2658, 5
      %v2661 = vor.u32 %v2657, %v2660
      %v2662 = vrot.slane %v2661, 4
      %v2664 = vshll.u32 %v454, 16
      %v2666 = vrot.slane %v2664, 5
      %v2667 = vsel %vm476, %v2662, %v2666
      %v2669 = vshrl.u32 %v455, 16
      %v2671 = vrot.slane %v2669, 4
      %v2672 = vshll.u32 %v455, 16
      %v2674 = vrot.slane %v2672, 5
      %v2675 = vor.u32 %v2671, %v2674
      %v2676 = vrot.slane %v2675, 4
      %v2678 = vshll.u32 %v456, 16
      %v2680 = vrot.slane %v2678, 5
      %v2681 = vsel %vm476, %v2676, %v2680
      %v2683 = vshrl.u32 %v457, 16
      %v2685 = vrot.slane %v2683, 4
      %v2686 = vshll.u32 %v457, 16
      %v2688 = vrot.slane %v2686, 5
      %v2689 = vor.u32 %v2685, %v2688
      %v2690 = vrot.slane %v2689, 4
      %v2692 = vshll.u32 %v458, 16
      %v2694 = vrot.slane %v2692, 5
      %v2695 = vsel %vm476, %v2690, %v2694
      %v2697 = vshrl.u32 %v459, 16
      %v2699 = vrot.slane %v2697, 4
      %v2700 = vshll.u32 %v459, 16
      %v2702 = vrot.slane %v2700, 5
      %v2703 = vor.u32 %v2699, %v2702
      %v2704 = vrot.slane %v2703, 4
      %v2706 = vshll.u32 %v460, 16
      %v2708 = vrot.slane %v2706, 5
      %v2709 = vsel %vm476, %v2704, %v2708
      %v2711 = vshrl.u32 %v461, 16
      %v2713 = vrot.slane %v2711, 4
      %v2714 = vshll.u32 %v461, 16
      %v2716 = vrot.slane %v2714, 5
      %v2717 = vor.u32 %v2713, %v2716
      %v2718 = vrot.slane %v2717, 4
      %v2720 = vshll.u32 %v462, 16
      %v2722 = vrot.slane %v2720, 5
      %v2723 = vsel %vm476, %v2718, %v2722
      %v2725 = vshrl.u32 %v463, 16
      %v2727 = vrot.slane %v2725, 4
      %v2728 = vshll.u32 %v463, 16
      %v2730 = vrot.slane %v2728, 5
      %v2731 = vor.u32 %v2727, %v2730
      %v2732 = vrot.slane %v2731, 4
      %v2734 = vshll.u32 %v464, 16
      %v2736 = vrot.slane %v2734, 5
      %v2737 = vsel %vm476, %v2732, %v2736
      %v2739 = vshrl.u32 %v465, 16
      %v2741 = vrot.slane %v2739, 4
      %v2742 = vshll.u32 %v465, 16
      %v2744 = vrot.slane %v2742, 5
      %v2745 = vor.u32 %v2741, %v2744
      %v2746 = vrot.slane %v2745, 4
      %v2748 = vshll.u32 %v466, 16
      %v2750 = vrot.slane %v2748, 5
      %v2751 = vsel %vm476, %v2746, %v2750
      %v2753 = vshrl.u32 %v467, 16
      %v2755 = vrot.slane %v2753, 4
      %v2756 = vshll.u32 %v467, 16
      %v2758 = vrot.slane %v2756, 5
      %v2759 = vor.u32 %v2755, %v2758
      %v2760 = vrot.slane %v2759, 4
      %v2762 = vshll.u32 %v468, 16
      %v2764 = vrot.slane %v2762, 5
      %v2765 = vsel %vm476, %v2760, %v2764
      %s2766 = scalar_lea.vmem %s3, 38
      %v2767 = vld [vmem:[%s2766] sm:$0x3]
      %v2768 = vunpack.c.l.b16 %v2667
      %v2769 = vunpack.c.l.b16 %v2681
      %v2770 = vunpack.c.l.b16 %v2695
      %v2771 = vunpack.c.l.b16 %v2709
      %v2772 = vunpack.c.l.b16 %v2723
      %v2773 = vunpack.c.l.b16 %v2737
      %v2774 = vunpack.c.l.b16 %v2751
      %v2775 = vunpack.c.l.b16 %v2765
      %v2776 = vpack.c.b16 %v2769, %v2768
      %v2777 = vpack.c.b16 %v2771, %v2770
      %v2778 = vpack.c.b16 %v2773, %v2772
      %v2779 = vpack.c.b16 %v2775, %v2774
      %v2781 = vsel %vm603, %v2776, 0
      %v2784 = vsel %vm603, %v2777, 0
      %v2787 = vsel %vm603, %v2778, 0
      %v2790 = vsel %vm603, %v2779, 0
      %v2793 = vsel %vm616, %v2767, 0
      %2795 = vmatprep.subr.bf16.mxu0 0
      %2796 = vmatpush1.bf16.msra.mxu0 %v2793
      %2797 = vmatprep.subr.bf16.mxu0 0
      %2798 = vmatpush1.bf16.msra.mxu0 0
      %2799 = vmatprep.subr.bf16.mxu0 0
      %2800 = vmatpush1.bf16.msra.mxu0 0
      %2801 = vmatprep.subr.bf16.mxu0 0
      %2802 = vmatpush1.bf16.msra.mxu0 0
      %2803 = vmatprep.subr.bf16.mxu0 0
      %2804 = vmatpush1.bf16.msra.mxu0 0
      %2805 = vmatprep.subr.bf16.mxu0 0
      %2806 = vmatpush1.bf16.msra.mxu0 0
      %2807 = vmatprep.subr.bf16.mxu0 0
      %2808 = vmatpush1.bf16.msra.mxu0 0
      %2809 = vmatprep.subr.bf16.mxu0 0
      %2810 = vmatpush1.bf16.msra.mxu0 0
      %2811 = vmatprep.subr.bf16.mxu0 0
      %2812 = vmatpush1.bf16.msra.mxu0 0
      %2813 = vmatprep.subr.bf16.mxu0 0
      %2814 = vmatpush1.bf16.msra.mxu0 0
      %2815 = vmatprep.subr.bf16.mxu0 0
      %2816 = vmatpush1.bf16.msra.mxu0 0
      %2817 = vmatprep.subr.bf16.mxu0 0
      %2818 = vmatpush1.bf16.msra.mxu0 0
      %2819 = vmatprep.subr.bf16.mxu0 0
      %2820 = vmatpush1.bf16.msra.mxu0 0
      %2821 = vmatprep.subr.bf16.mxu0 0
      %2822 = vmatpush1.bf16.msra.mxu0 0
      %2823 = vmatprep.subr.bf16.mxu0 0
      %2824 = vmatpush1.bf16.msra.mxu0 0
      %2825 = vmatprep.subr.bf16.mxu0 0
      %2826 = vmatpush1.bf16.msra.mxu0 0
      %2827 = vmatprep.mubr.bf16.mxu0 0
      %2828 = vmatmul.mubr.bf16.gmra.mrb[0].mxu0 %v2781
      %v2829 = vpop.f32.mrb[0].mxu0
      %v2830 = vadd.f32 0.0, %v2829
      %v2831 = vpop.f32.mrb[0].mxu0
      %v2832 = vpop.f32.mrb[0].mxu0
      %v2833 = vadd.f32 0.0, %v2832
      %v2834 = vpop.f32.mrb[0].mxu0
      %2835 = vmatprep.mubr.bf16.mxu0 0
      %2836 = vmatmul.mubr.bf16.gmra.mrb[0].mxu0 %v2784
      %v2837 = vpop.f32.mrb[0].mxu0
      %v2838 = vadd.f32 0.0, %v2837
      %v2839 = vpop.f32.mrb[0].mxu0
      %v2840 = vpop.f32.mrb[0].mxu0
      %v2841 = vadd.f32 0.0, %v2840
      %v2842 = vpop.f32.mrb[0].mxu0
      %2843 = vmatprep.mubr.bf16.mxu0 0
      %2844 = vmatmul.mubr.bf16.gmra.mrb[0].mxu0 %v2787
      %v2845 = vpop.f32.mrb[0].mxu0
      %v2846 = vadd.f32 0.0, %v2845
      %v2847 = vpop.f32.mrb[0].mxu0
      %v2848 = vpop.f32.mrb[0].mxu0
      %v2849 = vadd.f32 0.0, %v2848
      %v2850 = vpop.f32.mrb[0].mxu0
      %2851 = vmatprep.mubr.bf16.mxu0 0
      %2852 = vmatmul.mubr.bf16.gmra.mrb[0].mxu0 %v2790
      %v2853 = vpop.f32.mrb[0].mxu0
      %v2854 = vadd.f32 0.0, %v2853
      %v2855 = vpop.f32.mrb[0].mxu0
      %v2856 = vpop.f32.mrb[0].mxu0
      %v2857 = vadd.f32 0.0, %v2856
      %v2858 = vpop.f32.mrb[0].mxu0
      %2859 = vdwg.mxu0
      %v2860 = vadd.f32 %v2646, %v2830
      %v2861 = vadd.f32 %v2647, %v2833
      %v2862 = vadd.f32 %v2648, %v2838
      %v2863 = vadd.f32 %v2649, %v2841
      %v2864 = vadd.f32 %v2650, %v2846
      %v2865 = vadd.f32 %v2651, %v2849
      %v2866 = vadd.f32 %v2652, %v2854
      %v2867 = vadd.f32 %v2653, %v2857
      %v2876 = vrot.slane %v453, 5
      %v2877 = vrot.slane %v2876, 4
      %v2878 = vrot.slane %v454, 5
      %v2879 = vsel %vm795, %v2877, %v2878
      %v2880 = vrot.slane %v455, 5
      %v2881 = vrot.slane %v2880, 4
      %v2882 = vrot.slane %v456, 5
      %v2883 = vsel %vm795, %v2881, %v2882
      %v2884 = vrot.slane %v457, 5
      %v2885 = vrot.slane %v2884, 4
      %v2886 = vrot.slane %v458, 5
      %v2887 = vsel %vm795, %v2885, %v2886
      %v2888 = vrot.slane %v459, 5
      %v2889 = vrot.slane %v2888, 4
      %v2890 = vrot.slane %v460, 5
      %v2891 = vsel %vm795, %v2889, %v2890
      %v2892 = vrot.slane %v461, 5
      %v2893 = vrot.slane %v2892, 4
      %v2894 = vrot.slane %v462, 5
      %v2895 = vsel %vm795, %v2893, %v2894
      %v2896 = vrot.slane %v463, 5
      %v2897 = vrot.slane %v2896, 4
      %v2898 = vrot.slane %v464, 5
      %v2899 = vsel %vm795, %v2897, %v2898
      %v2900 = vrot.slane %v465, 5
      %v2901 = vrot.slane %v2900, 4
      %v2902 = vrot.slane %v466, 5
      %v2903 = vsel %vm795, %v2901, %v2902
      %v2904 = vrot.slane %v467, 5
      %v2905 = vrot.slane %v2904, 4
      %v2906 = vrot.slane %v468, 5
      %v2907 = vsel %vm795, %v2905, %v2906
      %s2908 = scalar_lea.vmem %s3, 40
      %v2909 = vld [vmem:[%s2908] sm:$0x3]
      %v2910 = vunpack.c.l.b16 %v2879
      %v2911 = vunpack.c.l.b16 %v2883
      %v2912 = vunpack.c.l.b16 %v2887
      %v2913 = vunpack.c.l.b16 %v2891
      %v2914 = vunpack.c.l.b16 %v2895
      %v2915 = vunpack.c.l.b16 %v2899
      %v2916 = vunpack.c.l.b16 %v2903
      %v2917 = vunpack.c.l.b16 %v2907
      %v2918 = vpack.c.b16 %v2911, %v2910
      %v2919 = vpack.c.b16 %v2913, %v2912
      %v2920 = vpack.c.b16 %v2915, %v2914
      %v2921 = vpack.c.b16 %v2917, %v2916
      %v2923 = vsel %vm603, %v2918, 0
      %v2926 = vsel %vm603, %v2919, 0
      %v2929 = vsel %vm603, %v2920, 0
      %v2932 = vsel %vm603, %v2921, 0
      %v2935 = vsel %vm616, %v2909, 0
      %2937 = vmatprep.subr.bf16.mxu0 0
      %2938 = vmatpush1.bf16.msra.mxu0 %v2935
      %2939 = vmatprep.subr.bf16.mxu0 0
      %2940 = vmatpush1.bf16.msra.mxu0 0
      %2941 = vmatprep.subr.bf16.mxu0 0
      %2942 = vmatpush1.bf16.msra.mxu0 0
      %2943 = vmatprep.subr.bf16.mxu0 0
      %2944 = vmatpush1.bf16.msra.mxu0 0
      %2945 = vmatprep.subr.bf16.mxu0 0
      %2946 = vmatpush1.bf16.msra.mxu0 0
      %2947 = vmatprep.subr.bf16.mxu0 0
      %2948 = vmatpush1.bf16.msra.mxu0 0
      %2949 = vmatprep.subr.bf16.mxu0 0
      %2950 = vmatpush1.bf16.msra.mxu0 0
      %2951 = vmatprep.subr.bf16.mxu0 0
      %2952 = vmatpush1.bf16.msra.mxu0 0
      %2953 = vmatprep.subr.bf16.mxu0 0
      %2954 = vmatpush1.bf16.msra.mxu0 0
      %2955 = vmatprep.subr.bf16.mxu0 0
      %2956 = vmatpush1.bf16.msra.mxu0 0
      %2957 = vmatprep.subr.bf16.mxu0 0
      %2958 = vmatpush1.bf16.msra.mxu0 0
      %2959 = vmatprep.subr.bf16.mxu0 0
      %2960 = vmatpush1.bf16.msra.mxu0 0
      %2961 = vmatprep.subr.bf16.mxu0 0
      %2962 = vmatpush1.bf16.msra.mxu0 0
      %2963 = vmatprep.subr.bf16.mxu0 0
      %2964 = vmatpush1.bf16.msra.mxu0 0
      %2965 = vmatprep.subr.bf16.mxu0 0
      %2966 = vmatpush1.bf16.msra.mxu0 0
      %2967 = vmatprep.subr.bf16.mxu0 0
      %2968 = vmatpush1.bf16.msra.mxu0 0
      %2969 = vmatprep.mubr.bf16.mxu0 0
      %2970 = vmatmul.mubr.bf16.gmra.mrb[0].mxu0 %v2923
      %v2971 = vpop.f32.mrb[0].mxu0
      %v2972 = vadd.f32 0.0, %v2971
      %v2973 = vpop.f32.mrb[0].mxu0
      %v2974 = vpop.f32.mrb[0].mxu0
      %v2975 = vadd.f32 0.0, %v2974
      %v2976 = vpop.f32.mrb[0].mxu0
      %2977 = vmatprep.mubr.bf16.mxu0 0
      %2978 = vmatmul.mubr.bf16.gmra.mrb[0].mxu0 %v2926
      %v2979 = vpop.f32.mrb[0].mxu0
      %v2980 = vadd.f32 0.0, %v2979
      %v2981 = vpop.f32.mrb[0].mxu0
      %v2982 = vpop.f32.mrb[0].mxu0
      %v2983 = vadd.f32 0.0, %v2982
      %v2984 = vpop.f32.mrb[0].mxu0
      %2985 = vmatprep.mubr.bf16.mxu0 0
      %2986 = vmatmul.mubr.bf16.gmra.mrb[0].mxu0 %v2929
      %v2987 = vpop.f32.mrb[0].mxu0
      %v2988 = vadd.f32 0.0, %v2987
      %v2989 = vpop.f32.mrb[0].mxu0
      %v2990 = vpop.f32.mrb[0].mxu0
      %v2991 = vadd.f32 0.0, %v2990
      %v2992 = vpop.f32.mrb[0].mxu0
      %2993 = vmatprep.mubr.bf16.mxu0 0
      %2994 = vmatmul.mubr.bf16.gmra.mrb[0].mxu0 %v2932
      %v2995 = vpop.f32.mrb[0].mxu0
      %v2996 = vadd.f32 0.0, %v2995
      %v2997 = vpop.f32.mrb[0].mxu0
      %v2998 = vpop.f32.mrb[0].mxu0
      %v2999 = vadd.f32 0.0, %v2998
      %v3000 = vpop.f32.mrb[0].mxu0
      %3001 = vdwg.mxu0
      %v3002 = vadd.f32 %v2860, %v2972
      %v3003 = vadd.f32 %v2861, %v2975
      %v3004 = vadd.f32 %v2862, %v2980
      %v3005 = vadd.f32 %v2863, %v2983
      %v3006 = vadd.f32 %v2864, %v2988
      %v3007 = vadd.f32 %v2865, %v2991
      %v3008 = vadd.f32 %v2866, %v2996
      %v3009 = vadd.f32 %v2867, %v2999
      %s3010 = scalar_lea.vmem %s3, 42
      %v3011 = vld [vmem:[%s3010] sm:$0x3]
      %v3013 = vunpack.c.l.b16 %v469
      %v3014 = vpack.c.b16 %v2556, %v2555
      %v3015 = vpack.c.b16 %v2558, %v2557
      %v3016 = vpack.c.b16 %v2560, %v2559
      %v3017 = vpack.c.b16 %v3013, %v2561
      %v3019 = vsel %vm603, %v3014, 0
      %v3022 = vsel %vm603, %v3015, 0
      %v3025 = vsel %vm603, %v3016, 0
      %v3028 = vsel %vm603, %v3017, 0
      %v3031 = vsel %vm616, %v3011, 0
      %3033 = vmatprep.subr.bf16.mxu0 0
      %3034 = vmatpush1.bf16.msra.mxu0 %v3031
      %3035 = vmatprep.subr.bf16.mxu0 0
      %3036 = vmatpush1.bf16.msra.mxu0 0
      %3037 = vmatprep.subr.bf16.mxu0 0
      %3038 = vmatpush1.bf16.msra.mxu0 0
      %3039 = vmatprep.subr.bf16.mxu0 0
      %3040 = vmatpush1.bf16.msra.mxu0 0
      %3041 = vmatprep.subr.bf16.mxu0 0
      %3042 = vmatpush1.bf16.msra.mxu0 0
      %3043 = vmatprep.subr.bf16.mxu0 0
      %3044 = vmatpush1.bf16.msra.mxu0 0
      %3045 = vmatprep.subr.bf16.mxu0 0
      %3046 = vmatpush1.bf16.msra.mxu0 0
      %3047 = vmatprep.subr.bf16.mxu0 0
      %3048 = vmatpush1.bf16.msra.mxu0 0
      %3049 = vmatprep.subr.bf16.mxu0 0
      %3050 = vmatpush1.bf16.msra.mxu0 0
      %3051 = vmatprep.subr.bf16.mxu0 0
      %3052 = vmatpush1.bf16.msra.mxu0 0
      %3053 = vmatprep.subr.bf16.mxu0 0
      %3054 = vmatpush1.bf16.msra.mxu0 0
      %3055 = vmatprep.subr.bf16.mxu0 0
      %3056 = vmatpush1.bf16.msra.mxu0 0
      %3057 = vmatprep.subr.bf16.mxu0 0
      %3058 = vmatpush1.bf16.msra.mxu0 0
      %3059 = vmatprep.subr.bf16.mxu0 0
      %3060 = vmatpush1.bf16.msra.mxu0 0
      %3061 = vmatprep.subr.bf16.mxu0 0
      %3062 = vmatpush1.bf16.msra.mxu0 0
      %3063 = vmatprep.subr.bf16.mxu0 0
      %3064 = vmatpush1.bf16.msra.mxu0 0
      %3065 = vmatprep.mubr.bf16.mxu0 0
      %3066 = vmatmul.mubr.bf16.gmra.mrb[0].mxu0 %v3019
      %v3067 = vpop.f32.mrb[0].mxu0
      %v3068 = vadd.f32 0.0, %v3067
      %v3069 = vpop.f32.mrb[0].mxu0
      %v3070 = vpop.f32.mrb[0].mxu0
      %v3071 = vadd.f32 0.0, %v3070
      %v3072 = vpop.f32.mrb[0].mxu0
      %3073 = vmatprep.mubr.bf16.mxu0 0
      %3074 = vmatmul.mubr.bf16.gmra.mrb[0].mxu0 %v3022
      %v3075 = vpop.f32.mrb[0].mxu0
      %v3076 = vadd.f32 0.0, %v3075
      %v3077 = vpop.f32.mrb[0].mxu0
      %v3078 = vpop.f32.mrb[0].mxu0
      %v3079 = vadd.f32 0.0, %v3078
      %v3080 = vpop.f32.mrb[0].mxu0
      %3081 = vmatprep.mubr.bf16.mxu0 0
      %3082 = vmatmul.mubr.bf16.gmra.mrb[0].mxu0 %v3025
      %v3083 = vpop.f32.mrb[0].mxu0
      %v3084 = vadd.f32 0.0, %v3083
      %v3085 = vpop.f32.mrb[0].mxu0
      %v3086 = vpop.f32.mrb[0].mxu0
      %v3087 = vadd.f32 0.0, %v3086
      %v3088 = vpop.f32.mrb[0].mxu0
      %3089 = vmatprep.mubr.bf16.mxu0 0
      %3090 = vmatmul.mubr.bf16.gmra.mrb[0].mxu0 %v3028
      %v3091 = vpop.f32.mrb[0].mxu0
      %v3092 = vadd.f32 0.0, %v3091
      %v3093 = vpop.f32.mrb[0].mxu0
      %v3094 = vpop.f32.mrb[0].mxu0
      %v3095 = vadd.f32 0.0, %v3094
      %v3096 = vpop.f32.mrb[0].mxu0
      %3097 = vdwg.mxu0
      %v3098 = vadd.f32 %v3002, %v3068
      %v3099 = vadd.f32 %v3003, %v3071
      %v3100 = vadd.f32 %v3004, %v3076
      %v3101 = vadd.f32 %v3005, %v3079
      %v3102 = vadd.f32 %v3006, %v3084
      %v3103 = vadd.f32 %v3007, %v3087
      %v3104 = vadd.f32 %v3008, %v3092
      %v3105 = vadd.f32 %v3009, %v3095
      %v3107 = vshrl.u32 %v469, 16
      %v3109 = vrot.slane %v3107, 4
      %v3110 = vshll.u32 %v469, 16
      %v3112 = vrot.slane %v3110, 5
      %v3113 = vor.u32 %v3109, %v3112
      %v3114 = vrot.slane %v3113, 4
      %v3116 = vshll.u32 %v470, 16
      %v3118 = vrot.slane %v3116, 5
      %v3119 = vsel %vm476, %v3114, %v3118
      %s3120 = scalar_lea.vmem %s3, 44
      %v3121 = vld [vmem:[%s3120] sm:$0x3]
      %v3122 = vunpack.c.l.b16 %v3119
      %v3123 = vpack.c.b16 %v2770, %v2769
      %v3124 = vpack.c.b16 %v2772, %v2771
      %v3125 = vpack.c.b16 %v2774, %v2773
      %v3126 = vpack.c.b16 %v3122, %v2775
      %v3128 = vsel %vm603, %v3123, 0
      %v3131 = vsel %vm603, %v3124, 0
      %v3134 = vsel %vm603, %v3125, 0
      %v3137 = vsel %vm603, %v3126, 0
      %v3140 = vsel %vm616, %v3121, 0
      %3142 = vmatprep.subr.bf16.mxu0 0
      %3143 = vmatpush1.bf16.msra.mxu0 %v3140
      %3144 = vmatprep.subr.bf16.mxu0 0
      %3145 = vmatpush1.bf16.msra.mxu0 0
      %3146 = vmatprep.subr.bf16.mxu0 0
      %3147 = vmatpush1.bf16.msra.mxu0 0
      %3148 = vmatprep.subr.bf16.mxu0 0
      %3149 = vmatpush1.bf16.msra.mxu0 0
      %3150 = vmatprep.subr.bf16.mxu0 0
      %3151 = vmatpush1.bf16.msra.mxu0 0
      %3152 = vmatprep.subr.bf16.mxu0 0
      %3153 = vmatpush1.bf16.msra.mxu0 0
      %3154 = vmatprep.subr.bf16.mxu0 0
      %3155 = vmatpush1.bf16.msra.mxu0 0
      %3156 = vmatprep.subr.bf16.mxu0 0
      %3157 = vmatpush1.bf16.msra.mxu0 0
      %3158 = vmatprep.subr.bf16.mxu0 0
      %3159 = vmatpush1.bf16.msra.mxu0 0
      %3160 = vmatprep.subr.bf16.mxu0 0
      %3161 = vmatpush1.bf16.msra.mxu0 0
      %3162 = vmatprep.subr.bf16.mxu0 0
      %3163 = vmatpush1.bf16.msra.mxu0 0
      %3164 = vmatprep.subr.bf16.mxu0 0
      %3165 = vmatpush1.bf16.msra.mxu0 0
      %3166 = vmatprep.subr.bf16.mxu0 0
      %3167 = vmatpush1.bf16.msra.mxu0 0
      %3168 = vmatprep.subr.bf16.mxu0 0
      %3169 = vmatpush1.bf16.msra.mxu0 0
      %3170 = vmatprep.subr.bf16.mxu0 0
      %3171 = vmatpush1.bf16.msra.mxu0 0
      %3172 = vmatprep.subr.bf16.mxu0 0
      %3173 = vmatpush1.bf16.msra.mxu0 0
      %3174 = vmatprep.mubr.bf16.mxu0 0
      %3175 = vmatmul.mubr.bf16.gmra.mrb[0].mxu0 %v3128
      %v3176 = vpop.f32.mrb[0].mxu0
      %v3177 = vadd.f32 0.0, %v3176
      %v3178 = vpop.f32.mrb[0].mxu0
      %v3179 = vpop.f32.mrb[0].mxu0
      %v3180 = vadd.f32 0.0, %v3179
      %v3181 = vpop.f32.mrb[0].mxu0
      %3182 = vmatprep.mubr.bf16.mxu0 0
      %3183 = vmatmul.mubr.bf16.gmra.mrb[0].mxu0 %v3131
      %v3184 = vpop.f32.mrb[0].mxu0
      %v3185 = vadd.f32 0.0, %v3184
      %v3186 = vpop.f32.mrb[0].mxu0
      %v3187 = vpop.f32.mrb[0].mxu0
      %v3188 = vadd.f32 0.0, %v3187
      %v3189 = vpop.f32.mrb[0].mxu0
      %3190 = vmatprep.mubr.bf16.mxu0 0
      %3191 = vmatmul.mubr.bf16.gmra.mrb[0].mxu0 %v3134
      %v3192 = vpop.f32.mrb[0].mxu0
      %v3193 = vadd.f32 0.0, %v3192
      %v3194 = vpop.f32.mrb[0].mxu0
      %v3195 = vpop.f32.mrb[0].mxu0
      %v3196 = vadd.f32 0.0, %v3195
      %v3197 = vpop.f32.mrb[0].mxu0
      %3198 = vmatprep.mubr.bf16.mxu0 0
      %3199 = vmatmul.mubr.bf16.gmra.mrb[0].mxu0 %v3137
      %v3200 = vpop.f32.mrb[0].mxu0
      %v3201 = vadd.f32 0.0, %v3200
      %v3202 = vpop.f32.mrb[0].mxu0
      %v3203 = vpop.f32.mrb[0].mxu0
      %v3204 = vadd.f32 0.0, %v3203
      %v3205 = vpop.f32.mrb[0].mxu0
      %3206 = vdwg.mxu0
      %v3207 = vadd.f32 %v3098, %v3177
      %v3208 = vadd.f32 %v3099, %v3180
      %v3209 = vadd.f32 %v3100, %v3185
      %v3210 = vadd.f32 %v3101, %v3188
      %v3211 = vadd.f32 %v3102, %v3193
      %v3212 = vadd.f32 %v3103, %v3196
      %v3213 = vadd.f32 %v3104, %v3201
      %v3214 = vadd.f32 %v3105, %v3204
      %v3216 = vrot.slane %v469, 5
      %v3217 = vrot.slane %v3216, 4
      %v3218 = vrot.slane %v470, 5
      %v3219 = vsel %vm795, %v3217, %v3218
      %s3220 = scalar_lea.vmem %s3, 46
      %v3221 = vld [vmem:[%s3220] sm:$0x3]
      %v3222 = vunpack.c.l.b16 %v3219
      %v3223 = vpack.c.b16 %v2912, %v2911
      %v3224 = vpack.c.b16 %v2914, %v2913
      %v3225 = vpack.c.b16 %v2916, %v2915
      %v3226 = vpack.c.b16 %v3222, %v2917
      %v3228 = vsel %vm603, %v3223, 0
      %v3231 = vsel %vm603, %v3224, 0
      %v3234 = vsel %vm603, %v3225, 0
      %v3237 = vsel %vm603, %v3226, 0
      %v3240 = vsel %vm616, %v3221, 0
      %3242 = vmatprep.subr.bf16.mxu0 0
      %3243 = vmatpush1.bf16.msra.mxu0 %v3240
      %3244 = vmatprep.subr.bf16.mxu0 0
      %3245 = vmatpush1.bf16.msra.mxu0 0
      %3246 = vmatprep.subr.bf16.mxu0 0
      %3247 = vmatpush1.bf16.msra.mxu0 0
      %3248 = vmatprep.subr.bf16.mxu0 0
      %3249 = vmatpush1.bf16.msra.mxu0 0
      %3250 = vmatprep.subr.bf16.mxu0 0
      %3251 = vmatpush1.bf16.msra.mxu0 0
      %3252 = vmatprep.subr.bf16.mxu0 0
      %3253 = vmatpush1.bf16.msra.mxu0 0
      %3254 = vmatprep.subr.bf16.mxu0 0
      %3255 = vmatpush1.bf16.msra.mxu0 0
      %3256 = vmatprep.subr.bf16.mxu0 0
      %3257 = vmatpush1.bf16.msra.mxu0 0
      %3258 = vmatprep.subr.bf16.mxu0 0
      %3259 = vmatpush1.bf16.msra.mxu0 0
      %3260 = vmatprep.subr.bf16.mxu0 0
      %3261 = vmatpush1.bf16.msra.mxu0 0
      %3262 = vmatprep.subr.bf16.mxu0 0
      %3263 = vmatpush1.bf16.msra.mxu0 0
      %3264 = vmatprep.subr.bf16.mxu0 0
      %3265 = vmatpush1.bf16.msra.mxu0 0
      %3266 = vmatprep.subr.bf16.mxu0 0
      %3267 = vmatpush1.bf16.msra.mxu0 0
      %3268 = vmatprep.subr.bf16.mxu0 0
      %3269 = vmatpush1.bf16.msra.mxu0 0
      %3270 = vmatprep.subr.bf16.mxu0 0
      %3271 = vmatpush1.bf16.msra.mxu0 0
      %3272 = vmatprep.subr.bf16.mxu0 0
      %3273 = vmatpush1.bf16.msra.mxu0 0
      %3274 = vmatprep.mubr.bf16.mxu0 0
      %3275 = vmatmul.mubr.bf16.gmra.mrb[0].mxu0 %v3228
      %v3276 = vpop.f32.mrb[0].mxu0
      %v3277 = vadd.f32 0.0, %v3276
      %v3278 = vpop.f32.mrb[0].mxu0
      %v3279 = vpop.f32.mrb[0].mxu0
      %v3280 = vadd.f32 0.0, %v3279
      %v3281 = vpop.f32.mrb[0].mxu0
      %3282 = vmatprep.mubr.bf16.mxu0 0
      %3283 = vmatmul.mubr.bf16.gmra.mrb[0].mxu0 %v3231
      %v3284 = vpop.f32.mrb[0].mxu0
      %v3285 = vadd.f32 0.0, %v3284
      %v3286 = vpop.f32.mrb[0].mxu0
      %v3287 = vpop.f32.mrb[0].mxu0
      %v3288 = vadd.f32 0.0, %v3287
      %v3289 = vpop.f32.mrb[0].mxu0
      %3290 = vmatprep.mubr.bf16.mxu0 0
      %3291 = vmatmul.mubr.bf16.gmra.mrb[0].mxu0 %v3234
      %v3292 = vpop.f32.mrb[0].mxu0
      %v3293 = vadd.f32 0.0, %v3292
      %v3294 = vpop.f32.mrb[0].mxu0
      %v3295 = vpop.f32.mrb[0].mxu0
      %v3296 = vadd.f32 0.0, %v3295
      %v3297 = vpop.f32.mrb[0].mxu0
      %3298 = vmatprep.mubr.bf16.mxu0 0
      %3299 = vmatmul.mubr.bf16.gmra.mrb[0].mxu0 %v3237
      %v3300 = vpop.f32.mrb[0].mxu0
      %v3301 = vadd.f32 0.0, %v3300
      %v3302 = vpop.f32.mrb[0].mxu0
      %v3303 = vpop.f32.mrb[0].mxu0
      %v3304 = vadd.f32 0.0, %v3303
      %v3305 = vpop.f32.mrb[0].mxu0
      %3306 = vdwg.mxu0
      %v3307 = vadd.f32 %v3207, %v3277
      %v3308 = vadd.f32 %v3208, %v3280
      %v3309 = vadd.f32 %v3209, %v3285
      %v3310 = vadd.f32 %v3210, %v3288
      %v3311 = vadd.f32 %v3211, %v3293
      %v3312 = vadd.f32 %v3212, %v3296
      %v3313 = vadd.f32 %v3213, %v3301
      %v3314 = vadd.f32 %v3214, %v3304
      %s3315 = scalar_lea.vmem %s3, 48
      %v3316 = vld [vmem:[%s3315] sm:$0x3]
      %v3318 = vunpack.c.l.b16 %v471
      %v3319 = vpack.c.b16 %v3318, %v3013
      %v3321 = vsel %vm603, %v3319, 0
      %v3324 = vsel %vm616, %v3316, 0
      %3326 = vmatprep.subr.bf16.mxu0 0
      %3327 = vmatpush1.bf16.msra.mxu0 %v3324
      %3328 = vmatprep.subr.bf16.mxu0 0
      %3329 = vmatpush1.bf16.msra.mxu0 0
      %3330 = vmatprep.subr.bf16.mxu0 0
      %3331 = vmatpush1.bf16.msra.mxu0 0
      %3332 = vmatprep.subr.bf16.mxu0 0
      %3333 = vmatpush1.bf16.msra.mxu0 0
      %3334 = vmatprep.subr.bf16.mxu0 0
      %3335 = vmatpush1.bf16.msra.mxu0 0
      %3336 = vmatprep.subr.bf16.mxu0 0
      %3337 = vmatpush1.bf16.msra.mxu0 0
      %3338 = vmatprep.subr.bf16.mxu0 0
      %3339 = vmatpush1.bf16.msra.mxu0 0
      %3340 = vmatprep.subr.bf16.mxu0 0
      %3341 = vmatpush1.bf16.msra.mxu0 0
      %3342 = vmatprep.subr.bf16.mxu0 0
      %3343 = vmatpush1.bf16.msra.mxu0 0
      %3344 = vmatprep.subr.bf16.mxu0 0
      %3345 = vmatpush1.bf16.msra.mxu0 0
      %3346 = vmatprep.subr.bf16.mxu0 0
      %3347 = vmatpush1.bf16.msra.mxu0 0
      %3348 = vmatprep.subr.bf16.mxu0 0
      %3349 = vmatpush1.bf16.msra.mxu0 0
      %3350 = vmatprep.subr.bf16.mxu0 0
      %3351 = vmatpush1.bf16.msra.mxu0 0
      %3352 = vmatprep.subr.bf16.mxu0 0
      %3353 = vmatpush1.bf16.msra.mxu0 0
      %3354 = vmatprep.subr.bf16.mxu0 0
      %3355 = vmatpush1.bf16.msra.mxu0 0
      %3356 = vmatprep.subr.bf16.mxu0 0
      %3357 = vmatpush1.bf16.msra.mxu0 0
      %3358 = vmatprep.mubr.bf16.mxu0 0
      %3359 = vmatmul.mubr.bf16.gmra.mrb[0].mxu0 %v2570
      %v3360 = vpop.f32.mrb[0].mxu0
      %v3361 = vadd.f32 0.0, %v3360
      %v3362 = vpop.f32.mrb[0].mxu0
      %v3363 = vpop.f32.mrb[0].mxu0
      %v3364 = vadd.f32 0.0, %v3363
      %v3365 = vpop.f32.mrb[0].mxu0
      %3366 = vmatprep.mubr.bf16.mxu0 0
      %3367 = vmatmul.mubr.bf16.gmra.mrb[0].mxu0 %v2573
      %v3368 = vpop.f32.mrb[0].mxu0
      %v3369 = vadd.f32 0.0, %v3368
      %v3370 = vpop.f32.mrb[0].mxu0
      %v3371 = vpop.f32.mrb[0].mxu0
      %v3372 = vadd.f32 0.0, %v3371
      %v3373 = vpop.f32.mrb[0].mxu0
      %3374 = vmatprep.mubr.bf16.mxu0 0
      %3375 = vmatmul.mubr.bf16.gmra.mrb[0].mxu0 %v2576
      %v3376 = vpop.f32.mrb[0].mxu0
      %v3377 = vadd.f32 0.0, %v3376
      %v3378 = vpop.f32.mrb[0].mxu0
      %v3379 = vpop.f32.mrb[0].mxu0
      %v3380 = vadd.f32 0.0, %v3379
      %v3381 = vpop.f32.mrb[0].mxu0
      %3382 = vmatprep.mubr.bf16.mxu0 0
      %3383 = vmatmul.mubr.bf16.gmra.mrb[0].mxu0 %v3321
      %v3384 = vpop.f32.mrb[0].mxu0
      %v3385 = vadd.f32 0.0, %v3384
      %v3386 = vpop.f32.mrb[0].mxu0
      %v3387 = vpop.f32.mrb[0].mxu0
      %v3388 = vadd.f32 0.0, %v3387
      %v3389 = vpop.f32.mrb[0].mxu0
      %3390 = vdwg.mxu0
      %v3391 = vadd.f32 %v3307, %v3361
      %v3392 = vadd.f32 %v3308, %v3364
      %v3393 = vadd.f32 %v3309, %v3369
      %v3394 = vadd.f32 %v3310, %v3372
      %v3395 = vadd.f32 %v3311, %v3377
      %v3396 = vadd.f32 %v3312, %v3380
      %v3397 = vadd.f32 %v3313, %v3385
      %v3398 = vadd.f32 %v3314, %v3388
      %v3400 = vshrl.u32 %v471, 16
      %v3402 = vrot.slane %v3400, 4
      %v3403 = vshll.u32 %v471, 16
      %v3405 = vrot.slane %v3403, 5
      %v3406 = vor.u32 %v3402, %v3405
      %v3407 = vrot.slane %v3406, 4
      %v3409 = vshll.u32 %v472, 16
      %v3411 = vrot.slane %v3409, 5
      %v3412 = vsel %vm476, %v3407, %v3411
      %s3413 = scalar_lea.vmem %s3, 50
      %v3414 = vld [vmem:[%s3413] sm:$0x3]
      %v3415 = vunpack.c.l.b16 %v3412
      %v3416 = vpack.c.b16 %v3415, %v3122
      %v3418 = vsel %vm603, %v3416, 0
      %v3421 = vsel %vm616, %v3414, 0
      %3423 = vmatprep.subr.bf16.mxu0 0
      %3424 = vmatpush1.bf16.msra.mxu0 %v3421
      %3425 = vmatprep.subr.bf16.mxu0 0
      %3426 = vmatpush1.bf16.msra.mxu0 0
      %3427 = vmatprep.subr.bf16.mxu0 0
      %3428 = vmatpush1.bf16.msra.mxu0 0
      %3429 = vmatprep.subr.bf16.mxu0 0
      %3430 = vmatpush1.bf16.msra.mxu0 0
      %3431 = vmatprep.subr.bf16.mxu0 0
      %3432 = vmatpush1.bf16.msra.mxu0 0
      %3433 = vmatprep.subr.bf16.mxu0 0
      %3434 = vmatpush1.bf16.msra.mxu0 0
      %3435 = vmatprep.subr.bf16.mxu0 0
      %3436 = vmatpush1.bf16.msra.mxu0 0
      %3437 = vmatprep.subr.bf16.mxu0 0
      %3438 = vmatpush1.bf16.msra.mxu0 0
      %3439 = vmatprep.subr.bf16.mxu0 0
      %3440 = vmatpush1.bf16.msra.mxu0 0
      %3441 = vmatprep.subr.bf16.mxu0 0
      %3442 = vmatpush1.bf16.msra.mxu0 0
      %3443 = vmatprep.subr.bf16.mxu0 0
      %3444 = vmatpush1.bf16.msra.mxu0 0
      %3445 = vmatprep.subr.bf16.mxu0 0
      %3446 = vmatpush1.bf16.msra.mxu0 0
      %3447 = vmatprep.subr.bf16.mxu0 0
      %3448 = vmatpush1.bf16.msra.mxu0 0
      %3449 = vmatprep.subr.bf16.mxu0 0
      %3450 = vmatpush1.bf16.msra.mxu0 0
      %3451 = vmatprep.subr.bf16.mxu0 0
      %3452 = vmatpush1.bf16.msra.mxu0 0
      %3453 = vmatprep.subr.bf16.mxu0 0
      %3454 = vmatpush1.bf16.msra.mxu0 0
      %3455 = vmatprep.mubr.bf16.mxu0 0
      %3456 = vmatmul.mubr.bf16.gmra.mrb[0].mxu0 %v2784
      %v3457 = vpop.f32.mrb[0].mxu0
      %v3458 = vadd.f32 0.0, %v3457
      %v3459 = vpop.f32.mrb[0].mxu0
      %v3460 = vpop.f32.mrb[0].mxu0
      %v3461 = vadd.f32 0.0, %v3460
      %v3462 = vpop.f32.mrb[0].mxu0
      %3463 = vmatprep.mubr.bf16.mxu0 0
      %3464 = vmatmul.mubr.bf16.gmra.mrb[0].mxu0 %v2787
      %v3465 = vpop.f32.mrb[0].mxu0
      %v3466 = vadd.f32 0.0, %v3465
      %v3467 = vpop.f32.mrb[0].mxu0
      %v3468 = vpop.f32.mrb[0].mxu0
      %v3469 = vadd.f32 0.0, %v3468
      %v3470 = vpop.f32.mrb[0].mxu0
      %3471 = vmatprep.mubr.bf16.mxu0 0
      %3472 = vmatmul.mubr.bf16.gmra.mrb[0].mxu0 %v2790
      %v3473 = vpop.f32.mrb[0].mxu0
      %v3474 = vadd.f32 0.0, %v3473
      %v3475 = vpop.f32.mrb[0].mxu0
      %v3476 = vpop.f32.mrb[0].mxu0
      %v3477 = vadd.f32 0.0, %v3476
      %v3478 = vpop.f32.mrb[0].mxu0
      %3479 = vmatprep.mubr.bf16.mxu0 0
      %3480 = vmatmul.mubr.bf16.gmra.mrb[0].mxu0 %v3418
      %v3481 = vpop.f32.mrb[0].mxu0
      %v3482 = vadd.f32 0.0, %v3481
      %v3483 = vpop.f32.mrb[0].mxu0
      %v3484 = vpop.f32.mrb[0].mxu0
      %v3485 = vadd.f32 0.0, %v3484
      %v3486 = vpop.f32.mrb[0].mxu0
      %3487 = vdwg.mxu0
      %v3488 = vadd.f32 %v3391, %v3458
      %v3489 = vadd.f32 %v3392, %v3461
      %v3490 = vadd.f32 %v3393, %v3466
      %v3491 = vadd.f32 %v3394, %v3469
      %v3492 = vadd.f32 %v3395, %v3474
      %v3493 = vadd.f32 %v3396, %v3477
      %v3494 = vadd.f32 %v3397, %v3482
      %v3495 = vadd.f32 %v3398, %v3485
      %v3497 = vrot.slane %v471, 5
      %v3498 = vrot.slane %v3497, 4
      %v3499 = vrot.slane %v472, 5
      %v3500 = vsel %vm795, %v3498, %v3499
      %s3501 = scalar_lea.vmem %s3, 52
      %v3502 = vld [vmem:[%s3501] sm:$0x3]
      %v3503 = vunpack.c.l.b16 %v3500
      %v3504 = vpack.c.b16 %v3503, %v3222
      %v3506 = vsel %vm603, %v3504, 0
      %v3509 = vsel %vm616, %v3502, 0
      %3511 = vmatprep.subr.bf16.mxu0 0
      %3512 = vmatpush1.bf16.msra.mxu0 %v3509
      %3513 = vmatprep.subr.bf16.mxu0 0
      %3514 = vmatpush1.bf16.msra.mxu0 0
      %3515 = vmatprep.subr.bf16.mxu0 0
      %3516 = vmatpush1.bf16.msra.mxu0 0
      %3517 = vmatprep.subr.bf16.mxu0 0
      %3518 = vmatpush1.bf16.msra.mxu0 0
      %3519 = vmatprep.subr.bf16.mxu0 0
      %3520 = vmatpush1.bf16.msra.mxu0 0
      %3521 = vmatprep.subr.bf16.mxu0 0
      %3522 = vmatpush1.bf16.msra.mxu0 0
      %3523 = vmatprep.subr.bf16.mxu0 0
      %3524 = vmatpush1.bf16.msra.mxu0 0
      %3525 = vmatprep.subr.bf16.mxu0 0
      %3526 = vmatpush1.bf16.msra.mxu0 0
      %3527 = vmatprep.subr.bf16.mxu0 0
      %3528 = vmatpush1.bf16.msra.mxu0 0
      %3529 = vmatprep.subr.bf16.mxu0 0
      %3530 = vmatpush1.bf16.msra.mxu0 0
      %3531 = vmatprep.subr.bf16.mxu0 0
      %3532 = vmatpush1.bf16.msra.mxu0 0
      %3533 = vmatprep.subr.bf16.mxu0 0
      %3534 = vmatpush1.bf16.msra.mxu0 0
      %3535 = vmatprep.subr.bf16.mxu0 0
      %3536 = vmatpush1.bf16.msra.mxu0 0
      %3537 = vmatprep.subr.bf16.mxu0 0
      %3538 = vmatpush1.bf16.msra.mxu0 0
      %3539 = vmatprep.subr.bf16.mxu0 0
      %3540 = vmatpush1.bf16.msra.mxu0 0
      %3541 = vmatprep.subr.bf16.mxu0 0
      %3542 = vmatpush1.bf16.msra.mxu0 0
      %3543 = vmatprep.mubr.bf16.mxu0 0
      %3544 = vmatmul.mubr.bf16.gmra.mrb[0].mxu0 %v2926
      %v3545 = vpop.f32.mrb[0].mxu0
      %v3546 = vadd.f32 0.0, %v3545
      %v3547 = vpop.f32.mrb[0].mxu0
      %v3548 = vpop.f32.mrb[0].mxu0
      %v3549 = vadd.f32 0.0, %v3548
      %v3550 = vpop.f32.mrb[0].mxu0
      %3551 = vmatprep.mubr.bf16.mxu0 0
      %3552 = vmatmul.mubr.bf16.gmra.mrb[0].mxu0 %v2929
      %v3553 = vpop.f32.mrb[0].mxu0
      %v3554 = vadd.f32 0.0, %v3553
      %v3555 = vpop.f32.mrb[0].mxu0
      %v3556 = vpop.f32.mrb[0].mxu0
      %v3557 = vadd.f32 0.0, %v3556
      %v3558 = vpop.f32.mrb[0].mxu0
      %3559 = vmatprep.mubr.bf16.mxu0 0
      %3560 = vmatmul.mubr.bf16.gmra.mrb[0].mxu0 %v2932
      %v3561 = vpop.f32.mrb[0].mxu0
      %v3562 = vadd.f32 0.0, %v3561
      %v3563 = vpop.f32.mrb[0].mxu0
      %v3564 = vpop.f32.mrb[0].mxu0
      %v3565 = vadd.f32 0.0, %v3564
      %v3566 = vpop.f32.mrb[0].mxu0
      %3567 = vmatprep.mubr.bf16.mxu0 0
      %3568 = vmatmul.mubr.bf16.gmra.mrb[0].mxu0 %v3506
      %v3569 = vpop.f32.mrb[0].mxu0
      %v3570 = vadd.f32 0.0, %v3569
      %v3571 = vpop.f32.mrb[0].mxu0
      %v3572 = vpop.f32.mrb[0].mxu0
      %v3573 = vadd.f32 0.0, %v3572
      %v3574 = vpop.f32.mrb[0].mxu0
      %3575 = vdwg.mxu0
      %v3576 = vadd.f32 %v3488, %v3546
      %v3577 = vadd.f32 %v3489, %v3549
      %v3578 = vadd.f32 %v3490, %v3554
      %v3579 = vadd.f32 %v3491, %v3557
      %v3580 = vadd.f32 %v3492, %v3562
      %v3581 = vadd.f32 %v3493, %v3565
      %v3582 = vadd.f32 %v3494, %v3570
      %v3583 = vadd.f32 %v3495, %v3573
      %v3584 = vpack.c.bf16 %v3577, %v3576
      %v3585 = vpack.c.bf16 %v3579, %v3578
      %v3586 = vpack.c.bf16 %v3581, %v3580
      %v3587 = vpack.c.bf16 %v3583, %v3582
      %v3592 = vunpack.c.l.b16 %v3584
      %v3593 = vunpack.c.h.b16 %v3584
      %v3594 = vunpack.c.l.b16 %v3585
      %v3595 = vunpack.c.h.b16 %v3585
      %v3596 = vunpack.c.l.b16 %v3586
      %v3597 = vunpack.c.h.b16 %v3586
      %v3598 = vunpack.c.l.b16 %v3587
      %v3599 = vunpack.c.h.b16 %v3587
      %v3600 = vpack.c.b16 %v3592, %v3592
      %v3601 = vpack.c.b16 %v3593, %v3593
      %v3602 = vpack.c.b16 %v3594, %v3594
      %v3603 = vpack.c.b16 %v3595, %v3595
      %v3604 = vpack.c.b16 %v3596, %v3596
      %v3605 = vpack.c.b16 %v3597, %v3597
      %v3606 = vpack.c.b16 %v3598, %v3598
      %v3607 = vpack.c.b16 %v3599, %v3599
      %vm3616 = vcmask 60416
      %3617 = vst.msk [vmem:[%s392] sm:$0xf] %vm3616, %v3600
      %3618 = vst.msk [vmem:[%s392 + $0x4] sm:$0xf] %vm3616, %v3601
      %3619 = vst.msk [vmem:[%s392 + $0x8] sm:$0xf] %vm3616, %v3602
      %3620 = vst.msk [vmem:[%s392 + $0xc] sm:$0xf] %vm3616, %v3603
      %3621 = vst.msk [vmem:[%s392 + $0x10] sm:$0xf] %vm3616, %v3604
      %3622 = vst.msk [vmem:[%s392 + $0x14] sm:$0xf] %vm3616, %v3605
      %3623 = vst.msk [vmem:[%s392 + $0x18] sm:$0xf] %vm3616, %v3606
      %3624 = vst.msk [vmem:[%s392 + $0x1c] sm:$0xf] %vm3616, %v3607
      %vm3625 = vcmask 64512
      %v3626 = vsel %vm3625, %v3576, 0.0
      %v3627 = vsel %vm3625, %v3577, 0.0
      %v3628 = vadd.f32 %v3626, %v3627
      %v3629 = vsel %vm3625, %v3578, 0.0
      %v3630 = vadd.f32 %v3628, %v3629
      %v3631 = vsel %vm3625, %v3579, 0.0
      %v3632 = vadd.f32 %v3630, %v3631
      %v3633 = vsel %vm3625, %v3580, 0.0
      %v3634 = vadd.f32 %v3632, %v3633
      %v3635 = vsel %vm3625, %v3581, 0.0
      %v3636 = vadd.f32 %v3634, %v3635
      %v3637 = vsel %vm3625, %v3582, 0.0
      %v3638 = vadd.f32 %v3636, %v3637
      %v3639 = vsel %vm3625, %v3583, 0.0
      %v3640 = vadd.f32 %v3638, %v3639
      %v3641 = vrot.slane %v3640, 4
      %v3642 = vadd.f32 %v3640, %v3641
      %v3643 = vrot.slane %v3642, 2
      %v3644 = vadd.f32 %v3642, %v3643
      %v3645 = vrot.slane %v3644, 1
      %v3646 = vadd.f32 %v3644, %v3645
      %v3647 = vmul.f32 %v3576, %v3576
      %v3648 = vmul.f32 %v3577, %v3577
      %v3649 = vmul.f32 %v3578, %v3578
      %v3650 = vmul.f32 %v3579, %v3579
      %v3651 = vmul.f32 %v3580, %v3580
      %v3652 = vmul.f32 %v3581, %v3581
      %v3653 = vmul.f32 %v3582, %v3582
      %v3654 = vmul.f32 %v3583, %v3583
      %v3655 = vsel %vm3625, %v3647, 0.0
      %v3656 = vsel %vm3625, %v3648, 0.0
      %v3657 = vadd.f32 %v3655, %v3656
      %v3658 = vsel %vm3625, %v3649, 0.0
      %v3659 = vadd.f32 %v3657, %v3658
      %v3660 = vsel %vm3625, %v3650, 0.0
      %v3661 = vadd.f32 %v3659, %v3660
      %v3662 = vsel %vm3625, %v3651, 0.0
      %v3663 = vadd.f32 %v3661, %v3662
      %v3664 = vsel %vm3625, %v3652, 0.0
      %v3665 = vadd.f32 %v3663, %v3664
      %v3666 = vsel %vm3625, %v3653, 0.0
      %v3667 = vadd.f32 %v3665, %v3666
      %v3668 = vsel %vm3625, %v3654, 0.0
      %v3669 = vadd.f32 %v3667, %v3668
      %v3670 = vrot.slane %v3669, 4
      %v3671 = vadd.f32 %v3669, %v3670
      %v3672 = vrot.slane %v3671, 2
      %v3673 = vadd.f32 %v3671, %v3672
      %v3674 = vrot.slane %v3673, 1
      %v3675 = vadd.f32 %v3673, %v3674
      %3676 = vst.msk [vmem:[%s401] sm:$0xff] %vm3625, %v3646
      %3677 = vst.msk [vmem:[%s409] sm:$0xff] %vm3625, %v3675
      %s3678 = smul.u32 %s22, 8
      %s3679 = sadd.s32 %s3678, %s23
      %s3680 = smul.u32 8, %s3679
      %p3681 = scmp.lt.s32.totalorder %s3680, 127
      %s3682 = scalar_select %p3681, %s3680, 127
      %s3683 = smul.addr %s3682, 4
      %s3684 = scalar_lea.vmem %s4, %s3683
      %s3685 = smul.u32 %s22, 8
      %s3686 = sadd.s32 %s3685, %s23
      %p3687 = scmp.lt.s32.totalorder %s3686, 15
      %s3688 = scalar_select %p3687, %s3686, 15
      %s3689 = smul.addr %s3688, 8
      %s3690 = scalar_lea.vmem %s5, %s3689
      %s3691 = smul.u32 %s22, 8
      %s3692 = sadd.s32 %s3691, %s23
      %p3693 = scmp.lt.s32.totalorder %s3692, 15
      %s3694 = scalar_select %p3693, %s3692, 15
      %s3695 = smul.addr %s3694, 8
      %s3696 = scalar_lea.vmem %s6, %s3695
      // Predicated region
      $region37: #{_lambda_.4} parent=35 // pred_check
        %p3697 = pneg %p161
      $region38: #{_lambda_.4} parent=35 // pred_check_branch
        %3699 = sbr.rel (%p3697) target = $region40
      $region39: #{_lambda_.4} parent=35 // pred_region
        %s3700 = smul.u32 %s22, 8
        %s3701 = sadd.s32 %s3700, %s23
        %s3702 = smul.u32 8, %s3701
      $region40: #{_lambda_.4} parent=35 // pred_fallthru
        _
      // Predicated region
      $region41: #{_lambda_.4} parent=35 // pred_check
        %p3703 = pneg %p191
      $region42: #{_lambda_.4} parent=35 // pred_check_branch
        %3705 = sbr.rel (%p3703) target = $region44
      $region43: #{_lambda_.4} parent=35 // pred_region
        %s3706 = smul.u32 %s22, 8
        %s3707 = sadd.s32 %s3706, %s23
      $region44: #{_lambda_.4} parent=35 // pred_fallthru
        _
      // Predicated region
      $region45: #{_lambda_.4} parent=35 // pred_check
        %p3708 = pneg %p221
      $region46: #{_lambda_.4} parent=35 // pred_check_branch
        %3710 = sbr.rel (%p3708) target = $region48
      $region47: #{_lambda_.4} parent=35 // pred_region
        %s3711 = smul.u32 %s22, 8
        %s3712 = sadd.s32 %s3711, %s23
      $region48: #{_lambda_.4} parent=35 // pred_fallthru
        _
    $region36: #{_lambda_.4} parent=5 // pred_fallthru
      _
    %p3713 = scmp.le.s32.totalorder 2, %s13
    // Predicated region
    $region49: #{_lambda_.4} parent=5 // pred_check
      %p3714 = pneg %p3713
    $region50: #{_lambda_.4} parent=5 // pred_check_branch
      %3716 = sbr.rel (%p3714) target = $region52
    $region51: #{_lambda_.4} parent=5 // pred_region
      %s3717 = ssub.s32 %s13, 2
      // Predicated region
      $region53: #{_lambda_.4} parent=51 // pred_check
        %p3718 = pneg %p167
      $region54: #{_lambda_.4} parent=51 // pred_check_branch
        %3720 = sbr.rel (%p3718) target = $region56
      $region55: #{_lambda_.4} parent=51 // pred_region
        %s3721 = smul.u32 %s24, 8
        %s3722 = sadd.s32 %s3721, %s25
        %s3723 = smul.u32 8, %s3722
        %p3724 = scmp.lt.s32.totalorder %s3723, 127
        %s3725 = scalar_select %p3724, %s3723, 127
        %s3726 = smul.addr %s3725, 4
        %s3727 = scalar_lea.vmem %s4, %s3726
      $region56: #{_lambda_.4} parent=51 // pred_fallthru
        _
      // Predicated region
      $region57: #{_lambda_.4} parent=51 // pred_check
        %p3728 = pneg %p197
      $region58: #{_lambda_.4} parent=51 // pred_check_branch
        %3730 = sbr.rel (%p3728) target = $region60
      $region59: #{_lambda_.4} parent=51 // pred_region
        %s3731 = smul.u32 %s24, 8
        %s3732 = sadd.s32 %s3731, %s25
        %p3733 = scmp.lt.s32.totalorder %s3732, 15
        %s3734 = scalar_select %p3733, %s3732, 15
        %s3735 = smul.addr %s3734, 8
        %s3736 = scalar_lea.vmem %s5, %s3735
      $region60: #{_lambda_.4} parent=51 // pred_fallthru
        _
      // Predicated region
      $region61: #{_lambda_.4} parent=51 // pred_check
        %p3737 = pneg %p227
      $region62: #{_lambda_.4} parent=51 // pred_check_branch
        %3739 = sbr.rel (%p3737) target = $region64
      $region63: #{_lambda_.4} parent=51 // pred_region
        %s3740 = smul.u32 %s24, 8
        %s3741 = sadd.s32 %s3740, %s25
        %p3742 = scmp.lt.s32.totalorder %s3741, 15
        %s3743 = scalar_select %p3742, %s3741, 15
        %s3744 = smul.addr %s3743, 8
        %s3745 = scalar_lea.vmem %s6, %s3744
      $region64: #{_lambda_.4} parent=51 // pred_fallthru
        _
    $region52: #{_lambda_.4} parent=5 // pred_fallthru
      _
  $region6: #{_lambda_.4} parent=0 // loop_footer
    %s17 = sadd.s32 1, %s13
  $region7: #{_lambda_.4} parent=0 // loop_footer_branch
    %12 = sbr.rel target = $region3
  $region8: #{_lambda_.4} parent=0 // loop_exit
    _

// kernel: _lambda_.7
$region0: #{_lambda_.7}
  #allocation0 [shape = 'u32[]', space=smem, size = 0x4, offset = 0x4, fixed_abs, tag = 'smem constant byte address 0x4 - core index']
  #allocation1 [shape = 'u32[144,128]{1,0:T(1,128)}', space=vmem, size = 0x12000, scoped, tag = 'internal scratch']
  %s0 = inlined_call_operand.vmem [shape: bf16[64,128], index: 0, kind: input, shape index: {}]
  %s1 = inlined_call_operand.vmem [shape: f32[1,128], index: 1, kind: input, shape index: {}]
  %s2 = inlined_call_operand.vmem [shape: f32[1,128], index: 2, kind: input, shape index: {}]
  %s3 = inlined_call_operand.vmem [shape: f32[64,128], index: 3, kind: output, shape index: {}]
  %s4 = sld [smem:[#allocation0]]
  $region22: #{_lambda_.7} parent=0
    _
  %s6 = ssub.s32 1, %s4
  %s7 = scalar_select 0, %s6, %s4
  // Predicated region
  $region2: #{_lambda_.7} parent=0 // pred_check
    _
  $region3: #{_lambda_.7} parent=0 // pred_check_branch
    %9 = sbr.rel (0) target = $region5
  $region4: #{_lambda_.7} parent=0 // pred_region
    _
  $region5: #{_lambda_.7} parent=0 // pred_fallthru
    _
  // Predicated region
  $region6: #{_lambda_.7} parent=0 // pred_check
    _
  $region7: #{_lambda_.7} parent=0 // pred_check_branch
    %11 = sbr.rel (0) target = $region9
  $region8: #{_lambda_.7} parent=0 // pred_region
    _
  $region9: #{_lambda_.7} parent=0 // pred_fallthru
    _
  // Predicated region
  $region10: #{_lambda_.7} parent=0 // pred_check
    _
  $region11: #{_lambda_.7} parent=0 // pred_check_branch
    %13 = sbr.rel (0) target = $region13
  $region12: #{_lambda_.7} parent=0 // pred_region
    _
  $region13: #{_lambda_.7} parent=0 // pred_fallthru
    _
  %v14 = vld [vmem:[%s0] sm:$0xf]
  %v15 = vld [vmem:[%s0 + $0x4] sm:$0xf]
  %v16 = vld [vmem:[%s0 + $0x8] sm:$0xf]
  %v17 = vld [vmem:[%s0 + $0xc] sm:$0xf]
  %v18 = vld [vmem:[%s0 + $0x10] sm:$0xf]
  %v19 = vld [vmem:[%s0 + $0x14] sm:$0xf]
  %v20 = vld [vmem:[%s0 + $0x18] sm:$0xf]
  %v21 = vld [vmem:[%s0 + $0x1c] sm:$0xf]
  %v22 = vunpack.c.l.bf16 %v14
  %v23 = vunpack.c.l.bf16 %v15
  %v24 = vunpack.c.l.bf16 %v16
  %v25 = vunpack.c.l.bf16 %v17
  %v26 = vunpack.c.l.bf16 %v18
  %v27 = vunpack.c.l.bf16 %v19
  %v28 = vunpack.c.l.bf16 %v20
  %v29 = vunpack.c.l.bf16 %v21
  %v30 = vld [vmem:[%s1] sm:$0x1]
  %v32 = vlaneseq
  %v33 = vshrl.u32 %v32, 7
  %v34 = vsub.s32 0, %v33
  %v35 = vrot.slane %v30, %v34
  %v37 = vmul.f32 %v22, %v35
  %v38 = vmul.f32 %v23, %v35
  %v39 = vmul.f32 %v24, %v35
  %v40 = vmul.f32 %v25, %v35
  %v41 = vmul.f32 %v26, %v35
  %v42 = vmul.f32 %v27, %v35
  %v43 = vmul.f32 %v28, %v35
  %v44 = vmul.f32 %v29, %v35
  %v45 = vld [vmem:[%s2] sm:$0x1]
  %v47 = vlaneseq
  %v48 = vshrl.u32 %v47, 7
  %v49 = vsub.s32 0, %v48
  %v50 = vrot.slane %v45, %v49
  %v52 = vadd.f32 %v37, %v50
  %v53 = vadd.f32 %v38, %v50
  %v54 = vadd.f32 %v39, %v50
  %v55 = vadd.f32 %v40, %v50
  %v56 = vadd.f32 %v41, %v50
  %v57 = vadd.f32 %v42, %v50
  %v58 = vadd.f32 %v43, %v50
  %v59 = vadd.f32 %v44, %v50
  %v60 = vmax.f32 %v52, 0.0
  %v61 = vmax.f32 %v53, 0.0
  %v62 = vmax.f32 %v54, 0.0
  %v63 = vmax.f32 %v55, 0.0
  %v64 = vmax.f32 %v56, 0.0
  %v65 = vmax.f32 %v57, 0.0
  %v66 = vmax.f32 %v58, 0.0
  %v67 = vmax.f32 %v59, 0.0
  %68 = vst [vmem:[%s3] sm:$0xff] %v60
  %69 = vst [vmem:[%s3 + $0x8] sm:$0xff] %v61
  %70 = vst [vmem:[%s3 + $0x10] sm:$0xff] %v62
  %71 = vst [vmem:[%s3 + $0x18] sm:$0xff] %v63
  %72 = vst [vmem:[%s3 + $0x20] sm:$0xff] %v64
  %73 = vst [vmem:[%s3 + $0x28] sm:$0xff] %v65
  %74 = vst [vmem:[%s3 + $0x30] sm:$0xff] %v66
  %75 = vst [vmem:[%s3 + $0x38] sm:$0xff] %v67
  // Predicated region
  $region14: #{_lambda_.7} parent=0 // pred_check
    _
  $region15: #{_lambda_.7} parent=0 // pred_check_branch
    %77 = sbr.rel (0) target = $region17
  $region16: #{_lambda_.7} parent=0 // pred_region
    _
  $region17: #{_lambda_.7} parent=0 // pred_fallthru
    _
  // Predicated region
  $region18: #{_lambda_.7} parent=0 // pred_check
    _
  $region19: #{_lambda_.7} parent=0 // pred_check_branch
    %79 = sbr.rel (0) target = $region21
  $region20: #{_lambda_.7} parent=0 // pred_region
    _
  $region21: #{_lambda_.7} parent=0 // pred_fallthru
    _

// kernel: _lambda_.6
$region0: #{_lambda_.6}
  #allocation0 [shape = 'u32[]', space=smem, size = 0x4, offset = 0x4, fixed_abs, tag = 'smem constant byte address 0x4 - core index']
  #allocation1 [shape = 'u32[144,128]{1,0:T(1,128)}', space=vmem, size = 0x12000, scoped, tag = 'internal scratch']
  %s0 = inlined_call_operand.vmem [shape: bf16[2,10,10,10,8], index: 0, kind: input, shape index: {}, may-alias: {0,1,2}]
  %s1 = inlined_call_operand.vmem [shape: bf16[2,10,10,10,8], index: 1, kind: input, shape index: {}, may-alias: {0,1,2}]
  %s2 = inlined_call_operand.vmem [shape: bf16[2,10,10,10,8], index: 2, kind: input, shape index: {}, may-alias: {0,1,2}]
  %s3 = inlined_call_operand.vmem [shape: bf16[27,8,8], index: 3, kind: input, shape index: {}]
  %s4 = inlined_call_operand.vmem [shape: bf16[1024,8], index: 4, kind: output, shape index: {0}]
  %s5 = inlined_call_operand.vmem [shape: f32[128,8], index: 5, kind: output, shape index: {1}]
  %s6 = inlined_call_operand.vmem [shape: f32[128,8], index: 6, kind: output, shape index: {2}]
  %7 = xla_tuple %s4, %s5, %s6
  %s8 = sld [smem:[#allocation0]]
  $region65: #{_lambda_.6} parent=0
    _
  %s10 = ssub.s32 1, %s8
  %s11 = scalar_select 0, %s10, %s8
  loop: start=0, step=1, limit=18
  $region2: #{_lambda_.6} parent=0 // loop_pre_header
    _
  $region3: #{_lambda_.6} parent=0 // loop_header
    %s13 = sphi 0, %s17
    %p14 = scmp.ge.s32.totalorder %s13, 18
    %s20 = sphi 0, %s32
    %s21 = sphi 0, %s28
    %s22 = sphi 0, %s20
    %s23 = sphi 0, %s21
    %s24 = sphi 0, %s22
    %s25 = sphi 0, %s23
    %s37 = sphi 0, %s39
    %s40 = sphi 0, %s37
    %s41 = sphi 0, %s40
    %s57 = sphi 0, %s41
    %s67 = sphi 0, %s69
    %s70 = sphi 0, %s67
    %s71 = sphi 0, %s70
    %s87 = sphi 0, %s71
    %s97 = sphi 0, %s99
    %s100 = sphi 0, %s97
    %s101 = sphi 0, %s100
    %s117 = sphi 0, %s101
    %s121 = sphi 0, %s121
    %s123 = sphi 0, %s121
    %s124 = sphi 0, %s123
    %s138 = sphi 0, %s124
    %s148 = sphi 0, %s150
    %s151 = sphi 0, %s148
    %s152 = sphi 0, %s151
    %s168 = sphi 0, %s152
    %s178 = sphi 0, %s180
    %s181 = sphi 0, %s178
    %s182 = sphi 0, %s181
    %s198 = sphi 0, %s182
    %s208 = sphi 0, %s210
    %s211 = sphi 0, %s208
    %s212 = sphi 0, %s211
    %s228 = sphi 0, %s212
  $region4: #{_lambda_.6} parent=0 // loop_header_branch
    %16 = sbr.rel (%p14) target = $region8
  $region5: #{_lambda_.6} parent=0 // loop_body
    %s18 = ssub.s32 %s13, 1
    %s19 = ssub.s32 %s13, 2
    %s26 = sadd.s32 1, %s21
    %p27 = scmp.ge.s32.totalorder %s26, 8
    %s28 = scalar_select %p27, 0, %s26
    %s29 = sadd.s32 1, %s20
    %s30 = scalar_select %p27, %s29, %s20
    %p31 = scmp.ge.s32.totalorder %s30, 2
    %s32 = scalar_select %p31, 0, %s30
    %s33 = ssub.s32 %s20, %s32
    %s34 = ssub.s32 %s21, %s28
    %s35 = sor.u32 %s33, %s34
    %p36 = scmp.eq.s32.totalorder %s35, 0
    %s38 = sadd.s32 %s37, 1
    %s39 = scalar_select %p36, %s37, %s38
    %p42 = pneg %p36
    %p43 = scmp.eq.s32.totalorder %s13, 15
    %p44 = por %p42, %p43
    %p45 = scmp.ne.s32.totalorder %s37, %s40
    %p46 = scmp.eq.s32.totalorder %s13, 0
    %p47 = por %p45, %p46
    %p48 = scmp.ne.s32.totalorder %s37, %s40
    %p49 = scmp.eq.s32.totalorder %s18, 15
    %p50 = por %p48, %p49
    %p51 = scmp.ne.s32.totalorder %s40, %s41
    %p52 = scmp.eq.s32.totalorder %s18, 0
    %p53 = por %p51, %p52
    %p54 = scmp.ne.s32.totalorder %s40, %s41
    %p55 = scmp.eq.s32.totalorder %s19, 15
    %p56 = por %p54, %p55
    %p58 = scmp.ne.s32.totalorder %s41, %s57
    %p59 = scmp.eq.s32.totalorder %s19, 0
    %p60 = por %p58, %p59
    %s61 = sadd.s32 %s21, 1
    %s62 = sadd.s32 %s28, 1
    %s63 = ssub.s32 %s20, %s32
    %s64 = ssub.s32 %s61, %s62
    %s65 = sor.u32 %s63, %s64
    %p66 = scmp.eq.s32.totalorder %s65, 0
    %s68 = sadd.s32 %s67, 1
    %s69 = scalar_select %p66, %s67, %s68
    %p72 = pneg %p66
    %p73 = scmp.eq.s32.totalorder %s13, 15
    %p74 = por %p72, %p73
    %p75 = scmp.ne.s32.totalorder %s67, %s70
    %p76 = scmp.eq.s32.totalorder %s13, 0
    %p77 = por %p75, %p76
    %p78 = scmp.ne.s32.totalorder %s67, %s70
    %p79 = scmp.eq.s32.totalorder %s18, 15
    %p80 = por %p78, %p79
    %p81 = scmp.ne.s32.totalorder %s70, %s71
    %p82 = scmp.eq.s32.totalorder %s18, 0
    %p83 = por %p81, %p82
    %p84 = scmp.ne.s32.totalorder %s70, %s71
    %p85 = scmp.eq.s32.totalorder %s19, 15
    %p86 = por %p84, %p85
    %p88 = scmp.ne.s32.totalorder %s71, %s87
    %p89 = scmp.eq.s32.totalorder %s19, 0
    %p90 = por %p88, %p89
    %s91 = sadd.s32 %s21, 2
    %s92 = sadd.s32 %s28, 2
    %s93 = ssub.s32 %s20, %s32
    %s94 = ssub.s32 %s91, %s92
    %s95 = sor.u32 %s93, %s94
    %p96 = scmp.eq.s32.totalorder %s95, 0
    %s98 = sadd.s32 %s97, 1
    %s99 = scalar_select %p96, %s97, %s98
    %p102 = pneg %p96
    %p103 = scmp.eq.s32.totalorder %s13, 15
    %p104 = por %p102, %p103
    %p105 = scmp.ne.s32.totalorder %s97, %s100
    %p106 = scmp.eq.s32.totalorder %s13, 0
    %p107 = por %p105, %p106
    %p108 = scmp.ne.s32.totalorder %s97, %s100
    %p109 = scmp.eq.s32.totalorder %s18, 15
    %p110 = por %p108, %p109
    %p111 = scmp.ne.s32.totalorder %s100, %s101
    %p112 = scmp.eq.s32.totalorder %s18, 0
    %p113 = por %p111, %p112
    %p114 = scmp.ne.s32.totalorder %s100, %s101
    %p115 = scmp.eq.s32.totalorder %s19, 15
    %p116 = por %p114, %p115
    %p118 = scmp.ne.s32.totalorder %s101, %s117
    %p119 = scmp.eq.s32.totalorder %s19, 0
    %p120 = por %p118, %p119
    %s122 = sadd.s32 %s121, 1
    %p125 = scmp.eq.s32.totalorder %s13, 15
    %p126 = scmp.ne.s32.totalorder %s121, %s123
    %p127 = scmp.eq.s32.totalorder %s13, 0
    %p128 = por %p126, %p127
    %p129 = scmp.ne.s32.totalorder %s121, %s123
    %p130 = scmp.eq.s32.totalorder %s18, 15
    %p131 = por %p129, %p130
    %p132 = scmp.ne.s32.totalorder %s123, %s124
    %p133 = scmp.eq.s32.totalorder %s18, 0
    %p134 = por %p132, %p133
    %p135 = scmp.ne.s32.totalorder %s123, %s124
    %p136 = scmp.eq.s32.totalorder %s19, 15
    %p137 = por %p135, %p136
    %p139 = scmp.ne.s32.totalorder %s124, %s138
    %p140 = scmp.eq.s32.totalorder %s19, 0
    %p141 = por %p139, %p140
    %s142 = smul.u32 %s20, 8
    %s143 = sadd.s32 %s142, %s21
    %s144 = smul.u32 %s32, 8
    %s145 = sadd.s32 %s144, %s28
    %s146 = ssub.s32 %s143, %s145
    %p147 = scmp.eq.s32.totalorder %s146, 0
    %s149 = sadd.s32 %s148, 1
    %s150 = scalar_select %p147, %s148, %s149
    %p153 = pneg %p147
    %p154 = scmp.eq.s32.totalorder %s13, 15
    %p155 = por %p153, %p154
    %p156 = scmp.ne.s32.totalorder %s148, %s151
    %p157 = scmp.eq.s32.totalorder %s13, 0
    %p158 = por %p156, %p157
    %p159 = scmp.ne.s32.totalorder %s148, %s151
    %p160 = scmp.eq.s32.totalorder %s18, 15
    %p161 = por %p159, %p160
    %p162 = scmp.ne.s32.totalorder %s151, %s152
    %p163 = scmp.eq.s32.totalorder %s18, 0
    %p164 = por %p162, %p163
    %p165 = scmp.ne.s32.totalorder %s151, %s152
    %p166 = scmp.eq.s32.totalorder %s19, 15
    %p167 = por %p165, %p166
    %p169 = scmp.ne.s32.totalorder %s152, %s168
    %p170 = scmp.eq.s32.totalorder %s19, 0
    %p171 = por %p169, %p170
    %s172 = smul.u32 %s20, 8
    %s173 = sadd.s32 %s172, %s21
    %s174 = smul.u32 %s32, 8
    %s175 = sadd.s32 %s174, %s28
    %s176 = ssub.s32 %s173, %s175
    %p177 = scmp.eq.s32.totalorder %s176, 0
    %s179 = sadd.s32 %s178, 1
    %s180 = scalar_select %p177, %s178, %s179
    %p183 = pneg %p177
    %p184 = scmp.eq.s32.totalorder %s13, 15
    %p185 = por %p183, %p184
    %p186 = scmp.ne.s32.totalorder %s178, %s181
    %p187 = scmp.eq.s32.totalorder %s13, 0
    %p188 = por %p186, %p187
    %p189 = scmp.ne.s32.totalorder %s178, %s181
    %p190 = scmp.eq.s32.totalorder %s18, 15
    %p191 = por %p189, %p190
    %p192 = scmp.ne.s32.totalorder %s181, %s182
    %p193 = scmp.eq.s32.totalorder %s18, 0
    %p194 = por %p192, %p193
    %p195 = scmp.ne.s32.totalorder %s181, %s182
    %p196 = scmp.eq.s32.totalorder %s19, 15
    %p197 = por %p195, %p196
    %p199 = scmp.ne.s32.totalorder %s182, %s198
    %p200 = scmp.eq.s32.totalorder %s19, 0
    %p201 = por %p199, %p200
    %s202 = smul.u32 %s20, 8
    %s203 = sadd.s32 %s202, %s21
    %s204 = smul.u32 %s32, 8
    %s205 = sadd.s32 %s204, %s28
    %s206 = ssub.s32 %s203, %s205
    %p207 = scmp.eq.s32.totalorder %s206, 0
    %s209 = sadd.s32 %s208, 1
    %s210 = scalar_select %p207, %s208, %s209
    %p213 = pneg %p207
    %p214 = scmp.eq.s32.totalorder %s13, 15
    %p215 = por %p213, %p214
    %p216 = scmp.ne.s32.totalorder %s208, %s211
    %p217 = scmp.eq.s32.totalorder %s13, 0
    %p218 = por %p216, %p217
    %p219 = scmp.ne.s32.totalorder %s208, %s211
    %p220 = scmp.eq.s32.totalorder %s18, 15
    %p221 = por %p219, %p220
    %p222 = scmp.ne.s32.totalorder %s211, %s212
    %p223 = scmp.eq.s32.totalorder %s18, 0
    %p224 = por %p222, %p223
    %p225 = scmp.ne.s32.totalorder %s211, %s212
    %p226 = scmp.eq.s32.totalorder %s19, 15
    %p227 = por %p225, %p226
    %p229 = scmp.ne.s32.totalorder %s212, %s228
    %p230 = scmp.eq.s32.totalorder %s19, 0
    %p231 = por %p229, %p230
    %p232 = scmp.le.s32.totalorder 1, %s13
    %p233 = scmp.lt.s32.totalorder %s13, 17
    %p234 = pnand %p232, %p233
    %p235 = pneg %p234
    // Predicated region
    $region9: #{_lambda_.6} parent=5 // pred_check
      _
    $region10: #{_lambda_.6} parent=5 // pred_check_branch
      %237 = sbr.rel (%p234) target = $region12
    $region11: #{_lambda_.6} parent=5 // pred_region
      %s238 = ssub.s32 %s13, 1
      // Predicated region
      $region13: #{_lambda_.6} parent=11 // pred_check
        %p239 = pneg %p134
      $region14: #{_lambda_.6} parent=11 // pred_check_branch
        %241 = sbr.rel (%p239) target = $region16
      $region15: #{_lambda_.6} parent=11 // pred_region
        _
      $region16: #{_lambda_.6} parent=11 // pred_fallthru
        _
    $region12: #{_lambda_.6} parent=5 // pred_fallthru
      _
    %p242 = scmp.lt.s32.totalorder %s13, 16
    // Predicated region
    $region17: #{_lambda_.6} parent=5 // pred_check
      %p243 = pneg %p242
    $region18: #{_lambda_.6} parent=5 // pred_check_branch
      %245 = sbr.rel (%p243) target = $region20
    $region19: #{_lambda_.6} parent=5 // pred_region
      // Predicated region
      $region21: #{_lambda_.6} parent=19 // pred_check
        %p246 = pneg %p47
      $region22: #{_lambda_.6} parent=19 // pred_check_branch
        %248 = sbr.rel (%p246) target = $region24
      $region23: #{_lambda_.6} parent=19 // pred_region
        %p249 = scmp.lt.s32.totalorder %s20, 1
        %s250 = scalar_select %p249, %s20, 1
        %p251 = scmp.lt.s32.totalorder %s21, 9
        %s252 = scalar_select %p251, %s21, 9
        %s253 = smul.addr %s252, 20
        %s254 = smul.addr %s250, 200
        %s255 = sadd.s32 %s253, %s254
        %s256 = smul.addr %s255, 4
        %s257 = scalar_lea.vmem %s0, %s256
      $region24: #{_lambda_.6} parent=19 // pred_fallthru
        _
      // Predicated region
      $region25: #{_lambda_.6} parent=19 // pred_check
        %p258 = pneg %p77
      $region26: #{_lambda_.6} parent=19 // pred_check_branch
        %260 = sbr.rel (%p258) target = $region28
      $region27: #{_lambda_.6} parent=19 // pred_region
        %s261 = sadd.s32 %s21, 1
        %p262 = scmp.lt.s32.totalorder %s20, 1
        %s263 = scalar_select %p262, %s20, 1
        %p264 = scmp.lt.s32.totalorder %s261, 9
        %s265 = scalar_select %p264, %s261, 9
        %s266 = smul.addr %s265, 20
        %s267 = smul.addr %s263, 200
        %s268 = sadd.s32 %s266, %s267
        %s269 = smul.addr %s268, 4
        %s270 = scalar_lea.vmem %s1, %s269
        %s271 = sadd.s32 %s21, 1
      $region28: #{_lambda_.6} parent=19 // pred_fallthru
        _
      // Predicated region
      $region29: #{_lambda_.6} parent=19 // pred_check
        %p272 = pneg %p107
      $region30: #{_lambda_.6} parent=19 // pred_check_branch
        %274 = sbr.rel (%p272) target = $region32
      $region31: #{_lambda_.6} parent=19 // pred_region
        %s275 = sadd.s32 %s21, 2
        %p276 = scmp.lt.s32.totalorder %s20, 1
        %s277 = scalar_select %p276, %s20, 1
        %p278 = scmp.lt.s32.totalorder %s275, 9
        %s279 = scalar_select %p278, %s275, 9
        %s280 = smul.addr %s279, 20
        %s281 = smul.addr %s277, 200
        %s282 = sadd.s32 %s280, %s281
        %s283 = smul.addr %s282, 4
        %s284 = scalar_lea.vmem %s2, %s283
        %s285 = sadd.s32 %s21, 2
      $region32: #{_lambda_.6} parent=19 // pred_fallthru
        _
    $region20: #{_lambda_.6} parent=5 // pred_fallthru
      _
    %p286 = scmp.le.s32.totalorder 1, %s13
    %p287 = scmp.lt.s32.totalorder %s13, 17
    %p288 = pnand %p286, %p287
    %p289 = pneg %p288
    // Predicated region
    $region33: #{_lambda_.6} parent=5 // pred_check
      _
    $region34: #{_lambda_.6} parent=5 // pred_check_branch
      %291 = sbr.rel (%p288) target = $region36
    $region35: #{_lambda_.6} parent=5 // pred_region
      %s292 = ssub.s32 %s13, 1
      %p293 = scmp.lt.s32.totalorder %s22, 1
      %s294 = scalar_select %p293, %s22, 1
      %p295 = scmp.lt.s32.totalorder %s23, 9
      %s296 = scalar_select %p295, %s23, 9
      %s297 = smul.addr %s296, 20
      %s298 = smul.addr %s294, 200
      %s299 = sadd.s32 %s297, %s298
      %s300 = smul.addr %s299, 4
      %s301 = scalar_lea.vmem %s0, %s300
      %p302 = pneg %p53
      %p303 = pneg %p50
      %s304 = sadd.s32 %s23, 1
      %p305 = scmp.lt.s32.totalorder %s22, 1
      %s306 = scalar_select %p305, %s22, 1
      %p307 = scmp.lt.s32.totalorder %s304, 9
      %s308 = scalar_select %p307, %s304, 9
      %s309 = smul.addr %s308, 20
      %s310 = smul.addr %s306, 200
      %s311 = sadd.s32 %s309, %s310
      %s312 = smul.addr %s311, 4
      %s313 = scalar_lea.vmem %s1, %s312
      %p314 = pneg %p83
      %p315 = pneg %p80
      %s316 = sadd.s32 %s23, 2
      %p317 = scmp.lt.s32.totalorder %s22, 1
      %s318 = scalar_select %p317, %s22, 1
      %p319 = scmp.lt.s32.totalorder %s316, 9
      %s320 = scalar_select %p319, %s316, 9
      %s321 = smul.addr %s320, 20
      %s322 = smul.addr %s318, 200
      %s323 = sadd.s32 %s321, %s322
      %s324 = smul.addr %s323, 4
      %s325 = scalar_lea.vmem %s2, %s324
      %p326 = pneg %p113
      %p327 = pneg %p110
      %p328 = pneg %p134
      %p329 = pneg %p131
      %p330 = pneg %p164
      %p331 = pneg %p161
      %s332 = smul.u32 %s22, 8
      %s333 = sadd.s32 %s332, %s23
      %s334 = smul.u32 8, %s333
      %p335 = scmp.lt.s32.totalorder %s334, 127
      %s336 = scalar_select %p335, %s334, 127
      %s337 = smul.addr %s336, 4
      %s338 = scalar_lea.vmem %s4, %s337
      %p339 = pneg %p194
      %p340 = pneg %p191
      %s341 = smul.u32 %s22, 8
      %s342 = sadd.s32 %s341, %s23
      %p343 = scmp.lt.s32.totalorder %s342, 15
      %s344 = scalar_select %p343, %s342, 15
      %s345 = smul.addr %s344, 8
      %s346 = scalar_lea.vmem %s5, %s345
      %p347 = pneg %p224
      %p348 = pneg %p221
      %s349 = smul.u32 %s22, 8
      %s350 = sadd.s32 %s349, %s23
      %p351 = scmp.lt.s32.totalorder %s350, 15
      %s352 = scalar_select %p351, %s350, 15
      %s353 = smul.addr %s352, 8
      %s354 = scalar_lea.vmem %s6, %s353
      %p355 = scmp.lt.s32.totalorder %s22, 1
      %s356 = scalar_select %p355, %s22, 1
      %p357 = scmp.lt.s32.totalorder %s23, 9
      %s358 = scalar_select %p357, %s23, 9
      %s359 = smul.addr %s358, 20
      %s360 = smul.addr %s356, 200
      %s361 = sadd.s32 %s359, %s360
      %s362 = smul.addr %s361, 4
      %s363 = scalar_lea.vmem %s0, %s362
      %s364 = sadd.s32 %s23, 1
      %p365 = scmp.lt.s32.totalorder %s22, 1
      %s366 = scalar_select %p365, %s22, 1
      %p367 = scmp.lt.s32.totalorder %s364, 9
      %s368 = scalar_select %p367, %s364, 9
      %s369 = smul.addr %s368, 20
      %s370 = smul.addr %s366, 200
      %s371 = sadd.s32 %s369, %s370
      %s372 = smul.addr %s371, 4
      %s373 = scalar_lea.vmem %s1, %s372
      %s374 = sadd.s32 %s23, 1
      %s375 = sadd.s32 %s23, 2
      %p376 = scmp.lt.s32.totalorder %s22, 1
      %s377 = scalar_select %p376, %s22, 1
      %p378 = scmp.lt.s32.totalorder %s375, 9
      %s379 = scalar_select %p378, %s375, 9
      %s380 = smul.addr %s379, 20
      %s381 = smul.addr %s377, 200
      %s382 = sadd.s32 %s380, %s381
      %s383 = smul.addr %s382, 4
      %s384 = scalar_lea.vmem %s2, %s383
      %s385 = sadd.s32 %s23, 2
      %s386 = smul.u32 %s22, 8
      %s387 = sadd.s32 %s386, %s23
      %s388 = smul.u32 8, %s387
      %p389 = scmp.lt.s32.totalorder %s388, 127
      %s390 = scalar_select %p389, %s388, 127
      %s391 = smul.addr %s390, 4
      %s392 = scalar_lea.vmem %s4, %s391
      %s393 = smul.u32 %s22, 8
      %s394 = sadd.s32 %s393, %s23
      %s395 = smul.u32 8, %s394
      %s396 = smul.u32 %s22, 8
      %s397 = sadd.s32 %s396, %s23
      %p398 = scmp.lt.s32.totalorder %s397, 15
      %s399 = scalar_select %p398, %s397, 15
      %s400 = smul.addr %s399, 8
      %s401 = scalar_lea.vmem %s5, %s400
      %s402 = smul.u32 %s22, 8
      %s403 = sadd.s32 %s402, %s23
      %s404 = smul.u32 %s22, 8
      %s405 = sadd.s32 %s404, %s23
      %p406 = scmp.lt.s32.totalorder %s405, 15
      %s407 = scalar_select %p406, %s405, 15
      %s408 = smul.addr %s407, 8
      %s409 = scalar_lea.vmem %s6, %s408
      %s410 = smul.u32 %s22, 8
      %s411 = sadd.s32 %s410, %s23
      %v413 = vld [vmem:[%s363] sm:$0xf]
      %v414 = vld [vmem:[%s363 + $0x4] sm:$0x1]
      %v415 = vld [vmem:[%s363 + $0x8] sm:$0xf]
      %v416 = vld [vmem:[%s363 + $0xc] sm:$0x1]
      %v417 = vld [vmem:[%s363 + $0x10] sm:$0xf]
      %v418 = vld [vmem:[%s363 + $0x14] sm:$0x1]
      %v419 = vld [vmem:[%s363 + $0x18] sm:$0xf]
      %v420 = vld [vmem:[%s363 + $0x1c] sm:$0x1]
      %v421 = vld [vmem:[%s363 + $0x20] sm:$0xf]
      %v422 = vld [vmem:[%s363 + $0x24] sm:$0x1]
      %v423 = vld [vmem:[%s363 + $0x28] sm:$0xf]
      %v424 = vld [vmem:[%s363 + $0x2c] sm:$0x1]
      %v425 = vld [vmem:[%s363 + $0x30] sm:$0xf]
      %v426 = vld [vmem:[%s363 + $0x34] sm:$0x1]
      %v427 = vld [vmem:[%s363 + $0x38] sm:$0xf]
      %v428 = vld [vmem:[%s363 + $0x3c] sm:$0x1]
      %v429 = vld [vmem:[%s363 + $0x40] sm:$0xf]
      %v430 = vld [vmem:[%s363 + $0x44] sm:$0x1]
      %v431 = vld [vmem:[%s363 + $0x48] sm:$0xf]
      %v432 = vld [vmem:[%s363 + $0x4c] sm:$0x1]
      %v433 = vld [vmem:[%s373] sm:$0xf]
      %v434 = vld [vmem:[%s373 + $0x4] sm:$0x1]
      %v435 = vld [vmem:[%s373 + $0x8] sm:$0xf]
      %v436 = vld [vmem:[%s373 + $0xc] sm:$0x1]
      %v437 = vld [vmem:[%s373 + $0x10] sm:$0xf]
      %v438 = vld [vmem:[%s373 + $0x14] sm:$0x1]
      %v439 = vld [vmem:[%s373 + $0x18] sm:$0xf]
      %v440 = vld [vmem:[%s373 + $0x1c] sm:$0x1]
      %v441 = vld [vmem:[%s373 + $0x20] sm:$0xf]
      %v442 = vld [vmem:[%s373 + $0x24] sm:$0x1]
      %v443 = vld [vmem:[%s373 + $0x28] sm:$0xf]
      %v444 = vld [vmem:[%s373 + $0x2c] sm:$0x1]
      %v445 = vld [vmem:[%s373 + $0x30] sm:$0xf]
      %v446 = vld [vmem:[%s373 + $0x34] sm:$0x1]
      %v447 = vld [vmem:[%s373 + $0x38] sm:$0xf]
      %v448 = vld [vmem:[%s373 + $0x3c] sm:$0x1]
      %v449 = vld [vmem:[%s373 + $0x40] sm:$0xf]
      %v450 = vld [vmem:[%s373 + $0x44] sm:$0x1]
      %v451 = vld [vmem:[%s373 + $0x48] sm:$0xf]
      %v452 = vld [vmem:[%s373 + $0x4c] sm:$0x1]
      %v453 = vld [vmem:[%s384] sm:$0xf]
      %v454 = vld [vmem:[%s384 + $0x4] sm:$0x1]
      %v455 = vld [vmem:[%s384 + $0x8] sm:$0xf]
      %v456 = vld [vmem:[%s384 + $0xc] sm:$0x1]
      %v457 = vld [vmem:[%s384 + $0x10] sm:$0xf]
      %v458 = vld [vmem:[%s384 + $0x14] sm:$0x1]
      %v459 = vld [vmem:[%s384 + $0x18] sm:$0xf]
      %v460 = vld [vmem:[%s384 + $0x1c] sm:$0x1]
      %v461 = vld [vmem:[%s384 + $0x20] sm:$0xf]
      %v462 = vld [vmem:[%s384 + $0x24] sm:$0x1]
      %v463 = vld [vmem:[%s384 + $0x28] sm:$0xf]
      %v464 = vld [vmem:[%s384 + $0x2c] sm:$0x1]
      %v465 = vld [vmem:[%s384 + $0x30] sm:$0xf]
      %v466 = vld [vmem:[%s384 + $0x34] sm:$0x1]
      %v467 = vld [vmem:[%s384 + $0x38] sm:$0xf]
      %v468 = vld [vmem:[%s384 + $0x3c] sm:$0x1]
      %v469 = vld [vmem:[%s384 + $0x40] sm:$0xf]
      %v470 = vld [vmem:[%s384 + $0x44] sm:$0x1]
      %v471 = vld [vmem:[%s384 + $0x48] sm:$0xf]
      %v472 = vld [vmem:[%s384 + $0x4c] sm:$0x1]
      %v473 = vld [vmem:[%s3] sm:$0xf]
      %vm474 = vsmask.f32 3328
      %vm475 = vsmask.f32 7440
      %vm476 = vmor %vm474, %vm475
      %v478 = vshrl.u32 %v413, 16
      %v480 = vrot.slane %v478, 4
      %v481 = vshll.u32 %v413, 16
      %v483 = vrot.slane %v481, 5
      %v484 = vor.u32 %v480, %v483
      %v485 = vrot.slane %v484, 4
      %v487 = vshll.u32 %v414, 16
      %v489 = vrot.slane %v487, 5
      %v490 = vsel %vm476, %v485, %v489
      %v492 = vshrl.u32 %v415, 16
      %v494 = vrot.slane %v492, 4
      %v495 = vshll.u32 %v415, 16
      %v497 = vrot.slane %v495, 5
      %v498 = vor.u32 %v494, %v497
      %v499 = vrot.slane %v498, 4
      %v501 = vshll.u32 %v416, 16
      %v503 = vrot.slane %v501, 5
      %v504 = vsel %vm476, %v499, %v503
      %v506 = vshrl.u32 %v417, 16
      %v508 = vrot.slane %v506, 4
      %v509 = vshll.u32 %v417, 16
      %v511 = vrot.slane %v509, 5
      %v512 = vor.u32 %v508, %v511
      %v513 = vrot.slane %v512, 4
      %v515 = vshll.u32 %v418, 16
      %v517 = vrot.slane %v515, 5
      %v518 = vsel %vm476, %v513, %v517
      %v520 = vshrl.u32 %v419, 16
      %v522 = vrot.slane %v520, 4
      %v523 = vshll.u32 %v419, 16
      %v525 = vrot.slane %v523, 5
      %v526 = vor.u32 %v522, %v525
      %v527 = vrot.slane %v526, 4
      %v529 = vshll.u32 %v420, 16
      %v531 = vrot.slane %v529, 5
      %v532 = vsel %vm476, %v527, %v531
      %v534 = vshrl.u32 %v421, 16
      %v536 = vrot.slane %v534, 4
      %v537 = vshll.u32 %v421, 16
      %v539 = vrot.slane %v537, 5
      %v540 = vor.u32 %v536, %v539
      %v541 = vrot.slane %v540, 4
      %v543 = vshll.u32 %v422, 16
      %v545 = vrot.slane %v543, 5
      %v546 = vsel %vm476, %v541, %v545
      %v548 = vshrl.u32 %v423, 16
      %v550 = vrot.slane %v548, 4
      %v551 = vshll.u32 %v423, 16
      %v553 = vrot.slane %v551, 5
      %v554 = vor.u32 %v550, %v553
      %v555 = vrot.slane %v554, 4
      %v557 = vshll.u32 %v424, 16
      %v559 = vrot.slane %v557, 5
      %v560 = vsel %vm476, %v555, %v559
      %v562 = vshrl.u32 %v425, 16
      %v564 = vrot.slane %v562, 4
      %v565 = vshll.u32 %v425, 16
      %v567 = vrot.slane %v565, 5
      %v568 = vor.u32 %v564, %v567
      %v569 = vrot.slane %v568, 4
      %v571 = vshll.u32 %v426, 16
      %v573 = vrot.slane %v571, 5
      %v574 = vsel %vm476, %v569, %v573
      %v576 = vshrl.u32 %v427, 16
      %v578 = vrot.slane %v576, 4
      %v579 = vshll.u32 %v427, 16
      %v581 = vrot.slane %v579, 5
      %v582 = vor.u32 %v578, %v581
      %v583 = vrot.slane %v582, 4
      %v585 = vshll.u32 %v428, 16
      %v587 = vrot.slane %v585, 5
      %v588 = vsel %vm476, %v583, %v587
      %s589 = scalar_lea.vmem %s3, 4
      %v590 = vld [vmem:[%s589] sm:$0xf]
      %v591 = vunpack.c.l.b16 %v490
      %v592 = vunpack.c.l.b16 %v504
      %v593 = vunpack.c.l.b16 %v518
      %v594 = vunpack.c.l.b16 %v532
      %v595 = vunpack.c.l.b16 %v546
      %v596 = vunpack.c.l.b16 %v560
      %v597 = vunpack.c.l.b16 %v574
      %v598 = vunpack.c.l.b16 %v588
      %v599 = vpack.c.b16 %v592, %v591
      %v600 = vpack.c.b16 %v594, %v593
      %v601 = vpack.c.b16 %v596, %v595
      %v602 = vpack.c.b16 %v598, %v597
      %vm603 = vcmask 64512
      %v605 = vsel %vm603, %v599, 0
      %v608 = vsel %vm603, %v600, 0
      %v611 = vsel %vm603, %v601, 0
      %v614 = vsel %vm603, %v602, 0
      %vm616 = vcmask 1043456
      %v618 = vsel %vm616, %v590, 0
      %620 = vmatprep.subr.bf16.mxu0 0
      %621 = vmatpush1.bf16.msra.mxu0 %v618
      %622 = vmatprep.subr.bf16.mxu0 0
      %623 = vmatpush1.bf16.msra.mxu0 0
      %624 = vmatprep.subr.bf16.mxu0 0
      %625 = vmatpush1.bf16.msra.mxu0 0
      %626 = vmatprep.subr.bf16.mxu0 0
      %627 = vmatpush1.bf16.msra.mxu0 0
      %628 = vmatprep.subr.bf16.mxu0 0
      %629 = vmatpush1.bf16.msra.mxu0 0
      %630 = vmatprep.subr.bf16.mxu0 0
      %631 = vmatpush1.bf16.msra.mxu0 0
      %632 = vmatprep.subr.bf16.mxu0 0
      %633 = vmatpush1.bf16.msra.mxu0 0
      %634 = vmatprep.subr.bf16.mxu0 0
      %635 = vmatpush1.bf16.msra.mxu0 0
      %636 = vmatprep.subr.bf16.mxu0 0
      %637 = vmatpush1.bf16.msra.mxu0 0
      %638 = vmatprep.subr.bf16.mxu0 0
      %639 = vmatpush1.bf16.msra.mxu0 0
      %640 = vmatprep.subr.bf16.mxu0 0
      %641 = vmatpush1.bf16.msra.mxu0 0
      %642 = vmatprep.subr.bf16.mxu0 0
      %643 = vmatpush1.bf16.msra.mxu0 0
      %644 = vmatprep.subr.bf16.mxu0 0
      %645 = vmatpush1.bf16.msra.mxu0 0
      %646 = vmatprep.subr.bf16.mxu0 0
      %647 = vmatpush1.bf16.msra.mxu0 0
      %648 = vmatprep.subr.bf16.mxu0 0
      %649 = vmatpush1.bf16.msra.mxu0 0
      %650 = vmatprep.subr.bf16.mxu0 0
      %651 = vmatpush1.bf16.msra.mxu0 0
      %652 = vmatprep.mubr.bf16.mxu0 0
      %653 = vmatmul.mubr.bf16.gmra.mrb[0].mxu0 %v605
      %v654 = vpop.f32.mrb[0].mxu0
      %v655 = vadd.f32 0.0, %v654
      %v656 = vpop.f32.mrb[0].mxu0
      %v657 = vpop.f32.mrb[0].mxu0
      %v658 = vadd.f32 0.0, %v657
      %v659 = vpop.f32.mrb[0].mxu0
      %660 = vmatprep.mubr.bf16.mxu0 0
      %661 = vmatmul.mubr.bf16.gmra.mrb[0].mxu0 %v608
      %v662 = vpop.f32.mrb[0].mxu0
      %v663 = vadd.f32 0.0, %v662
      %v664 = vpop.f32.mrb[0].mxu0
      %v665 = vpop.f32.mrb[0].mxu0
      %v666 = vadd.f32 0.0, %v665
      %v667 = vpop.f32.mrb[0].mxu0
      %668 = vmatprep.mubr.bf16.mxu0 0
      %669 = vmatmul.mubr.bf16.gmra.mrb[0].mxu0 %v611
      %v670 = vpop.f32.mrb[0].mxu0
      %v671 = vadd.f32 0.0, %v670
      %v672 = vpop.f32.mrb[0].mxu0
      %v673 = vpop.f32.mrb[0].mxu0
      %v674 = vadd.f32 0.0, %v673
      %v675 = vpop.f32.mrb[0].mxu0
      %676 = vmatprep.mubr.bf16.mxu0 0
      %677 = vmatmul.mubr.bf16.gmra.mrb[0].mxu0 %v614
      %v678 = vpop.f32.mrb[0].mxu0
      %v679 = vadd.f32 0.0, %v678
      %v680 = vpop.f32.mrb[0].mxu0
      %v681 = vpop.f32.mrb[0].mxu0
      %v682 = vadd.f32 0.0, %v681
      %v683 = vpop.f32.mrb[0].mxu0
      %684 = vdwg.mxu0
      %v693 = vunpack.c.l.b16 %v413
      %v694 = vunpack.c.l.b16 %v415
      %v695 = vunpack.c.l.b16 %v417
      %v696 = vunpack.c.l.b16 %v419
      %v697 = vunpack.c.l.b16 %v421
      %v698 = vunpack.c.l.b16 %v423
      %v699 = vunpack.c.l.b16 %v425
      %v700 = vunpack.c.l.b16 %v427
      %v701 = vpack.c.b16 %v694, %v693
      %v702 = vpack.c.b16 %v696, %v695
      %v703 = vpack.c.b16 %v698, %v697
      %v704 = vpack.c.b16 %v700, %v699
      %v706 = vsel %vm603, %v701, 0
      %v709 = vsel %vm603, %v702, 0
      %v712 = vsel %vm603, %v703, 0
      %v715 = vsel %vm603, %v704, 0
      %v718 = vsel %vm616, %v473, 0
      %720 = vmatprep.subr.bf16.mxu0 0
      %721 = vmatpush1.bf16.msra.mxu0 %v718
      %722 = vmatprep.subr.bf16.mxu0 0
      %723 = vmatpush1.bf16.msra.mxu0 0
      %724 = vmatprep.subr.bf16.mxu0 0
      %725 = vmatpush1.bf16.msra.mxu0 0
      %726 = vmatprep.subr.bf16.mxu0 0
      %727 = vmatpush1.bf16.msra.mxu0 0
      %728 = vmatprep.subr.bf16.mxu0 0
      %729 = vmatpush1.bf16.msra.mxu0 0
      %730 = vmatprep.subr.bf16.mxu0 0
      %731 = vmatpush1.bf16.msra.mxu0 0
      %732 = vmatprep.subr.bf16.mxu0 0
      %733 = vmatpush1.bf16.msra.mxu0 0
      %734 = vmatprep.subr.bf16.mxu0 0
      %735 = vmatpush1.bf16.msra.mxu0 0
      %736 = vmatprep.subr.bf16.mxu0 0
      %737 = vmatpush1.bf16.msra.mxu0 0
      %738 = vmatprep.subr.bf16.mxu0 0
      %739 = vmatpush1.bf16.msra.mxu0 0
      %740 = vmatprep.subr.bf16.mxu0 0
      %741 = vmatpush1.bf16.msra.mxu0 0
      %742 = vmatprep.subr.bf16.mxu0 0
      %743 = vmatpush1.bf16.msra.mxu0 0
      %744 = vmatprep.subr.bf16.mxu0 0
      %745 = vmatpush1.bf16.msra.mxu0 0
      %746 = vmatprep.subr.bf16.mxu0 0
      %747 = vmatpush1.bf16.msra.mxu0 0
      %748 = vmatprep.subr.bf16.mxu0 0
      %749 = vmatpush1.bf16.msra.mxu0 0
      %750 = vmatprep.subr.bf16.mxu0 0
      %751 = vmatpush1.bf16.msra.mxu0 0
      %752 = vmatprep.mubr.bf16.mxu0 0
      %753 = vmatmul.mubr.bf16.gmra.mrb[0].mxu0 %v706
      %v754 = vpop.f32.mrb[0].mxu0
      %v755 = vadd.f32 %v655, %v754
      %v756 = vpop.f32.mrb[0].mxu0
      %v757 = vpop.f32.mrb[0].mxu0
      %v758 = vadd.f32 %v658, %v757
      %v759 = vpop.f32.mrb[0].mxu0
      %760 = vmatprep.mubr.bf16.mxu0 0
      %761 = vmatmul.mubr.bf16.gmra.mrb[0].mxu0 %v709
      %v762 = vpop.f32.mrb[0].mxu0
      %v763 = vadd.f32 %v663, %v762
      %v764 = vpop.f32.mrb[0].mxu0
      %v765 = vpop.f32.mrb[0].mxu0
      %v766 = vadd.f32 %v666, %v765
      %v767 = vpop.f32.mrb[0].mxu0
      %768 = vmatprep.mubr.bf16.mxu0 0
      %769 = vmatmul.mubr.bf16.gmra.mrb[0].mxu0 %v712
      %v770 = vpop.f32.mrb[0].mxu0
      %v771 = vadd.f32 %v671, %v770
      %v772 = vpop.f32.mrb[0].mxu0
      %v773 = vpop.f32.mrb[0].mxu0
      %v774 = vadd.f32 %v674, %v773
      %v775 = vpop.f32.mrb[0].mxu0
      %776 = vmatprep.mubr.bf16.mxu0 0
      %777 = vmatmul.mubr.bf16.gmra.mrb[0].mxu0 %v715
      %v778 = vpop.f32.mrb[0].mxu0
      %v779 = vadd.f32 %v679, %v778
      %v780 = vpop.f32.mrb[0].mxu0
      %v781 = vpop.f32.mrb[0].mxu0
      %v782 = vadd.f32 %v682, %v781
      %v783 = vpop.f32.mrb[0].mxu0
      %784 = vdwg.mxu0
      %vm793 = vcmask 1042432
      %vm794 = vcmask 1046532
      %vm795 = vmor %vm793, %vm794
      %v796 = vrot.slane %v413, 5
      %v797 = vrot.slane %v796, 4
      %v798 = vrot.slane %v414, 5
      %v799 = vsel %vm795, %v797, %v798
      %v800 = vrot.slane %v415, 5
      %v801 = vrot.slane %v800, 4
      %v802 = vrot.slane %v416, 5
      %v803 = vsel %vm795, %v801, %v802
      %v804 = vrot.slane %v417, 5
      %v805 = vrot.slane %v804, 4
      %v806 = vrot.slane %v418, 5
      %v807 = vsel %vm795, %v805, %v806
      %v808 = vrot.slane %v419, 5
      %v809 = vrot.slane %v808, 4
      %v810 = vrot.slane %v420, 5
      %v811 = vsel %vm795, %v809, %v810
      %v812 = vrot.slane %v421, 5
      %v813 = vrot.slane %v812, 4
      %v814 = vrot.slane %v422, 5
      %v815 = vsel %vm795, %v813, %v814
      %v816 = vrot.slane %v423, 5
      %v817 = vrot.slane %v816, 4
      %v818 = vrot.slane %v424, 5
      %v819 = vsel %vm795, %v817, %v818
      %v820 = vrot.slane %v425, 5
      %v821 = vrot.slane %v820, 4
      %v822 = vrot.slane %v426, 5
      %v823 = vsel %vm795, %v821, %v822
      %v824 = vrot.slane %v427, 5
      %v825 = vrot.slane %v824, 4
      %v826 = vrot.slane %v428, 5
      %v827 = vsel %vm795, %v825, %v826
      %s828 = scalar_lea.vmem %s3, 8
      %v829 = vld [vmem:[%s828] sm:$0xf]
      %v830 = vunpack.c.l.b16 %v799
      %v831 = vunpack.c.l.b16 %v803
      %v832 = vunpack.c.l.b16 %v807
      %v833 = vunpack.c.l.b16 %v811
      %v834 = vunpack.c.l.b16 %v815
      %v835 = vunpack.c.l.b16 %v819
      %v836 = vunpack.c.l.b16 %v823
      %v837 = vunpack.c.l.b16 %v827
      %v838 = vpack.c.b16 %v831, %v830
      %v839 = vpack.c.b16 %v833, %v832
      %v840 = vpack.c.b16 %v835, %v834
      %v841 = vpack.c.b16 %v837, %v836
      %v843 = vsel %vm603, %v838, 0
      %v846 = vsel %vm603, %v839, 0
      %v849 = vsel %vm603, %v840, 0
      %v852 = vsel %vm603, %v841, 0
      %v855 = vsel %vm616, %v829, 0
      %857 = vmatprep.subr.bf16.mxu0 0
      %858 = vmatpush1.bf16.msra.mxu0 %v855
      %859 = vmatprep.subr.bf16.mxu0 0
      %860 = vmatpush1.bf16.msra.mxu0 0
      %861 = vmatprep.subr.bf16.mxu0 0
      %862 = vmatpush1.bf16.msra.mxu0 0
      %863 = vmatprep.subr.bf16.mxu0 0
      %864 = vmatpush1.bf16.msra.mxu0 0
      %865 = vmatprep.subr.bf16.mxu0 0
      %866 = vmatpush1.bf16.msra.mxu0 0
      %867 = vmatprep.subr.bf16.mxu0 0
      %868 = vmatpush1.bf16.msra.mxu0 0
      %869 = vmatprep.subr.bf16.mxu0 0
      %870 = vmatpush1.bf16.msra.mxu0 0
      %871 = vmatprep.subr.bf16.mxu0 0
      %872 = vmatpush1.bf16.msra.mxu0 0
      %873 = vmatprep.subr.bf16.mxu0 0
      %874 = vmatpush1.bf16.msra.mxu0 0
      %875 = vmatprep.subr.bf16.mxu0 0
      %876 = vmatpush1.bf16.msra.mxu0 0
      %877 = vmatprep.subr.bf16.mxu0 0
      %878 = vmatpush1.bf16.msra.mxu0 0
      %879 = vmatprep.subr.bf16.mxu0 0
      %880 = vmatpush1.bf16.msra.mxu0 0
      %881 = vmatprep.subr.bf16.mxu0 0
      %882 = vmatpush1.bf16.msra.mxu0 0
      %883 = vmatprep.subr.bf16.mxu0 0
      %884 = vmatpush1.bf16.msra.mxu0 0
      %885 = vmatprep.subr.bf16.mxu0 0
      %886 = vmatpush1.bf16.msra.mxu0 0
      %887 = vmatprep.subr.bf16.mxu0 0
      %888 = vmatpush1.bf16.msra.mxu0 0
      %889 = vmatprep.mubr.bf16.mxu0 0
      %890 = vmatmul.mubr.bf16.gmra.mrb[0].mxu0 %v843
      %v891 = vpop.f32.mrb[0].mxu0
      %v892 = vadd.f32 0.0, %v891
      %v893 = vpop.f32.mrb[0].mxu0
      %v894 = vpop.f32.mrb[0].mxu0
      %v895 = vadd.f32 0.0, %v894
      %v896 = vpop.f32.mrb[0].mxu0
      %897 = vmatprep.mubr.bf16.mxu0 0
      %898 = vmatmul.mubr.bf16.gmra.mrb[0].mxu0 %v846
      %v899 = vpop.f32.mrb[0].mxu0
      %v900 = vadd.f32 0.0, %v899
      %v901 = vpop.f32.mrb[0].mxu0
      %v902 = vpop.f32.mrb[0].mxu0
      %v903 = vadd.f32 0.0, %v902
      %v904 = vpop.f32.mrb[0].mxu0
      %905 = vmatprep.mubr.bf16.mxu0 0
      %906 = vmatmul.mubr.bf16.gmra.mrb[0].mxu0 %v849
      %v907 = vpop.f32.mrb[0].mxu0
      %v908 = vadd.f32 0.0, %v907
      %v909 = vpop.f32.mrb[0].mxu0
      %v910 = vpop.f32.mrb[0].mxu0
      %v911 = vadd.f32 0.0, %v910
      %v912 = vpop.f32.mrb[0].mxu0
      %913 = vmatprep.mubr.bf16.mxu0 0
      %914 = vmatmul.mubr.bf16.gmra.mrb[0].mxu0 %v852
      %v915 = vpop.f32.mrb[0].mxu0
      %v916 = vadd.f32 0.0, %v915
      %v917 = vpop.f32.mrb[0].mxu0
      %v918 = vpop.f32.mrb[0].mxu0
      %v919 = vadd.f32 0.0, %v918
      %v920 = vpop.f32.mrb[0].mxu0
      %921 = vdwg.mxu0
      %v922 = vadd.f32 %v755, %v892
      %v923 = vadd.f32 %v758, %v895
      %v924 = vadd.f32 %v763, %v900
      %v925 = vadd.f32 %v766, %v903
      %v926 = vadd.f32 %v771, %v908
      %v927 = vadd.f32 %v774, %v911
      %v928 = vadd.f32 %v779, %v916
      %v929 = vadd.f32 %v782, %v919
      %s930 = scalar_lea.vmem %s3, 12
      %v931 = vld [vmem:[%s930] sm:$0xf]
      %v933 = vunpack.c.l.b16 %v429
      %v934 = vpack.c.b16 %v695, %v694
      %v935 = vpack.c.b16 %v697, %v696
      %v936 = vpack.c.b16 %v699, %v698
      %v937 = vpack.c.b16 %v933, %v700
      %v939 = vsel %vm603, %v934, 0
      %v942 = vsel %vm603, %v935, 0
      %v945 = vsel %vm603, %v936, 0
      %v948 = vsel %vm603, %v937, 0
      %v951 = vsel %vm616, %v931, 0
      %953 = vmatprep.subr.bf16.mxu0 0
      %954 = vmatpush1.bf16.msra.mxu0 %v951
      %955 = vmatprep.subr.bf16.mxu0 0
      %956 = vmatpush1.bf16.msra.mxu0 0
      %957 = vmatprep.subr.bf16.mxu0 0
      %958 = vmatpush1.bf16.msra.mxu0 0
      %959 = vmatprep.subr.bf16.mxu0 0
      %960 = vmatpush1.bf16.msra.mxu0 0
      %961 = vmatprep.subr.bf16.mxu0 0
      %962 = vmatpush1.bf16.msra.mxu0 0
      %963 = vmatprep.subr.bf16.mxu0 0
      %964 = vmatpush1.bf16.msra.mxu0 0
      %965 = vmatprep.subr.bf16.mxu0 0
      %966 = vmatpush1.bf16.msra.mxu0 0
      %967 = vmatprep.subr.bf16.mxu0 0
      %968 = vmatpush1.bf16.msra.mxu0 0
      %969 = vmatprep.subr.bf16.mxu0 0
      %970 = vmatpush1.bf16.msra.mxu0 0
      %971 = vmatprep.subr.bf16.mxu0 0
      %972 = vmatpush1.bf16.msra.mxu0 0
      %973 = vmatprep.subr.bf16.mxu0 0
      %974 = vmatpush1.bf16.msra.mxu0 0
      %975 = vmatprep.subr.bf16.mxu0 0
      %976 = vmatpush1.bf16.msra.mxu0 0
      %977 = vmatprep.subr.bf16.mxu0 0
      %978 = vmatpush1.bf16.msra.mxu0 0
      %979 = vmatprep.subr.bf16.mxu0 0
      %980 = vmatpush1.bf16.msra.mxu0 0
      %981 = vmatprep.subr.bf16.mxu0 0
      %982 = vmatpush1.bf16.msra.mxu0 0
      %983 = vmatprep.subr.bf16.mxu0 0
      %984 = vmatpush1.bf16.msra.mxu0 0
      %985 = vmatprep.mubr.bf16.mxu0 0
      %986 = vmatmul.mubr.bf16.gmra.mrb[0].mxu0 %v939
      %v987 = vpop.f32.mrb[0].mxu0
      %v988 = vadd.f32 0.0, %v987
      %v989 = vpop.f32.mrb[0].mxu0
      %v990 = vpop.f32.mrb[0].mxu0
      %v991 = vadd.f32 0.0, %v990
      %v992 = vpop.f32.mrb[0].mxu0
      %993 = vmatprep.mubr.bf16.mxu0 0
      %994 = vmatmul.mubr.bf16.gmra.mrb[0].mxu0 %v942
      %v995 = vpop.f32.mrb[0].mxu0
      %v996 = vadd.f32 0.0, %v995
      %v997 = vpop.f32.mrb[0].mxu0
      %v998 = vpop.f32.mrb[0].mxu0
      %v999 = vadd.f32 0.0, %v998
      %v1000 = vpop.f32.mrb[0].mxu0
      %1001 = vmatprep.mubr.bf16.mxu0 0
      %1002 = vmatmul.mubr.bf16.gmra.mrb[0].mxu0 %v945
      %v1003 = vpop.f32.mrb[0].mxu0
      %v1004 = vadd.f32 0.0, %v1003
      %v1005 = vpop.f32.mrb[0].mxu0
      %v1006 = vpop.f32.mrb[0].mxu0
      %v1007 = vadd.f32 0.0, %v1006
      %v1008 = vpop.f32.mrb[0].mxu0
      %1009 = vmatprep.mubr.bf16.mxu0 0
      %1010 = vmatmul.mubr.bf16.gmra.mrb[0].mxu0 %v948
      %v1011 = vpop.f32.mrb[0].mxu0
      %v1012 = vadd.f32 0.0, %v1011
      %v1013 = vpop.f32.mrb[0].mxu0
      %v1014 = vpop.f32.mrb[0].mxu0
      %v1015 = vadd.f32 0.0, %v1014
      %v1016 = vpop.f32.mrb[0].mxu0
      %1017 = vdwg.mxu0
      %v1018 = vadd.f32 %v922, %v988
      %v1019 = vadd.f32 %v923, %v991
      %v1020 = vadd.f32 %v924, %v996
      %v1021 = vadd.f32 %v925, %v999
      %v1022 = vadd.f32 %v926, %v1004
      %v1023 = vadd.f32 %v927, %v1007
      %v1024 = vadd.f32 %v928, %v1012
      %v1025 = vadd.f32 %v929, %v1015
      %v1027 = vshrl.u32 %v429, 16
      %v1029 = vrot.slane %v1027, 4
      %v1030 = vshll.u32 %v429, 16
      %v1032 = vrot.slane %v1030, 5
      %v1033 = vor.u32 %v1029, %v1032
      %v1034 = vrot.slane %v1033, 4
      %v1036 = vshll.u32 %v430, 16
      %v1038 = vrot.slane %v1036, 5
      %v1039 = vsel %vm476, %v1034, %v1038
      %s1040 = scalar_lea.vmem %s3, 16
      %v1041 = vld [vmem:[%s1040] sm:$0xf]
      %v1042 = vunpack.c.l.b16 %v1039
      %v1043 = vpack.c.b16 %v593, %v592
      %v1044 = vpack.c.b16 %v595, %v594
      %v1045 = vpack.c.b16 %v597, %v596
      %v1046 = vpack.c.b16 %v1042, %v598
      %v1048 = vsel %vm603, %v1043, 0
      %v1051 = vsel %vm603, %v1044, 0
      %v1054 = vsel %vm603, %v1045, 0
      %v1057 = vsel %vm603, %v1046, 0
      %v1060 = vsel %vm616, %v1041, 0
      %1062 = vmatprep.subr.bf16.mxu0 0
      %1063 = vmatpush1.bf16.msra.mxu0 %v1060
      %1064 = vmatprep.subr.bf16.mxu0 0
      %1065 = vmatpush1.bf16.msra.mxu0 0
      %1066 = vmatprep.subr.bf16.mxu0 0
      %1067 = vmatpush1.bf16.msra.mxu0 0
      %1068 = vmatprep.subr.bf16.mxu0 0
      %1069 = vmatpush1.bf16.msra.mxu0 0
      %1070 = vmatprep.subr.bf16.mxu0 0
      %1071 = vmatpush1.bf16.msra.mxu0 0
      %1072 = vmatprep.subr.bf16.mxu0 0
      %1073 = vmatpush1.bf16.msra.mxu0 0
      %1074 = vmatprep.subr.bf16.mxu0 0
      %1075 = vmatpush1.bf16.msra.mxu0 0
      %1076 = vmatprep.subr.bf16.mxu0 0
      %1077 = vmatpush1.bf16.msra.mxu0 0
      %1078 = vmatprep.subr.bf16.mxu0 0
      %1079 = vmatpush1.bf16.msra.mxu0 0
      %1080 = vmatprep.subr.bf16.mxu0 0
      %1081 = vmatpush1.bf16.msra.mxu0 0
      %1082 = vmatprep.subr.bf16.mxu0 0
      %1083 = vmatpush1.bf16.msra.mxu0 0
      %1084 = vmatprep.subr.bf16.mxu0 0
      %1085 = vmatpush1.bf16.msra.mxu0 0
      %1086 = vmatprep.subr.bf16.mxu0 0
      %1087 = vmatpush1.bf16.msra.mxu0 0
      %1088 = vmatprep.subr.bf16.mxu0 0
      %1089 = vmatpush1.bf16.msra.mxu0 0
      %1090 = vmatprep.subr.bf16.mxu0 0
      %1091 = vmatpush1.bf16.msra.mxu0 0
      %1092 = vmatprep.subr.bf16.mxu0 0
      %1093 = vmatpush1.bf16.msra.mxu0 0
      %1094 = vmatprep.mubr.bf16.mxu0 0
      %1095 = vmatmul.mubr.bf16.gmra.mrb[0].mxu0 %v1048
      %v1096 = vpop.f32.mrb[0].mxu0
      %v1097 = vadd.f32 0.0, %v1096
      %v1098 = vpop.f32.mrb[0].mxu0
      %v1099 = vpop.f32.mrb[0].mxu0
      %v1100 = vadd.f32 0.0, %v1099
      %v1101 = vpop.f32.mrb[0].mxu0
      %1102 = vmatprep.mubr.bf16.mxu0 0
      %1103 = vmatmul.mubr.bf16.gmra.mrb[0].mxu0 %v1051
      %v1104 = vpop.f32.mrb[0].mxu0
      %v1105 = vadd.f32 0.0, %v1104
      %v1106 = vpop.f32.mrb[0].mxu0
      %v1107 = vpop.f32.mrb[0].mxu0
      %v1108 = vadd.f32 0.0, %v1107
      %v1109 = vpop.f32.mrb[0].mxu0
      %1110 = vmatprep.mubr.bf16.mxu0 0
      %1111 = vmatmul.mubr.bf16.gmra.mrb[0].mxu0 %v1054
      %v1112 = vpop.f32.mrb[0].mxu0
      %v1113 = vadd.f32 0.0, %v1112
      %v1114 = vpop.f32.mrb[0].mxu0
      %v1115 = vpop.f32.mrb[0].mxu0
      %v1116 = vadd.f32 0.0, %v1115
      %v1117 = vpop.f32.mrb[0].mxu0
      %1118 = vmatprep.mubr.bf16.mxu0 0
      %1119 = vmatmul.mubr.bf16.gmra.mrb[0].mxu0 %v1057
      %v1120 = vpop.f32.mrb[0].mxu0
      %v1121 = vadd.f32 0.0, %v1120
      %v1122 = vpop.f32.mrb[0].mxu0
      %v1123 = vpop.f32.mrb[0].mxu0
      %v1124 = vadd.f32 0.0, %v1123
      %v1125 = vpop.f32.mrb[0].mxu0
      %1126 = vdwg.mxu0
      %v1127 = vadd.f32 %v1018, %v1097
      %v1128 = vadd.f32 %v1019, %v1100
      %v1129 = vadd.f32 %v1020, %v1105
      %v1130 = vadd.f32 %v1021, %v1108
      %v1131 = vadd.f32 %v1022, %v1113
      %v1132 = vadd.f32 %v1023, %v1116
      %v1133 = vadd.f32 %v1024, %v1121
      %v1134 = vadd.f32 %v1025, %v1124
      %v1136 = vrot.slane %v429, 5
      %v1137 = vrot.slane %v1136, 4
      %v1138 = vrot.slane %v430, 5
      %v1139 = vsel %vm795, %v1137, %v1138
      %s1140 = scalar_lea.vmem %s3, 20
      %v1141 = vld [vmem:[%s1140] sm:$0xf]
      %v1142 = vunpack.c.l.b16 %v1139
      %v1143 = vpack.c.b16 %v832, %v831
      %v1144 = vpack.c.b16 %v834, %v833
      %v1145 = vpack.c.b16 %v836, %v835
      %v1146 = vpack.c.b16 %v1142, %v837
      %v1148 = vsel %vm603, %v1143, 0
      %v1151 = vsel %vm603, %v1144, 0
      %v1154 = vsel %vm603, %v1145, 0
      %v1157 = vsel %vm603, %v1146, 0
      %v1160 = vsel %vm616, %v1141, 0
      %1162 = vmatprep.subr.bf16.mxu0 0
      %1163 = vmatpush1.bf16.msra.mxu0 %v1160
      %1164 = vmatprep.subr.bf16.mxu0 0
      %1165 = vmatpush1.bf16.msra.mxu0 0
      %1166 = vmatprep.subr.bf16.mxu0 0
      %1167 = vmatpush1.bf16.msra.mxu0 0
      %1168 = vmatprep.subr.bf16.mxu0 0
      %1169 = vmatpush1.bf16.msra.mxu0 0
      %1170 = vmatprep.subr.bf16.mxu0 0
      %1171 = vmatpush1.bf16.msra.mxu0 0
      %1172 = vmatprep.subr.bf16.mxu0 0
      %1173 = vmatpush1.bf16.msra.mxu0 0
      %1174 = vmatprep.subr.bf16.mxu0 0
      %1175 = vmatpush1.bf16.msra.mxu0 0
      %1176 = vmatprep.subr.bf16.mxu0 0
      %1177 = vmatpush1.bf16.msra.mxu0 0
      %1178 = vmatprep.subr.bf16.mxu0 0
      %1179 = vmatpush1.bf16.msra.mxu0 0
      %1180 = vmatprep.subr.bf16.mxu0 0
      %1181 = vmatpush1.bf16.msra.mxu0 0
      %1182 = vmatprep.subr.bf16.mxu0 0
      %1183 = vmatpush1.bf16.msra.mxu0 0
      %1184 = vmatprep.subr.bf16.mxu0 0
      %1185 = vmatpush1.bf16.msra.mxu0 0
      %1186 = vmatprep.subr.bf16.mxu0 0
      %1187 = vmatpush1.bf16.msra.mxu0 0
      %1188 = vmatprep.subr.bf16.mxu0 0
      %1189 = vmatpush1.bf16.msra.mxu0 0
      %1190 = vmatprep.subr.bf16.mxu0 0
      %1191 = vmatpush1.bf16.msra.mxu0 0
      %1192 = vmatprep.subr.bf16.mxu0 0
      %1193 = vmatpush1.bf16.msra.mxu0 0
      %1194 = vmatprep.mubr.bf16.mxu0 0
      %1195 = vmatmul.mubr.bf16.gmra.mrb[0].mxu0 %v1148
      %v1196 = vpop.f32.mrb[0].mxu0
      %v1197 = vadd.f32 0.0, %v1196
      %v1198 = vpop.f32.mrb[0].mxu0
      %v1199 = vpop.f32.mrb[0].mxu0
      %v1200 = vadd.f32 0.0, %v1199
      %v1201 = vpop.f32.mrb[0].mxu0
      %1202 = vmatprep.mubr.bf16.mxu0 0
      %1203 = vmatmul.mubr.bf16.gmra.mrb[0].mxu0 %v1151
      %v1204 = vpop.f32.mrb[0].mxu0
      %v1205 = vadd.f32 0.0, %v1204
      %v1206 = vpop.f32.mrb[0].mxu0
      %v1207 = vpop.f32.mrb[0].mxu0
      %v1208 = vadd.f32 0.0, %v1207
      %v1209 = vpop.f32.mrb[0].mxu0
      %1210 = vmatprep.mubr.bf16.mxu0 0
      %1211 = vmatmul.mubr.bf16.gmra.mrb[0].mxu0 %v1154
      %v1212 = vpop.f32.mrb[0].mxu0
      %v1213 = vadd.f32 0.0, %v1212
      %v1214 = vpop.f32.mrb[0].mxu0
      %v1215 = vpop.f32.mrb[0].mxu0
      %v1216 = vadd.f32 0.0, %v1215
      %v1217 = vpop.f32.mrb[0].mxu0
      %1218 = vmatprep.mubr.bf16.mxu0 0
      %1219 = vmatmul.mubr.bf16.gmra.mrb[0].mxu0 %v1157
      %v1220 = vpop.f32.mrb[0].mxu0
      %v1221 = vadd.f32 0.0, %v1220
      %v1222 = vpop.f32.mrb[0].mxu0
      %v1223 = vpop.f32.mrb[0].mxu0
      %v1224 = vadd.f32 0.0, %v1223
      %v1225 = vpop.f32.mrb[0].mxu0
      %1226 = vdwg.mxu0
      %v1227 = vadd.f32 %v1127, %v1197
      %v1228 = vadd.f32 %v1128, %v1200
      %v1229 = vadd.f32 %v1129, %v1205
      %v1230 = vadd.f32 %v1130, %v1208
      %v1231 = vadd.f32 %v1131, %v1213
      %v1232 = vadd.f32 %v1132, %v1216
      %v1233 = vadd.f32 %v1133, %v1221
      %v1234 = vadd.f32 %v1134, %v1224
      %s1235 = scalar_lea.vmem %s3, 24
      %v1236 = vld [vmem:[%s1235] sm:$0xf]
      %v1238 = vunpack.c.l.b16 %v431
      %v1239 = vpack.c.b16 %v1238, %v933
      %v1241 = vsel %vm603, %v1239, 0
      %v1244 = vsel %vm616, %v1236, 0
      %1246 = vmatprep.subr.bf16.mxu0 0
      %1247 = vmatpush1.bf16.msra.mxu0 %v1244
      %1248 = vmatprep.subr.bf16.mxu0 0
      %1249 = vmatpush1.bf16.msra.mxu0 0
      %1250 = vmatprep.subr.bf16.mxu0 0
      %1251 = vmatpush1.bf16.msra.mxu0 0
      %1252 = vmatprep.subr.bf16.mxu0 0
      %1253 = vmatpush1.bf16.msra.mxu0 0
      %1254 = vmatprep.subr.bf16.mxu0 0
      %1255 = vmatpush1.bf16.msra.mxu0 0
      %1256 = vmatprep.subr.bf16.mxu0 0
      %1257 = vmatpush1.bf16.msra.mxu0 0
      %1258 = vmatprep.subr.bf16.mxu0 0
      %1259 = vmatpush1.bf16.msra.mxu0 0
      %1260 = vmatprep.subr.bf16.mxu0 0
      %1261 = vmatpush1.bf16.msra.mxu0 0
      %1262 = vmatprep.subr.bf16.mxu0 0
      %1263 = vmatpush1.bf16.msra.mxu0 0
      %1264 = vmatprep.subr.bf16.mxu0 0
      %1265 = vmatpush1.bf16.msra.mxu0 0
      %1266 = vmatprep.subr.bf16.mxu0 0
      %1267 = vmatpush1.bf16.msra.mxu0 0
      %1268 = vmatprep.subr.bf16.mxu0 0
      %1269 = vmatpush1.bf16.msra.mxu0 0
      %1270 = vmatprep.subr.bf16.mxu0 0
      %1271 = vmatpush1.bf16.msra.mxu0 0
      %1272 = vmatprep.subr.bf16.mxu0 0
      %1273 = vmatpush1.bf16.msra.mxu0 0
      %1274 = vmatprep.subr.bf16.mxu0 0
      %1275 = vmatpush1.bf16.msra.mxu0 0
      %1276 = vmatprep.subr.bf16.mxu0 0
      %1277 = vmatpush1.bf16.msra.mxu0 0
      %1278 = vmatprep.mubr.bf16.mxu0 0
      %1279 = vmatmul.mubr.bf16.gmra.mrb[0].mxu0 %v709
      %v1280 = vpop.f32.mrb[0].mxu0
      %v1281 = vadd.f32 0.0, %v1280
      %v1282 = vpop.f32.mrb[0].mxu0
      %v1283 = vpop.f32.mrb[0].mxu0
      %v1284 = vadd.f32 0.0, %v1283
      %v1285 = vpop.f32.mrb[0].mxu0
      %1286 = vmatprep.mubr.bf16.mxu0 0
      %1287 = vmatmul.mubr.bf16.gmra.mrb[0].mxu0 %v712
      %v1288 = vpop.f32.mrb[0].mxu0
      %v1289 = vadd.f32 0.0, %v1288
      %v1290 = vpop.f32.mrb[0].mxu0
      %v1291 = vpop.f32.mrb[0].mxu0
      %v1292 = vadd.f32 0.0, %v1291
      %v1293 = vpop.f32.mrb[0].mxu0
      %1294 = vmatprep.mubr.bf16.mxu0 0
      %1295 = vmatmul.mubr.bf16.gmra.mrb[0].mxu0 %v715
      %v1296 = vpop.f32.mrb[0].mxu0
      %v1297 = vadd.f32 0.0, %v1296
      %v1298 = vpop.f32.mrb[0].mxu0
      %v1299 = vpop.f32.mrb[0].mxu0
      %v1300 = vadd.f32 0.0, %v1299
      %v1301 = vpop.f32.mrb[0].mxu0
      %1302 = vmatprep.mubr.bf16.mxu0 0
      %1303 = vmatmul.mubr.bf16.gmra.mrb[0].mxu0 %v1241
      %v1304 = vpop.f32.mrb[0].mxu0
      %v1305 = vadd.f32 0.0, %v1304
      %v1306 = vpop.f32.mrb[0].mxu0
      %v1307 = vpop.f32.mrb[0].mxu0
      %v1308 = vadd.f32 0.0, %v1307
      %v1309 = vpop.f32.mrb[0].mxu0
      %1310 = vdwg.mxu0
      %v1311 = vadd.f32 %v1227, %v1281
      %v1312 = vadd.f32 %v1228, %v1284
      %v1313 = vadd.f32 %v1229, %v1289
      %v1314 = vadd.f32 %v1230, %v1292
      %v1315 = vadd.f32 %v1231, %v1297
      %v1316 = vadd.f32 %v1232, %v1300
      %v1317 = vadd.f32 %v1233, %v1305
      %v1318 = vadd.f32 %v1234, %v1308
      %v1320 = vshrl.u32 %v431, 16
      %v1322 = vrot.slane %v1320, 4
      %v1323 = vshll.u32 %v431, 16
      %v1325 = vrot.slane %v1323, 5
      %v1326 = vor.u32 %v1322, %v1325
      %v1327 = vrot.slane %v1326, 4
      %v1329 = vshll.u32 %v432, 16
      %v1331 = vrot.slane %v1329, 5
      %v1332 = vsel %vm476, %v1327, %v1331
      %s1333 = scalar_lea.vmem %s3, 28
      %v1334 = vld [vmem:[%s1333] sm:$0xf]
      %v1335 = vunpack.c.l.b16 %v1332
      %v1336 = vpack.c.b16 %v1335, %v1042
      %v1338 = vsel %vm603, %v1336, 0
      %v1341 = vsel %vm616, %v1334, 0
      %1343 = vmatprep.subr.bf16.mxu0 0
      %1344 = vmatpush1.bf16.msra.mxu0 %v1341
      %1345 = vmatprep.subr.bf16.mxu0 0
      %1346 = vmatpush1.bf16.msra.mxu0 0
      %1347 = vmatprep.subr.bf16.mxu0 0
      %1348 = vmatpush1.bf16.msra.mxu0 0
      %1349 = vmatprep.subr.bf16.mxu0 0
      %1350 = vmatpush1.bf16.msra.mxu0 0
      %1351 = vmatprep.subr.bf16.mxu0 0
      %1352 = vmatpush1.bf16.msra.mxu0 0
      %1353 = vmatprep.subr.bf16.mxu0 0
      %1354 = vmatpush1.bf16.msra.mxu0 0
      %1355 = vmatprep.subr.bf16.mxu0 0
      %1356 = vmatpush1.bf16.msra.mxu0 0
      %1357 = vmatprep.subr.bf16.mxu0 0
      %1358 = vmatpush1.bf16.msra.mxu0 0
      %1359 = vmatprep.subr.bf16.mxu0 0
      %1360 = vmatpush1.bf16.msra.mxu0 0
      %1361 = vmatprep.subr.bf16.mxu0 0
      %1362 = vmatpush1.bf16.msra.mxu0 0
      %1363 = vmatprep.subr.bf16.mxu0 0
      %1364 = vmatpush1.bf16.msra.mxu0 0
      %1365 = vmatprep.subr.bf16.mxu0 0
      %1366 = vmatpush1.bf16.msra.mxu0 0
      %1367 = vmatprep.subr.bf16.mxu0 0
      %1368 = vmatpush1.bf16.msra.mxu0 0
      %1369 = vmatprep.subr.bf16.mxu0 0
      %1370 = vmatpush1.bf16.msra.mxu0 0
      %1371 = vmatprep.subr.bf16.mxu0 0
      %1372 = vmatpush1.bf16.msra.mxu0 0
      %1373 = vmatprep.subr.bf16.mxu0 0
      %1374 = vmatpush1.bf16.msra.mxu0 0
      %1375 = vmatprep.mubr.bf16.mxu0 0
      %1376 = vmatmul.mubr.bf16.gmra.mrb[0].mxu0 %v608
      %v1377 = vpop.f32.mrb[0].mxu0
      %v1378 = vadd.f32 0.0, %v1377
      %v1379 = vpop.f32.mrb[0].mxu0
      %v1380 = vpop.f32.mrb[0].mxu0
      %v1381 = vadd.f32 0.0, %v1380
      %v1382 = vpop.f32.mrb[0].mxu0
      %1383 = vmatprep.mubr.bf16.mxu0 0
      %1384 = vmatmul.mubr.bf16.gmra.mrb[0].mxu0 %v611
      %v1385 = vpop.f32.mrb[0].mxu0
      %v1386 = vadd.f32 0.0, %v1385
      %v1387 = vpop.f32.mrb[0].mxu0
      %v1388 = vpop.f32.mrb[0].mxu0
      %v1389 = vadd.f32 0.0, %v1388
      %v1390 = vpop.f32.mrb[0].mxu0
      %1391 = vmatprep.mubr.bf16.mxu0 0
      %1392 = vmatmul.mubr.bf16.gmra.mrb[0].mxu0 %v614
      %v1393 = vpop.f32.mrb[0].mxu0
      %v1394 = vadd.f32 0.0, %v1393
      %v1395 = vpop.f32.mrb[0].mxu0
      %v1396 = vpop.f32.mrb[0].mxu0
      %v1397 = vadd.f32 0.0, %v1396
      %v1398 = vpop.f32.mrb[0].mxu0
      %1399 = vmatprep.mubr.bf16.mxu0 0
      %1400 = vmatmul.mubr.bf16.gmra.mrb[0].mxu0 %v1338
      %v1401 = vpop.f32.mrb[0].mxu0
      %v1402 = vadd.f32 0.0, %v1401
      %v1403 = vpop.f32.mrb[0].mxu0
      %v1404 = vpop.f32.mrb[0].mxu0
      %v1405 = vadd.f32 0.0, %v1404
      %v1406 = vpop.f32.mrb[0].mxu0
      %1407 = vdwg.mxu0
      %v1408 = vadd.f32 %v1311, %v1378
      %v1409 = vadd.f32 %v1312, %v1381
      %v1410 = vadd.f32 %v1313, %v1386
      %v1411 = vadd.f32 %v1314, %v1389
      %v1412 = vadd.f32 %v1315, %v1394
      %v1413 = vadd.f32 %v1316, %v1397
      %v1414 = vadd.f32 %v1317, %v1402
      %v1415 = vadd.f32 %v1318, %v1405
      %v1417 = vrot.slane %v431, 5
      %v1418 = vrot.slane %v1417, 4
      %v1419 = vrot.slane %v432, 5
      %v1420 = vsel %vm795, %v1418, %v1419
      %s1421 = scalar_lea.vmem %s3, 32
      %v1422 = vld [vmem:[%s1421] sm:$0xf]
      %v1423 = vunpack.c.l.b16 %v1420
      %v1424 = vpack.c.b16 %v1423, %v1142
      %v1426 = vsel %vm603, %v1424, 0
      %v1429 = vsel %vm616, %v1422, 0
      %1431 = vmatprep.subr.bf16.mxu0 0
      %1432 = vmatpush1.bf16.msra.mxu0 %v1429
      %1433 = vmatprep.subr.bf16.mxu0 0
      %1434 = vmatpush1.bf16.msra.mxu0 0
      %1435 = vmatprep.subr.bf16.mxu0 0
      %1436 = vmatpush1.bf16.msra.mxu0 0
      %1437 = vmatprep.subr.bf16.mxu0 0
      %1438 = vmatpush1.bf16.msra.mxu0 0
      %1439 = vmatprep.subr.bf16.mxu0 0
      %1440 = vmatpush1.bf16.msra.mxu0 0
      %1441 = vmatprep.subr.bf16.mxu0 0
      %1442 = vmatpush1.bf16.msra.mxu0 0
      %1443 = vmatprep.subr.bf16.mxu0 0
      %1444 = vmatpush1.bf16.msra.mxu0 0
      %1445 = vmatprep.subr.bf16.mxu0 0
      %1446 = vmatpush1.bf16.msra.mxu0 0
      %1447 = vmatprep.subr.bf16.mxu0 0
      %1448 = vmatpush1.bf16.msra.mxu0 0
      %1449 = vmatprep.subr.bf16.mxu0 0
      %1450 = vmatpush1.bf16.msra.mxu0 0
      %1451 = vmatprep.subr.bf16.mxu0 0
      %1452 = vmatpush1.bf16.msra.mxu0 0
      %1453 = vmatprep.subr.bf16.mxu0 0
      %1454 = vmatpush1.bf16.msra.mxu0 0
      %1455 = vmatprep.subr.bf16.mxu0 0
      %1456 = vmatpush1.bf16.msra.mxu0 0
      %1457 = vmatprep.subr.bf16.mxu0 0
      %1458 = vmatpush1.bf16.msra.mxu0 0
      %1459 = vmatprep.subr.bf16.mxu0 0
      %1460 = vmatpush1.bf16.msra.mxu0 0
      %1461 = vmatprep.subr.bf16.mxu0 0
      %1462 = vmatpush1.bf16.msra.mxu0 0
      %1463 = vmatprep.mubr.bf16.mxu0 0
      %1464 = vmatmul.mubr.bf16.gmra.mrb[0].mxu0 %v846
      %v1465 = vpop.f32.mrb[0].mxu0
      %v1466 = vadd.f32 0.0, %v1465
      %v1467 = vpop.f32.mrb[0].mxu0
      %v1468 = vpop.f32.mrb[0].mxu0
      %v1469 = vadd.f32 0.0, %v1468
      %v1470 = vpop.f32.mrb[0].mxu0
      %1471 = vmatprep.mubr.bf16.mxu0 0
      %1472 = vmatmul.mubr.bf16.gmra.mrb[0].mxu0 %v849
      %v1473 = vpop.f32.mrb[0].mxu0
      %v1474 = vadd.f32 0.0, %v1473
      %v1475 = vpop.f32.mrb[0].mxu0
      %v1476 = vpop.f32.mrb[0].mxu0
      %v1477 = vadd.f32 0.0, %v1476
      %v1478 = vpop.f32.mrb[0].mxu0
      %1479 = vmatprep.mubr.bf16.mxu0 0
      %1480 = vmatmul.mubr.bf16.gmra.mrb[0].mxu0 %v852
      %v1481 = vpop.f32.mrb[0].mxu0
      %v1482 = vadd.f32 0.0, %v1481
      %v1483 = vpop.f32.mrb[0].mxu0
      %v1484 = vpop.f32.mrb[0].mxu0
      %v1485 = vadd.f32 0.0, %v1484
      %v1486 = vpop.f32.mrb[0].mxu0
      %1487 = vmatprep.mubr.bf16.mxu0 0
      %1488 = vmatmul.mubr.bf16.gmra.mrb[0].mxu0 %v1426
      %v1489 = vpop.f32.mrb[0].mxu0
      %v1490 = vadd.f32 0.0, %v1489
      %v1491 = vpop.f32.mrb[0].mxu0
      %v1492 = vpop.f32.mrb[0].mxu0
      %v1493 = vadd.f32 0.0, %v1492
      %v1494 = vpop.f32.mrb[0].mxu0
      %1495 = vdwg.mxu0
      %v1496 = vadd.f32 %v1408, %v1466
      %v1497 = vadd.f32 %v1409, %v1469
      %v1498 = vadd.f32 %v1410, %v1474
      %v1499 = vadd.f32 %v1411, %v1477
      %v1500 = vadd.f32 %v1412, %v1482
      %v1501 = vadd.f32 %v1413, %v1485
      %v1502 = vadd.f32 %v1414, %v1490
      %v1503 = vadd.f32 %v1415, %v1493
      %s1504 = scalar_lea.vmem %s3, 36
      %v1505 = vld [vmem:[%s1504] sm:$0xf]
      %v1514 = vunpack.c.l.b16 %v433
      %v1515 = vunpack.c.l.b16 %v435
      %v1516 = vunpack.c.l.b16 %v437
      %v1517 = vunpack.c.l.b16 %v439
      %v1518 = vunpack.c.l.b16 %v441
      %v1519 = vunpack.c.l.b16 %v443
      %v1520 = vunpack.c.l.b16 %v445
      %v1521 = vunpack.c.l.b16 %v447
      %v1522 = vpack.c.b16 %v1515, %v1514
      %v1523 = vpack.c.b16 %v1517, %v1516
      %v1524 = vpack.c.b16 %v1519, %v1518
      %v1525 = vpack.c.b16 %v1521, %v1520
      %v1527 = vsel %vm603, %v1522, 0
      %v1530 = vsel %vm603, %v1523, 0
      %v1533 = vsel %vm603, %v1524, 0
      %v1536 = vsel %vm603, %v1525, 0
      %v1539 = vsel %vm616, %v1505, 0
      %1541 = vmatprep.subr.bf16.mxu0 0
      %1542 = vmatpush1.bf16.msra.mxu0 %v1539
      %1543 = vmatprep.subr.bf16.mxu0 0
      %1544 = vmatpush1.bf16.msra.mxu0 0
      %1545 = vmatprep.subr.bf16.mxu0 0
      %1546 = vmatpush1.bf16.msra.mxu0 0
      %1547 = vmatprep.subr.bf16.mxu0 0
      %1548 = vmatpush1.bf16.msra.mxu0 0
      %1549 = vmatprep.subr.bf16.mxu0 0
      %1550 = vmatpush1.bf16.msra.mxu0 0
      %1551 = vmatprep.subr.bf16.mxu0 0
      %1552 = vmatpush1.bf16.msra.mxu0 0
      %1553 = vmatprep.subr.bf16.mxu0 0
      %1554 = vmatpush1.bf16.msra.mxu0 0
      %1555 = vmatprep.subr.bf16.mxu0 0
      %1556 = vmatpush1.bf16.msra.mxu0 0
      %1557 = vmatprep.subr.bf16.mxu0 0
      %1558 = vmatpush1.bf16.msra.mxu0 0
      %1559 = vmatprep.subr.bf16.mxu0 0
      %1560 = vmatpush1.bf16.msra.mxu0 0
      %1561 = vmatprep.subr.bf16.mxu0 0
      %1562 = vmatpush1.bf16.msra.mxu0 0
      %1563 = vmatprep.subr.bf16.mxu0 0
      %1564 = vmatpush1.bf16.msra.mxu0 0
      %1565 = vmatprep.subr.bf16.mxu0 0
      %1566 = vmatpush1.bf16.msra.mxu0 0
      %1567 = vmatprep.subr.bf16.mxu0 0
      %1568 = vmatpush1.bf16.msra.mxu0 0
      %1569 = vmatprep.subr.bf16.mxu0 0
      %1570 = vmatpush1.bf16.msra.mxu0 0
      %1571 = vmatprep.subr.bf16.mxu0 0
      %1572 = vmatpush1.bf16.msra.mxu0 0
      %1573 = vmatprep.mubr.bf16.mxu0 0
      %1574 = vmatmul.mubr.bf16.gmra.mrb[0].mxu0 %v1527
      %v1575 = vpop.f32.mrb[0].mxu0
      %v1576 = vadd.f32 0.0, %v1575
      %v1577 = vpop.f32.mrb[0].mxu0
      %v1578 = vpop.f32.mrb[0].mxu0
      %v1579 = vadd.f32 0.0, %v1578
      %v1580 = vpop.f32.mrb[0].mxu0
      %1581 = vmatprep.mubr.bf16.mxu0 0
      %1582 = vmatmul.mubr.bf16.gmra.mrb[0].mxu0 %v1530
      %v1583 = vpop.f32.mrb[0].mxu0
      %v1584 = vadd.f32 0.0, %v1583
      %v1585 = vpop.f32.mrb[0].mxu0
      %v1586 = vpop.f32.mrb[0].mxu0
      %v1587 = vadd.f32 0.0, %v1586
      %v1588 = vpop.f32.mrb[0].mxu0
      %1589 = vmatprep.mubr.bf16.mxu0 0
      %1590 = vmatmul.mubr.bf16.gmra.mrb[0].mxu0 %v1533
      %v1591 = vpop.f32.mrb[0].mxu0
      %v1592 = vadd.f32 0.0, %v1591
      %v1593 = vpop.f32.mrb[0].mxu0
      %v1594 = vpop.f32.mrb[0].mxu0
      %v1595 = vadd.f32 0.0, %v1594
      %v1596 = vpop.f32.mrb[0].mxu0
      %1597 = vmatprep.mubr.bf16.mxu0 0
      %1598 = vmatmul.mubr.bf16.gmra.mrb[0].mxu0 %v1536
      %v1599 = vpop.f32.mrb[0].mxu0
      %v1600 = vadd.f32 0.0, %v1599
      %v1601 = vpop.f32.mrb[0].mxu0
      %v1602 = vpop.f32.mrb[0].mxu0
      %v1603 = vadd.f32 0.0, %v1602
      %v1604 = vpop.f32.mrb[0].mxu0
      %1605 = vdwg.mxu0
      %v1606 = vadd.f32 %v1496, %v1576
      %v1607 = vadd.f32 %v1497, %v1579
      %v1608 = vadd.f32 %v1498, %v1584
      %v1609 = vadd.f32 %v1499, %v1587
      %v1610 = vadd.f32 %v1500, %v1592
      %v1611 = vadd.f32 %v1501, %v1595
      %v1612 = vadd.f32 %v1502, %v1600
      %v1613 = vadd.f32 %v1503, %v1603
      %v1615 = vshrl.u32 %v433, 16
      %v1617 = vrot.slane %v1615, 4
      %v1618 = vshll.u32 %v433, 16
      %v1620 = vrot.slane %v1618, 5
      %v1621 = vor.u32 %v1617, %v1620
      %v1622 = vrot.slane %v1621, 4
      %v1624 = vshll.u32 %v434, 16
      %v1626 = vrot.slane %v1624, 5
      %v1627 = vsel %vm476, %v1622, %v1626
      %v1629 = vshrl.u32 %v435, 16
      %v1631 = vrot.slane %v1629, 4
      %v1632 = vshll.u32 %v435, 16
      %v1634 = vrot.slane %v1632, 5
      %v1635 = vor.u32 %v1631, %v1634
      %v1636 = vrot.slane %v1635, 4
      %v1638 = vshll.u32 %v436, 16
      %v1640 = vrot.slane %v1638, 5
      %v1641 = vsel %vm476, %v1636, %v1640
      %v1643 = vshrl.u32 %v437, 16
      %v1645 = vrot.slane %v1643, 4
      %v1646 = vshll.u32 %v437, 16
      %v1648 = vrot.slane %v1646, 5
      %v1649 = vor.u32 %v1645, %v1648
      %v1650 = vrot.slane %v1649, 4
      %v1652 = vshll.u32 %v438, 16
      %v1654 = vrot.slane %v1652, 5
      %v1655 = vsel %vm476, %v1650, %v1654
      %v1657 = vshrl.u32 %v439, 16
      %v1659 = vrot.slane %v1657, 4
      %v1660 = vshll.u32 %v439, 16
      %v1662 = vrot.slane %v1660, 5
      %v1663 = vor.u32 %v1659, %v1662
      %v1664 = vrot.slane %v1663, 4
      %v1666 = vshll.u32 %v440, 16
      %v1668 = vrot.slane %v1666, 5
      %v1669 = vsel %vm476, %v1664, %v1668
      %v1671 = vshrl.u32 %v441, 16
      %v1673 = vrot.slane %v1671, 4
      %v1674 = vshll.u32 %v441, 16
      %v1676 = vrot.slane %v1674, 5
      %v1677 = vor.u32 %v1673, %v1676
      %v1678 = vrot.slane %v1677, 4
      %v1680 = vshll.u32 %v442, 16
      %v1682 = vrot.slane %v1680, 5
      %v1683 = vsel %vm476, %v1678, %v1682
      %v1685 = vshrl.u32 %v443, 16
      %v1687 = vrot.slane %v1685, 4
      %v1688 = vshll.u32 %v443, 16
      %v1690 = vrot.slane %v1688, 5
      %v1691 = vor.u32 %v1687, %v1690
      %v1692 = vrot.slane %v1691, 4
      %v1694 = vshll.u32 %v444, 16
      %v1696 = vrot.slane %v1694, 5
      %v1697 = vsel %vm476, %v1692, %v1696
      %v1699 = vshrl.u32 %v445, 16
      %v1701 = vrot.slane %v1699, 4
      %v1702 = vshll.u32 %v445, 16
      %v1704 = vrot.slane %v1702, 5
      %v1705 = vor.u32 %v1701, %v1704
      %v1706 = vrot.slane %v1705, 4
      %v1708 = vshll.u32 %v446, 16
      %v1710 = vrot.slane %v1708, 5
      %v1711 = vsel %vm476, %v1706, %v1710
      %v1713 = vshrl.u32 %v447, 16
      %v1715 = vrot.slane %v1713, 4
      %v1716 = vshll.u32 %v447, 16
      %v1718 = vrot.slane %v1716, 5
      %v1719 = vor.u32 %v1715, %v1718
      %v1720 = vrot.slane %v1719, 4
      %v1722 = vshll.u32 %v448, 16
      %v1724 = vrot.slane %v1722, 5
      %v1725 = vsel %vm476, %v1720, %v1724
      %s1726 = scalar_lea.vmem %s3, 40
      %v1727 = vld [vmem:[%s1726] sm:$0xf]
      %v1728 = vunpack.c.l.b16 %v1627
      %v1729 = vunpack.c.l.b16 %v1641
      %v1730 = vunpack.c.l.b16 %v1655
      %v1731 = vunpack.c.l.b16 %v1669
      %v1732 = vunpack.c.l.b16 %v1683
      %v1733 = vunpack.c.l.b16 %v1697
      %v1734 = vunpack.c.l.b16 %v1711
      %v1735 = vunpack.c.l.b16 %v1725
      %v1736 = vpack.c.b16 %v1729, %v1728
      %v1737 = vpack.c.b16 %v1731, %v1730
      %v1738 = vpack.c.b16 %v1733, %v1732
      %v1739 = vpack.c.b16 %v1735, %v1734
      %v1741 = vsel %vm603, %v1736, 0
      %v1744 = vsel %vm603, %v1737, 0
      %v1747 = vsel %vm603, %v1738, 0
      %v1750 = vsel %vm603, %v1739, 0
      %v1753 = vsel %vm616, %v1727, 0
      %1755 = vmatprep.subr.bf16.mxu0 0
      %1756 = vmatpush1.bf16.msra.mxu0 %v1753
      %1757 = vmatprep.subr.bf16.mxu0 0
      %1758 = vmatpush1.bf16.msra.mxu0 0
      %1759 = vmatprep.subr.bf16.mxu0 0
      %1760 = vmatpush1.bf16.msra.mxu0 0
      %1761 = vmatprep.subr.bf16.mxu0 0
      %1762 = vmatpush1.bf16.msra.mxu0 0
      %1763 = vmatprep.subr.bf16.mxu0 0
      %1764 = vmatpush1.bf16.msra.mxu0 0
      %1765 = vmatprep.subr.bf16.mxu0 0
      %1766 = vmatpush1.bf16.msra.mxu0 0
      %1767 = vmatprep.subr.bf16.mxu0 0
      %1768 = vmatpush1.bf16.msra.mxu0 0
      %1769 = vmatprep.subr.bf16.mxu0 0
      %1770 = vmatpush1.bf16.msra.mxu0 0
      %1771 = vmatprep.subr.bf16.mxu0 0
      %1772 = vmatpush1.bf16.msra.mxu0 0
      %1773 = vmatprep.subr.bf16.mxu0 0
      %1774 = vmatpush1.bf16.msra.mxu0 0
      %1775 = vmatprep.subr.bf16.mxu0 0
      %1776 = vmatpush1.bf16.msra.mxu0 0
      %1777 = vmatprep.subr.bf16.mxu0 0
      %1778 = vmatpush1.bf16.msra.mxu0 0
      %1779 = vmatprep.subr.bf16.mxu0 0
      %1780 = vmatpush1.bf16.msra.mxu0 0
      %1781 = vmatprep.subr.bf16.mxu0 0
      %1782 = vmatpush1.bf16.msra.mxu0 0
      %1783 = vmatprep.subr.bf16.mxu0 0
      %1784 = vmatpush1.bf16.msra.mxu0 0
      %1785 = vmatprep.subr.bf16.mxu0 0
      %1786 = vmatpush1.bf16.msra.mxu0 0
      %1787 = vmatprep.mubr.bf16.mxu0 0
      %1788 = vmatmul.mubr.bf16.gmra.mrb[0].mxu0 %v1741
      %v1789 = vpop.f32.mrb[0].mxu0
      %v1790 = vadd.f32 0.0, %v1789
      %v1791 = vpop.f32.mrb[0].mxu0
      %v1792 = vpop.f32.mrb[0].mxu0
      %v1793 = vadd.f32 0.0, %v1792
      %v1794 = vpop.f32.mrb[0].mxu0
      %1795 = vmatprep.mubr.bf16.mxu0 0
      %1796 = vmatmul.mubr.bf16.gmra.mrb[0].mxu0 %v1744
      %v1797 = vpop.f32.mrb[0].mxu0
      %v1798 = vadd.f32 0.0, %v1797
      %v1799 = vpop.f32.mrb[0].mxu0
      %v1800 = vpop.f32.mrb[0].mxu0
      %v1801 = vadd.f32 0.0, %v1800
      %v1802 = vpop.f32.mrb[0].mxu0
      %1803 = vmatprep.mubr.bf16.mxu0 0
      %1804 = vmatmul.mubr.bf16.gmra.mrb[0].mxu0 %v1747
      %v1805 = vpop.f32.mrb[0].mxu0
      %v1806 = vadd.f32 0.0, %v1805
      %v1807 = vpop.f32.mrb[0].mxu0
      %v1808 = vpop.f32.mrb[0].mxu0
      %v1809 = vadd.f32 0.0, %v1808
      %v1810 = vpop.f32.mrb[0].mxu0
      %1811 = vmatprep.mubr.bf16.mxu0 0
      %1812 = vmatmul.mubr.bf16.gmra.mrb[0].mxu0 %v1750
      %v1813 = vpop.f32.mrb[0].mxu0
      %v1814 = vadd.f32 0.0, %v1813
      %v1815 = vpop.f32.mrb[0].mxu0
      %v1816 = vpop.f32.mrb[0].mxu0
      %v1817 = vadd.f32 0.0, %v1816
      %v1818 = vpop.f32.mrb[0].mxu0
      %1819 = vdwg.mxu0
      %v1820 = vadd.f32 %v1606, %v1790
      %v1821 = vadd.f32 %v1607, %v1793
      %v1822 = vadd.f32 %v1608, %v1798
      %v1823 = vadd.f32 %v1609, %v1801
      %v1824 = vadd.f32 %v1610, %v1806
      %v1825 = vadd.f32 %v1611, %v1809
      %v1826 = vadd.f32 %v1612, %v1814
      %v1827 = vadd.f32 %v1613, %v1817
      %v1836 = vrot.slane %v433, 5
      %v1837 = vrot.slane %v1836, 4
      %v1838 = vrot.slane %v434, 5
      %v1839 = vsel %vm795, %v1837, %v1838
      %v1840 = vrot.slane %v435, 5
      %v1841 = vrot.slane %v1840, 4
      %v1842 = vrot.slane %v436, 5
      %v1843 = vsel %vm795, %v1841, %v1842
      %v1844 = vrot.slane %v437, 5
      %v1845 = vrot.slane %v1844, 4
      %v1846 = vrot.slane %v438, 5
      %v1847 = vsel %vm795, %v1845, %v1846
      %v1848 = vrot.slane %v439, 5
      %v1849 = vrot.slane %v1848, 4
      %v1850 = vrot.slane %v440, 5
      %v1851 = vsel %vm795, %v1849, %v1850
      %v1852 = vrot.slane %v441, 5
      %v1853 = vrot.slane %v1852, 4
      %v1854 = vrot.slane %v442, 5
      %v1855 = vsel %vm795, %v1853, %v1854
      %v1856 = vrot.slane %v443, 5
      %v1857 = vrot.slane %v1856, 4
      %v1858 = vrot.slane %v444, 5
      %v1859 = vsel %vm795, %v1857, %v1858
      %v1860 = vrot.slane %v445, 5
      %v1861 = vrot.slane %v1860, 4
      %v1862 = vrot.slane %v446, 5
      %v1863 = vsel %vm795, %v1861, %v1862
      %v1864 = vrot.slane %v447, 5
      %v1865 = vrot.slane %v1864, 4
      %v1866 = vrot.slane %v448, 5
      %v1867 = vsel %vm795, %v1865, %v1866
      %s1868 = scalar_lea.vmem %s3, 44
      %v1869 = vld [vmem:[%s1868] sm:$0xf]
      %v1870 = vunpack.c.l.b16 %v1839
      %v1871 = vunpack.c.l.b16 %v1843
      %v1872 = vunpack.c.l.b16 %v1847
      %v1873 = vunpack.c.l.b16 %v1851
      %v1874 = vunpack.c.l.b16 %v1855
      %v1875 = vunpack.c.l.b16 %v1859
      %v1876 = vunpack.c.l.b16 %v1863
      %v1877 = vunpack.c.l.b16 %v1867
      %v1878 = vpack.c.b16 %v1871, %v1870
      %v1879 = vpack.c.b16 %v1873, %v1872
      %v1880 = vpack.c.b16 %v1875, %v1874
      %v1881 = vpack.c.b16 %v1877, %v1876
      %v1883 = vsel %vm603, %v1878, 0
      %v1886 = vsel %vm603, %v1879, 0
      %v1889 = vsel %vm603, %v1880, 0
      %v1892 = vsel %vm603, %v1881, 0
      %v1895 = vsel %vm616, %v1869, 0
      %1897 = vmatprep.subr.bf16.mxu0 0
      %1898 = vmatpush1.bf16.msra.mxu0 %v1895
      %1899 = vmatprep.subr.bf16.mxu0 0
      %1900 = vmatpush1.bf16.msra.mxu0 0
      %1901 = vmatprep.subr.bf16.mxu0 0
      %1902 = vmatpush1.bf16.msra.mxu0 0
      %1903 = vmatprep.subr.bf16.mxu0 0
      %1904 = vmatpush1.bf16.msra.mxu0 0
      %1905 = vmatprep.subr.bf16.mxu0 0
      %1906 = vmatpush1.bf16.msra.mxu0 0
      %1907 = vmatprep.subr.bf16.mxu0 0
      %1908 = vmatpush1.bf16.msra.mxu0 0
      %1909 = vmatprep.subr.bf16.mxu0 0
      %1910 = vmatpush1.bf16.msra.mxu0 0
      %1911 = vmatprep.subr.bf16.mxu0 0
      %1912 = vmatpush1.bf16.msra.mxu0 0
      %1913 = vmatprep.subr.bf16.mxu0 0
      %1914 = vmatpush1.bf16.msra.mxu0 0
      %1915 = vmatprep.subr.bf16.mxu0 0
      %1916 = vmatpush1.bf16.msra.mxu0 0
      %1917 = vmatprep.subr.bf16.mxu0 0
      %1918 = vmatpush1.bf16.msra.mxu0 0
      %1919 = vmatprep.subr.bf16.mxu0 0
      %1920 = vmatpush1.bf16.msra.mxu0 0
      %1921 = vmatprep.subr.bf16.mxu0 0
      %1922 = vmatpush1.bf16.msra.mxu0 0
      %1923 = vmatprep.subr.bf16.mxu0 0
      %1924 = vmatpush1.bf16.msra.mxu0 0
      %1925 = vmatprep.subr.bf16.mxu0 0
      %1926 = vmatpush1.bf16.msra.mxu0 0
      %1927 = vmatprep.subr.bf16.mxu0 0
      %1928 = vmatpush1.bf16.msra.mxu0 0
      %1929 = vmatprep.mubr.bf16.mxu0 0
      %1930 = vmatmul.mubr.bf16.gmra.mrb[0].mxu0 %v1883
      %v1931 = vpop.f32.mrb[0].mxu0
      %v1932 = vadd.f32 0.0, %v1931
      %v1933 = vpop.f32.mrb[0].mxu0
      %v1934 = vpop.f32.mrb[0].mxu0
      %v1935 = vadd.f32 0.0, %v1934
      %v1936 = vpop.f32.mrb[0].mxu0
      %1937 = vmatprep.mubr.bf16.mxu0 0
      %1938 = vmatmul.mubr.bf16.gmra.mrb[0].mxu0 %v1886
      %v1939 = vpop.f32.mrb[0].mxu0
      %v1940 = vadd.f32 0.0, %v1939
      %v1941 = vpop.f32.mrb[0].mxu0
      %v1942 = vpop.f32.mrb[0].mxu0
      %v1943 = vadd.f32 0.0, %v1942
      %v1944 = vpop.f32.mrb[0].mxu0
      %1945 = vmatprep.mubr.bf16.mxu0 0
      %1946 = vmatmul.mubr.bf16.gmra.mrb[0].mxu0 %v1889
      %v1947 = vpop.f32.mrb[0].mxu0
      %v1948 = vadd.f32 0.0, %v1947
      %v1949 = vpop.f32.mrb[0].mxu0
      %v1950 = vpop.f32.mrb[0].mxu0
      %v1951 = vadd.f32 0.0, %v1950
      %v1952 = vpop.f32.mrb[0].mxu0
      %1953 = vmatprep.mubr.bf16.mxu0 0
      %1954 = vmatmul.mubr.bf16.gmra.mrb[0].mxu0 %v1892
      %v1955 = vpop.f32.mrb[0].mxu0
      %v1956 = vadd.f32 0.0, %v1955
      %v1957 = vpop.f32.mrb[0].mxu0
      %v1958 = vpop.f32.mrb[0].mxu0
      %v1959 = vadd.f32 0.0, %v1958
      %v1960 = vpop.f32.mrb[0].mxu0
      %1961 = vdwg.mxu0
      %v1962 = vadd.f32 %v1820, %v1932
      %v1963 = vadd.f32 %v1821, %v1935
      %v1964 = vadd.f32 %v1822, %v1940
      %v1965 = vadd.f32 %v1823, %v1943
      %v1966 = vadd.f32 %v1824, %v1948
      %v1967 = vadd.f32 %v1825, %v1951
      %v1968 = vadd.f32 %v1826, %v1956
      %v1969 = vadd.f32 %v1827, %v1959
      %s1970 = scalar_lea.vmem %s3, 48
      %v1971 = vld [vmem:[%s1970] sm:$0xf]
      %v1973 = vunpack.c.l.b16 %v449
      %v1974 = vpack.c.b16 %v1516, %v1515
      %v1975 = vpack.c.b16 %v1518, %v1517
      %v1976 = vpack.c.b16 %v1520, %v1519
      %v1977 = vpack.c.b16 %v1973, %v1521
      %v1979 = vsel %vm603, %v1974, 0
      %v1982 = vsel %vm603, %v1975, 0
      %v1985 = vsel %vm603, %v1976, 0
      %v1988 = vsel %vm603, %v1977, 0
      %v1991 = vsel %vm616, %v1971, 0
      %1993 = vmatprep.subr.bf16.mxu0 0
      %1994 = vmatpush1.bf16.msra.mxu0 %v1991
      %1995 = vmatprep.subr.bf16.mxu0 0
      %1996 = vmatpush1.bf16.msra.mxu0 0
      %1997 = vmatprep.subr.bf16.mxu0 0
      %1998 = vmatpush1.bf16.msra.mxu0 0
      %1999 = vmatprep.subr.bf16.mxu0 0
      %2000 = vmatpush1.bf16.msra.mxu0 0
      %2001 = vmatprep.subr.bf16.mxu0 0
      %2002 = vmatpush1.bf16.msra.mxu0 0
      %2003 = vmatprep.subr.bf16.mxu0 0
      %2004 = vmatpush1.bf16.msra.mxu0 0
      %2005 = vmatprep.subr.bf16.mxu0 0
      %2006 = vmatpush1.bf16.msra.mxu0 0
      %2007 = vmatprep.subr.bf16.mxu0 0
      %2008 = vmatpush1.bf16.msra.mxu0 0
      %2009 = vmatprep.subr.bf16.mxu0 0
      %2010 = vmatpush1.bf16.msra.mxu0 0
      %2011 = vmatprep.subr.bf16.mxu0 0
      %2012 = vmatpush1.bf16.msra.mxu0 0
      %2013 = vmatprep.subr.bf16.mxu0 0
      %2014 = vmatpush1.bf16.msra.mxu0 0
      %2015 = vmatprep.subr.bf16.mxu0 0
      %2016 = vmatpush1.bf16.msra.mxu0 0
      %2017 = vmatprep.subr.bf16.mxu0 0
      %2018 = vmatpush1.bf16.msra.mxu0 0
      %2019 = vmatprep.subr.bf16.mxu0 0
      %2020 = vmatpush1.bf16.msra.mxu0 0
      %2021 = vmatprep.subr.bf16.mxu0 0
      %2022 = vmatpush1.bf16.msra.mxu0 0
      %2023 = vmatprep.subr.bf16.mxu0 0
      %2024 = vmatpush1.bf16.msra.mxu0 0
      %2025 = vmatprep.mubr.bf16.mxu0 0
      %2026 = vmatmul.mubr.bf16.gmra.mrb[0].mxu0 %v1979
      %v2027 = vpop.f32.mrb[0].mxu0
      %v2028 = vadd.f32 0.0, %v2027
      %v2029 = vpop.f32.mrb[0].mxu0
      %v2030 = vpop.f32.mrb[0].mxu0
      %v2031 = vadd.f32 0.0, %v2030
      %v2032 = vpop.f32.mrb[0].mxu0
      %2033 = vmatprep.mubr.bf16.mxu0 0
      %2034 = vmatmul.mubr.bf16.gmra.mrb[0].mxu0 %v1982
      %v2035 = vpop.f32.mrb[0].mxu0
      %v2036 = vadd.f32 0.0, %v2035
      %v2037 = vpop.f32.mrb[0].mxu0
      %v2038 = vpop.f32.mrb[0].mxu0
      %v2039 = vadd.f32 0.0, %v2038
      %v2040 = vpop.f32.mrb[0].mxu0
      %2041 = vmatprep.mubr.bf16.mxu0 0
      %2042 = vmatmul.mubr.bf16.gmra.mrb[0].mxu0 %v1985
      %v2043 = vpop.f32.mrb[0].mxu0
      %v2044 = vadd.f32 0.0, %v2043
      %v2045 = vpop.f32.mrb[0].mxu0
      %v2046 = vpop.f32.mrb[0].mxu0
      %v2047 = vadd.f32 0.0, %v2046
      %v2048 = vpop.f32.mrb[0].mxu0
      %2049 = vmatprep.mubr.bf16.mxu0 0
      %2050 = vmatmul.mubr.bf16.gmra.mrb[0].mxu0 %v1988
      %v2051 = vpop.f32.mrb[0].mxu0
      %v2052 = vadd.f32 0.0, %v2051
      %v2053 = vpop.f32.mrb[0].mxu0
      %v2054 = vpop.f32.mrb[0].mxu0
      %v2055 = vadd.f32 0.0, %v2054
      %v2056 = vpop.f32.mrb[0].mxu0
      %2057 = vdwg.mxu0
      %v2058 = vadd.f32 %v1962, %v2028
      %v2059 = vadd.f32 %v1963, %v2031
      %v2060 = vadd.f32 %v1964, %v2036
      %v2061 = vadd.f32 %v1965, %v2039
      %v2062 = vadd.f32 %v1966, %v2044
      %v2063 = vadd.f32 %v1967, %v2047
      %v2064 = vadd.f32 %v1968, %v2052
      %v2065 = vadd.f32 %v1969, %v2055
      %v2067 = vshrl.u32 %v449, 16
      %v2069 = vrot.slane %v2067, 4
      %v2070 = vshll.u32 %v449, 16
      %v2072 = vrot.slane %v2070, 5
      %v2073 = vor.u32 %v2069, %v2072
      %v2074 = vrot.slane %v2073, 4
      %v2076 = vshll.u32 %v450, 16
      %v2078 = vrot.slane %v2076, 5
      %v2079 = vsel %vm476, %v2074, %v2078
      %s2080 = scalar_lea.vmem %s3, 52
      %v2081 = vld [vmem:[%s2080] sm:$0xf]
      %v2082 = vunpack.c.l.b16 %v2079
      %v2083 = vpack.c.b16 %v1730, %v1729
      %v2084 = vpack.c.b16 %v1732, %v1731
      %v2085 = vpack.c.b16 %v1734, %v1733
      %v2086 = vpack.c.b16 %v2082, %v1735
      %v2088 = vsel %vm603, %v2083, 0
      %v2091 = vsel %vm603, %v2084, 0
      %v2094 = vsel %vm603, %v2085, 0
      %v2097 = vsel %vm603, %v2086, 0
      %v2100 = vsel %vm616, %v2081, 0
      %2102 = vmatprep.subr.bf16.mxu0 0
      %2103 = vmatpush1.bf16.msra.mxu0 %v2100
      %2104 = vmatprep.subr.bf16.mxu0 0
      %2105 = vmatpush1.bf16.msra.mxu0 0
      %2106 = vmatprep.subr.bf16.mxu0 0
      %2107 = vmatpush1.bf16.msra.mxu0 0
      %2108 = vmatprep.subr.bf16.mxu0 0
      %2109 = vmatpush1.bf16.msra.mxu0 0
      %2110 = vmatprep.subr.bf16.mxu0 0
      %2111 = vmatpush1.bf16.msra.mxu0 0
      %2112 = vmatprep.subr.bf16.mxu0 0
      %2113 = vmatpush1.bf16.msra.mxu0 0
      %2114 = vmatprep.subr.bf16.mxu0 0
      %2115 = vmatpush1.bf16.msra.mxu0 0
      %2116 = vmatprep.subr.bf16.mxu0 0
      %2117 = vmatpush1.bf16.msra.mxu0 0
      %2118 = vmatprep.subr.bf16.mxu0 0
      %2119 = vmatpush1.bf16.msra.mxu0 0
      %2120 = vmatprep.subr.bf16.mxu0 0
      %2121 = vmatpush1.bf16.msra.mxu0 0
      %2122 = vmatprep.subr.bf16.mxu0 0
      %2123 = vmatpush1.bf16.msra.mxu0 0
      %2124 = vmatprep.subr.bf16.mxu0 0
      %2125 = vmatpush1.bf16.msra.mxu0 0
      %2126 = vmatprep.subr.bf16.mxu0 0
      %2127 = vmatpush1.bf16.msra.mxu0 0
      %2128 = vmatprep.subr.bf16.mxu0 0
      %2129 = vmatpush1.bf16.msra.mxu0 0
      %2130 = vmatprep.subr.bf16.mxu0 0
      %2131 = vmatpush1.bf16.msra.mxu0 0
      %2132 = vmatprep.subr.bf16.mxu0 0
      %2133 = vmatpush1.bf16.msra.mxu0 0
      %2134 = vmatprep.mubr.bf16.mxu0 0
      %2135 = vmatmul.mubr.bf16.gmra.mrb[0].mxu0 %v2088
      %v2136 = vpop.f32.mrb[0].mxu0
      %v2137 = vadd.f32 0.0, %v2136
      %v2138 = vpop.f32.mrb[0].mxu0
      %v2139 = vpop.f32.mrb[0].mxu0
      %v2140 = vadd.f32 0.0, %v2139
      %v2141 = vpop.f32.mrb[0].mxu0
      %2142 = vmatprep.mubr.bf16.mxu0 0
      %2143 = vmatmul.mubr.bf16.gmra.mrb[0].mxu0 %v2091
      %v2144 = vpop.f32.mrb[0].mxu0
      %v2145 = vadd.f32 0.0, %v2144
      %v2146 = vpop.f32.mrb[0].mxu0
      %v2147 = vpop.f32.mrb[0].mxu0
      %v2148 = vadd.f32 0.0, %v2147
      %v2149 = vpop.f32.mrb[0].mxu0
      %2150 = vmatprep.mubr.bf16.mxu0 0
      %2151 = vmatmul.mubr.bf16.gmra.mrb[0].mxu0 %v2094
      %v2152 = vpop.f32.mrb[0].mxu0
      %v2153 = vadd.f32 0.0, %v2152
      %v2154 = vpop.f32.mrb[0].mxu0
      %v2155 = vpop.f32.mrb[0].mxu0
      %v2156 = vadd.f32 0.0, %v2155
      %v2157 = vpop.f32.mrb[0].mxu0
      %2158 = vmatprep.mubr.bf16.mxu0 0
      %2159 = vmatmul.mubr.bf16.gmra.mrb[0].mxu0 %v2097
      %v2160 = vpop.f32.mrb[0].mxu0
      %v2161 = vadd.f32 0.0, %v2160
      %v2162 = vpop.f32.mrb[0].mxu0
      %v2163 = vpop.f32.mrb[0].mxu0
      %v2164 = vadd.f32 0.0, %v2163
      %v2165 = vpop.f32.mrb[0].mxu0
      %2166 = vdwg.mxu0
      %v2167 = vadd.f32 %v2058, %v2137
      %v2168 = vadd.f32 %v2059, %v2140
      %v2169 = vadd.f32 %v2060, %v2145
      %v2170 = vadd.f32 %v2061, %v2148
      %v2171 = vadd.f32 %v2062, %v2153
      %v2172 = vadd.f32 %v2063, %v2156
      %v2173 = vadd.f32 %v2064, %v2161
      %v2174 = vadd.f32 %v2065, %v2164
      %v2176 = vrot.slane %v449, 5
      %v2177 = vrot.slane %v2176, 4
      %v2178 = vrot.slane %v450, 5
      %v2179 = vsel %vm795, %v2177, %v2178
      %s2180 = scalar_lea.vmem %s3, 56
      %v2181 = vld [vmem:[%s2180] sm:$0xf]
      %v2182 = vunpack.c.l.b16 %v2179
      %v2183 = vpack.c.b16 %v1872, %v1871
      %v2184 = vpack.c.b16 %v1874, %v1873
      %v2185 = vpack.c.b16 %v1876, %v1875
      %v2186 = vpack.c.b16 %v2182, %v1877
      %v2188 = vsel %vm603, %v2183, 0
      %v2191 = vsel %vm603, %v2184, 0
      %v2194 = vsel %vm603, %v2185, 0
      %v2197 = vsel %vm603, %v2186, 0
      %v2200 = vsel %vm616, %v2181, 0
      %2202 = vmatprep.subr.bf16.mxu0 0
      %2203 = vmatpush1.bf16.msra.mxu0 %v2200
      %2204 = vmatprep.subr.bf16.mxu0 0
      %2205 = vmatpush1.bf16.msra.mxu0 0
      %2206 = vmatprep.subr.bf16.mxu0 0
      %2207 = vmatpush1.bf16.msra.mxu0 0
      %2208 = vmatprep.subr.bf16.mxu0 0
      %2209 = vmatpush1.bf16.msra.mxu0 0
      %2210 = vmatprep.subr.bf16.mxu0 0
      %2211 = vmatpush1.bf16.msra.mxu0 0
      %2212 = vmatprep.subr.bf16.mxu0 0
      %2213 = vmatpush1.bf16.msra.mxu0 0
      %2214 = vmatprep.subr.bf16.mxu0 0
      %2215 = vmatpush1.bf16.msra.mxu0 0
      %2216 = vmatprep.subr.bf16.mxu0 0
      %2217 = vmatpush1.bf16.msra.mxu0 0
      %2218 = vmatprep.subr.bf16.mxu0 0
      %2219 = vmatpush1.bf16.msra.mxu0 0
      %2220 = vmatprep.subr.bf16.mxu0 0
      %2221 = vmatpush1.bf16.msra.mxu0 0
      %2222 = vmatprep.subr.bf16.mxu0 0
      %2223 = vmatpush1.bf16.msra.mxu0 0
      %2224 = vmatprep.subr.bf16.mxu0 0
      %2225 = vmatpush1.bf16.msra.mxu0 0
      %2226 = vmatprep.subr.bf16.mxu0 0
      %2227 = vmatpush1.bf16.msra.mxu0 0
      %2228 = vmatprep.subr.bf16.mxu0 0
      %2229 = vmatpush1.bf16.msra.mxu0 0
      %2230 = vmatprep.subr.bf16.mxu0 0
      %2231 = vmatpush1.bf16.msra.mxu0 0
      %2232 = vmatprep.subr.bf16.mxu0 0
      %2233 = vmatpush1.bf16.msra.mxu0 0
      %2234 = vmatprep.mubr.bf16.mxu0 0
      %2235 = vmatmul.mubr.bf16.gmra.mrb[0].mxu0 %v2188
      %v2236 = vpop.f32.mrb[0].mxu0
      %v2237 = vadd.f32 0.0, %v2236
      %v2238 = vpop.f32.mrb[0].mxu0
      %v2239 = vpop.f32.mrb[0].mxu0
      %v2240 = vadd.f32 0.0, %v2239
      %v2241 = vpop.f32.mrb[0].mxu0
      %2242 = vmatprep.mubr.bf16.mxu0 0
      %2243 = vmatmul.mubr.bf16.gmra.mrb[0].mxu0 %v2191
      %v2244 = vpop.f32.mrb[0].mxu0
      %v2245 = vadd.f32 0.0, %v2244
      %v2246 = vpop.f32.mrb[0].mxu0
      %v2247 = vpop.f32.mrb[0].mxu0
      %v2248 = vadd.f32 0.0, %v2247
      %v2249 = vpop.f32.mrb[0].mxu0
      %2250 = vmatprep.mubr.bf16.mxu0 0
      %2251 = vmatmul.mubr.bf16.gmra.mrb[0].mxu0 %v2194
      %v2252 = vpop.f32.mrb[0].mxu0
      %v2253 = vadd.f32 0.0, %v2252
      %v2254 = vpop.f32.mrb[0].mxu0
      %v2255 = vpop.f32.mrb[0].mxu0
      %v2256 = vadd.f32 0.0, %v2255
      %v2257 = vpop.f32.mrb[0].mxu0
      %2258 = vmatprep.mubr.bf16.mxu0 0
      %2259 = vmatmul.mubr.bf16.gmra.mrb[0].mxu0 %v2197
      %v2260 = vpop.f32.mrb[0].mxu0
      %v2261 = vadd.f32 0.0, %v2260
      %v2262 = vpop.f32.mrb[0].mxu0
      %v2263 = vpop.f32.mrb[0].mxu0
      %v2264 = vadd.f32 0.0, %v2263
      %v2265 = vpop.f32.mrb[0].mxu0
      %2266 = vdwg.mxu0
      %v2267 = vadd.f32 %v2167, %v2237
      %v2268 = vadd.f32 %v2168, %v2240
      %v2269 = vadd.f32 %v2169, %v2245
      %v2270 = vadd.f32 %v2170, %v2248
      %v2271 = vadd.f32 %v2171, %v2253
      %v2272 = vadd.f32 %v2172, %v2256
      %v2273 = vadd.f32 %v2173, %v2261
      %v2274 = vadd.f32 %v2174, %v2264
      %s2275 = scalar_lea.vmem %s3, 60
      %v2276 = vld [vmem:[%s2275] sm:$0xf]
      %v2278 = vunpack.c.l.b16 %v451
      %v2279 = vpack.c.b16 %v2278, %v1973
      %v2281 = vsel %vm603, %v2279, 0
      %v2284 = vsel %vm616, %v2276, 0
      %2286 = vmatprep.subr.bf16.mxu0 0
      %2287 = vmatpush1.bf16.msra.mxu0 %v2284
      %2288 = vmatprep.subr.bf16.mxu0 0
      %2289 = vmatpush1.bf16.msra.mxu0 0
      %2290 = vmatprep.subr.bf16.mxu0 0
      %2291 = vmatpush1.bf16.msra.mxu0 0
      %2292 = vmatprep.subr.bf16.mxu0 0
      %2293 = vmatpush1.bf16.msra.mxu0 0
      %2294 = vmatprep.subr.bf16.mxu0 0
      %2295 = vmatpush1.bf16.msra.mxu0 0
      %2296 = vmatprep.subr.bf16.mxu0 0
      %2297 = vmatpush1.bf16.msra.mxu0 0
      %2298 = vmatprep.subr.bf16.mxu0 0
      %2299 = vmatpush1.bf16.msra.mxu0 0
      %2300 = vmatprep.subr.bf16.mxu0 0
      %2301 = vmatpush1.bf16.msra.mxu0 0
      %2302 = vmatprep.subr.bf16.mxu0 0
      %2303 = vmatpush1.bf16.msra.mxu0 0
      %2304 = vmatprep.subr.bf16.mxu0 0
      %2305 = vmatpush1.bf16.msra.mxu0 0
      %2306 = vmatprep.subr.bf16.mxu0 0
      %2307 = vmatpush1.bf16.msra.mxu0 0
      %2308 = vmatprep.subr.bf16.mxu0 0
      %2309 = vmatpush1.bf16.msra.mxu0 0
      %2310 = vmatprep.subr.bf16.mxu0 0
      %2311 = vmatpush1.bf16.msra.mxu0 0
      %2312 = vmatprep.subr.bf16.mxu0 0
      %2313 = vmatpush1.bf16.msra.mxu0 0
      %2314 = vmatprep.subr.bf16.mxu0 0
      %2315 = vmatpush1.bf16.msra.mxu0 0
      %2316 = vmatprep.subr.bf16.mxu0 0
      %2317 = vmatpush1.bf16.msra.mxu0 0
      %2318 = vmatprep.mubr.bf16.mxu0 0
      %2319 = vmatmul.mubr.bf16.gmra.mrb[0].mxu0 %v1530
      %v2320 = vpop.f32.mrb[0].mxu0
      %v2321 = vadd.f32 0.0, %v2320
      %v2322 = vpop.f32.mrb[0].mxu0
      %v2323 = vpop.f32.mrb[0].mxu0
      %v2324 = vadd.f32 0.0, %v2323
      %v2325 = vpop.f32.mrb[0].mxu0
      %2326 = vmatprep.mubr.bf16.mxu0 0
      %2327 = vmatmul.mubr.bf16.gmra.mrb[0].mxu0 %v1533
      %v2328 = vpop.f32.mrb[0].mxu0
      %v2329 = vadd.f32 0.0, %v2328
      %v2330 = vpop.f32.mrb[0].mxu0
      %v2331 = vpop.f32.mrb[0].mxu0
      %v2332 = vadd.f32 0.0, %v2331
      %v2333 = vpop.f32.mrb[0].mxu0
      %2334 = vmatprep.mubr.bf16.mxu0 0
      %2335 = vmatmul.mubr.bf16.gmra.mrb[0].mxu0 %v1536
      %v2336 = vpop.f32.mrb[0].mxu0
      %v2337 = vadd.f32 0.0, %v2336
      %v2338 = vpop.f32.mrb[0].mxu0
      %v2339 = vpop.f32.mrb[0].mxu0
      %v2340 = vadd.f32 0.0, %v2339
      %v2341 = vpop.f32.mrb[0].mxu0
      %2342 = vmatprep.mubr.bf16.mxu0 0
      %2343 = vmatmul.mubr.bf16.gmra.mrb[0].mxu0 %v2281
      %v2344 = vpop.f32.mrb[0].mxu0
      %v2345 = vadd.f32 0.0, %v2344
      %v2346 = vpop.f32.mrb[0].mxu0
      %v2347 = vpop.f32.mrb[0].mxu0
      %v2348 = vadd.f32 0.0, %v2347
      %v2349 = vpop.f32.mrb[0].mxu0
      %2350 = vdwg.mxu0
      %v2351 = vadd.f32 %v2267, %v2321
      %v2352 = vadd.f32 %v2268, %v2324
      %v2353 = vadd.f32 %v2269, %v2329
      %v2354 = vadd.f32 %v2270, %v2332
      %v2355 = vadd.f32 %v2271, %v2337
      %v2356 = vadd.f32 %v2272, %v2340
      %v2357 = vadd.f32 %v2273, %v2345
      %v2358 = vadd.f32 %v2274, %v2348
      %v2360 = vshrl.u32 %v451, 16
      %v2362 = vrot.slane %v2360, 4
      %v2363 = vshll.u32 %v451, 16
      %v2365 = vrot.slane %v2363, 5
      %v2366 = vor.u32 %v2362, %v2365
      %v2367 = vrot.slane %v2366, 4
      %v2369 = vshll.u32 %v452, 16
      %v2371 = vrot.slane %v2369, 5
      %v2372 = vsel %vm476, %v2367, %v2371
      %s2373 = scalar_lea.vmem %s3, 64
      %v2374 = vld [vmem:[%s2373] sm:$0xf]
      %v2375 = vunpack.c.l.b16 %v2372
      %v2376 = vpack.c.b16 %v2375, %v2082
      %v2378 = vsel %vm603, %v2376, 0
      %v2381 = vsel %vm616, %v2374, 0
      %2383 = vmatprep.subr.bf16.mxu0 0
      %2384 = vmatpush1.bf16.msra.mxu0 %v2381
      %2385 = vmatprep.subr.bf16.mxu0 0
      %2386 = vmatpush1.bf16.msra.mxu0 0
      %2387 = vmatprep.subr.bf16.mxu0 0
      %2388 = vmatpush1.bf16.msra.mxu0 0
      %2389 = vmatprep.subr.bf16.mxu0 0
      %2390 = vmatpush1.bf16.msra.mxu0 0
      %2391 = vmatprep.subr.bf16.mxu0 0
      %2392 = vmatpush1.bf16.msra.mxu0 0
      %2393 = vmatprep.subr.bf16.mxu0 0
      %2394 = vmatpush1.bf16.msra.mxu0 0
      %2395 = vmatprep.subr.bf16.mxu0 0
      %2396 = vmatpush1.bf16.msra.mxu0 0
      %2397 = vmatprep.subr.bf16.mxu0 0
      %2398 = vmatpush1.bf16.msra.mxu0 0
      %2399 = vmatprep.subr.bf16.mxu0 0
      %2400 = vmatpush1.bf16.msra.mxu0 0
      %2401 = vmatprep.subr.bf16.mxu0 0
      %2402 = vmatpush1.bf16.msra.mxu0 0
      %2403 = vmatprep.subr.bf16.mxu0 0
      %2404 = vmatpush1.bf16.msra.mxu0 0
      %2405 = vmatprep.subr.bf16.mxu0 0
      %2406 = vmatpush1.bf16.msra.mxu0 0
      %2407 = vmatprep.subr.bf16.mxu0 0
      %2408 = vmatpush1.bf16.msra.mxu0 0
      %2409 = vmatprep.subr.bf16.mxu0 0
      %2410 = vmatpush1.bf16.msra.mxu0 0
      %2411 = vmatprep.subr.bf16.mxu0 0
      %2412 = vmatpush1.bf16.msra.mxu0 0
      %2413 = vmatprep.subr.bf16.mxu0 0
      %2414 = vmatpush1.bf16.msra.mxu0 0
      %2415 = vmatprep.mubr.bf16.mxu0 0
      %2416 = vmatmul.mubr.bf16.gmra.mrb[0].mxu0 %v1744
      %v2417 = vpop.f32.mrb[0].mxu0
      %v2418 = vadd.f32 0.0, %v2417
      %v2419 = vpop.f32.mrb[0].mxu0
      %v2420 = vpop.f32.mrb[0].mxu0
      %v2421 = vadd.f32 0.0, %v2420
      %v2422 = vpop.f32.mrb[0].mxu0
      %2423 = vmatprep.mubr.bf16.mxu0 0
      %2424 = vmatmul.mubr.bf16.gmra.mrb[0].mxu0 %v1747
      %v2425 = vpop.f32.mrb[0].mxu0
      %v2426 = vadd.f32 0.0, %v2425
      %v2427 = vpop.f32.mrb[0].mxu0
      %v2428 = vpop.f32.mrb[0].mxu0
      %v2429 = vadd.f32 0.0, %v2428
      %v2430 = vpop.f32.mrb[0].mxu0
      %2431 = vmatprep.mubr.bf16.mxu0 0
      %2432 = vmatmul.mubr.bf16.gmra.mrb[0].mxu0 %v1750
      %v2433 = vpop.f32.mrb[0].mxu0
      %v2434 = vadd.f32 0.0, %v2433
      %v2435 = vpop.f32.mrb[0].mxu0
      %v2436 = vpop.f32.mrb[0].mxu0
      %v2437 = vadd.f32 0.0, %v2436
      %v2438 = vpop.f32.mrb[0].mxu0
      %2439 = vmatprep.mubr.bf16.mxu0 0
      %2440 = vmatmul.mubr.bf16.gmra.mrb[0].mxu0 %v2378
      %v2441 = vpop.f32.mrb[0].mxu0
      %v2442 = vadd.f32 0.0, %v2441
      %v2443 = vpop.f32.mrb[0].mxu0
      %v2444 = vpop.f32.mrb[0].mxu0
      %v2445 = vadd.f32 0.0, %v2444
      %v2446 = vpop.f32.mrb[0].mxu0
      %2447 = vdwg.mxu0
      %v2448 = vadd.f32 %v2351, %v2418
      %v2449 = vadd.f32 %v2352, %v2421
      %v2450 = vadd.f32 %v2353, %v2426
      %v2451 = vadd.f32 %v2354, %v2429
      %v2452 = vadd.f32 %v2355, %v2434
      %v2453 = vadd.f32 %v2356, %v2437
      %v2454 = vadd.f32 %v2357, %v2442
      %v2455 = vadd.f32 %v2358, %v2445
      %v2457 = vrot.slane %v451, 5
      %v2458 = vrot.slane %v2457, 4
      %v2459 = vrot.slane %v452, 5
      %v2460 = vsel %vm795, %v2458, %v2459
      %s2461 = scalar_lea.vmem %s3, 68
      %v2462 = vld [vmem:[%s2461] sm:$0xf]
      %v2463 = vunpack.c.l.b16 %v2460
      %v2464 = vpack.c.b16 %v2463, %v2182
      %v2466 = vsel %vm603, %v2464, 0
      %v2469 = vsel %vm616, %v2462, 0
      %2471 = vmatprep.subr.bf16.mxu0 0
      %2472 = vmatpush1.bf16.msra.mxu0 %v2469
      %2473 = vmatprep.subr.bf16.mxu0 0
      %2474 = vmatpush1.bf16.msra.mxu0 0
      %2475 = vmatprep.subr.bf16.mxu0 0
      %2476 = vmatpush1.bf16.msra.mxu0 0
      %2477 = vmatprep.subr.bf16.mxu0 0
      %2478 = vmatpush1.bf16.msra.mxu0 0
      %2479 = vmatprep.subr.bf16.mxu0 0
      %2480 = vmatpush1.bf16.msra.mxu0 0
      %2481 = vmatprep.subr.bf16.mxu0 0
      %2482 = vmatpush1.bf16.msra.mxu0 0
      %2483 = vmatprep.subr.bf16.mxu0 0
      %2484 = vmatpush1.bf16.msra.mxu0 0
      %2485 = vmatprep.subr.bf16.mxu0 0
      %2486 = vmatpush1.bf16.msra.mxu0 0
      %2487 = vmatprep.subr.bf16.mxu0 0
      %2488 = vmatpush1.bf16.msra.mxu0 0
      %2489 = vmatprep.subr.bf16.mxu0 0
      %2490 = vmatpush1.bf16.msra.mxu0 0
      %2491 = vmatprep.subr.bf16.mxu0 0
      %2492 = vmatpush1.bf16.msra.mxu0 0
      %2493 = vmatprep.subr.bf16.mxu0 0
      %2494 = vmatpush1.bf16.msra.mxu0 0
      %2495 = vmatprep.subr.bf16.mxu0 0
      %2496 = vmatpush1.bf16.msra.mxu0 0
      %2497 = vmatprep.subr.bf16.mxu0 0
      %2498 = vmatpush1.bf16.msra.mxu0 0
      %2499 = vmatprep.subr.bf16.mxu0 0
      %2500 = vmatpush1.bf16.msra.mxu0 0
      %2501 = vmatprep.subr.bf16.mxu0 0
      %2502 = vmatpush1.bf16.msra.mxu0 0
      %2503 = vmatprep.mubr.bf16.mxu0 0
      %2504 = vmatmul.mubr.bf16.gmra.mrb[0].mxu0 %v1886
      %v2505 = vpop.f32.mrb[0].mxu0
      %v2506 = vadd.f32 0.0, %v2505
      %v2507 = vpop.f32.mrb[0].mxu0
      %v2508 = vpop.f32.mrb[0].mxu0
      %v2509 = vadd.f32 0.0, %v2508
      %v2510 = vpop.f32.mrb[0].mxu0
      %2511 = vmatprep.mubr.bf16.mxu0 0
      %2512 = vmatmul.mubr.bf16.gmra.mrb[0].mxu0 %v1889
      %v2513 = vpop.f32.mrb[0].mxu0
      %v2514 = vadd.f32 0.0, %v2513
      %v2515 = vpop.f32.mrb[0].mxu0
      %v2516 = vpop.f32.mrb[0].mxu0
      %v2517 = vadd.f32 0.0, %v2516
      %v2518 = vpop.f32.mrb[0].mxu0
      %2519 = vmatprep.mubr.bf16.mxu0 0
      %2520 = vmatmul.mubr.bf16.gmra.mrb[0].mxu0 %v1892
      %v2521 = vpop.f32.mrb[0].mxu0
      %v2522 = vadd.f32 0.0, %v2521
      %v2523 = vpop.f32.mrb[0].mxu0
      %v2524 = vpop.f32.mrb[0].mxu0
      %v2525 = vadd.f32 0.0, %v2524
      %v2526 = vpop.f32.mrb[0].mxu0
      %2527 = vmatprep.mubr.bf16.mxu0 0
      %2528 = vmatmul.mubr.bf16.gmra.mrb[0].mxu0 %v2466
      %v2529 = vpop.f32.mrb[0].mxu0
      %v2530 = vadd.f32 0.0, %v2529
      %v2531 = vpop.f32.mrb[0].mxu0
      %v2532 = vpop.f32.mrb[0].mxu0
      %v2533 = vadd.f32 0.0, %v2532
      %v2534 = vpop.f32.mrb[0].mxu0
      %2535 = vdwg.mxu0
      %v2536 = vadd.f32 %v2448, %v2506
      %v2537 = vadd.f32 %v2449, %v2509
      %v2538 = vadd.f32 %v2450, %v2514
      %v2539 = vadd.f32 %v2451, %v2517
      %v2540 = vadd.f32 %v2452, %v2522
      %v2541 = vadd.f32 %v2453, %v2525
      %v2542 = vadd.f32 %v2454, %v2530
      %v2543 = vadd.f32 %v2455, %v2533
      %s2544 = scalar_lea.vmem %s3, 72
      %v2545 = vld [vmem:[%s2544] sm:$0xf]
      %v2554 = vunpack.c.l.b16 %v453
      %v2555 = vunpack.c.l.b16 %v455
      %v2556 = vunpack.c.l.b16 %v457
      %v2557 = vunpack.c.l.b16 %v459
      %v2558 = vunpack.c.l.b16 %v461
      %v2559 = vunpack.c.l.b16 %v463
      %v2560 = vunpack.c.l.b16 %v465
      %v2561 = vunpack.c.l.b16 %v467
      %v2562 = vpack.c.b16 %v2555, %v2554
      %v2563 = vpack.c.b16 %v2557, %v2556
      %v2564 = vpack.c.b16 %v2559, %v2558
      %v2565 = vpack.c.b16 %v2561, %v2560
      %v2567 = vsel %vm603, %v2562, 0
      %v2570 = vsel %vm603, %v2563, 0
      %v2573 = vsel %vm603, %v2564, 0
      %v2576 = vsel %vm603, %v2565, 0
      %v2579 = vsel %vm616, %v2545, 0
      %2581 = vmatprep.subr.bf16.mxu0 0
      %2582 = vmatpush1.bf16.msra.mxu0 %v2579
      %2583 = vmatprep.subr.bf16.mxu0 0
      %2584 = vmatpush1.bf16.msra.mxu0 0
      %2585 = vmatprep.subr.bf16.mxu0 0
      %2586 = vmatpush1.bf16.msra.mxu0 0
      %2587 = vmatprep.subr.bf16.mxu0 0
      %2588 = vmatpush1.bf16.msra.mxu0 0
      %2589 = vmatprep.subr.bf16.mxu0 0
      %2590 = vmatpush1.bf16.msra.mxu0 0
      %2591 = vmatprep.subr.bf16.mxu0 0
      %2592 = vmatpush1.bf16.msra.mxu0 0
      %2593 = vmatprep.subr.bf16.mxu0 0
      %2594 = vmatpush1.bf16.msra.mxu0 0
      %2595 = vmatprep.subr.bf16.mxu0 0
      %2596 = vmatpush1.bf16.msra.mxu0 0
      %2597 = vmatprep.subr.bf16.mxu0 0
      %2598 = vmatpush1.bf16.msra.mxu0 0
      %2599 = vmatprep.subr.bf16.mxu0 0
      %2600 = vmatpush1.bf16.msra.mxu0 0
      %2601 = vmatprep.subr.bf16.mxu0 0
      %2602 = vmatpush1.bf16.msra.mxu0 0
      %2603 = vmatprep.subr.bf16.mxu0 0
      %2604 = vmatpush1.bf16.msra.mxu0 0
      %2605 = vmatprep.subr.bf16.mxu0 0
      %2606 = vmatpush1.bf16.msra.mxu0 0
      %2607 = vmatprep.subr.bf16.mxu0 0
      %2608 = vmatpush1.bf16.msra.mxu0 0
      %2609 = vmatprep.subr.bf16.mxu0 0
      %2610 = vmatpush1.bf16.msra.mxu0 0
      %2611 = vmatprep.subr.bf16.mxu0 0
      %2612 = vmatpush1.bf16.msra.mxu0 0
      %2613 = vmatprep.mubr.bf16.mxu0 0
      %2614 = vmatmul.mubr.bf16.gmra.mrb[0].mxu0 %v2567
      %v2615 = vpop.f32.mrb[0].mxu0
      %v2616 = vadd.f32 0.0, %v2615
      %v2617 = vpop.f32.mrb[0].mxu0
      %v2618 = vpop.f32.mrb[0].mxu0
      %v2619 = vadd.f32 0.0, %v2618
      %v2620 = vpop.f32.mrb[0].mxu0
      %2621 = vmatprep.mubr.bf16.mxu0 0
      %2622 = vmatmul.mubr.bf16.gmra.mrb[0].mxu0 %v2570
      %v2623 = vpop.f32.mrb[0].mxu0
      %v2624 = vadd.f32 0.0, %v2623
      %v2625 = vpop.f32.mrb[0].mxu0
      %v2626 = vpop.f32.mrb[0].mxu0
      %v2627 = vadd.f32 0.0, %v2626
      %v2628 = vpop.f32.mrb[0].mxu0
      %2629 = vmatprep.mubr.bf16.mxu0 0
      %2630 = vmatmul.mubr.bf16.gmra.mrb[0].mxu0 %v2573
      %v2631 = vpop.f32.mrb[0].mxu0
      %v2632 = vadd.f32 0.0, %v2631
      %v2633 = vpop.f32.mrb[0].mxu0
      %v2634 = vpop.f32.mrb[0].mxu0
      %v2635 = vadd.f32 0.0, %v2634
      %v2636 = vpop.f32.mrb[0].mxu0
      %2637 = vmatprep.mubr.bf16.mxu0 0
      %2638 = vmatmul.mubr.bf16.gmra.mrb[0].mxu0 %v2576
      %v2639 = vpop.f32.mrb[0].mxu0
      %v2640 = vadd.f32 0.0, %v2639
      %v2641 = vpop.f32.mrb[0].mxu0
      %v2642 = vpop.f32.mrb[0].mxu0
      %v2643 = vadd.f32 0.0, %v2642
      %v2644 = vpop.f32.mrb[0].mxu0
      %2645 = vdwg.mxu0
      %v2646 = vadd.f32 %v2536, %v2616
      %v2647 = vadd.f32 %v2537, %v2619
      %v2648 = vadd.f32 %v2538, %v2624
      %v2649 = vadd.f32 %v2539, %v2627
      %v2650 = vadd.f32 %v2540, %v2632
      %v2651 = vadd.f32 %v2541, %v2635
      %v2652 = vadd.f32 %v2542, %v2640
      %v2653 = vadd.f32 %v2543, %v2643
      %v2655 = vshrl.u32 %v453, 16
      %v2657 = vrot.slane %v2655, 4
      %v2658 = vshll.u32 %v453, 16
      %v2660 = vrot.slane %v2658, 5
      %v2661 = vor.u32 %v2657, %v2660
      %v2662 = vrot.slane %v2661, 4
      %v2664 = vshll.u32 %v454, 16
      %v2666 = vrot.slane %v2664, 5
      %v2667 = vsel %vm476, %v2662, %v2666
      %v2669 = vshrl.u32 %v455, 16
      %v2671 = vrot.slane %v2669, 4
      %v2672 = vshll.u32 %v455, 16
      %v2674 = vrot.slane %v2672, 5
      %v2675 = vor.u32 %v2671, %v2674
      %v2676 = vrot.slane %v2675, 4
      %v2678 = vshll.u32 %v456, 16
      %v2680 = vrot.slane %v2678, 5
      %v2681 = vsel %vm476, %v2676, %v2680
      %v2683 = vshrl.u32 %v457, 16
      %v2685 = vrot.slane %v2683, 4
      %v2686 = vshll.u32 %v457, 16
      %v2688 = vrot.slane %v2686, 5
      %v2689 = vor.u32 %v2685, %v2688
      %v2690 = vrot.slane %v2689, 4
      %v2692 = vshll.u32 %v458, 16
      %v2694 = vrot.slane %v2692, 5
      %v2695 = vsel %vm476, %v2690, %v2694
      %v2697 = vshrl.u32 %v459, 16
      %v2699 = vrot.slane %v2697, 4
      %v2700 = vshll.u32 %v459, 16
      %v2702 = vrot.slane %v2700, 5
      %v2703 = vor.u32 %v2699, %v2702
      %v2704 = vrot.slane %v2703, 4
      %v2706 = vshll.u32 %v460, 16
      %v2708 = vrot.slane %v2706, 5
      %v2709 = vsel %vm476, %v2704, %v2708
      %v2711 = vshrl.u32 %v461, 16
      %v2713 = vrot.slane %v2711, 4
      %v2714 = vshll.u32 %v461, 16
      %v2716 = vrot.slane %v2714, 5
      %v2717 = vor.u32 %v2713, %v2716
      %v2718 = vrot.slane %v2717, 4
      %v2720 = vshll.u32 %v462, 16
      %v2722 = vrot.slane %v2720, 5
      %v2723 = vsel %vm476, %v2718, %v2722
      %v2725 = vshrl.u32 %v463, 16
      %v2727 = vrot.slane %v2725, 4
      %v2728 = vshll.u32 %v463, 16
      %v2730 = vrot.slane %v2728, 5
      %v2731 = vor.u32 %v2727, %v2730
      %v2732 = vrot.slane %v2731, 4
      %v2734 = vshll.u32 %v464, 16
      %v2736 = vrot.slane %v2734, 5
      %v2737 = vsel %vm476, %v2732, %v2736
      %v2739 = vshrl.u32 %v465, 16
      %v2741 = vrot.slane %v2739, 4
      %v2742 = vshll.u32 %v465, 16
      %v2744 = vrot.slane %v2742, 5
      %v2745 = vor.u32 %v2741, %v2744
      %v2746 = vrot.slane %v2745, 4
      %v2748 = vshll.u32 %v466, 16
      %v2750 = vrot.slane %v2748, 5
      %v2751 = vsel %vm476, %v2746, %v2750
      %v2753 = vshrl.u32 %v467, 16
      %v2755 = vrot.slane %v2753, 4
      %v2756 = vshll.u32 %v467, 16
      %v2758 = vrot.slane %v2756, 5
      %v2759 = vor.u32 %v2755, %v2758
      %v2760 = vrot.slane %v2759, 4
      %v2762 = vshll.u32 %v468, 16
      %v2764 = vrot.slane %v2762, 5
      %v2765 = vsel %vm476, %v2760, %v2764
      %s2766 = scalar_lea.vmem %s3, 76
      %v2767 = vld [vmem:[%s2766] sm:$0xf]
      %v2768 = vunpack.c.l.b16 %v2667
      %v2769 = vunpack.c.l.b16 %v2681
      %v2770 = vunpack.c.l.b16 %v2695
      %v2771 = vunpack.c.l.b16 %v2709
      %v2772 = vunpack.c.l.b16 %v2723
      %v2773 = vunpack.c.l.b16 %v2737
      %v2774 = vunpack.c.l.b16 %v2751
      %v2775 = vunpack.c.l.b16 %v2765
      %v2776 = vpack.c.b16 %v2769, %v2768
      %v2777 = vpack.c.b16 %v2771, %v2770
      %v2778 = vpack.c.b16 %v2773, %v2772
      %v2779 = vpack.c.b16 %v2775, %v2774
      %v2781 = vsel %vm603, %v2776, 0
      %v2784 = vsel %vm603, %v2777, 0
      %v2787 = vsel %vm603, %v2778, 0
      %v2790 = vsel %vm603, %v2779, 0
      %v2793 = vsel %vm616, %v2767, 0
      %2795 = vmatprep.subr.bf16.mxu0 0
      %2796 = vmatpush1.bf16.msra.mxu0 %v2793
      %2797 = vmatprep.subr.bf16.mxu0 0
      %2798 = vmatpush1.bf16.msra.mxu0 0
      %2799 = vmatprep.subr.bf16.mxu0 0
      %2800 = vmatpush1.bf16.msra.mxu0 0
      %2801 = vmatprep.subr.bf16.mxu0 0
      %2802 = vmatpush1.bf16.msra.mxu0 0
      %2803 = vmatprep.subr.bf16.mxu0 0
      %2804 = vmatpush1.bf16.msra.mxu0 0
      %2805 = vmatprep.subr.bf16.mxu0 0
      %2806 = vmatpush1.bf16.msra.mxu0 0
      %2807 = vmatprep.subr.bf16.mxu0 0
      %2808 = vmatpush1.bf16.msra.mxu0 0
      %2809 = vmatprep.subr.bf16.mxu0 0
      %2810 = vmatpush1.bf16.msra.mxu0 0
      %2811 = vmatprep.subr.bf16.mxu0 0
      %2812 = vmatpush1.bf16.msra.mxu0 0
      %2813 = vmatprep.subr.bf16.mxu0 0
      %2814 = vmatpush1.bf16.msra.mxu0 0
      %2815 = vmatprep.subr.bf16.mxu0 0
      %2816 = vmatpush1.bf16.msra.mxu0 0
      %2817 = vmatprep.subr.bf16.mxu0 0
      %2818 = vmatpush1.bf16.msra.mxu0 0
      %2819 = vmatprep.subr.bf16.mxu0 0
      %2820 = vmatpush1.bf16.msra.mxu0 0
      %2821 = vmatprep.subr.bf16.mxu0 0
      %2822 = vmatpush1.bf16.msra.mxu0 0
      %2823 = vmatprep.subr.bf16.mxu0 0
      %2824 = vmatpush1.bf16.msra.mxu0 0
      %2825 = vmatprep.subr.bf16.mxu0 0
      %2826 = vmatpush1.bf16.msra.mxu0 0
      %2827 = vmatprep.mubr.bf16.mxu0 0
      %2828 = vmatmul.mubr.bf16.gmra.mrb[0].mxu0 %v2781
      %v2829 = vpop.f32.mrb[0].mxu0
      %v2830 = vadd.f32 0.0, %v2829
      %v2831 = vpop.f32.mrb[0].mxu0
      %v2832 = vpop.f32.mrb[0].mxu0
      %v2833 = vadd.f32 0.0, %v2832
      %v2834 = vpop.f32.mrb[0].mxu0
      %2835 = vmatprep.mubr.bf16.mxu0 0
      %2836 = vmatmul.mubr.bf16.gmra.mrb[0].mxu0 %v2784
      %v2837 = vpop.f32.mrb[0].mxu0
      %v2838 = vadd.f32 0.0, %v2837
      %v2839 = vpop.f32.mrb[0].mxu0
      %v2840 = vpop.f32.mrb[0].mxu0
      %v2841 = vadd.f32 0.0, %v2840
      %v2842 = vpop.f32.mrb[0].mxu0
      %2843 = vmatprep.mubr.bf16.mxu0 0
      %2844 = vmatmul.mubr.bf16.gmra.mrb[0].mxu0 %v2787
      %v2845 = vpop.f32.mrb[0].mxu0
      %v2846 = vadd.f32 0.0, %v2845
      %v2847 = vpop.f32.mrb[0].mxu0
      %v2848 = vpop.f32.mrb[0].mxu0
      %v2849 = vadd.f32 0.0, %v2848
      %v2850 = vpop.f32.mrb[0].mxu0
      %2851 = vmatprep.mubr.bf16.mxu0 0
      %2852 = vmatmul.mubr.bf16.gmra.mrb[0].mxu0 %v2790
      %v2853 = vpop.f32.mrb[0].mxu0
      %v2854 = vadd.f32 0.0, %v2853
      %v2855 = vpop.f32.mrb[0].mxu0
      %v2856 = vpop.f32.mrb[0].mxu0
      %v2857 = vadd.f32 0.0, %v2856
      %v2858 = vpop.f32.mrb[0].mxu0
      %2859 = vdwg.mxu0
      %v2860 = vadd.f32 %v2646, %v2830
      %v2861 = vadd.f32 %v2647, %v2833
      %v2862 = vadd.f32 %v2648, %v2838
      %v2863 = vadd.f32 %v2649, %v2841
      %v2864 = vadd.f32 %v2650, %v2846
      %v2865 = vadd.f32 %v2651, %v2849
      %v2866 = vadd.f32 %v2652, %v2854
      %v2867 = vadd.f32 %v2653, %v2857
      %v2876 = vrot.slane %v453, 5
      %v2877 = vrot.slane %v2876, 4
      %v2878 = vrot.slane %v454, 5
      %v2879 = vsel %vm795, %v2877, %v2878
      %v2880 = vrot.slane %v455, 5
      %v2881 = vrot.slane %v2880, 4
      %v2882 = vrot.slane %v456, 5
      %v2883 = vsel %vm795, %v2881, %v2882
      %v2884 = vrot.slane %v457, 5
      %v2885 = vrot.slane %v2884, 4
      %v2886 = vrot.slane %v458, 5
      %v2887 = vsel %vm795, %v2885, %v2886
      %v2888 = vrot.slane %v459, 5
      %v2889 = vrot.slane %v2888, 4
      %v2890 = vrot.slane %v460, 5
      %v2891 = vsel %vm795, %v2889, %v2890
      %v2892 = vrot.slane %v461, 5
      %v2893 = vrot.slane %v2892, 4
      %v2894 = vrot.slane %v462, 5
      %v2895 = vsel %vm795, %v2893, %v2894
      %v2896 = vrot.slane %v463, 5
      %v2897 = vrot.slane %v2896, 4
      %v2898 = vrot.slane %v464, 5
      %v2899 = vsel %vm795, %v2897, %v2898
      %v2900 = vrot.slane %v465, 5
      %v2901 = vrot.slane %v2900, 4
      %v2902 = vrot.slane %v466, 5
      %v2903 = vsel %vm795, %v2901, %v2902
      %v2904 = vrot.slane %v467, 5
      %v2905 = vrot.slane %v2904, 4
      %v2906 = vrot.slane %v468, 5
      %v2907 = vsel %vm795, %v2905, %v2906
      %s2908 = scalar_lea.vmem %s3, 80
      %v2909 = vld [vmem:[%s2908] sm:$0xf]
      %v2910 = vunpack.c.l.b16 %v2879
      %v2911 = vunpack.c.l.b16 %v2883
      %v2912 = vunpack.c.l.b16 %v2887
      %v2913 = vunpack.c.l.b16 %v2891
      %v2914 = vunpack.c.l.b16 %v2895
      %v2915 = vunpack.c.l.b16 %v2899
      %v2916 = vunpack.c.l.b16 %v2903
      %v2917 = vunpack.c.l.b16 %v2907
      %v2918 = vpack.c.b16 %v2911, %v2910
      %v2919 = vpack.c.b16 %v2913, %v2912
      %v2920 = vpack.c.b16 %v2915, %v2914
      %v2921 = vpack.c.b16 %v2917, %v2916
      %v2923 = vsel %vm603, %v2918, 0
      %v2926 = vsel %vm603, %v2919, 0
      %v2929 = vsel %vm603, %v2920, 0
      %v2932 = vsel %vm603, %v2921, 0
      %v2935 = vsel %vm616, %v2909, 0
      %2937 = vmatprep.subr.bf16.mxu0 0
      %2938 = vmatpush1.bf16.msra.mxu0 %v2935
      %2939 = vmatprep.subr.bf16.mxu0 0
      %2940 = vmatpush1.bf16.msra.mxu0 0
      %2941 = vmatprep.subr.bf16.mxu0 0
      %2942 = vmatpush1.bf16.msra.mxu0 0
      %2943 = vmatprep.subr.bf16.mxu0 0
      %2944 = vmatpush1.bf16.msra.mxu0 0
      %2945 = vmatprep.subr.bf16.mxu0 0
      %2946 = vmatpush1.bf16.msra.mxu0 0
      %2947 = vmatprep.subr.bf16.mxu0 0
      %2948 = vmatpush1.bf16.msra.mxu0 0
      %2949 = vmatprep.subr.bf16.mxu0 0
      %2950 = vmatpush1.bf16.msra.mxu0 0
      %2951 = vmatprep.subr.bf16.mxu0 0
      %2952 = vmatpush1.bf16.msra.mxu0 0
      %2953 = vmatprep.subr.bf16.mxu0 0
      %2954 = vmatpush1.bf16.msra.mxu0 0
      %2955 = vmatprep.subr.bf16.mxu0 0
      %2956 = vmatpush1.bf16.msra.mxu0 0
      %2957 = vmatprep.subr.bf16.mxu0 0
      %2958 = vmatpush1.bf16.msra.mxu0 0
      %2959 = vmatprep.subr.bf16.mxu0 0
      %2960 = vmatpush1.bf16.msra.mxu0 0
      %2961 = vmatprep.subr.bf16.mxu0 0
      %2962 = vmatpush1.bf16.msra.mxu0 0
      %2963 = vmatprep.subr.bf16.mxu0 0
      %2964 = vmatpush1.bf16.msra.mxu0 0
      %2965 = vmatprep.subr.bf16.mxu0 0
      %2966 = vmatpush1.bf16.msra.mxu0 0
      %2967 = vmatprep.subr.bf16.mxu0 0
      %2968 = vmatpush1.bf16.msra.mxu0 0
      %2969 = vmatprep.mubr.bf16.mxu0 0
      %2970 = vmatmul.mubr.bf16.gmra.mrb[0].mxu0 %v2923
      %v2971 = vpop.f32.mrb[0].mxu0
      %v2972 = vadd.f32 0.0, %v2971
      %v2973 = vpop.f32.mrb[0].mxu0
      %v2974 = vpop.f32.mrb[0].mxu0
      %v2975 = vadd.f32 0.0, %v2974
      %v2976 = vpop.f32.mrb[0].mxu0
      %2977 = vmatprep.mubr.bf16.mxu0 0
      %2978 = vmatmul.mubr.bf16.gmra.mrb[0].mxu0 %v2926
      %v2979 = vpop.f32.mrb[0].mxu0
      %v2980 = vadd.f32 0.0, %v2979
      %v2981 = vpop.f32.mrb[0].mxu0
      %v2982 = vpop.f32.mrb[0].mxu0
      %v2983 = vadd.f32 0.0, %v2982
      %v2984 = vpop.f32.mrb[0].mxu0
      %2985 = vmatprep.mubr.bf16.mxu0 0
      %2986 = vmatmul.mubr.bf16.gmra.mrb[0].mxu0 %v2929
      %v2987 = vpop.f32.mrb[0].mxu0
      %v2988 = vadd.f32 0.0, %v2987
      %v2989 = vpop.f32.mrb[0].mxu0
      %v2990 = vpop.f32.mrb[0].mxu0
      %v2991 = vadd.f32 0.0, %v2990
      %v2992 = vpop.f32.mrb[0].mxu0
      %2993 = vmatprep.mubr.bf16.mxu0 0
      %2994 = vmatmul.mubr.bf16.gmra.mrb[0].mxu0 %v2932
      %v2995 = vpop.f32.mrb[0].mxu0
      %v2996 = vadd.f32 0.0, %v2995
      %v2997 = vpop.f32.mrb[0].mxu0
      %v2998 = vpop.f32.mrb[0].mxu0
      %v2999 = vadd.f32 0.0, %v2998
      %v3000 = vpop.f32.mrb[0].mxu0
      %3001 = vdwg.mxu0
      %v3002 = vadd.f32 %v2860, %v2972
      %v3003 = vadd.f32 %v2861, %v2975
      %v3004 = vadd.f32 %v2862, %v2980
      %v3005 = vadd.f32 %v2863, %v2983
      %v3006 = vadd.f32 %v2864, %v2988
      %v3007 = vadd.f32 %v2865, %v2991
      %v3008 = vadd.f32 %v2866, %v2996
      %v3009 = vadd.f32 %v2867, %v2999
      %s3010 = scalar_lea.vmem %s3, 84
      %v3011 = vld [vmem:[%s3010] sm:$0xf]
      %v3013 = vunpack.c.l.b16 %v469
      %v3014 = vpack.c.b16 %v2556, %v2555
      %v3015 = vpack.c.b16 %v2558, %v2557
      %v3016 = vpack.c.b16 %v2560, %v2559
      %v3017 = vpack.c.b16 %v3013, %v2561
      %v3019 = vsel %vm603, %v3014, 0
      %v3022 = vsel %vm603, %v3015, 0
      %v3025 = vsel %vm603, %v3016, 0
      %v3028 = vsel %vm603, %v3017, 0
      %v3031 = vsel %vm616, %v3011, 0
      %3033 = vmatprep.subr.bf16.mxu0 0
      %3034 = vmatpush1.bf16.msra.mxu0 %v3031
      %3035 = vmatprep.subr.bf16.mxu0 0
      %3036 = vmatpush1.bf16.msra.mxu0 0
      %3037 = vmatprep.subr.bf16.mxu0 0
      %3038 = vmatpush1.bf16.msra.mxu0 0
      %3039 = vmatprep.subr.bf16.mxu0 0
      %3040 = vmatpush1.bf16.msra.mxu0 0
      %3041 = vmatprep.subr.bf16.mxu0 0
      %3042 = vmatpush1.bf16.msra.mxu0 0
      %3043 = vmatprep.subr.bf16.mxu0 0
      %3044 = vmatpush1.bf16.msra.mxu0 0
      %3045 = vmatprep.subr.bf16.mxu0 0
      %3046 = vmatpush1.bf16.msra.mxu0 0
      %3047 = vmatprep.subr.bf16.mxu0 0
      %3048 = vmatpush1.bf16.msra.mxu0 0
      %3049 = vmatprep.subr.bf16.mxu0 0
      %3050 = vmatpush1.bf16.msra.mxu0 0
      %3051 = vmatprep.subr.bf16.mxu0 0
      %3052 = vmatpush1.bf16.msra.mxu0 0
      %3053 = vmatprep.subr.bf16.mxu0 0
      %3054 = vmatpush1.bf16.msra.mxu0 0
      %3055 = vmatprep.subr.bf16.mxu0 0
      %3056 = vmatpush1.bf16.msra.mxu0 0
      %3057 = vmatprep.subr.bf16.mxu0 0
      %3058 = vmatpush1.bf16.msra.mxu0 0
      %3059 = vmatprep.subr.bf16.mxu0 0
      %3060 = vmatpush1.bf16.msra.mxu0 0
      %3061 = vmatprep.subr.bf16.mxu0 0
      %3062 = vmatpush1.bf16.msra.mxu0 0
      %3063 = vmatprep.subr.bf16.mxu0 0
      %3064 = vmatpush1.bf16.msra.mxu0 0
      %3065 = vmatprep.mubr.bf16.mxu0 0
      %3066 = vmatmul.mubr.bf16.gmra.mrb[0].mxu0 %v3019
      %v3067 = vpop.f32.mrb[0].mxu0
      %v3068 = vadd.f32 0.0, %v3067
      %v3069 = vpop.f32.mrb[0].mxu0
      %v3070 = vpop.f32.mrb[0].mxu0
      %v3071 = vadd.f32 0.0, %v3070
      %v3072 = vpop.f32.mrb[0].mxu0
      %3073 = vmatprep.mubr.bf16.mxu0 0
      %3074 = vmatmul.mubr.bf16.gmra.mrb[0].mxu0 %v3022
      %v3075 = vpop.f32.mrb[0].mxu0
      %v3076 = vadd.f32 0.0, %v3075
      %v3077 = vpop.f32.mrb[0].mxu0
      %v3078 = vpop.f32.mrb[0].mxu0
      %v3079 = vadd.f32 0.0, %v3078
      %v3080 = vpop.f32.mrb[0].mxu0
      %3081 = vmatprep.mubr.bf16.mxu0 0
      %3082 = vmatmul.mubr.bf16.gmra.mrb[0].mxu0 %v3025
      %v3083 = vpop.f32.mrb[0].mxu0
      %v3084 = vadd.f32 0.0, %v3083
      %v3085 = vpop.f32.mrb[0].mxu0
      %v3086 = vpop.f32.mrb[0].mxu0
      %v3087 = vadd.f32 0.0, %v3086
      %v3088 = vpop.f32.mrb[0].mxu0
      %3089 = vmatprep.mubr.bf16.mxu0 0
      %3090 = vmatmul.mubr.bf16.gmra.mrb[0].mxu0 %v3028
      %v3091 = vpop.f32.mrb[0].mxu0
      %v3092 = vadd.f32 0.0, %v3091
      %v3093 = vpop.f32.mrb[0].mxu0
      %v3094 = vpop.f32.mrb[0].mxu0
      %v3095 = vadd.f32 0.0, %v3094
      %v3096 = vpop.f32.mrb[0].mxu0
      %3097 = vdwg.mxu0
      %v3098 = vadd.f32 %v3002, %v3068
      %v3099 = vadd.f32 %v3003, %v3071
      %v3100 = vadd.f32 %v3004, %v3076
      %v3101 = vadd.f32 %v3005, %v3079
      %v3102 = vadd.f32 %v3006, %v3084
      %v3103 = vadd.f32 %v3007, %v3087
      %v3104 = vadd.f32 %v3008, %v3092
      %v3105 = vadd.f32 %v3009, %v3095
      %v3107 = vshrl.u32 %v469, 16
      %v3109 = vrot.slane %v3107, 4
      %v3110 = vshll.u32 %v469, 16
      %v3112 = vrot.slane %v3110, 5
      %v3113 = vor.u32 %v3109, %v3112
      %v3114 = vrot.slane %v3113, 4
      %v3116 = vshll.u32 %v470, 16
      %v3118 = vrot.slane %v3116, 5
      %v3119 = vsel %vm476, %v3114, %v3118
      %s3120 = scalar_lea.vmem %s3, 88
      %v3121 = vld [vmem:[%s3120] sm:$0xf]
      %v3122 = vunpack.c.l.b16 %v3119
      %v3123 = vpack.c.b16 %v2770, %v2769
      %v3124 = vpack.c.b16 %v2772, %v2771
      %v3125 = vpack.c.b16 %v2774, %v2773
      %v3126 = vpack.c.b16 %v3122, %v2775
      %v3128 = vsel %vm603, %v3123, 0
      %v3131 = vsel %vm603, %v3124, 0
      %v3134 = vsel %vm603, %v3125, 0
      %v3137 = vsel %vm603, %v3126, 0
      %v3140 = vsel %vm616, %v3121, 0
      %3142 = vmatprep.subr.bf16.mxu0 0
      %3143 = vmatpush1.bf16.msra.mxu0 %v3140
      %3144 = vmatprep.subr.bf16.mxu0 0
      %3145 = vmatpush1.bf16.msra.mxu0 0
      %3146 = vmatprep.subr.bf16.mxu0 0
      %3147 = vmatpush1.bf16.msra.mxu0 0
      %3148 = vmatprep.subr.bf16.mxu0 0
      %3149 = vmatpush1.bf16.msra.mxu0 0
      %3150 = vmatprep.subr.bf16.mxu0 0
      %3151 = vmatpush1.bf16.msra.mxu0 0
      %3152 = vmatprep.subr.bf16.mxu0 0
      %3153 = vmatpush1.bf16.msra.mxu0 0
      %3154 = vmatprep.subr.bf16.mxu0 0
      %3155 = vmatpush1.bf16.msra.mxu0 0
      %3156 = vmatprep.subr.bf16.mxu0 0
      %3157 = vmatpush1.bf16.msra.mxu0 0
      %3158 = vmatprep.subr.bf16.mxu0 0
      %3159 = vmatpush1.bf16.msra.mxu0 0
      %3160 = vmatprep.subr.bf16.mxu0 0
      %3161 = vmatpush1.bf16.msra.mxu0 0
      %3162 = vmatprep.subr.bf16.mxu0 0
      %3163 = vmatpush1.bf16.msra.mxu0 0
      %3164 = vmatprep.subr.bf16.mxu0 0
      %3165 = vmatpush1.bf16.msra.mxu0 0
      %3166 = vmatprep.subr.bf16.mxu0 0
      %3167 = vmatpush1.bf16.msra.mxu0 0
      %3168 = vmatprep.subr.bf16.mxu0 0
      %3169 = vmatpush1.bf16.msra.mxu0 0
      %3170 = vmatprep.subr.bf16.mxu0 0
      %3171 = vmatpush1.bf16.msra.mxu0 0
      %3172 = vmatprep.subr.bf16.mxu0 0
      %3173 = vmatpush1.bf16.msra.mxu0 0
      %3174 = vmatprep.mubr.bf16.mxu0 0
      %3175 = vmatmul.mubr.bf16.gmra.mrb[0].mxu0 %v3128
      %v3176 = vpop.f32.mrb[0].mxu0
      %v3177 = vadd.f32 0.0, %v3176
      %v3178 = vpop.f32.mrb[0].mxu0
      %v3179 = vpop.f32.mrb[0].mxu0
      %v3180 = vadd.f32 0.0, %v3179
      %v3181 = vpop.f32.mrb[0].mxu0
      %3182 = vmatprep.mubr.bf16.mxu0 0
      %3183 = vmatmul.mubr.bf16.gmra.mrb[0].mxu0 %v3131
      %v3184 = vpop.f32.mrb[0].mxu0
      %v3185 = vadd.f32 0.0, %v3184
      %v3186 = vpop.f32.mrb[0].mxu0
      %v3187 = vpop.f32.mrb[0].mxu0
      %v3188 = vadd.f32 0.0, %v3187
      %v3189 = vpop.f32.mrb[0].mxu0
      %3190 = vmatprep.mubr.bf16.mxu0 0
      %3191 = vmatmul.mubr.bf16.gmra.mrb[0].mxu0 %v3134
      %v3192 = vpop.f32.mrb[0].mxu0
      %v3193 = vadd.f32 0.0, %v3192
      %v3194 = vpop.f32.mrb[0].mxu0
      %v3195 = vpop.f32.mrb[0].mxu0
      %v3196 = vadd.f32 0.0, %v3195
      %v3197 = vpop.f32.mrb[0].mxu0
      %3198 = vmatprep.mubr.bf16.mxu0 0
      %3199 = vmatmul.mubr.bf16.gmra.mrb[0].mxu0 %v3137
      %v3200 = vpop.f32.mrb[0].mxu0
      %v3201 = vadd.f32 0.0, %v3200
      %v3202 = vpop.f32.mrb[0].mxu0
      %v3203 = vpop.f32.mrb[0].mxu0
      %v3204 = vadd.f32 0.0, %v3203
      %v3205 = vpop.f32.mrb[0].mxu0
      %3206 = vdwg.mxu0
      %v3207 = vadd.f32 %v3098, %v3177
      %v3208 = vadd.f32 %v3099, %v3180
      %v3209 = vadd.f32 %v3100, %v3185
      %v3210 = vadd.f32 %v3101, %v3188
      %v3211 = vadd.f32 %v3102, %v3193
      %v3212 = vadd.f32 %v3103, %v3196
      %v3213 = vadd.f32 %v3104, %v3201
      %v3214 = vadd.f32 %v3105, %v3204
      %v3216 = vrot.slane %v469, 5
      %v3217 = vrot.slane %v3216, 4
      %v3218 = vrot.slane %v470, 5
      %v3219 = vsel %vm795, %v3217, %v3218
      %s3220 = scalar_lea.vmem %s3, 92
      %v3221 = vld [vmem:[%s3220] sm:$0xf]
      %v3222 = vunpack.c.l.b16 %v3219
      %v3223 = vpack.c.b16 %v2912, %v2911
      %v3224 = vpack.c.b16 %v2914, %v2913
      %v3225 = vpack.c.b16 %v2916, %v2915
      %v3226 = vpack.c.b16 %v3222, %v2917
      %v3228 = vsel %vm603, %v3223, 0
      %v3231 = vsel %vm603, %v3224, 0
      %v3234 = vsel %vm603, %v3225, 0
      %v3237 = vsel %vm603, %v3226, 0
      %v3240 = vsel %vm616, %v3221, 0
      %3242 = vmatprep.subr.bf16.mxu0 0
      %3243 = vmatpush1.bf16.msra.mxu0 %v3240
      %3244 = vmatprep.subr.bf16.mxu0 0
      %3245 = vmatpush1.bf16.msra.mxu0 0
      %3246 = vmatprep.subr.bf16.mxu0 0
      %3247 = vmatpush1.bf16.msra.mxu0 0
      %3248 = vmatprep.subr.bf16.mxu0 0
      %3249 = vmatpush1.bf16.msra.mxu0 0
      %3250 = vmatprep.subr.bf16.mxu0 0
      %3251 = vmatpush1.bf16.msra.mxu0 0
      %3252 = vmatprep.subr.bf16.mxu0 0
      %3253 = vmatpush1.bf16.msra.mxu0 0
      %3254 = vmatprep.subr.bf16.mxu0 0
      %3255 = vmatpush1.bf16.msra.mxu0 0
      %3256 = vmatprep.subr.bf16.mxu0 0
      %3257 = vmatpush1.bf16.msra.mxu0 0
      %3258 = vmatprep.subr.bf16.mxu0 0
      %3259 = vmatpush1.bf16.msra.mxu0 0
      %3260 = vmatprep.subr.bf16.mxu0 0
      %3261 = vmatpush1.bf16.msra.mxu0 0
      %3262 = vmatprep.subr.bf16.mxu0 0
      %3263 = vmatpush1.bf16.msra.mxu0 0
      %3264 = vmatprep.subr.bf16.mxu0 0
      %3265 = vmatpush1.bf16.msra.mxu0 0
      %3266 = vmatprep.subr.bf16.mxu0 0
      %3267 = vmatpush1.bf16.msra.mxu0 0
      %3268 = vmatprep.subr.bf16.mxu0 0
      %3269 = vmatpush1.bf16.msra.mxu0 0
      %3270 = vmatprep.subr.bf16.mxu0 0
      %3271 = vmatpush1.bf16.msra.mxu0 0
      %3272 = vmatprep.subr.bf16.mxu0 0
      %3273 = vmatpush1.bf16.msra.mxu0 0
      %3274 = vmatprep.mubr.bf16.mxu0 0
      %3275 = vmatmul.mubr.bf16.gmra.mrb[0].mxu0 %v3228
      %v3276 = vpop.f32.mrb[0].mxu0
      %v3277 = vadd.f32 0.0, %v3276
      %v3278 = vpop.f32.mrb[0].mxu0
      %v3279 = vpop.f32.mrb[0].mxu0
      %v3280 = vadd.f32 0.0, %v3279
      %v3281 = vpop.f32.mrb[0].mxu0
      %3282 = vmatprep.mubr.bf16.mxu0 0
      %3283 = vmatmul.mubr.bf16.gmra.mrb[0].mxu0 %v3231
      %v3284 = vpop.f32.mrb[0].mxu0
      %v3285 = vadd.f32 0.0, %v3284
      %v3286 = vpop.f32.mrb[0].mxu0
      %v3287 = vpop.f32.mrb[0].mxu0
      %v3288 = vadd.f32 0.0, %v3287
      %v3289 = vpop.f32.mrb[0].mxu0
      %3290 = vmatprep.mubr.bf16.mxu0 0
      %3291 = vmatmul.mubr.bf16.gmra.mrb[0].mxu0 %v3234
      %v3292 = vpop.f32.mrb[0].mxu0
      %v3293 = vadd.f32 0.0, %v3292
      %v3294 = vpop.f32.mrb[0].mxu0
      %v3295 = vpop.f32.mrb[0].mxu0
      %v3296 = vadd.f32 0.0, %v3295
      %v3297 = vpop.f32.mrb[0].mxu0
      %3298 = vmatprep.mubr.bf16.mxu0 0
      %3299 = vmatmul.mubr.bf16.gmra.mrb[0].mxu0 %v3237
      %v3300 = vpop.f32.mrb[0].mxu0
      %v3301 = vadd.f32 0.0, %v3300
      %v3302 = vpop.f32.mrb[0].mxu0
      %v3303 = vpop.f32.mrb[0].mxu0
      %v3304 = vadd.f32 0.0, %v3303
      %v3305 = vpop.f32.mrb[0].mxu0
      %3306 = vdwg.mxu0
      %v3307 = vadd.f32 %v3207, %v3277
      %v3308 = vadd.f32 %v3208, %v3280
      %v3309 = vadd.f32 %v3209, %v3285
      %v3310 = vadd.f32 %v3210, %v3288
      %v3311 = vadd.f32 %v3211, %v3293
      %v3312 = vadd.f32 %v3212, %v3296
      %v3313 = vadd.f32 %v3213, %v3301
      %v3314 = vadd.f32 %v3214, %v3304
      %s3315 = scalar_lea.vmem %s3, 96
      %v3316 = vld [vmem:[%s3315] sm:$0xf]
      %v3318 = vunpack.c.l.b16 %v471
      %v3319 = vpack.c.b16 %v3318, %v3013
      %v3321 = vsel %vm603, %v3319, 0
      %v3324 = vsel %vm616, %v3316, 0
      %3326 = vmatprep.subr.bf16.mxu0 0
      %3327 = vmatpush1.bf16.msra.mxu0 %v3324
      %3328 = vmatprep.subr.bf16.mxu0 0
      %3329 = vmatpush1.bf16.msra.mxu0 0
      %3330 = vmatprep.subr.bf16.mxu0 0
      %3331 = vmatpush1.bf16.msra.mxu0 0
      %3332 = vmatprep.subr.bf16.mxu0 0
      %3333 = vmatpush1.bf16.msra.mxu0 0
      %3334 = vmatprep.subr.bf16.mxu0 0
      %3335 = vmatpush1.bf16.msra.mxu0 0
      %3336 = vmatprep.subr.bf16.mxu0 0
      %3337 = vmatpush1.bf16.msra.mxu0 0
      %3338 = vmatprep.subr.bf16.mxu0 0
      %3339 = vmatpush1.bf16.msra.mxu0 0
      %3340 = vmatprep.subr.bf16.mxu0 0
      %3341 = vmatpush1.bf16.msra.mxu0 0
      %3342 = vmatprep.subr.bf16.mxu0 0
      %3343 = vmatpush1.bf16.msra.mxu0 0
      %3344 = vmatprep.subr.bf16.mxu0 0
      %3345 = vmatpush1.bf16.msra.mxu0 0
      %3346 = vmatprep.subr.bf16.mxu0 0
      %3347 = vmatpush1.bf16.msra.mxu0 0
      %3348 = vmatprep.subr.bf16.mxu0 0
      %3349 = vmatpush1.bf16.msra.mxu0 0
      %3350 = vmatprep.subr.bf16.mxu0 0
      %3351 = vmatpush1.bf16.msra.mxu0 0
      %3352 = vmatprep.subr.bf16.mxu0 0
      %3353 = vmatpush1.bf16.msra.mxu0 0
      %3354 = vmatprep.subr.bf16.mxu0 0
      %3355 = vmatpush1.bf16.msra.mxu0 0
      %3356 = vmatprep.subr.bf16.mxu0 0
      %3357 = vmatpush1.bf16.msra.mxu0 0
      %3358 = vmatprep.mubr.bf16.mxu0 0
      %3359 = vmatmul.mubr.bf16.gmra.mrb[0].mxu0 %v2570
      %v3360 = vpop.f32.mrb[0].mxu0
      %v3361 = vadd.f32 0.0, %v3360
      %v3362 = vpop.f32.mrb[0].mxu0
      %v3363 = vpop.f32.mrb[0].mxu0
      %v3364 = vadd.f32 0.0, %v3363
      %v3365 = vpop.f32.mrb[0].mxu0
      %3366 = vmatprep.mubr.bf16.mxu0 0
      %3367 = vmatmul.mubr.bf16.gmra.mrb[0].mxu0 %v2573
      %v3368 = vpop.f32.mrb[0].mxu0
      %v3369 = vadd.f32 0.0, %v3368
      %v3370 = vpop.f32.mrb[0].mxu0
      %v3371 = vpop.f32.mrb[0].mxu0
      %v3372 = vadd.f32 0.0, %v3371
      %v3373 = vpop.f32.mrb[0].mxu0
      %3374 = vmatprep.mubr.bf16.mxu0 0
      %3375 = vmatmul.mubr.bf16.gmra.mrb[0].mxu0 %v2576
      %v3376 = vpop.f32.mrb[0].mxu0
      %v3377 = vadd.f32 0.0, %v3376
      %v3378 = vpop.f32.mrb[0].mxu0
      %v3379 = vpop.f32.mrb[0].mxu0
      %v3380 = vadd.f32 0.0, %v3379
      %v3381 = vpop.f32.mrb[0].mxu0
      %3382 = vmatprep.mubr.bf16.mxu0 0
      %3383 = vmatmul.mubr.bf16.gmra.mrb[0].mxu0 %v3321
      %v3384 = vpop.f32.mrb[0].mxu0
      %v3385 = vadd.f32 0.0, %v3384
      %v3386 = vpop.f32.mrb[0].mxu0
      %v3387 = vpop.f32.mrb[0].mxu0
      %v3388 = vadd.f32 0.0, %v3387
      %v3389 = vpop.f32.mrb[0].mxu0
      %3390 = vdwg.mxu0
      %v3391 = vadd.f32 %v3307, %v3361
      %v3392 = vadd.f32 %v3308, %v3364
      %v3393 = vadd.f32 %v3309, %v3369
      %v3394 = vadd.f32 %v3310, %v3372
      %v3395 = vadd.f32 %v3311, %v3377
      %v3396 = vadd.f32 %v3312, %v3380
      %v3397 = vadd.f32 %v3313, %v3385
      %v3398 = vadd.f32 %v3314, %v3388
      %v3400 = vshrl.u32 %v471, 16
      %v3402 = vrot.slane %v3400, 4
      %v3403 = vshll.u32 %v471, 16
      %v3405 = vrot.slane %v3403, 5
      %v3406 = vor.u32 %v3402, %v3405
      %v3407 = vrot.slane %v3406, 4
      %v3409 = vshll.u32 %v472, 16
      %v3411 = vrot.slane %v3409, 5
      %v3412 = vsel %vm476, %v3407, %v3411
      %s3413 = scalar_lea.vmem %s3, 100
      %v3414 = vld [vmem:[%s3413] sm:$0xf]
      %v3415 = vunpack.c.l.b16 %v3412
      %v3416 = vpack.c.b16 %v3415, %v3122
      %v3418 = vsel %vm603, %v3416, 0
      %v3421 = vsel %vm616, %v3414, 0
      %3423 = vmatprep.subr.bf16.mxu0 0
      %3424 = vmatpush1.bf16.msra.mxu0 %v3421
      %3425 = vmatprep.subr.bf16.mxu0 0
      %3426 = vmatpush1.bf16.msra.mxu0 0
      %3427 = vmatprep.subr.bf16.mxu0 0
      %3428 = vmatpush1.bf16.msra.mxu0 0
      %3429 = vmatprep.subr.bf16.mxu0 0
      %3430 = vmatpush1.bf16.msra.mxu0 0
      %3431 = vmatprep.subr.bf16.mxu0 0
      %3432 = vmatpush1.bf16.msra.mxu0 0
      %3433 = vmatprep.subr.bf16.mxu0 0
      %3434 = vmatpush1.bf16.msra.mxu0 0
      %3435 = vmatprep.subr.bf16.mxu0 0
      %3436 = vmatpush1.bf16.msra.mxu0 0
      %3437 = vmatprep.subr.bf16.mxu0 0
      %3438 = vmatpush1.bf16.msra.mxu0 0
      %3439 = vmatprep.subr.bf16.mxu0 0
      %3440 = vmatpush1.bf16.msra.mxu0 0
      %3441 = vmatprep.subr.bf16.mxu0 0
      %3442 = vmatpush1.bf16.msra.mxu0 0
      %3443 = vmatprep.subr.bf16.mxu0 0
      %3444 = vmatpush1.bf16.msra.mxu0 0
      %3445 = vmatprep.subr.bf16.mxu0 0
      %3446 = vmatpush1.bf16.msra.mxu0 0
      %3447 = vmatprep.subr.bf16.mxu0 0
      %3448 = vmatpush1.bf16.msra.mxu0 0
      %3449 = vmatprep.subr.bf16.mxu0 0
      %3450 = vmatpush1.bf16.msra.mxu0 0
      %3451 = vmatprep.subr.bf16.mxu0 0
      %3452 = vmatpush1.bf16.msra.mxu0 0
      %3453 = vmatprep.subr.bf16.mxu0 0
      %3454 = vmatpush1.bf16.msra.mxu0 0
      %3455 = vmatprep.mubr.bf16.mxu0 0
      %3456 = vmatmul.mubr.bf16.gmra.mrb[0].mxu0 %v2784
      %v3457 = vpop.f32.mrb[0].mxu0
      %v3458 = vadd.f32 0.0, %v3457
      %v3459 = vpop.f32.mrb[0].mxu0
      %v3460 = vpop.f32.mrb[0].mxu0
      %v3461 = vadd.f32 0.0, %v3460
      %v3462 = vpop.f32.mrb[0].mxu0
      %3463 = vmatprep.mubr.bf16.mxu0 0
      %3464 = vmatmul.mubr.bf16.gmra.mrb[0].mxu0 %v2787
      %v3465 = vpop.f32.mrb[0].mxu0
      %v3466 = vadd.f32 0.0, %v3465
      %v3467 = vpop.f32.mrb[0].mxu0
      %v3468 = vpop.f32.mrb[0].mxu0
      %v3469 = vadd.f32 0.0, %v3468
      %v3470 = vpop.f32.mrb[0].mxu0
      %3471 = vmatprep.mubr.bf16.mxu0 0
      %3472 = vmatmul.mubr.bf16.gmra.mrb[0].mxu0 %v2790
      %v3473 = vpop.f32.mrb[0].mxu0
      %v3474 = vadd.f32 0.0, %v3473
      %v3475 = vpop.f32.mrb[0].mxu0
      %v3476 = vpop.f32.mrb[0].mxu0
      %v3477 = vadd.f32 0.0, %v3476
      %v3478 = vpop.f32.mrb[0].mxu0
      %3479 = vmatprep.mubr.bf16.mxu0 0
      %3480 = vmatmul.mubr.bf16.gmra.mrb[0].mxu0 %v3418
      %v3481 = vpop.f32.mrb[0].mxu0
      %v3482 = vadd.f32 0.0, %v3481
      %v3483 = vpop.f32.mrb[0].mxu0
      %v3484 = vpop.f32.mrb[0].mxu0
      %v3485 = vadd.f32 0.0, %v3484
      %v3486 = vpop.f32.mrb[0].mxu0
      %3487 = vdwg.mxu0
      %v3488 = vadd.f32 %v3391, %v3458
      %v3489 = vadd.f32 %v3392, %v3461
      %v3490 = vadd.f32 %v3393, %v3466
      %v3491 = vadd.f32 %v3394, %v3469
      %v3492 = vadd.f32 %v3395, %v3474
      %v3493 = vadd.f32 %v3396, %v3477
      %v3494 = vadd.f32 %v3397, %v3482
      %v3495 = vadd.f32 %v3398, %v3485
      %v3497 = vrot.slane %v471, 5
      %v3498 = vrot.slane %v3497, 4
      %v3499 = vrot.slane %v472, 5
      %v3500 = vsel %vm795, %v3498, %v3499
      %s3501 = scalar_lea.vmem %s3, 104
      %v3502 = vld [vmem:[%s3501] sm:$0xf]
      %v3503 = vunpack.c.l.b16 %v3500
      %v3504 = vpack.c.b16 %v3503, %v3222
      %v3506 = vsel %vm603, %v3504, 0
      %v3509 = vsel %vm616, %v3502, 0
      %3511 = vmatprep.subr.bf16.mxu0 0
      %3512 = vmatpush1.bf16.msra.mxu0 %v3509
      %3513 = vmatprep.subr.bf16.mxu0 0
      %3514 = vmatpush1.bf16.msra.mxu0 0
      %3515 = vmatprep.subr.bf16.mxu0 0
      %3516 = vmatpush1.bf16.msra.mxu0 0
      %3517 = vmatprep.subr.bf16.mxu0 0
      %3518 = vmatpush1.bf16.msra.mxu0 0
      %3519 = vmatprep.subr.bf16.mxu0 0
      %3520 = vmatpush1.bf16.msra.mxu0 0
      %3521 = vmatprep.subr.bf16.mxu0 0
      %3522 = vmatpush1.bf16.msra.mxu0 0
      %3523 = vmatprep.subr.bf16.mxu0 0
      %3524 = vmatpush1.bf16.msra.mxu0 0
      %3525 = vmatprep.subr.bf16.mxu0 0
      %3526 = vmatpush1.bf16.msra.mxu0 0
      %3527 = vmatprep.subr.bf16.mxu0 0
      %3528 = vmatpush1.bf16.msra.mxu0 0
      %3529 = vmatprep.subr.bf16.mxu0 0
      %3530 = vmatpush1.bf16.msra.mxu0 0
      %3531 = vmatprep.subr.bf16.mxu0 0
      %3532 = vmatpush1.bf16.msra.mxu0 0
      %3533 = vmatprep.subr.bf16.mxu0 0
      %3534 = vmatpush1.bf16.msra.mxu0 0
      %3535 = vmatprep.subr.bf16.mxu0 0
      %3536 = vmatpush1.bf16.msra.mxu0 0
      %3537 = vmatprep.subr.bf16.mxu0 0
      %3538 = vmatpush1.bf16.msra.mxu0 0
      %3539 = vmatprep.subr.bf16.mxu0 0
      %3540 = vmatpush1.bf16.msra.mxu0 0
      %3541 = vmatprep.subr.bf16.mxu0 0
      %3542 = vmatpush1.bf16.msra.mxu0 0
      %3543 = vmatprep.mubr.bf16.mxu0 0
      %3544 = vmatmul.mubr.bf16.gmra.mrb[0].mxu0 %v2926
      %v3545 = vpop.f32.mrb[0].mxu0
      %v3546 = vadd.f32 0.0, %v3545
      %v3547 = vpop.f32.mrb[0].mxu0
      %v3548 = vpop.f32.mrb[0].mxu0
      %v3549 = vadd.f32 0.0, %v3548
      %v3550 = vpop.f32.mrb[0].mxu0
      %3551 = vmatprep.mubr.bf16.mxu0 0
      %3552 = vmatmul.mubr.bf16.gmra.mrb[0].mxu0 %v2929
      %v3553 = vpop.f32.mrb[0].mxu0
      %v3554 = vadd.f32 0.0, %v3553
      %v3555 = vpop.f32.mrb[0].mxu0
      %v3556 = vpop.f32.mrb[0].mxu0
      %v3557 = vadd.f32 0.0, %v3556
      %v3558 = vpop.f32.mrb[0].mxu0
      %3559 = vmatprep.mubr.bf16.mxu0 0
      %3560 = vmatmul.mubr.bf16.gmra.mrb[0].mxu0 %v2932
      %v3561 = vpop.f32.mrb[0].mxu0
      %v3562 = vadd.f32 0.0, %v3561
      %v3563 = vpop.f32.mrb[0].mxu0
      %v3564 = vpop.f32.mrb[0].mxu0
      %v3565 = vadd.f32 0.0, %v3564
      %v3566 = vpop.f32.mrb[0].mxu0
      %3567 = vmatprep.mubr.bf16.mxu0 0
      %3568 = vmatmul.mubr.bf16.gmra.mrb[0].mxu0 %v3506
      %v3569 = vpop.f32.mrb[0].mxu0
      %v3570 = vadd.f32 0.0, %v3569
      %v3571 = vpop.f32.mrb[0].mxu0
      %v3572 = vpop.f32.mrb[0].mxu0
      %v3573 = vadd.f32 0.0, %v3572
      %v3574 = vpop.f32.mrb[0].mxu0
      %3575 = vdwg.mxu0
      %v3576 = vadd.f32 %v3488, %v3546
      %v3577 = vadd.f32 %v3489, %v3549
      %v3578 = vadd.f32 %v3490, %v3554
      %v3579 = vadd.f32 %v3491, %v3557
      %v3580 = vadd.f32 %v3492, %v3562
      %v3581 = vadd.f32 %v3493, %v3565
      %v3582 = vadd.f32 %v3494, %v3570
      %v3583 = vadd.f32 %v3495, %v3573
      %v3584 = vpack.c.bf16 %v3577, %v3576
      %v3585 = vpack.c.bf16 %v3579, %v3578
      %v3586 = vpack.c.bf16 %v3581, %v3580
      %v3587 = vpack.c.bf16 %v3583, %v3582
      %v3592 = vunpack.c.l.b16 %v3584
      %v3593 = vunpack.c.h.b16 %v3584
      %v3594 = vunpack.c.l.b16 %v3585
      %v3595 = vunpack.c.h.b16 %v3585
      %v3596 = vunpack.c.l.b16 %v3586
      %v3597 = vunpack.c.h.b16 %v3586
      %v3598 = vunpack.c.l.b16 %v3587
      %v3599 = vunpack.c.h.b16 %v3587
      %v3600 = vpack.c.b16 %v3592, %v3592
      %v3601 = vpack.c.b16 %v3593, %v3593
      %v3602 = vpack.c.b16 %v3594, %v3594
      %v3603 = vpack.c.b16 %v3595, %v3595
      %v3604 = vpack.c.b16 %v3596, %v3596
      %v3605 = vpack.c.b16 %v3597, %v3597
      %v3606 = vpack.c.b16 %v3598, %v3598
      %v3607 = vpack.c.b16 %v3599, %v3599
      %vm3616 = vcmask 60416
      %3617 = vst.msk [vmem:[%s392] sm:$0xf] %vm3616, %v3600
      %3618 = vst.msk [vmem:[%s392 + $0x4] sm:$0xf] %vm3616, %v3601
      %3619 = vst.msk [vmem:[%s392 + $0x8] sm:$0xf] %vm3616, %v3602
      %3620 = vst.msk [vmem:[%s392 + $0xc] sm:$0xf] %vm3616, %v3603
      %3621 = vst.msk [vmem:[%s392 + $0x10] sm:$0xf] %vm3616, %v3604
      %3622 = vst.msk [vmem:[%s392 + $0x14] sm:$0xf] %vm3616, %v3605
      %3623 = vst.msk [vmem:[%s392 + $0x18] sm:$0xf] %vm3616, %v3606
      %3624 = vst.msk [vmem:[%s392 + $0x1c] sm:$0xf] %vm3616, %v3607
      %v3625 = vsel %vm603, %v3576, 0.0
      %v3626 = vsel %vm603, %v3577, 0.0
      %v3627 = vadd.f32 %v3625, %v3626
      %v3628 = vsel %vm603, %v3578, 0.0
      %v3629 = vadd.f32 %v3627, %v3628
      %v3630 = vsel %vm603, %v3579, 0.0
      %v3631 = vadd.f32 %v3629, %v3630
      %v3632 = vsel %vm603, %v3580, 0.0
      %v3633 = vadd.f32 %v3631, %v3632
      %v3634 = vsel %vm603, %v3581, 0.0
      %v3635 = vadd.f32 %v3633, %v3634
      %v3636 = vsel %vm603, %v3582, 0.0
      %v3637 = vadd.f32 %v3635, %v3636
      %v3638 = vsel %vm603, %v3583, 0.0
      %v3639 = vadd.f32 %v3637, %v3638
      %v3640 = vrot.slane %v3639, 4
      %v3641 = vadd.f32 %v3639, %v3640
      %v3642 = vrot.slane %v3641, 2
      %v3643 = vadd.f32 %v3641, %v3642
      %v3644 = vrot.slane %v3643, 1
      %v3645 = vadd.f32 %v3643, %v3644
      %v3646 = vmul.f32 %v3576, %v3576
      %v3647 = vmul.f32 %v3577, %v3577
      %v3648 = vmul.f32 %v3578, %v3578
      %v3649 = vmul.f32 %v3579, %v3579
      %v3650 = vmul.f32 %v3580, %v3580
      %v3651 = vmul.f32 %v3581, %v3581
      %v3652 = vmul.f32 %v3582, %v3582
      %v3653 = vmul.f32 %v3583, %v3583
      %v3654 = vsel %vm603, %v3646, 0.0
      %v3655 = vsel %vm603, %v3647, 0.0
      %v3656 = vadd.f32 %v3654, %v3655
      %v3657 = vsel %vm603, %v3648, 0.0
      %v3658 = vadd.f32 %v3656, %v3657
      %v3659 = vsel %vm603, %v3649, 0.0
      %v3660 = vadd.f32 %v3658, %v3659
      %v3661 = vsel %vm603, %v3650, 0.0
      %v3662 = vadd.f32 %v3660, %v3661
      %v3663 = vsel %vm603, %v3651, 0.0
      %v3664 = vadd.f32 %v3662, %v3663
      %v3665 = vsel %vm603, %v3652, 0.0
      %v3666 = vadd.f32 %v3664, %v3665
      %v3667 = vsel %vm603, %v3653, 0.0
      %v3668 = vadd.f32 %v3666, %v3667
      %v3669 = vrot.slane %v3668, 4
      %v3670 = vadd.f32 %v3668, %v3669
      %v3671 = vrot.slane %v3670, 2
      %v3672 = vadd.f32 %v3670, %v3671
      %v3673 = vrot.slane %v3672, 1
      %v3674 = vadd.f32 %v3672, %v3673
      %3675 = vst.msk [vmem:[%s401] sm:$0xff] %vm603, %v3645
      %3676 = vst.msk [vmem:[%s409] sm:$0xff] %vm603, %v3674
      %s3677 = smul.u32 %s22, 8
      %s3678 = sadd.s32 %s3677, %s23
      %s3679 = smul.u32 8, %s3678
      %p3680 = scmp.lt.s32.totalorder %s3679, 127
      %s3681 = scalar_select %p3680, %s3679, 127
      %s3682 = smul.addr %s3681, 4
      %s3683 = scalar_lea.vmem %s4, %s3682
      %s3684 = smul.u32 %s22, 8
      %s3685 = sadd.s32 %s3684, %s23
      %p3686 = scmp.lt.s32.totalorder %s3685, 15
      %s3687 = scalar_select %p3686, %s3685, 15
      %s3688 = smul.addr %s3687, 8
      %s3689 = scalar_lea.vmem %s5, %s3688
      %s3690 = smul.u32 %s22, 8
      %s3691 = sadd.s32 %s3690, %s23
      %p3692 = scmp.lt.s32.totalorder %s3691, 15
      %s3693 = scalar_select %p3692, %s3691, 15
      %s3694 = smul.addr %s3693, 8
      %s3695 = scalar_lea.vmem %s6, %s3694
      // Predicated region
      $region37: #{_lambda_.6} parent=35 // pred_check
        %p3696 = pneg %p161
      $region38: #{_lambda_.6} parent=35 // pred_check_branch
        %3698 = sbr.rel (%p3696) target = $region40
      $region39: #{_lambda_.6} parent=35 // pred_region
        %s3699 = smul.u32 %s22, 8
        %s3700 = sadd.s32 %s3699, %s23
        %s3701 = smul.u32 8, %s3700
      $region40: #{_lambda_.6} parent=35 // pred_fallthru
        _
      // Predicated region
      $region41: #{_lambda_.6} parent=35 // pred_check
        %p3702 = pneg %p191
      $region42: #{_lambda_.6} parent=35 // pred_check_branch
        %3704 = sbr.rel (%p3702) target = $region44
      $region43: #{_lambda_.6} parent=35 // pred_region
        %s3705 = smul.u32 %s22, 8
        %s3706 = sadd.s32 %s3705, %s23
      $region44: #{_lambda_.6} parent=35 // pred_fallthru
        _
      // Predicated region
      $region45: #{_lambda_.6} parent=35 // pred_check
        %p3707 = pneg %p221
      $region46: #{_lambda_.6} parent=35 // pred_check_branch
        %3709 = sbr.rel (%p3707) target = $region48
      $region47: #{_lambda_.6} parent=35 // pred_region
        %s3710 = smul.u32 %s22, 8
        %s3711 = sadd.s32 %s3710, %s23
      $region48: #{_lambda_.6} parent=35 // pred_fallthru
        _
    $region36: #{_lambda_.6} parent=5 // pred_fallthru
      _
    %p3712 = scmp.le.s32.totalorder 2, %s13
    // Predicated region
    $region49: #{_lambda_.6} parent=5 // pred_check
      %p3713 = pneg %p3712
    $region50: #{_lambda_.6} parent=5 // pred_check_branch
      %3715 = sbr.rel (%p3713) target = $region52
    $region51: #{_lambda_.6} parent=5 // pred_region
      %s3716 = ssub.s32 %s13, 2
      // Predicated region
      $region53: #{_lambda_.6} parent=51 // pred_check
        %p3717 = pneg %p167
      $region54: #{_lambda_.6} parent=51 // pred_check_branch
        %3719 = sbr.rel (%p3717) target = $region56
      $region55: #{_lambda_.6} parent=51 // pred_region
        %s3720 = smul.u32 %s24, 8
        %s3721 = sadd.s32 %s3720, %s25
        %s3722 = smul.u32 8, %s3721
        %p3723 = scmp.lt.s32.totalorder %s3722, 127
        %s3724 = scalar_select %p3723, %s3722, 127
        %s3725 = smul.addr %s3724, 4
        %s3726 = scalar_lea.vmem %s4, %s3725
      $region56: #{_lambda_.6} parent=51 // pred_fallthru
        _
      // Predicated region
      $region57: #{_lambda_.6} parent=51 // pred_check
        %p3727 = pneg %p197
      $region58: #{_lambda_.6} parent=51 // pred_check_branch
        %3729 = sbr.rel (%p3727) target = $region60
      $region59: #{_lambda_.6} parent=51 // pred_region
        %s3730 = smul.u32 %s24, 8
        %s3731 = sadd.s32 %s3730, %s25
        %p3732 = scmp.lt.s32.totalorder %s3731, 15
        %s3733 = scalar_select %p3732, %s3731, 15
        %s3734 = smul.addr %s3733, 8
        %s3735 = scalar_lea.vmem %s5, %s3734
      $region60: #{_lambda_.6} parent=51 // pred_fallthru
        _
      // Predicated region
      $region61: #{_lambda_.6} parent=51 // pred_check
        %p3736 = pneg %p227
      $region62: #{_lambda_.6} parent=51 // pred_check_branch
        %3738 = sbr.rel (%p3736) target = $region64
      $region63: #{_lambda_.6} parent=51 // pred_region
        %s3739 = smul.u32 %s24, 8
        %s3740 = sadd.s32 %s3739, %s25
        %p3741 = scmp.lt.s32.totalorder %s3740, 15
        %s3742 = scalar_select %p3741, %s3740, 15
        %s3743 = smul.addr %s3742, 8
        %s3744 = scalar_lea.vmem %s6, %s3743
      $region64: #{_lambda_.6} parent=51 // pred_fallthru
        _
    $region52: #{_lambda_.6} parent=5 // pred_fallthru
      _
  $region6: #{_lambda_.6} parent=0 // loop_footer
    %s17 = sadd.s32 1, %s13
  $region7: #{_lambda_.6} parent=0 // loop_footer_branch
    %12 = sbr.rel target = $region3
  $region8: #{_lambda_.6} parent=0 // loop_exit
    _

</llo_original>
